<compile_context>
chip_gen: v7x
topology: tpu7x:2x2x1
jax: 0.10.0
libtpu: 0.0.40
codegen_flags: <defaults>
</compile_context>

<pallas_src>
import jax
import jax.numpy as jnp
from jax import lax
from jax.experimental import pallas as pl
from jax.experimental.pallas import tpu as pltpu


_LANE = 128
_SUBLANE = 8


def _round_up(n, m):
    return ((n + m - 1) // m) * m


def _pick_tile(n, max_tile, quantum):
    """Largest multiple of `quantum` <= max_tile that divides n (n % quantum == 0)."""
    if n <= max_tile:
        return n
    t = (max_tile // quantum) * quantum
    while t > quantum and n % t:
        t -= quantum
    return t if (t > 0 and n % t == 0) else n


def _vmem_cap_bytes():
    """Generation-aware scoped-VMEM cap (v7x: 64 MiB/TC, v5e/v6e: 128 MiB)."""
    try:
        cap = int(pltpu.get_tpu_info().vmem_capacity_bytes)
        if cap > 0:
            return int(cap * 0.8)
    except Exception:
        pass
    return 48 * 1024 * 1024          # conservative: safe on every generation


def _vmem_limit(est_bytes):
    return int(min(max(2 * est_bytes, 4 * 1024 * 1024), _vmem_cap_bytes()))


# ----------------------------------------------------------------------------
# Kernel 1: row/lane-tiled GEMM + bias  (hoisted input projection x @ W_ih).
# ----------------------------------------------------------------------------
def _gemm_bias_kernel(x_ref, w_ref, b_ref, o_ref):
    o_ref[...] = (
        jnp.dot(x_ref[...], w_ref[...], preferred_element_type=jnp.float32)
        + b_ref[...]
    ).astype(o_ref.dtype)


def _gemm_bias(x, w, b, *, out_dtype=jnp.float32, tile_rows=512, tile_cols=2048):
    """x: (M, K), w: (K, N), b: (1, N) -> (M, N) in out_dtype.  M % 8 == 0, N % 128 == 0."""
    M, Kc = x.shape
    N = w.shape[1]
    tm = min(tile_rows, M)
    Mp = _round_up(M, tm)
    if Mp > M:
        x = jnp.pad(x, ((0, Mp - M), (0, 0)))
    tn = _pick_tile(N, tile_cols, _LANE)

    est = (2 * tm * Kc * x.dtype.itemsize + 2 * Kc * tn * w.dtype.itemsize
           + 2 * tn * 4 + 2 * tm * tn * jnp.dtype(out_dtype).itemsize)
    out = pl.pallas_call(
        _gemm_bias_kernel,
        out_shape=jax.ShapeDtypeStruct((Mp, N), out_dtype),
        grid_spec=pltpu.PrefetchScalarGridSpec(
            num_scalar_prefetch=0,
            grid=(Mp // tm, N // tn),
            in_specs=[
                pl.BlockSpec((tm, Kc), lambda i, j: (i, 0)),
                pl.BlockSpec((Kc, tn), lambda i, j: (0, j)),
                pl.BlockSpec((1, tn), lambda i, j: (0, j)),
            ],
            out_specs=pl.BlockSpec((tm, tn), lambda i, j: (i, j)),
        ),
        compiler_params=pltpu.CompilerParams(
            dimension_semantics=("parallel", "parallel"),
            vmem_limit_bytes=_vmem_limit(est)),
    )(x, w, b)
    return out[:M]


# ----------------------------------------------------------------------------
# Kernel 2: LSTM recurrence — both directions per grid step.
#   gf_ref : (K, Bp, 4Hp)  fwd gates for time block  s            (bf16)
#   gb_ref : (K, Bp, 4Hp)  bwd gates for time block  S-1-s        (bf16)
#   whh    : (2, Hp, 4Hp)  recurrent weights, left in HBM (pl.ANY)
#   hf_ref : (K, Bp, Hp)   fwd hidden states, natural time order  (bf16)
#   hb_ref : (K, Bp, Hp)   bwd hidden states, natural time order  (bf16)
#   *_sc   : per-direction f32 h/c state + single-buffered W_hh VMEM copy
# Gate layout inside the 4Hp lanes is reordered to (i, f, o, g): one sigmoid
# slab over the first 3Hp lanes, one tanh slab over the last Hp lanes.
# ----------------------------------------------------------------------------
def _bilstm_rec_kernel(gf_ref, gb_ref, whh_hbm, hf_ref, hb_ref,
                       hf_sc, cf_sc, hb_sc, cb_sc, w_sc, dma_sem):
    s = pl.program_id(0)
    K = gf_ref.shape[0]
    Hp = hf_sc.shape[-1]

    @pl.when(s == 0)
    def _init():
        hf_sc[...] = jnp.zeros_like(hf_sc)
        cf_sc[...] = jnp.zeros_like(cf_sc)
        hb_sc[...] = jnp.zeros_like(hb_sc)
        cb_sc[...] = jnp.zeros_like(cb_sc)
        # single-buffer the loop-invariant W_hh: one DMA, persists in scratch
        cp = pltpu.make_async_copy(whh_hbm, w_sc, dma_sem.at[0])
        cp.start()
        cp.wait()

    def cell(gates, c):
        sg = jax.nn.sigmoid(gates[:, :3 * Hp])      # i | f | o  in one slab
        g_g = jnp.tanh(gates[:, 3 * Hp:])           # g
        i_g = sg[:, :Hp]
        f_g = sg[:, Hp:2 * Hp]
        o_g = sg[:, 2 * Hp:]
        c_new = f_g * c + i_g * g_g
        h_new = o_g * jnp.tanh(c_new)
        return h_new, c_new

    def step(j, carry):
        kb = K - 1 - j                              # bwd within-block time idx
        # ---- forward direction (within-block time j) -----------------------
        w_f = w_sc[0]
        gates_f = gf_ref[j].astype(jnp.float32) + jnp.dot(
            hf_sc[...].astype(w_f.dtype), w_f, preferred_element_type=jnp.float32)
        h_f, c_f = cell(gates_f, cf_sc[...])
        hf_sc[...] = h_f
        cf_sc[...] = c_f
        hf_ref[j] = h_f.astype(hf_ref.dtype)
        # ---- backward direction (within-block time kb), independent --------
        w_b = w_sc[1]
        gates_b = gb_ref[kb].astype(jnp.float32) + jnp.dot(
            hb_sc[...].astype(w_b.dtype), w_b, preferred_element_type=jnp.float32)
        h_b, c_b = cell(gates_b, cb_sc[...])
        hb_sc[...] = h_b
        cb_sc[...] = c_b
        hb_ref[kb] = h_b.astype(hb_ref.dtype)
        return carry

    lax.fori_loop(0, K, step, 0, unroll=True)


# ----------------------------------------------------------------------------
# Kernel 3: linear head  y = hf @ W1 + hb @ W2 + b   (row-tiled, no concat).
# ----------------------------------------------------------------------------
def _head_kernel(hf_ref, hb_ref, w1_ref, w2_ref, b_ref, o_ref):
    o_ref[...] = (
        jnp.dot(hf_ref[...], w1_ref[...], preferred_element_type=jnp.float32)
        + jnp.dot(hb_ref[...], w2_ref[...], preferred_element_type=jnp.float32)
        + b_ref[...]
    )


# ----------------------------------------------------------------------------
# Wrapper
# ----------------------------------------------------------------------------
def bilstm_forward(x, params, *, block_t=16, tile_rows=512,
                   matmul_dtype=jnp.bfloat16):
    """x: (B, T, input_size) float32 -> (B, T, output_size) float32."""
    B, T, I = x.shape
    H = params["w_hh_f"].shape[1]
    O = params["w_lin"].shape[0]

    Bp = _round_up(B, _SUBLANE)
    Hp = _round_up(H, _LANE)
    Op = _round_up(O, _LANE)
    K = min(block_t, T)                      # timesteps per grid step
    Tp = _round_up(T, K)
    S = Tp // K

    # ---- gate-aware zero padding + reorder (i,f,g,o) -> (i,f,o,g) -----------
    perm = jnp.array((0, 1, 3, 2))

    def pad_gate_mat(w):                     # (4H, X) -> (4Hp, X)
        w4 = w.reshape(4, H, -1)[perm]
        w4 = jnp.pad(w4, ((0, 0), (0, Hp - H), (0, 0)))
        return w4.reshape(4 * Hp, -1)

    def pad_gate_vec(b):                     # (4H,) -> (4Hp,)
        b4 = b.reshape(4, H)[perm]
        return jnp.pad(b4, ((0, 0), (0, Hp - H))).reshape(4 * Hp)

    w_ih_f = pad_gate_mat(params["w_ih_f"])                        # (4Hp, I)
    w_ih_b = pad_gate_mat(params["w_ih_b"])
    w_hh_f = pad_gate_mat(jnp.pad(params["w_hh_f"], ((0, 0), (0, Hp - H))))
    w_hh_b = pad_gate_mat(jnp.pad(params["w_hh_b"], ((0, 0), (0, Hp - H))))
    b_f = pad_gate_vec(params["b_ih_f"] + params["b_hh_f"])        # (4Hp,)
    b_b = pad_gate_vec(params["b_ih_b"] + params["b_hh_b"])

    # both directions' input projections fused into one GEMM operand
    w_ih_cat = jnp.concatenate([w_ih_f.T, w_ih_b.T], axis=1).astype(matmul_dtype)
    b_cat = jnp.concatenate([b_f, b_b]).reshape(1, 8 * Hp).astype(jnp.float32)
    w_hh_all = jnp.stack([w_hh_f.T, w_hh_b.T], axis=0).astype(matmul_dtype)

    w_lin = params["w_lin"]                                        # (O, 2H)
    w1 = jnp.pad(w_lin[:, :H], ((0, Op - O), (0, Hp - H))).T.astype(matmul_dtype)
    w2 = jnp.pad(w_lin[:, H:], ((0, Op - O), (0, Hp - H))).T.astype(matmul_dtype)
    b_lin = jnp.pad(params["b_lin"], (0, Op - O)).reshape(1, Op).astype(jnp.float32)

    # ---- 1) hoisted input projection: one big GEMM, bf16 gate stream --------
    x_tm = jnp.pad(jnp.transpose(x, (1, 0, 2)), ((0, 0), (0, Bp - B), (0, 0)))
    x_flat = x_tm.reshape(T * Bp, I).astype(matmul_dtype)
    gates = _gemm_bias(x_flat, w_ih_cat, b_cat,
                       out_dtype=matmul_dtype, tile_rows=tile_rows)
    gates = gates.reshape(T, Bp, 8 * Hp)                           # fwd | bwd lanes
    if Tp > T:
        # Zero gates for padded trailing timesteps.  The bwd direction visits
        # them first, but a zero-gate cell starting from (h,c)=(0,0) stays
        # exactly zero, so the real states are untouched.
        gates = jnp.pad(gates, ((0, Tp - T), (0, 0), (0, 0)))

    # ---- 2) recurrence: both directions per time-block grid step ------------
    gdt = jnp.dtype(matmul_dtype).itemsize
    est = (2 * 2 * K * Bp * 4 * Hp * gdt          # gf/gb pipeline buffers
           + 2 * 2 * K * Bp * Hp * gdt            # hf/hb pipeline buffers
           + 2 * Hp * 4 * Hp * gdt                # W_hh scratch (single-buffered)
           + 4 * Bp * Hp * 4)                     # h/c state
    hf, hb = pl.pallas_call(
        _bilstm_rec_kernel,
        out_shape=(jax.ShapeDtypeStruct((Tp, Bp, Hp), matmul_dtype),
                   jax.ShapeDtypeStruct((Tp, Bp, Hp), matmul_dtype)),
        grid_spec=pltpu.PrefetchScalarGridSpec(
            num_scalar_prefetch=0,
            grid=(S,),
            in_specs=[
                # fwd gates: natural time order, lane-block 0
                pl.BlockSpec((K, Bp, 4 * Hp), lambda s: (s, 0, 0)),
                # bwd gates: reversed time blocks, lane-block 1 (no XLA flip)
                pl.BlockSpec((K, Bp, 4 * Hp), lambda s: (S - 1 - s, 0, 1)),
                # W_hh stays in HBM; DMA'd once into VMEM scratch at s == 0
                pl.BlockSpec(memory_space=pl.ANY),
            ],
            out_specs=[
                pl.BlockSpec((K, Bp, Hp), lambda s: (s, 0, 0)),
                # bwd hidden states land directly in natural sequence order
                pl.BlockSpec((K, Bp, Hp), lambda s: (S - 1 - s, 0, 0)),
            ],
            scratch_shapes=[
                pltpu.VMEM((Bp, Hp), jnp.float32),        # h fwd
                pltpu.VMEM((Bp, Hp), jnp.float32),        # c fwd
                pltpu.VMEM((Bp, Hp), jnp.float32),        # h bwd
                pltpu.VMEM((Bp, Hp), jnp.float32),        # c bwd
                pltpu.VMEM((2, Hp, 4 * Hp), matmul_dtype),
                pltpu.SemaphoreType.DMA((1,)),
            ],
        ),
        compiler_params=pltpu.CompilerParams(
            dimension_semantics=("arbitrary",),
            vmem_limit_bytes=_vmem_limit(est)),
    )(gates, gates, w_hh_all)

    # ---- 3) linear head: row-tiled 2-operand GEMM + bias ---------------------
    M2 = Tp * Bp
    hf2 = hf.reshape(M2, Hp)
    hb2 = hb.reshape(M2, Hp)
    tm2 = min(tile_rows, M2)
    Mp2 = _round_up(M2, tm2)
    if Mp2 > M2:
        hf2 = jnp.pad(hf2, ((0, Mp2 - M2), (0, 0)))
        hb2 = jnp.pad(hb2, ((0, Mp2 - M2), (0, 0)))

    est = (4 * tm2 * Hp * gdt + 4 * Hp * Op * gdt + 2 * Op * 4 + 2 * tm2 * Op * 4)
    y_flat = pl.pallas_call(
        _head_kernel,
        out_shape=jax.ShapeDtypeStruct((Mp2, Op), jnp.float32),
        grid_spec=pltpu.PrefetchScalarGridSpec(
            num_scalar_prefetch=0,
            grid=(Mp2 // tm2,),
            in_specs=[
                pl.BlockSpec((tm2, Hp), lambda i: (i, 0)),
                pl.BlockSpec((tm2, Hp), lambda i: (i, 0)),
                pl.BlockSpec((Hp, Op), lambda i: (0, 0)),
                pl.BlockSpec((Hp, Op), lambda i: (0, 0)),
                pl.BlockSpec((1, Op), lambda i: (0, 0)),
            ],
            out_specs=pl.BlockSpec((tm2, Op), lambda i: (i, 0)),
        ),
        compiler_params=pltpu.CompilerParams(
            dimension_semantics=("parallel",),
            vmem_limit_bytes=_vmem_limit(est)),
    )(hf2, hb2, w1, w2, b_lin)

    y = y_flat[:M2].reshape(Tp, Bp, Op)[:T, :B, :O]
    return jnp.transpose(y, (1, 0, 2))                             # (B, T, O)


# ----------------------------------------------------------------------------
# Pure-JAX reference (mirrors torch.nn.LSTM / Linear semantics, f32).
# ----------------------------------------------------------------------------
def bilstm_reference(x, params):
    B, T, I = x.shape
    H = params["w_hh_f"].shape[1]

    def run_dir(xs, w_ih, w_hh, b_ih, b_hh, reverse):
        def cell(carry, xt):
            h, c = carry
            g = xt @ w_ih.T + h @ w_hh.T + b_ih + b_hh
            i, f, gg, o = jnp.split(g, 4, axis=-1)
            i = jax.nn.sigmoid(i)
            f = jax.nn.sigmoid(f)
            gg = jnp.tanh(gg)
            o = jax.nn.sigmoid(o)
            c = f * c + i * gg
            h = o * jnp.tanh(c)
            return (h, c), h

        h0 = jnp.zeros((B, H), jnp.float32)
        c0 = jnp.zeros((B, H), jnp.float32)
        xs_tm = jnp.transpose(xs, (1, 0, 2))
        _, hs = lax.scan(cell, (h0, c0), xs_tm, reverse=reverse)
        return jnp.transpose(hs, (1, 0, 2))

    hf = run_dir(x, params["w_ih_f"], params["w_hh_f"],
                 params["b_ih_f"], params["b_hh_f"], reverse=False)
    hb = run_dir(x, params["w_ih_b"], params["w_hh_b"],
                 params["b_ih_b"], params["b_hh_b"], reverse=True)
    rec = jnp.concatenate([hf, hb], axis=-1)
    return rec @ params["w_lin"].T + params["b_lin"]


def init_params(key, input_size, hidden_size, output_size):
    k = 1.0 / jnp.sqrt(hidden_size)
    keys = jax.random.split(key, 12)
    u = lambda kk, shape: jax.random.uniform(kk, shape, jnp.float32, -k, k)
    H, I, O = hidden_size, input_size, output_size
    return dict(
        w_ih_f=u(keys[0], (4 * H, I)), w_hh_f=u(keys[1], (4 * H, H)),
        b_ih_f=u(keys[2], (4 * H,)),   b_hh_f=u(keys[3], (4 * H,)),
        w_ih_b=u(keys[4], (4 * H, I)), w_hh_b=u(keys[5], (4 * H, H)),
        b_ih_b=u(keys[6], (4 * H,)),   b_hh_b=u(keys[7], (4 * H,)),
        w_lin=u(keys[8], (O, 2 * H)),  b_lin=u(keys[9], (O,)),
    )


if __name__ == "__main__":
    B, T, I, H, O = 2, 8, 16, 32, 8
    key = jax.random.PRNGKey(0)
    k_x, k_p = jax.random.split(key)
    x = jax.random.normal(k_x, (B, T, I), jnp.float32)
    params = init_params(k_p, I, H, O)

    y = jax.jit(bilstm_forward)(x, params)
    y = jax.block_until_ready(y)

    y_ref = bilstm_reference(x, params)
    assert y.shape == (B, T, O)
    max_err = float(jnp.max(jnp.abs(y - y_ref)))
    # bf16 matmul operands + bf16 gate/h streams (f32 accumulation & state)
    assert jnp.allclose(y, y_ref, rtol=5e-2, atol=5e-2), (
        f"mismatch vs reference (max abs err {max_err})")

    print("KERNEL_OK")
</pallas_src>

<mosaic_0001>
module attributes {stable_mosaic.version = 11 : i64} {
  func.func @_gemm_bias_kernel(%arg0: i32, %arg1: i32, %arg2: memref<64x16xbf16, #tpu.memory_space<vmem>>, %arg3: memref<16x1024xbf16, #tpu.memory_space<vmem>>, %arg4: memref<1x1024xf32, #tpu.memory_space<vmem>>, %arg5: memref<64x1024xbf16, #tpu.memory_space<vmem>>) attributes {dimension_semantics = [#tpu.dimension_semantics<parallel>, #tpu.dimension_semantics<parallel>], iteration_bounds = array<i64: 1, 1>, scalar_prefetch = 0 : i64, scratch_operands = 0 : i64, tpu.core_type = #tpu.core_type<tc>, window_params = [{transform_indices = @transform_0, window_bounds = array<i64: 64, 16>}, {transform_indices = @transform_1, window_bounds = array<i64: 16, 1024>}, {transform_indices = @transform_2, window_bounds = array<i64: 1, 1024>}, {transform_indices = @transform_3, window_bounds = array<i64: 64, 1024>}]} {
    %c0 = arith.constant 0 : index
    %c0_0 = arith.constant 0 : index
    %0 = vector.load %arg2[%c0, %c0_0] : memref<64x16xbf16, #tpu.memory_space<vmem>>, vector<64x16xbf16>
    %c0_1 = arith.constant 0 : index
    %c0_2 = arith.constant 0 : index
    %1 = vector.load %arg3[%c0_1, %c0_2] : memref<16x1024xbf16, #tpu.memory_space<vmem>>, vector<16x1024xbf16>
    %cst = arith.constant dense<0.000000e+00> : vector<64x1024xf32>
    %2 = tpu.matmul %0, %1, %cst {dimension_numbers = #tpu.dot_dimension_numbers<[1], [0], [0], [1], [0, 0, 1, 1], [], []>} : vector<64x16xbf16>, vector<16x1024xbf16>, vector<64x1024xf32> -> vector<64x1024xf32>
    %c0_3 = arith.constant 0 : index
    %c0_4 = arith.constant 0 : index
    %3 = vector.load %arg4[%c0_3, %c0_4] : memref<1x1024xf32, #tpu.memory_space<vmem>>, vector<1x1024xf32>
    %4 = vector.broadcast %3 : vector<1x1024xf32> to vector<64x1024xf32>
    %5 = arith.addf %2, %4 : vector<64x1024xf32>
    %6 = arith.truncf %5 : vector<64x1024xf32> to vector<64x1024xbf16>
    %c0_5 = arith.constant 0 : index
    %c0_6 = arith.constant 0 : index
    %7 = vector.load %arg5[%c0_5, %c0_6] : memref<64x1024xbf16, #tpu.memory_space<vmem>>, vector<64x1024xbf16>
    tpu.vector_store %arg5[%c0_5, %c0_6], %6 {strides = array<i32>} : memref<64x1024xbf16, #tpu.memory_space<vmem>>, vector<64x1024xbf16>,
    return
  }
  func.func @transform_0(%arg0: i32, %arg1: i32) -> (i32, i32) {
    %c0_i32 = arith.constant 0 : i32
    %c0_i32_0 = arith.constant 0 : i32
    return %arg0, %c0_i32 : i32, i32
  }
  func.func @transform_1(%arg0: i32, %arg1: i32) -> (i32, i32) {
    %c0_i32 = arith.constant 0 : i32
    %c0_i32_0 = arith.constant 0 : i32
    return %c0_i32, %arg1 : i32, i32
  }
  func.func @transform_2(%arg0: i32, %arg1: i32) -> (i32, i32) {
    %c0_i32 = arith.constant 0 : i32
    %c0_i32_0 = arith.constant 0 : i32
    return %c0_i32, %arg1 : i32, i32
  }
  func.func @transform_3(%arg0: i32, %arg1: i32) -> (i32, i32) {
    %c0_i32 = arith.constant 0 : i32
    return %arg0, %arg1 : i32, i32
  }
}

module attributes {stable_mosaic.version = 11 : i64} {
  func.func @_bilstm_rec_kernel(%arg0: i32, %arg1: memref<8x8x512xbf16, #tpu.memory_space<vmem>>, %arg2: memref<8x8x512xbf16, #tpu.memory_space<vmem>>, %arg3: memref<2x128x512xbf16, #tpu.memory_space<any>>, %arg4: memref<8x8x128xbf16, #tpu.memory_space<vmem>>, %arg5: memref<8x8x128xbf16, #tpu.memory_space<vmem>>, %arg6: memref<8x128xf32, #tpu.memory_space<vmem>>, %arg7: memref<8x128xf32, #tpu.memory_space<vmem>>, %arg8: memref<8x128xf32, #tpu.memory_space<vmem>>, %arg9: memref<8x128xf32, #tpu.memory_space<vmem>>, %arg10: memref<2x128x512xbf16, #tpu.memory_space<vmem>>, %arg11: memref<1x!tpu.dma_semaphore, #tpu.memory_space<semaphore_mem>>) attributes {dimension_semantics = [#tpu.dimension_semantics<arbitrary>], iteration_bounds = array<i64: 1>, scalar_prefetch = 0 : i64, scratch_operands = 6 : i64, tpu.core_type = #tpu.core_type<tc>, window_params = [{transform_indices = @transform_0, window_bounds = array<i64: 8, 8, 512>}, {transform_indices = @transform_1, window_bounds = array<i64: 8, 8, 512>}, {}, {transform_indices = @transform_3, window_bounds = array<i64: 8, 8, 128>}, {transform_indices = @transform_4, window_bounds = array<i64: 8, 8, 128>}]} {
    %c0_i32 = arith.constant 0 : i32
    %0 = arith.cmpi eq, %arg0, %c0_i32 : i32
    %1 = arith.extui %0 : i1 to i32
    %c0_i32_0 = arith.constant 0 : i32
    %2 = arith.cmpi ne, %1, %c0_i32_0 : i32
    scf.if %2 {
      %cst_279 = arith.constant 0.000000e+00 : f32
      %555 = vector.broadcast %cst_279 : f32 to vector<8x128xf32>
      %c0_280 = arith.constant 0 : index
      %c0_281 = arith.constant 0 : index
      %556 = vector.load %arg6[%c0_280, %c0_281] : memref<8x128xf32, #tpu.memory_space<vmem>>, vector<8x128xf32>
      tpu.vector_store %arg6[%c0_280, %c0_281], %555 {strides = array<i32>} : memref<8x128xf32, #tpu.memory_space<vmem>>, vector<8x128xf32>,
      %cst_282 = arith.constant 0.000000e+00 : f32
      %557 = vector.broadcast %cst_282 : f32 to vector<8x128xf32>
      %c0_283 = arith.constant 0 : index
      %c0_284 = arith.constant 0 : index
      %558 = vector.load %arg7[%c0_283, %c0_284] : memref<8x128xf32, #tpu.memory_space<vmem>>, vector<8x128xf32>
      tpu.vector_store %arg7[%c0_283, %c0_284], %557 {strides = array<i32>} : memref<8x128xf32, #tpu.memory_space<vmem>>, vector<8x128xf32>,
      %cst_285 = arith.constant 0.000000e+00 : f32
      %559 = vector.broadcast %cst_285 : f32 to vector<8x128xf32>
      %c0_286 = arith.constant 0 : index
      %c0_287 = arith.constant 0 : index
      %560 = vector.load %arg8[%c0_286, %c0_287] : memref<8x128xf32, #tpu.memory_space<vmem>>, vector<8x128xf32>
      tpu.vector_store %arg8[%c0_286, %c0_287], %559 {strides = array<i32>} : memref<8x128xf32, #tpu.memory_space<vmem>>, vector<8x128xf32>,
      %cst_288 = arith.constant 0.000000e+00 : f32
      %561 = vector.broadcast %cst_288 : f32 to vector<8x128xf32>
      %c0_289 = arith.constant 0 : index
      %c0_290 = arith.constant 0 : index
      %562 = vector.load %arg9[%c0_289, %c0_290] : memref<8x128xf32, #tpu.memory_space<vmem>>, vector<8x128xf32>
      tpu.vector_store %arg9[%c0_289, %c0_290], %561 {strides = array<i32>} : memref<8x128xf32, #tpu.memory_space<vmem>>, vector<8x128xf32>,
      %c0_i32_291 = arith.constant 0 : i32
      %563 = tpu.memref_slice %arg11[%c0_i32_291] : memref<1x!tpu.dma_semaphore, #tpu.memory_space<semaphore_mem>> -> memref<1x!tpu.dma_semaphore, #tpu.memory_space<semaphore_mem>>
      %564 = tpu.memref_squeeze %563 : memref<1x!tpu.dma_semaphore, #tpu.memory_space<semaphore_mem>> -> memref<!tpu.dma_semaphore, #tpu.memory_space<semaphore_mem>>
      tpu.enqueue_dma source(%arg3 : memref<2x128x512xbf16, #tpu.memory_space<any>>) target(%arg10 : memref<2x128x512xbf16, #tpu.memory_space<vmem>>) target_semaphore(%564 : memref<!tpu.dma_semaphore, #tpu.memory_space<semaphore_mem>>)
      %c0_i32_292 = arith.constant 0 : i32
      %565 = tpu.memref_slice %arg11[%c0_i32_292] : memref<1x!tpu.dma_semaphore, #tpu.memory_space<semaphore_mem>> -> memref<1x!tpu.dma_semaphore, #tpu.memory_space<semaphore_mem>>
      %566 = tpu.memref_squeeze %565 : memref<1x!tpu.dma_semaphore, #tpu.memory_space<semaphore_mem>> -> memref<!tpu.dma_semaphore, #tpu.memory_space<semaphore_mem>>
      tpu.wait_dma2 semaphore(%566 : memref<!tpu.dma_semaphore, #tpu.memory_space<semaphore_mem>>) src(%arg3 : memref<2x128x512xbf16, #tpu.memory_space<any>>) dst(%arg10 : memref<2x128x512xbf16, #tpu.memory_space<vmem>>)
    } else {
    }
    %c0_i32_1 = arith.constant 0 : i32
    %c7_i32 = arith.constant 7 : i32
    %3 = arith.subi %c7_i32, %c0_i32_1 : i32
    %c0 = arith.constant 0 : index
    %c0_2 = arith.constant 0 : index
    %c0_3 = arith.constant 0 : index
    %4 = vector.load %arg10[%c0, %c0_2, %c0_3] : memref<2x128x512xbf16, #tpu.memory_space<vmem>>, vector<1x128x512xbf16>
    %5 = vector.shape_cast %4 : vector<1x128x512xbf16> to vector<128x512xbf16>
    %6 = arith.index_cast %c0_i32_1 : i32 to index
    %c0_4 = arith.constant 0 : index
    %c0_5 = arith.constant 0 : index
    %7 = vector.load %arg1[%6, %c0_4, %c0_5] : memref<8x8x512xbf16, #tpu.memory_space<vmem>>, vector<1x8x512xbf16>
    %8 = vector.shape_cast %7 : vector<1x8x512xbf16> to vector<8x512xbf16>
    %9 = arith.extf %8 : vector<8x512xbf16> to vector<8x512xf32>
    %c0_6 = arith.constant 0 : index
    %c0_7 = arith.constant 0 : index
    %10 = vector.load %arg6[%c0_6, %c0_7] : memref<8x128xf32, #tpu.memory_space<vmem>>, vector<8x128xf32>
    %11 = arith.truncf %10 : vector<8x128xf32> to vector<8x128xbf16>
    %cst = arith.constant dense<0.000000e+00> : vector<8x512xf32>
    %12 = tpu.matmul %11, %5, %cst {dimension_numbers = #tpu.dot_dimension_numbers<[1], [0], [0], [1], [0, 0, 1, 1], [], []>} : vector<8x128xbf16>, vector<128x512xbf16>, vector<8x512xf32> -> vector<8x512xf32>
    %13 = arith.addf %9, %12 : vector<8x512xf32>
    %c0_8 = arith.constant 0 : index
    %c0_9 = arith.constant 0 : index
    %14 = vector.load %arg7[%c0_8, %c0_9] : memref<8x128xf32, #tpu.memory_space<vmem>>, vector<8x128xf32>
    %15 = vector.extract_strided_slice %13 {offsets = [0, 0], sizes = [8, 384], strides = [1, 1]} : vector<8x512xf32> to vector<8x384xf32>
    %16 = arith.negf %15 : vector<8x384xf32>
    %17 = math.exp %16 : vector<8x384xf32>
    %cst_10 = arith.constant 1.000000e+00 : f32
    %18 = vector.broadcast %cst_10 : f32 to vector<8x384xf32>
    %19 = arith.addf %18, %17 : vector<8x384xf32>
    %20 = arith.divf %18, %19 : vector<8x384xf32>
    %21 = vector.extract_strided_slice %13 {offsets = [0, 384], sizes = [8, 128], strides = [1, 1]} : vector<8x512xf32> to vector<8x128xf32>
    %22 = math.tanh %21 : vector<8x128xf32>
    %23 = vector.extract_strided_slice %20 {offsets = [0, 0], sizes = [8, 128], strides = [1, 1]} : vector<8x384xf32> to vector<8x128xf32>
    %24 = vector.extract_strided_slice %20 {offsets = [0, 128], sizes = [8, 128], strides = [1, 1]} : vector<8x384xf32> to vector<8x128xf32>
    %25 = vector.extract_strided_slice %20 {offsets = [0, 256], sizes = [8, 128], strides = [1, 1]} : vector<8x384xf32> to vector<8x128xf32>
    %26 = arith.mulf %24, %14 : vector<8x128xf32>
    %27 = arith.mulf %23, %22 : vector<8x128xf32>
    %28 = arith.addf %26, %27 : vector<8x128xf32>
    %29 = math.tanh %28 : vector<8x128xf32>
    %30 = arith.mulf %25, %29 : vector<8x128xf32>
    %c0_11 = arith.constant 0 : index
    %c0_12 = arith.constant 0 : index
    %31 = vector.load %arg6[%c0_11, %c0_12] : memref<8x128xf32, #tpu.memory_space<vmem>>, vector<8x128xf32>
    tpu.vector_store %arg6[%c0_11, %c0_12], %30 {strides = array<i32>} : memref<8x128xf32, #tpu.memory_space<vmem>>, vector<8x128xf32>,
    %c0_13 = arith.constant 0 : index
    %c0_14 = arith.constant 0 : index
    %32 = vector.load %arg7[%c0_13, %c0_14] : memref<8x128xf32, #tpu.memory_space<vmem>>, vector<8x128xf32>
    tpu.vector_store %arg7[%c0_13, %c0_14], %28 {strides = array<i32>} : memref<8x128xf32, #tpu.memory_space<vmem>>, vector<8x128xf32>,
    %33 = arith.truncf %30 : vector<8x128xf32> to vector<8x128xbf16>
    %34 = arith.index_cast %c0_i32_1 : i32 to index
    %c0_15 = arith.constant 0 : index
    %c0_16 = arith.constant 0 : index
    %35 = vector.load %arg4[%34, %c0_15, %c0_16] : memref<8x8x128xbf16, #tpu.memory_space<vmem>>, vector<1x8x128xbf16>
    %36 = vector.shape_cast %35 : vector<1x8x128xbf16> to vector<8x128xbf16>
    %37 = vector.shape_cast %33 : vector<8x128xbf16> to vector<1x8x128xbf16>
    tpu.vector_store %arg4[%34, %c0_15, %c0_16], %37 {strides = array<i32>} : memref<8x8x128xbf16, #tpu.memory_space<vmem>>, vector<1x8x128xbf16>,
    %c1 = arith.constant 1 : index
    %c0_17 = arith.constant 0 : index
    %c0_18 = arith.constant 0 : index
    %38 = vector.load %arg10[%c1, %c0_17, %c0_18] : memref<2x128x512xbf16, #tpu.memory_space<vmem>>, vector<1x128x512xbf16>
    %39 = vector.shape_cast %38 : vector<1x128x512xbf16> to vector<128x512xbf16>
    %40 = arith.index_cast %3 : i32 to index
    %c0_19 = arith.constant 0 : index
    %c0_20 = arith.constant 0 : index
    %41 = vector.load %arg2[%40, %c0_19, %c0_20] : memref<8x8x512xbf16, #tpu.memory_space<vmem>>, vector<1x8x512xbf16>
    %42 = vector.shape_cast %41 : vector<1x8x512xbf16> to vector<8x512xbf16>
    %43 = arith.extf %42 : vector<8x512xbf16> to vector<8x512xf32>
    %c0_21 = arith.constant 0 : index
    %c0_22 = arith.constant 0 : index
    %44 = vector.load %arg8[%c0_21, %c0_22] : memref<8x128xf32, #tpu.memory_space<vmem>>, vector<8x128xf32>
    %45 = arith.truncf %44 : vector<8x128xf32> to vector<8x128xbf16>
    %cst_23 = arith.constant dense<0.000000e+00> : vector<8x512xf32>
    %46 = tpu.matmul %45, %39, %cst_23 {dimension_numbers = #tpu.dot_dimension_numbers<[1], [0], [0], [1], [0, 0, 1, 1], [], []>} : vector<8x128xbf16>, vector<128x512xbf16>, vector<8x512xf32> -> vector<8x512xf32>
    %47 = arith.addf %43, %46 : vector<8x512xf32>
    %c0_24 = arith.constant 0 : index
    %c0_25 = arith.constant 0 : index
    %48 = vector.load %arg9[%c0_24, %c0_25] : memref<8x128xf32, #tpu.memory_space<vmem>>, vector<8x128xf32>
    %49 = vector.extract_strided_slice %47 {offsets = [0, 0], sizes = [8, 384], strides = [1, 1]} : vector<8x512xf32> to vector<8x384xf32>
    %50 = arith.negf %49 : vector<8x384xf32>
    %51 = math.exp %50 : vector<8x384xf32>
    %cst_26 = arith.constant 1.000000e+00 : f32
    %52 = vector.broadcast %cst_26 : f32 to vector<8x384xf32>
    %53 = arith.addf %52, %51 : vector<8x384xf32>
    %54 = arith.divf %52, %53 : vector<8x384xf32>
    %55 = vector.extract_strided_slice %47 {offsets = [0, 384], sizes = [8, 128], strides = [1, 1]} : vector<8x512xf32> to vector<8x128xf32>
    %56 = math.tanh %55 : vector<8x128xf32>
    %57 = vector.extract_strided_slice %54 {offsets = [0, 0], sizes = [8, 128], strides = [1, 1]} : vector<8x384xf32> to vector<8x128xf32>
    %58 = vector.extract_strided_slice %54 {offsets = [0, 128], sizes = [8, 128], strides = [1, 1]} : vector<8x384xf32> to vector<8x128xf32>
    %59 = vector.extract_strided_slice %54 {offsets = [0, 256], sizes = [8, 128], strides = [1, 1]} : vector<8x384xf32> to vector<8x128xf32>
    %60 = arith.mulf %58, %48 : vector<8x128xf32>
    %61 = arith.mulf %57, %56 : vector<8x128xf32>
    %62 = arith.addf %60, %61 : vector<8x128xf32>
    %63 = math.tanh %62 : vector<8x128xf32>
    %64 = arith.mulf %59, %63 : vector<8x128xf32>
    %c0_27 = arith.constant 0 : index
    %c0_28 = arith.constant 0 : index
    %65 = vector.load %arg8[%c0_27, %c0_28] : memref<8x128xf32, #tpu.memory_space<vmem>>, vector<8x128xf32>
    tpu.vector_store %arg8[%c0_27, %c0_28], %64 {strides = array<i32>} : memref<8x128xf32, #tpu.memory_space<vmem>>, vector<8x128xf32>,
    %c0_29 = arith.constant 0 : index
    %c0_30 = arith.constant 0 : index
    %66 = vector.load %arg9[%c0_29, %c0_30] : memref<8x128xf32, #tpu.memory_space<vmem>>, vector<8x128xf32>
    tpu.vector_store %arg9[%c0_29, %c0_30], %62 {strides = array<i32>} : memref<8x128xf32, #tpu.memory_space<vmem>>, vector<8x128xf32>,
    %67 = arith.truncf %64 : vector<8x128xf32> to vector<8x128xbf16>
    %68 = arith.index_cast %3 : i32 to index
    %c0_31 = arith.constant 0 : index
    %c0_32 = arith.constant 0 : index
    %69 = vector.load %arg5[%68, %c0_31, %c0_32] : memref<8x8x128xbf16, #tpu.memory_space<vmem>>, vector<1x8x128xbf16>
    %70 = vector.shape_cast %69 : vector<1x8x128xbf16> to vector<8x128xbf16>
    %71 = vector.shape_cast %67 : vector<8x128xbf16> to vector<1x8x128xbf16>
    tpu.vector_store %arg5[%68, %c0_31, %c0_32], %71 {strides = array<i32>} : memref<8x8x128xbf16, #tpu.memory_space<vmem>>, vector<1x8x128xbf16>,
    %c1_i32 = arith.constant 1 : i32
    %c7_i32_33 = arith.constant 7 : i32
    %72 = arith.subi %c7_i32_33, %c1_i32 : i32
    %c0_34 = arith.constant 0 : index
    %c0_35 = arith.constant 0 : index
    %c0_36 = arith.constant 0 : index
    %73 = vector.load %arg10[%c0_34, %c0_35, %c0_36] : memref<2x128x512xbf16, #tpu.memory_space<vmem>>, vector<1x128x512xbf16>
    %74 = vector.shape_cast %73 : vector<1x128x512xbf16> to vector<128x512xbf16>
    %75 = arith.index_cast %c1_i32 : i32 to index
    %c0_37 = arith.constant 0 : index
    %c0_38 = arith.constant 0 : index
    %76 = vector.load %arg1[%75, %c0_37, %c0_38] : memref<8x8x512xbf16, #tpu.memory_space<vmem>>, vector<1x8x512xbf16>
    %77 = vector.shape_cast %76 : vector<1x8x512xbf16> to vector<8x512xbf16>
    %78 = arith.extf %77 : vector<8x512xbf16> to vector<8x512xf32>
    %c0_39 = arith.constant 0 : index
    %c0_40 = arith.constant 0 : index
    %79 = vector.load %arg6[%c0_39, %c0_40] : memref<8x128xf32, #tpu.memory_space<vmem>>, vector<8x128xf32>
    %80 = arith.truncf %79 : vector<8x128xf32> to vector<8x128xbf16>
    %cst_41 = arith.constant dense<0.000000e+00> : vector<8x512xf32>
    %81 = tpu.matmul %80, %74, %cst_41 {dimension_numbers = #tpu.dot_dimension_numbers<[1], [0], [0], [1], [0, 0, 1, 1], [], []>} : vector<8x128xbf16>, vector<128x512xbf16>, vector<8x512xf32> -> vector<8x512xf32>
    %82 = arith.addf %78, %81 : vector<8x512xf32>
    %c0_42 = arith.constant 0 : index
    %c0_43 = arith.constant 0 : index
    %83 = vector.load %arg7[%c0_42, %c0_43] : memref<8x128xf32, #tpu.memory_space<vmem>>, vector<8x128xf32>
    %84 = vector.extract_strided_slice %82 {offsets = [0, 0], sizes = [8, 384], strides = [1, 1]} : vector<8x512xf32> to vector<8x384xf32>
    %85 = arith.negf %84 : vector<8x384xf32>
    %86 = math.exp %85 : vector<8x384xf32>
    %cst_44 = arith.constant 1.000000e+00 : f32
    %87 = vector.broadcast %cst_44 : f32 to vector<8x384xf32>
    %88 = arith.addf %87, %86 : vector<8x384xf32>
    %89 = arith.divf %87, %88 : vector<8x384xf32>
    %90 = vector.extract_strided_slice %82 {offsets = [0, 384], sizes = [8, 128], strides = [1, 1]} : vector<8x512xf32> to vector<8x128xf32>
    %91 = math.tanh %90 : vector<8x128xf32>
    %92 = vector.extract_strided_slice %89 {offsets = [0, 0], sizes = [8, 128], strides = [1, 1]} : vector<8x384xf32> to vector<8x128xf32>
    %93 = vector.extract_strided_slice %89 {offsets = [0, 128], sizes = [8, 128], strides = [1, 1]} : vector<8x384xf32> to vector<8x128xf32>
    %94 = vector.extract_strided_slice %89 {offsets = [0, 256], sizes = [8, 128], strides = [1, 1]} : vector<8x384xf32> to vector<8x128xf32>
    %95 = arith.mulf %93, %83 : vector<8x128xf32>
    %96 = arith.mulf %92, %91 : vector<8x128xf32>
    %97 = arith.addf %95, %96 : vector<8x128xf32>
    %98 = math.tanh %97 : vector<8x128xf32>
    %99 = arith.mulf %94, %98 : vector<8x128xf32>
    %c0_45 = arith.constant 0 : index
    %c0_46 = arith.constant 0 : index
    %100 = vector.load %arg6[%c0_45, %c0_46] : memref<8x128xf32, #tpu.memory_space<vmem>>, vector<8x128xf32>
    tpu.vector_store %arg6[%c0_45, %c0_46], %99 {strides = array<i32>} : memref<8x128xf32, #tpu.memory_space<vmem>>, vector<8x128xf32>,
    %c0_47 = arith.constant 0 : index
    %c0_48 = arith.constant 0 : index
    %101 = vector.load %arg7[%c0_47, %c0_48] : memref<8x128xf32, #tpu.memory_space<vmem>>, vector<8x128xf32>
    tpu.vector_store %arg7[%c0_47, %c0_48], %97 {strides = array<i32>} : memref<8x128xf32, #tpu.memory_space<vmem>>, vector<8x128xf32>,
    %102 = arith.truncf %99 : vector<8x128xf32> to vector<8x128xbf16>
    %103 = arith.index_cast %c1_i32 : i32 to index
    %c0_49 = arith.constant 0 : index
    %c0_50 = arith.constant 0 : index
    %104 = vector.load %arg4[%103, %c0_49, %c0_50] : memref<8x8x128xbf16, #tpu.memory_space<vmem>>, vector<1x8x128xbf16>
    %105 = vector.shape_cast %104 : vector<1x8x128xbf16> to vector<8x128xbf16>
    %106 = vector.shape_cast %102 : vector<8x128xbf16> to vector<1x8x128xbf16>
    tpu.vector_store %arg4[%103, %c0_49, %c0_50], %106 {strides = array<i32>} : memref<8x8x128xbf16, #tpu.memory_space<vmem>>, vector<1x8x128xbf16>,
    %c1_51 = arith.constant 1 : index
    %c0_52 = arith.constant 0 : index
    %c0_53 = arith.constant 0 : index
    %107 = vector.load %arg10[%c1_51, %c0_52, %c0_53] : memref<2x128x512xbf16, #tpu.memory_space<vmem>>, vector<1x128x512xbf16>
    %108 = vector.shape_cast %107 : vector<1x128x512xbf16> to vector<128x512xbf16>
    %109 = arith.index_cast %72 : i32 to index
    %c0_54 = arith.constant 0 : index
    %c0_55 = arith.constant 0 : index
    %110 = vector.load %arg2[%109, %c0_54, %c0_55] : memref<8x8x512xbf16, #tpu.memory_space<vmem>>, vector<1x8x512xbf16>
    %111 = vector.shape_cast %110 : vector<1x8x512xbf16> to vector<8x512xbf16>
    %112 = arith.extf %111 : vector<8x512xbf16> to vector<8x512xf32>
    %c0_56 = arith.constant 0 : index
    %c0_57 = arith.constant 0 : index
    %113 = vector.load %arg8[%c0_56, %c0_57] : memref<8x128xf32, #tpu.memory_space<vmem>>, vector<8x128xf32>
    %114 = arith.truncf %113 : vector<8x128xf32> to vector<8x128xbf16>
    %cst_58 = arith.constant dense<0.000000e+00> : vector<8x512xf32>
    %115 = tpu.matmul %114, %108, %cst_58 {dimension_numbers = #tpu.dot_dimension_numbers<[1], [0], [0], [1], [0, 0, 1, 1], [], []>} : vector<8x128xbf16>, vector<128x512xbf16>, vector<8x512xf32> -> vector<8x512xf32>
    %116 = arith.addf %112, %115 : vector<8x512xf32>
    %c0_59 = arith.constant 0 : index
    %c0_60 = arith.constant 0 : index
    %117 = vector.load %arg9[%c0_59, %c0_60] : memref<8x128xf32, #tpu.memory_space<vmem>>, vector<8x128xf32>
    %118 = vector.extract_strided_slice %116 {offsets = [0, 0], sizes = [8, 384], strides = [1, 1]} : vector<8x512xf32> to vector<8x384xf32>
    %119 = arith.negf %118 : vector<8x384xf32>
    %120 = math.exp %119 : vector<8x384xf32>
    %cst_61 = arith.constant 1.000000e+00 : f32
    %121 = vector.broadcast %cst_61 : f32 to vector<8x384xf32>
    %122 = arith.addf %121, %120 : vector<8x384xf32>
    %123 = arith.divf %121, %122 : vector<8x384xf32>
    %124 = vector.extract_strided_slice %116 {offsets = [0, 384], sizes = [8, 128], strides = [1, 1]} : vector<8x512xf32> to vector<8x128xf32>
    %125 = math.tanh %124 : vector<8x128xf32>
    %126 = vector.extract_strided_slice %123 {offsets = [0, 0], sizes = [8, 128], strides = [1, 1]} : vector<8x384xf32> to vector<8x128xf32>
    %127 = vector.extract_strided_slice %123 {offsets = [0, 128], sizes = [8, 128], strides = [1, 1]} : vector<8x384xf32> to vector<8x128xf32>
    %128 = vector.extract_strided_slice %123 {offsets = [0, 256], sizes = [8, 128], strides = [1, 1]} : vector<8x384xf32> to vector<8x128xf32>
    %129 = arith.mulf %127, %117 : vector<8x128xf32>
    %130 = arith.mulf %126, %125 : vector<8x128xf32>
    %131 = arith.addf %129, %130 : vector<8x128xf32>
    %132 = math.tanh %131 : vector<8x128xf32>
    %133 = arith.mulf %128, %132 : vector<8x128xf32>
    %c0_62 = arith.constant 0 : index
    %c0_63 = arith.constant 0 : index
    %134 = vector.load %arg8[%c0_62, %c0_63] : memref<8x128xf32, #tpu.memory_space<vmem>>, vector<8x128xf32>
    tpu.vector_store %arg8[%c0_62, %c0_63], %133 {strides = array<i32>} : memref<8x128xf32, #tpu.memory_space<vmem>>, vector<8x128xf32>,
    %c0_64 = arith.constant 0 : index
    %c0_65 = arith.constant 0 : index
    %135 = vector.load %arg9[%c0_64, %c0_65] : memref<8x128xf32, #tpu.memory_space<vmem>>, vector<8x128xf32>
    tpu.vector_store %arg9[%c0_64, %c0_65], %131 {strides = array<i32>} : memref<8x128xf32, #tpu.memory_space<vmem>>, vector<8x128xf32>,
    %136 = arith.truncf %133 : vector<8x128xf32> to vector<8x128xbf16>
    %137 = arith.index_cast %72 : i32 to index
    %c0_66 = arith.constant 0 : index
    %c0_67 = arith.constant 0 : index
    %138 = vector.load %arg5[%137, %c0_66, %c0_67] : memref<8x8x128xbf16, #tpu.memory_space<vmem>>, vector<1x8x128xbf16>
    %139 = vector.shape_cast %138 : vector<1x8x128xbf16> to vector<8x128xbf16>
    %140 = vector.shape_cast %136 : vector<8x128xbf16> to vector<1x8x128xbf16>
    tpu.vector_store %arg5[%137, %c0_66, %c0_67], %140 {strides = array<i32>} : memref<8x8x128xbf16, #tpu.memory_space<vmem>>, vector<1x8x128xbf16>,
    %c2_i32 = arith.constant 2 : i32
    %c7_i32_68 = arith.constant 7 : i32
    %141 = arith.subi %c7_i32_68, %c2_i32 : i32
    %c0_69 = arith.constant 0 : index
    %c0_70 = arith.constant 0 : index
    %c0_71 = arith.constant 0 : index
    %142 = vector.load %arg10[%c0_69, %c0_70, %c0_71] : memref<2x128x512xbf16, #tpu.memory_space<vmem>>, vector<1x128x512xbf16>
    %143 = vector.shape_cast %142 : vector<1x128x512xbf16> to vector<128x512xbf16>
    %144 = arith.index_cast %c2_i32 : i32 to index
    %c0_72 = arith.constant 0 : index
    %c0_73 = arith.constant 0 : index
    %145 = vector.load %arg1[%144, %c0_72, %c0_73] : memref<8x8x512xbf16, #tpu.memory_space<vmem>>, vector<1x8x512xbf16>
    %146 = vector.shape_cast %145 : vector<1x8x512xbf16> to vector<8x512xbf16>
    %147 = arith.extf %146 : vector<8x512xbf16> to vector<8x512xf32>
    %c0_74 = arith.constant 0 : index
    %c0_75 = arith.constant 0 : index
    %148 = vector.load %arg6[%c0_74, %c0_75] : memref<8x128xf32, #tpu.memory_space<vmem>>, vector<8x128xf32>
    %149 = arith.truncf %148 : vector<8x128xf32> to vector<8x128xbf16>
    %cst_76 = arith.constant dense<0.000000e+00> : vector<8x512xf32>
    %150 = tpu.matmul %149, %143, %cst_76 {dimension_numbers = #tpu.dot_dimension_numbers<[1], [0], [0], [1], [0, 0, 1, 1], [], []>} : vector<8x128xbf16>, vector<128x512xbf16>, vector<8x512xf32> -> vector<8x512xf32>
    %151 = arith.addf %147, %150 : vector<8x512xf32>
    %c0_77 = arith.constant 0 : index
    %c0_78 = arith.constant 0 : index
    %152 = vector.load %arg7[%c0_77, %c0_78] : memref<8x128xf32, #tpu.memory_space<vmem>>, vector<8x128xf32>
    %153 = vector.extract_strided_slice %151 {offsets = [0, 0], sizes = [8, 384], strides = [1, 1]} : vector<8x512xf32> to vector<8x384xf32>
    %154 = arith.negf %153 : vector<8x384xf32>
    %155 = math.exp %154 : vector<8x384xf32>
    %cst_79 = arith.constant 1.000000e+00 : f32
    %156 = vector.broadcast %cst_79 : f32 to vector<8x384xf32>
    %157 = arith.addf %156, %155 : vector<8x384xf32>
    %158 = arith.divf %156, %157 : vector<8x384xf32>
    %159 = vector.extract_strided_slice %151 {offsets = [0, 384], sizes = [8, 128], strides = [1, 1]} : vector<8x512xf32> to vector<8x128xf32>
    %160 = math.tanh %159 : vector<8x128xf32>
    %161 = vector.extract_strided_slice %158 {offsets = [0, 0], sizes = [8, 128], strides = [1, 1]} : vector<8x384xf32> to vector<8x128xf32>
    %162 = vector.extract_strided_slice %158 {offsets = [0, 128], sizes = [8, 128], strides = [1, 1]} : vector<8x384xf32> to vector<8x128xf32>
    %163 = vector.extract_strided_slice %158 {offsets = [0, 256], sizes = [8, 128], strides = [1, 1]} : vector<8x384xf32> to vector<8x128xf32>
    %164 = arith.mulf %162, %152 : vector<8x128xf32>
    %165 = arith.mulf %161, %160 : vector<8x128xf32>
    %166 = arith.addf %164, %165 : vector<8x128xf32>
    %167 = math.tanh %166 : vector<8x128xf32>
    %168 = arith.mulf %163, %167 : vector<8x128xf32>
    %c0_80 = arith.constant 0 : index
    %c0_81 = arith.constant 0 : index
    %169 = vector.load %arg6[%c0_80, %c0_81] : memref<8x128xf32, #tpu.memory_space<vmem>>, vector<8x128xf32>
    tpu.vector_store %arg6[%c0_80, %c0_81], %168 {strides = array<i32>} : memref<8x128xf32, #tpu.memory_space<vmem>>, vector<8x128xf32>,
    %c0_82 = arith.constant 0 : index
    %c0_83 = arith.constant 0 : index
    %170 = vector.load %arg7[%c0_82, %c0_83] : memref<8x128xf32, #tpu.memory_space<vmem>>, vector<8x128xf32>
    tpu.vector_store %arg7[%c0_82, %c0_83], %166 {strides = array<i32>} : memref<8x128xf32, #tpu.memory_space<vmem>>, vector<8x128xf32>,
    %171 = arith.truncf %168 : vector<8x128xf32> to vector<8x128xbf16>
    %172 = arith.index_cast %c2_i32 : i32 to index
    %c0_84 = arith.constant 0 : index
    %c0_85 = arith.constant 0 : index
    %173 = vector.load %arg4[%172, %c0_84, %c0_85] : memref<8x8x128xbf16, #tpu.memory_space<vmem>>, vector<1x8x128xbf16>
    %174 = vector.shape_cast %173 : vector<1x8x128xbf16> to vector<8x128xbf16>
    %175 = vector.shape_cast %171 : vector<8x128xbf16> to vector<1x8x128xbf16>
    tpu.vector_store %arg4[%172, %c0_84, %c0_85], %175 {strides = array<i32>} : memref<8x8x128xbf16, #tpu.memory_space<vmem>>, vector<1x8x128xbf16>,
    %c1_86 = arith.constant 1 : index
    %c0_87 = arith.constant 0 : index
    %c0_88 = arith.constant 0 : index
    %176 = vector.load %arg10[%c1_86, %c0_87, %c0_88] : memref<2x128x512xbf16, #tpu.memory_space<vmem>>, vector<1x128x512xbf16>
    %177 = vector.shape_cast %176 : vector<1x128x512xbf16> to vector<128x512xbf16>
    %178 = arith.index_cast %141 : i32 to index
    %c0_89 = arith.constant 0 : index
    %c0_90 = arith.constant 0 : index
    %179 = vector.load %arg2[%178, %c0_89, %c0_90] : memref<8x8x512xbf16, #tpu.memory_space<vmem>>, vector<1x8x512xbf16>
    %180 = vector.shape_cast %179 : vector<1x8x512xbf16> to vector<8x512xbf16>
    %181 = arith.extf %180 : vector<8x512xbf16> to vector<8x512xf32>
    %c0_91 = arith.constant 0 : index
    %c0_92 = arith.constant 0 : index
    %182 = vector.load %arg8[%c0_91, %c0_92] : memref<8x128xf32, #tpu.memory_space<vmem>>, vector<8x128xf32>
    %183 = arith.truncf %182 : vector<8x128xf32> to vector<8x128xbf16>
    %cst_93 = arith.constant dense<0.000000e+00> : vector<8x512xf32>
    %184 = tpu.matmul %183, %177, %cst_93 {dimension_numbers = #tpu.dot_dimension_numbers<[1], [0], [0], [1], [0, 0, 1, 1], [], []>} : vector<8x128xbf16>, vector<128x512xbf16>, vector<8x512xf32> -> vector<8x512xf32>
    %185 = arith.addf %181, %184 : vector<8x512xf32>
    %c0_94 = arith.constant 0 : index
    %c0_95 = arith.constant 0 : index
    %186 = vector.load %arg9[%c0_94, %c0_95] : memref<8x128xf32, #tpu.memory_space<vmem>>, vector<8x128xf32>
    %187 = vector.extract_strided_slice %185 {offsets = [0, 0], sizes = [8, 384], strides = [1, 1]} : vector<8x512xf32> to vector<8x384xf32>
    %188 = arith.negf %187 : vector<8x384xf32>
    %189 = math.exp %188 : vector<8x384xf32>
    %cst_96 = arith.constant 1.000000e+00 : f32
    %190 = vector.broadcast %cst_96 : f32 to vector<8x384xf32>
    %191 = arith.addf %190, %189 : vector<8x384xf32>
    %192 = arith.divf %190, %191 : vector<8x384xf32>
    %193 = vector.extract_strided_slice %185 {offsets = [0, 384], sizes = [8, 128], strides = [1, 1]} : vector<8x512xf32> to vector<8x128xf32>
    %194 = math.tanh %193 : vector<8x128xf32>
    %195 = vector.extract_strided_slice %192 {offsets = [0, 0], sizes = [8, 128], strides = [1, 1]} : vector<8x384xf32> to vector<8x128xf32>
    %196 = vector.extract_strided_slice %192 {offsets = [0, 128], sizes = [8, 128], strides = [1, 1]} : vector<8x384xf32> to vector<8x128xf32>
    %197 = vector.extract_strided_slice %192 {offsets = [0, 256], sizes = [8, 128], strides = [1, 1]} : vector<8x384xf32> to vector<8x128xf32>
    %198 = arith.mulf %196, %186 : vector<8x128xf32>
    %199 = arith.mulf %195, %194 : vector<8x128xf32>
    %200 = arith.addf %198, %199 : vector<8x128xf32>
    %201 = math.tanh %200 : vector<8x128xf32>
    %202 = arith.mulf %197, %201 : vector<8x128xf32>
    %c0_97 = arith.constant 0 : index
    %c0_98 = arith.constant 0 : index
    %203 = vector.load %arg8[%c0_97, %c0_98] : memref<8x128xf32, #tpu.memory_space<vmem>>, vector<8x128xf32>
    tpu.vector_store %arg8[%c0_97, %c0_98], %202 {strides = array<i32>} : memref<8x128xf32, #tpu.memory_space<vmem>>, vector<8x128xf32>,
    %c0_99 = arith.constant 0 : index
    %c0_100 = arith.constant 0 : index
    %204 = vector.load %arg9[%c0_99, %c0_100] : memref<8x128xf32, #tpu.memory_space<vmem>>, vector<8x128xf32>
    tpu.vector_store %arg9[%c0_99, %c0_100], %200 {strides = array<i32>} : memref<8x128xf32, #tpu.memory_space<vmem>>, vector<8x128xf32>,
    %205 = arith.truncf %202 : vector<8x128xf32> to vector<8x128xbf16>
    %206 = arith.index_cast %141 : i32 to index
    %c0_101 = arith.constant 0 : index
    %c0_102 = arith.constant 0 : index
    %207 = vector.load %arg5[%206, %c0_101, %c0_102] : memref<8x8x128xbf16, #tpu.memory_space<vmem>>, vector<1x8x128xbf16>
    %208 = vector.shape_cast %207 : vector<1x8x128xbf16> to vector<8x128xbf16>
    %209 = vector.shape_cast %205 : vector<8x128xbf16> to vector<1x8x128xbf16>
    tpu.vector_store %arg5[%206, %c0_101, %c0_102], %209 {strides = array<i32>} : memref<8x8x128xbf16, #tpu.memory_space<vmem>>, vector<1x8x128xbf16>,
    %c3_i32 = arith.constant 3 : i32
    %c7_i32_103 = arith.constant 7 : i32
    %210 = arith.subi %c7_i32_103, %c3_i32 : i32
    %c0_104 = arith.constant 0 : index
    %c0_105 = arith.constant 0 : index
    %c0_106 = arith.constant 0 : index
    %211 = vector.load %arg10[%c0_104, %c0_105, %c0_106] : memref<2x128x512xbf16, #tpu.memory_space<vmem>>, vector<1x128x512xbf16>
    %212 = vector.shape_cast %211 : vector<1x128x512xbf16> to vector<128x512xbf16>
    %213 = arith.index_cast %c3_i32 : i32 to index
    %c0_107 = arith.constant 0 : index
    %c0_108 = arith.constant 0 : index
    %214 = vector.load %arg1[%213, %c0_107, %c0_108] : memref<8x8x512xbf16, #tpu.memory_space<vmem>>, vector<1x8x512xbf16>
    %215 = vector.shape_cast %214 : vector<1x8x512xbf16> to vector<8x512xbf16>
    %216 = arith.extf %215 : vector<8x512xbf16> to vector<8x512xf32>
    %c0_109 = arith.constant 0 : index
    %c0_110 = arith.constant 0 : index
    %217 = vector.load %arg6[%c0_109, %c0_110] : memref<8x128xf32, #tpu.memory_space<vmem>>, vector<8x128xf32>
    %218 = arith.truncf %217 : vector<8x128xf32> to vector<8x128xbf16>
    %cst_111 = arith.constant dense<0.000000e+00> : vector<8x512xf32>
    %219 = tpu.matmul %218, %212, %cst_111 {dimension_numbers = #tpu.dot_dimension_numbers<[1], [0], [0], [1], [0, 0, 1, 1], [], []>} : vector<8x128xbf16>, vector<128x512xbf16>, vector<8x512xf32> -> vector<8x512xf32>
    %220 = arith.addf %216, %219 : vector<8x512xf32>
    %c0_112 = arith.constant 0 : index
    %c0_113 = arith.constant 0 : index
    %221 = vector.load %arg7[%c0_112, %c0_113] : memref<8x128xf32, #tpu.memory_space<vmem>>, vector<8x128xf32>
    %222 = vector.extract_strided_slice %220 {offsets = [0, 0], sizes = [8, 384], strides = [1, 1]} : vector<8x512xf32> to vector<8x384xf32>
    %223 = arith.negf %222 : vector<8x384xf32>
    %224 = math.exp %223 : vector<8x384xf32>
    %cst_114 = arith.constant 1.000000e+00 : f32
    %225 = vector.broadcast %cst_114 : f32 to vector<8x384xf32>
    %226 = arith.addf %225, %224 : vector<8x384xf32>
    %227 = arith.divf %225, %226 : vector<8x384xf32>
    %228 = vector.extract_strided_slice %220 {offsets = [0, 384], sizes = [8, 128], strides = [1, 1]} : vector<8x512xf32> to vector<8x128xf32>
    %229 = math.tanh %228 : vector<8x128xf32>
    %230 = vector.extract_strided_slice %227 {offsets = [0, 0], sizes = [8, 128], strides = [1, 1]} : vector<8x384xf32> to vector<8x128xf32>
    %231 = vector.extract_strided_slice %227 {offsets = [0, 128], sizes = [8, 128], strides = [1, 1]} : vector<8x384xf32> to vector<8x128xf32>
    %232 = vector.extract_strided_slice %227 {offsets = [0, 256], sizes = [8, 128], strides = [1, 1]} : vector<8x384xf32> to vector<8x128xf32>
    %233 = arith.mulf %231, %221 : vector<8x128xf32>
    %234 = arith.mulf %230, %229 : vector<8x128xf32>
    %235 = arith.addf %233, %234 : vector<8x128xf32>
    %236 = math.tanh %235 : vector<8x128xf32>
    %237 = arith.mulf %232, %236 : vector<8x128xf32>
    %c0_115 = arith.constant 0 : index
    %c0_116 = arith.constant 0 : index
    %238 = vector.load %arg6[%c0_115, %c0_116] : memref<8x128xf32, #tpu.memory_space<vmem>>, vector<8x128xf32>
    tpu.vector_store %arg6[%c0_115, %c0_116], %237 {strides = array<i32>} : memref<8x128xf32, #tpu.memory_space<vmem>>, vector<8x128xf32>,
    %c0_117 = arith.constant 0 : index
    %c0_118 = arith.constant 0 : index
    %239 = vector.load %arg7[%c0_117, %c0_118] : memref<8x128xf32, #tpu.memory_space<vmem>>, vector<8x128xf32>
    tpu.vector_store %arg7[%c0_117, %c0_118], %235 {strides = array<i32>} : memref<8x128xf32, #tpu.memory_space<vmem>>, vector<8x128xf32>,
    %240 = arith.truncf %237 : vector<8x128xf32> to vector<8x128xbf16>
    %241 = arith.index_cast %c3_i32 : i32 to index
    %c0_119 = arith.constant 0 : index
    %c0_120 = arith.constant 0 : index
    %242 = vector.load %arg4[%241, %c0_119, %c0_120] : memref<8x8x128xbf16, #tpu.memory_space<vmem>>, vector<1x8x128xbf16>
    %243 = vector.shape_cast %242 : vector<1x8x128xbf16> to vector<8x128xbf16>
    %244 = vector.shape_cast %240 : vector<8x128xbf16> to vector<1x8x128xbf16>
    tpu.vector_store %arg4[%241, %c0_119, %c0_120], %244 {strides = array<i32>} : memref<8x8x128xbf16, #tpu.memory_space<vmem>>, vector<1x8x128xbf16>,
    %c1_121 = arith.constant 1 : index
    %c0_122 = arith.constant 0 : index
    %c0_123 = arith.constant 0 : index
    %245 = vector.load %arg10[%c1_121, %c0_122, %c0_123] : memref<2x128x512xbf16, #tpu.memory_space<vmem>>, vector<1x128x512xbf16>
    %246 = vector.shape_cast %245 : vector<1x128x512xbf16> to vector<128x512xbf16>
    %247 = arith.index_cast %210 : i32 to index
    %c0_124 = arith.constant 0 : index
    %c0_125 = arith.constant 0 : index
    %248 = vector.load %arg2[%247, %c0_124, %c0_125] : memref<8x8x512xbf16, #tpu.memory_space<vmem>>, vector<1x8x512xbf16>
    %249 = vector.shape_cast %248 : vector<1x8x512xbf16> to vector<8x512xbf16>
    %250 = arith.extf %249 : vector<8x512xbf16> to vector<8x512xf32>
    %c0_126 = arith.constant 0 : index
    %c0_127 = arith.constant 0 : index
    %251 = vector.load %arg8[%c0_126, %c0_127] : memref<8x128xf32, #tpu.memory_space<vmem>>, vector<8x128xf32>
    %252 = arith.truncf %251 : vector<8x128xf32> to vector<8x128xbf16>
    %cst_128 = arith.constant dense<0.000000e+00> : vector<8x512xf32>
    %253 = tpu.matmul %252, %246, %cst_128 {dimension_numbers = #tpu.dot_dimension_numbers<[1], [0], [0], [1], [0, 0, 1, 1], [], []>} : vector<8x128xbf16>, vector<128x512xbf16>, vector<8x512xf32> -> vector<8x512xf32>
    %254 = arith.addf %250, %253 : vector<8x512xf32>
    %c0_129 = arith.constant 0 : index
    %c0_130 = arith.constant 0 : index
    %255 = vector.load %arg9[%c0_129, %c0_130] : memref<8x128xf32, #tpu.memory_space<vmem>>, vector<8x128xf32>
    %256 = vector.extract_strided_slice %254 {offsets = [0, 0], sizes = [8, 384], strides = [1, 1]} : vector<8x512xf32> to vector<8x384xf32>
    %257 = arith.negf %256 : vector<8x384xf32>
    %258 = math.exp %257 : vector<8x384xf32>
    %cst_131 = arith.constant 1.000000e+00 : f32
    %259 = vector.broadcast %cst_131 : f32 to vector<8x384xf32>
    %260 = arith.addf %259, %258 : vector<8x384xf32>
    %261 = arith.divf %259, %260 : vector<8x384xf32>
    %262 = vector.extract_strided_slice %254 {offsets = [0, 384], sizes = [8, 128], strides = [1, 1]} : vector<8x512xf32> to vector<8x128xf32>
    %263 = math.tanh %262 : vector<8x128xf32>
    %264 = vector.extract_strided_slice %261 {offsets = [0, 0], sizes = [8, 128], strides = [1, 1]} : vector<8x384xf32> to vector<8x128xf32>
    %265 = vector.extract_strided_slice %261 {offsets = [0, 128], sizes = [8, 128], strides = [1, 1]} : vector<8x384xf32> to vector<8x128xf32>
    %266 = vector.extract_strided_slice %261 {offsets = [0, 256], sizes = [8, 128], strides = [1, 1]} : vector<8x384xf32> to vector<8x128xf32>
    %267 = arith.mulf %265, %255 : vector<8x128xf32>
    %268 = arith.mulf %264, %263 : vector<8x128xf32>
    %269 = arith.addf %267, %268 : vector<8x128xf32>
    %270 = math.tanh %269 : vector<8x128xf32>
    %271 = arith.mulf %266, %270 : vector<8x128xf32>
    %c0_132 = arith.constant 0 : index
    %c0_133 = arith.constant 0 : index
    %272 = vector.load %arg8[%c0_132, %c0_133] : memref<8x128xf32, #tpu.memory_space<vmem>>, vector<8x128xf32>
    tpu.vector_store %arg8[%c0_132, %c0_133], %271 {strides = array<i32>} : memref<8x128xf32, #tpu.memory_space<vmem>>, vector<8x128xf32>,
    %c0_134 = arith.constant 0 : index
    %c0_135 = arith.constant 0 : index
    %273 = vector.load %arg9[%c0_134, %c0_135] : memref<8x128xf32, #tpu.memory_space<vmem>>, vector<8x128xf32>
    tpu.vector_store %arg9[%c0_134, %c0_135], %269 {strides = array<i32>} : memref<8x128xf32, #tpu.memory_space<vmem>>, vector<8x128xf32>,
    %274 = arith.truncf %271 : vector<8x128xf32> to vector<8x128xbf16>
    %275 = arith.index_cast %210 : i32 to index
    %c0_136 = arith.constant 0 : index
    %c0_137 = arith.constant 0 : index
    %276 = vector.load %arg5[%275, %c0_136, %c0_137] : memref<8x8x128xbf16, #tpu.memory_space<vmem>>, vector<1x8x128xbf16>
    %277 = vector.shape_cast %276 : vector<1x8x128xbf16> to vector<8x128xbf16>
    %278 = vector.shape_cast %274 : vector<8x128xbf16> to vector<1x8x128xbf16>
    tpu.vector_store %arg5[%275, %c0_136, %c0_137], %278 {strides = array<i32>} : memref<8x8x128xbf16, #tpu.memory_space<vmem>>, vector<1x8x128xbf16>,
    %c4_i32 = arith.constant 4 : i32
    %c7_i32_138 = arith.constant 7 : i32
    %279 = arith.subi %c7_i32_138, %c4_i32 : i32
    %c0_139 = arith.constant 0 : index
    %c0_140 = arith.constant 0 : index
    %c0_141 = arith.constant 0 : index
    %280 = vector.load %arg10[%c0_139, %c0_140, %c0_141] : memref<2x128x512xbf16, #tpu.memory_space<vmem>>, vector<1x128x512xbf16>
    %281 = vector.shape_cast %280 : vector<1x128x512xbf16> to vector<128x512xbf16>
    %282 = arith.index_cast %c4_i32 : i32 to index
    %c0_142 = arith.constant 0 : index
    %c0_143 = arith.constant 0 : index
    %283 = vector.load %arg1[%282, %c0_142, %c0_143] : memref<8x8x512xbf16, #tpu.memory_space<vmem>>, vector<1x8x512xbf16>
    %284 = vector.shape_cast %283 : vector<1x8x512xbf16> to vector<8x512xbf16>
    %285 = arith.extf %284 : vector<8x512xbf16> to vector<8x512xf32>
    %c0_144 = arith.constant 0 : index
    %c0_145 = arith.constant 0 : index
    %286 = vector.load %arg6[%c0_144, %c0_145] : memref<8x128xf32, #tpu.memory_space<vmem>>, vector<8x128xf32>
    %287 = arith.truncf %286 : vector<8x128xf32> to vector<8x128xbf16>
    %cst_146 = arith.constant dense<0.000000e+00> : vector<8x512xf32>
    %288 = tpu.matmul %287, %281, %cst_146 {dimension_numbers = #tpu.dot_dimension_numbers<[1], [0], [0], [1], [0, 0, 1, 1], [], []>} : vector<8x128xbf16>, vector<128x512xbf16>, vector<8x512xf32> -> vector<8x512xf32>
    %289 = arith.addf %285, %288 : vector<8x512xf32>
    %c0_147 = arith.constant 0 : index
    %c0_148 = arith.constant 0 : index
    %290 = vector.load %arg7[%c0_147, %c0_148] : memref<8x128xf32, #tpu.memory_space<vmem>>, vector<8x128xf32>
    %291 = vector.extract_strided_slice %289 {offsets = [0, 0], sizes = [8, 384], strides = [1, 1]} : vector<8x512xf32> to vector<8x384xf32>
    %292 = arith.negf %291 : vector<8x384xf32>
    %293 = math.exp %292 : vector<8x384xf32>
    %cst_149 = arith.constant 1.000000e+00 : f32
    %294 = vector.broadcast %cst_149 : f32 to vector<8x384xf32>
    %295 = arith.addf %294, %293 : vector<8x384xf32>
    %296 = arith.divf %294, %295 : vector<8x384xf32>
    %297 = vector.extract_strided_slice %289 {offsets = [0, 384], sizes = [8, 128], strides = [1, 1]} : vector<8x512xf32> to vector<8x128xf32>
    %298 = math.tanh %297 : vector<8x128xf32>
    %299 = vector.extract_strided_slice %296 {offsets = [0, 0], sizes = [8, 128], strides = [1, 1]} : vector<8x384xf32> to vector<8x128xf32>
    %300 = vector.extract_strided_slice %296 {offsets = [0, 128], sizes = [8, 128], strides = [1, 1]} : vector<8x384xf32> to vector<8x128xf32>
    %301 = vector.extract_strided_slice %296 {offsets = [0, 256], sizes = [8, 128], strides = [1, 1]} : vector<8x384xf32> to vector<8x128xf32>
    %302 = arith.mulf %300, %290 : vector<8x128xf32>
    %303 = arith.mulf %299, %298 : vector<8x128xf32>
    %304 = arith.addf %302, %303 : vector<8x128xf32>
    %305 = math.tanh %304 : vector<8x128xf32>
    %306 = arith.mulf %301, %305 : vector<8x128xf32>
    %c0_150 = arith.constant 0 : index
    %c0_151 = arith.constant 0 : index
    %307 = vector.load %arg6[%c0_150, %c0_151] : memref<8x128xf32, #tpu.memory_space<vmem>>, vector<8x128xf32>
    tpu.vector_store %arg6[%c0_150, %c0_151], %306 {strides = array<i32>} : memref<8x128xf32, #tpu.memory_space<vmem>>, vector<8x128xf32>,
    %c0_152 = arith.constant 0 : index
    %c0_153 = arith.constant 0 : index
    %308 = vector.load %arg7[%c0_152, %c0_153] : memref<8x128xf32, #tpu.memory_space<vmem>>, vector<8x128xf32>
    tpu.vector_store %arg7[%c0_152, %c0_153], %304 {strides = array<i32>} : memref<8x128xf32, #tpu.memory_space<vmem>>, vector<8x128xf32>,
    %309 = arith.truncf %306 : vector<8x128xf32> to vector<8x128xbf16>
    %310 = arith.index_cast %c4_i32 : i32 to index
    %c0_154 = arith.constant 0 : index
    %c0_155 = arith.constant 0 : index
    %311 = vector.load %arg4[%310, %c0_154, %c0_155] : memref<8x8x128xbf16, #tpu.memory_space<vmem>>, vector<1x8x128xbf16>
    %312 = vector.shape_cast %311 : vector<1x8x128xbf16> to vector<8x128xbf16>
    %313 = vector.shape_cast %309 : vector<8x128xbf16> to vector<1x8x128xbf16>
    tpu.vector_store %arg4[%310, %c0_154, %c0_155], %313 {strides = array<i32>} : memref<8x8x128xbf16, #tpu.memory_space<vmem>>, vector<1x8x128xbf16>,
    %c1_156 = arith.constant 1 : index
    %c0_157 = arith.constant 0 : index
    %c0_158 = arith.constant 0 : index
    %314 = vector.load %arg10[%c1_156, %c0_157, %c0_158] : memref<2x128x512xbf16, #tpu.memory_space<vmem>>, vector<1x128x512xbf16>
    %315 = vector.shape_cast %314 : vector<1x128x512xbf16> to vector<128x512xbf16>
    %316 = arith.index_cast %279 : i32 to index
    %c0_159 = arith.constant 0 : index
    %c0_160 = arith.constant 0 : index
    %317 = vector.load %arg2[%316, %c0_159, %c0_160] : memref<8x8x512xbf16, #tpu.memory_space<vmem>>, vector<1x8x512xbf16>
    %318 = vector.shape_cast %317 : vector<1x8x512xbf16> to vector<8x512xbf16>
    %319 = arith.extf %318 : vector<8x512xbf16> to vector<8x512xf32>
    %c0_161 = arith.constant 0 : index
    %c0_162 = arith.constant 0 : index
    %320 = vector.load %arg8[%c0_161, %c0_162] : memref<8x128xf32, #tpu.memory_space<vmem>>, vector<8x128xf32>
    %321 = arith.truncf %320 : vector<8x128xf32> to vector<8x128xbf16>
    %cst_163 = arith.constant dense<0.000000e+00> : vector<8x512xf32>
    %322 = tpu.matmul %321, %315, %cst_163 {dimension_numbers = #tpu.dot_dimension_numbers<[1], [0], [0], [1], [0, 0, 1, 1], [], []>} : vector<8x128xbf16>, vector<128x512xbf16>, vector<8x512xf32> -> vector<8x512xf32>
    %323 = arith.addf %319, %322 : vector<8x512xf32>
    %c0_164 = arith.constant 0 : index
    %c0_165 = arith.constant 0 : index
    %324 = vector.load %arg9[%c0_164, %c0_165] : memref<8x128xf32, #tpu.memory_space<vmem>>, vector<8x128xf32>
    %325 = vector.extract_strided_slice %323 {offsets = [0, 0], sizes = [8, 384], strides = [1, 1]} : vector<8x512xf32> to vector<8x384xf32>
    %326 = arith.negf %325 : vector<8x384xf32>
    %327 = math.exp %326 : vector<8x384xf32>
    %cst_166 = arith.constant 1.000000e+00 : f32
    %328 = vector.broadcast %cst_166 : f32 to vector<8x384xf32>
    %329 = arith.addf %328, %327 : vector<8x384xf32>
    %330 = arith.divf %328, %329 : vector<8x384xf32>
    %331 = vector.extract_strided_slice %323 {offsets = [0, 384], sizes = [8, 128], strides = [1, 1]} : vector<8x512xf32> to vector<8x128xf32>
    %332 = math.tanh %331 : vector<8x128xf32>
    %333 = vector.extract_strided_slice %330 {offsets = [0, 0], sizes = [8, 128], strides = [1, 1]} : vector<8x384xf32> to vector<8x128xf32>
    %334 = vector.extract_strided_slice %330 {offsets = [0, 128], sizes = [8, 128], strides = [1, 1]} : vector<8x384xf32> to vector<8x128xf32>
    %335 = vector.extract_strided_slice %330 {offsets = [0, 256], sizes = [8, 128], strides = [1, 1]} : vector<8x384xf32> to vector<8x128xf32>
    %336 = arith.mulf %334, %324 : vector<8x128xf32>
    %337 = arith.mulf %333, %332 : vector<8x128xf32>
    %338 = arith.addf %336, %337 : vector<8x128xf32>
    %339 = math.tanh %338 : vector<8x128xf32>
    %340 = arith.mulf %335, %339 : vector<8x128xf32>
    %c0_167 = arith.constant 0 : index
    %c0_168 = arith.constant 0 : index
    %341 = vector.load %arg8[%c0_167, %c0_168] : memref<8x128xf32, #tpu.memory_space<vmem>>, vector<8x128xf32>
    tpu.vector_store %arg8[%c0_167, %c0_168], %340 {strides = array<i32>} : memref<8x128xf32, #tpu.memory_space<vmem>>, vector<8x128xf32>,
    %c0_169 = arith.constant 0 : index
    %c0_170 = arith.constant 0 : index
    %342 = vector.load %arg9[%c0_169, %c0_170] : memref<8x128xf32, #tpu.memory_space<vmem>>, vector<8x128xf32>
    tpu.vector_store %arg9[%c0_169, %c0_170], %338 {strides = array<i32>} : memref<8x128xf32, #tpu.memory_space<vmem>>, vector<8x128xf32>,
    %343 = arith.truncf %340 : vector<8x128xf32> to vector<8x128xbf16>
    %344 = arith.index_cast %279 : i32 to index
    %c0_171 = arith.constant 0 : index
    %c0_172 = arith.constant 0 : index
    %345 = vector.load %arg5[%344, %c0_171, %c0_172] : memref<8x8x128xbf16, #tpu.memory_space<vmem>>, vector<1x8x128xbf16>
    %346 = vector.shape_cast %345 : vector<1x8x128xbf16> to vector<8x128xbf16>
    %347 = vector.shape_cast %343 : vector<8x128xbf16> to vector<1x8x128xbf16>
    tpu.vector_store %arg5[%344, %c0_171, %c0_172], %347 {strides = array<i32>} : memref<8x8x128xbf16, #tpu.memory_space<vmem>>, vector<1x8x128xbf16>,
    %c5_i32 = arith.constant 5 : i32
    %c7_i32_173 = arith.constant 7 : i32
    %348 = arith.subi %c7_i32_173, %c5_i32 : i32
    %c0_174 = arith.constant 0 : index
    %c0_175 = arith.constant 0 : index
    %c0_176 = arith.constant 0 : index
    %349 = vector.load %arg10[%c0_174, %c0_175, %c0_176] : memref<2x128x512xbf16, #tpu.memory_space<vmem>>, vector<1x128x512xbf16>
    %350 = vector.shape_cast %349 : vector<1x128x512xbf16> to vector<128x512xbf16>
    %351 = arith.index_cast %c5_i32 : i32 to index
    %c0_177 = arith.constant 0 : index
    %c0_178 = arith.constant 0 : index
    %352 = vector.load %arg1[%351, %c0_177, %c0_178] : memref<8x8x512xbf16, #tpu.memory_space<vmem>>, vector<1x8x512xbf16>
    %353 = vector.shape_cast %352 : vector<1x8x512xbf16> to vector<8x512xbf16>
    %354 = arith.extf %353 : vector<8x512xbf16> to vector<8x512xf32>
    %c0_179 = arith.constant 0 : index
    %c0_180 = arith.constant 0 : index
    %355 = vector.load %arg6[%c0_179, %c0_180] : memref<8x128xf32, #tpu.memory_space<vmem>>, vector<8x128xf32>
    %356 = arith.truncf %355 : vector<8x128xf32> to vector<8x128xbf16>
    %cst_181 = arith.constant dense<0.000000e+00> : vector<8x512xf32>
    %357 = tpu.matmul %356, %350, %cst_181 {dimension_numbers = #tpu.dot_dimension_numbers<[1], [0], [0], [1], [0, 0, 1, 1], [], []>} : vector<8x128xbf16>, vector<128x512xbf16>, vector<8x512xf32> -> vector<8x512xf32>
    %358 = arith.addf %354, %357 : vector<8x512xf32>
    %c0_182 = arith.constant 0 : index
    %c0_183 = arith.constant 0 : index
    %359 = vector.load %arg7[%c0_182, %c0_183] : memref<8x128xf32, #tpu.memory_space<vmem>>, vector<8x128xf32>
    %360 = vector.extract_strided_slice %358 {offsets = [0, 0], sizes = [8, 384], strides = [1, 1]} : vector<8x512xf32> to vector<8x384xf32>
    %361 = arith.negf %360 : vector<8x384xf32>
    %362 = math.exp %361 : vector<8x384xf32>
    %cst_184 = arith.constant 1.000000e+00 : f32
    %363 = vector.broadcast %cst_184 : f32 to vector<8x384xf32>
    %364 = arith.addf %363, %362 : vector<8x384xf32>
    %365 = arith.divf %363, %364 : vector<8x384xf32>
    %366 = vector.extract_strided_slice %358 {offsets = [0, 384], sizes = [8, 128], strides = [1, 1]} : vector<8x512xf32> to vector<8x128xf32>
    %367 = math.tanh %366 : vector<8x128xf32>
    %368 = vector.extract_strided_slice %365 {offsets = [0, 0], sizes = [8, 128], strides = [1, 1]} : vector<8x384xf32> to vector<8x128xf32>
    %369 = vector.extract_strided_slice %365 {offsets = [0, 128], sizes = [8, 128], strides = [1, 1]} : vector<8x384xf32> to vector<8x128xf32>
    %370 = vector.extract_strided_slice %365 {offsets = [0, 256], sizes = [8, 128], strides = [1, 1]} : vector<8x384xf32> to vector<8x128xf32>
    %371 = arith.mulf %369, %359 : vector<8x128xf32>
    %372 = arith.mulf %368, %367 : vector<8x128xf32>
    %373 = arith.addf %371, %372 : vector<8x128xf32>
    %374 = math.tanh %373 : vector<8x128xf32>
    %375 = arith.mulf %370, %374 : vector<8x128xf32>
    %c0_185 = arith.constant 0 : index
    %c0_186 = arith.constant 0 : index
    %376 = vector.load %arg6[%c0_185, %c0_186] : memref<8x128xf32, #tpu.memory_space<vmem>>, vector<8x128xf32>
    tpu.vector_store %arg6[%c0_185, %c0_186], %375 {strides = array<i32>} : memref<8x128xf32, #tpu.memory_space<vmem>>, vector<8x128xf32>,
    %c0_187 = arith.constant 0 : index
    %c0_188 = arith.constant 0 : index
    %377 = vector.load %arg7[%c0_187, %c0_188] : memref<8x128xf32, #tpu.memory_space<vmem>>, vector<8x128xf32>
    tpu.vector_store %arg7[%c0_187, %c0_188], %373 {strides = array<i32>} : memref<8x128xf32, #tpu.memory_space<vmem>>, vector<8x128xf32>,
    %378 = arith.truncf %375 : vector<8x128xf32> to vector<8x128xbf16>
    %379 = arith.index_cast %c5_i32 : i32 to index
    %c0_189 = arith.constant 0 : index
    %c0_190 = arith.constant 0 : index
    %380 = vector.load %arg4[%379, %c0_189, %c0_190] : memref<8x8x128xbf16, #tpu.memory_space<vmem>>, vector<1x8x128xbf16>
    %381 = vector.shape_cast %380 : vector<1x8x128xbf16> to vector<8x128xbf16>
    %382 = vector.shape_cast %378 : vector<8x128xbf16> to vector<1x8x128xbf16>
    tpu.vector_store %arg4[%379, %c0_189, %c0_190], %382 {strides = array<i32>} : memref<8x8x128xbf16, #tpu.memory_space<vmem>>, vector<1x8x128xbf16>,
    %c1_191 = arith.constant 1 : index
    %c0_192 = arith.constant 0 : index
    %c0_193 = arith.constant 0 : index
    %383 = vector.load %arg10[%c1_191, %c0_192, %c0_193] : memref<2x128x512xbf16, #tpu.memory_space<vmem>>, vector<1x128x512xbf16>
    %384 = vector.shape_cast %383 : vector<1x128x512xbf16> to vector<128x512xbf16>
    %385 = arith.index_cast %348 : i32 to index
    %c0_194 = arith.constant 0 : index
    %c0_195 = arith.constant 0 : index
    %386 = vector.load %arg2[%385, %c0_194, %c0_195] : memref<8x8x512xbf16, #tpu.memory_space<vmem>>, vector<1x8x512xbf16>
    %387 = vector.shape_cast %386 : vector<1x8x512xbf16> to vector<8x512xbf16>
    %388 = arith.extf %387 : vector<8x512xbf16> to vector<8x512xf32>
    %c0_196 = arith.constant 0 : index
    %c0_197 = arith.constant 0 : index
    %389 = vector.load %arg8[%c0_196, %c0_197] : memref<8x128xf32, #tpu.memory_space<vmem>>, vector<8x128xf32>
    %390 = arith.truncf %389 : vector<8x128xf32> to vector<8x128xbf16>
    %cst_198 = arith.constant dense<0.000000e+00> : vector<8x512xf32>
    %391 = tpu.matmul %390, %384, %cst_198 {dimension_numbers = #tpu.dot_dimension_numbers<[1], [0], [0], [1], [0, 0, 1, 1], [], []>} : vector<8x128xbf16>, vector<128x512xbf16>, vector<8x512xf32> -> vector<8x512xf32>
    %392 = arith.addf %388, %391 : vector<8x512xf32>
    %c0_199 = arith.constant 0 : index
    %c0_200 = arith.constant 0 : index
    %393 = vector.load %arg9[%c0_199, %c0_200] : memref<8x128xf32, #tpu.memory_space<vmem>>, vector<8x128xf32>
    %394 = vector.extract_strided_slice %392 {offsets = [0, 0], sizes = [8, 384], strides = [1, 1]} : vector<8x512xf32> to vector<8x384xf32>
    %395 = arith.negf %394 : vector<8x384xf32>
    %396 = math.exp %395 : vector<8x384xf32>
    %cst_201 = arith.constant 1.000000e+00 : f32
    %397 = vector.broadcast %cst_201 : f32 to vector<8x384xf32>
    %398 = arith.addf %397, %396 : vector<8x384xf32>
    %399 = arith.divf %397, %398 : vector<8x384xf32>
    %400 = vector.extract_strided_slice %392 {offsets = [0, 384], sizes = [8, 128], strides = [1, 1]} : vector<8x512xf32> to vector<8x128xf32>
    %401 = math.tanh %400 : vector<8x128xf32>
    %402 = vector.extract_strided_slice %399 {offsets = [0, 0], sizes = [8, 128], strides = [1, 1]} : vector<8x384xf32> to vector<8x128xf32>
    %403 = vector.extract_strided_slice %399 {offsets = [0, 128], sizes = [8, 128], strides = [1, 1]} : vector<8x384xf32> to vector<8x128xf32>
    %404 = vector.extract_strided_slice %399 {offsets = [0, 256], sizes = [8, 128], strides = [1, 1]} : vector<8x384xf32> to vector<8x128xf32>
    %405 = arith.mulf %403, %393 : vector<8x128xf32>
    %406 = arith.mulf %402, %401 : vector<8x128xf32>
    %407 = arith.addf %405, %406 : vector<8x128xf32>
    %408 = math.tanh %407 : vector<8x128xf32>
    %409 = arith.mulf %404, %408 : vector<8x128xf32>
    %c0_202 = arith.constant 0 : index
    %c0_203 = arith.constant 0 : index
    %410 = vector.load %arg8[%c0_202, %c0_203] : memref<8x128xf32, #tpu.memory_space<vmem>>, vector<8x128xf32>
    tpu.vector_store %arg8[%c0_202, %c0_203], %409 {strides = array<i32>} : memref<8x128xf32, #tpu.memory_space<vmem>>, vector<8x128xf32>,
    %c0_204 = arith.constant 0 : index
    %c0_205 = arith.constant 0 : index
    %411 = vector.load %arg9[%c0_204, %c0_205] : memref<8x128xf32, #tpu.memory_space<vmem>>, vector<8x128xf32>
    tpu.vector_store %arg9[%c0_204, %c0_205], %407 {strides = array<i32>} : memref<8x128xf32, #tpu.memory_space<vmem>>, vector<8x128xf32>,
    %412 = arith.truncf %409 : vector<8x128xf32> to vector<8x128xbf16>
    %413 = arith.index_cast %348 : i32 to index
    %c0_206 = arith.constant 0 : index
    %c0_207 = arith.constant 0 : index
    %414 = vector.load %arg5[%413, %c0_206, %c0_207] : memref<8x8x128xbf16, #tpu.memory_space<vmem>>, vector<1x8x128xbf16>
    %415 = vector.shape_cast %414 : vector<1x8x128xbf16> to vector<8x128xbf16>
    %416 = vector.shape_cast %412 : vector<8x128xbf16> to vector<1x8x128xbf16>
    tpu.vector_store %arg5[%413, %c0_206, %c0_207], %416 {strides = array<i32>} : memref<8x8x128xbf16, #tpu.memory_space<vmem>>, vector<1x8x128xbf16>,
    %c6_i32 = arith.constant 6 : i32
    %c7_i32_208 = arith.constant 7 : i32
    %417 = arith.subi %c7_i32_208, %c6_i32 : i32
    %c0_209 = arith.constant 0 : index
    %c0_210 = arith.constant 0 : index
    %c0_211 = arith.constant 0 : index
    %418 = vector.load %arg10[%c0_209, %c0_210, %c0_211] : memref<2x128x512xbf16, #tpu.memory_space<vmem>>, vector<1x128x512xbf16>
    %419 = vector.shape_cast %418 : vector<1x128x512xbf16> to vector<128x512xbf16>
    %420 = arith.index_cast %c6_i32 : i32 to index
    %c0_212 = arith.constant 0 : index
    %c0_213 = arith.constant 0 : index
    %421 = vector.load %arg1[%420, %c0_212, %c0_213] : memref<8x8x512xbf16, #tpu.memory_space<vmem>>, vector<1x8x512xbf16>
    %422 = vector.shape_cast %421 : vector<1x8x512xbf16> to vector<8x512xbf16>
    %423 = arith.extf %422 : vector<8x512xbf16> to vector<8x512xf32>
    %c0_214 = arith.constant 0 : index
    %c0_215 = arith.constant 0 : index
    %424 = vector.load %arg6[%c0_214, %c0_215] : memref<8x128xf32, #tpu.memory_space<vmem>>, vector<8x128xf32>
    %425 = arith.truncf %424 : vector<8x128xf32> to vector<8x128xbf16>
    %cst_216 = arith.constant dense<0.000000e+00> : vector<8x512xf32>
    %426 = tpu.matmul %425, %419, %cst_216 {dimension_numbers = #tpu.dot_dimension_numbers<[1], [0], [0], [1], [0, 0, 1, 1], [], []>} : vector<8x128xbf16>, vector<128x512xbf16>, vector<8x512xf32> -> vector<8x512xf32>
    %427 = arith.addf %423, %426 : vector<8x512xf32>
    %c0_217 = arith.constant 0 : index
    %c0_218 = arith.constant 0 : index
    %428 = vector.load %arg7[%c0_217, %c0_218] : memref<8x128xf32, #tpu.memory_space<vmem>>, vector<8x128xf32>
    %429 = vector.extract_strided_slice %427 {offsets = [0, 0], sizes = [8, 384], strides = [1, 1]} : vector<8x512xf32> to vector<8x384xf32>
    %430 = arith.negf %429 : vector<8x384xf32>
    %431 = math.exp %430 : vector<8x384xf32>
    %cst_219 = arith.constant 1.000000e+00 : f32
    %432 = vector.broadcast %cst_219 : f32 to vector<8x384xf32>
    %433 = arith.addf %432, %431 : vector<8x384xf32>
    %434 = arith.divf %432, %433 : vector<8x384xf32>
    %435 = vector.extract_strided_slice %427 {offsets = [0, 384], sizes = [8, 128], strides = [1, 1]} : vector<8x512xf32> to vector<8x128xf32>
    %436 = math.tanh %435 : vector<8x128xf32>
    %437 = vector.extract_strided_slice %434 {offsets = [0, 0], sizes = [8, 128], strides = [1, 1]} : vector<8x384xf32> to vector<8x128xf32>
    %438 = vector.extract_strided_slice %434 {offsets = [0, 128], sizes = [8, 128], strides = [1, 1]} : vector<8x384xf32> to vector<8x128xf32>
    %439 = vector.extract_strided_slice %434 {offsets = [0, 256], sizes = [8, 128], strides = [1, 1]} : vector<8x384xf32> to vector<8x128xf32>
    %440 = arith.mulf %438, %428 : vector<8x128xf32>
    %441 = arith.mulf %437, %436 : vector<8x128xf32>
    %442 = arith.addf %440, %441 : vector<8x128xf32>
    %443 = math.tanh %442 : vector<8x128xf32>
    %444 = arith.mulf %439, %443 : vector<8x128xf32>
    %c0_220 = arith.constant 0 : index
    %c0_221 = arith.constant 0 : index
    %445 = vector.load %arg6[%c0_220, %c0_221] : memref<8x128xf32, #tpu.memory_space<vmem>>, vector<8x128xf32>
    tpu.vector_store %arg6[%c0_220, %c0_221], %444 {strides = array<i32>} : memref<8x128xf32, #tpu.memory_space<vmem>>, vector<8x128xf32>,
    %c0_222 = arith.constant 0 : index
    %c0_223 = arith.constant 0 : index
    %446 = vector.load %arg7[%c0_222, %c0_223] : memref<8x128xf32, #tpu.memory_space<vmem>>, vector<8x128xf32>
    tpu.vector_store %arg7[%c0_222, %c0_223], %442 {strides = array<i32>} : memref<8x128xf32, #tpu.memory_space<vmem>>, vector<8x128xf32>,
    %447 = arith.truncf %444 : vector<8x128xf32> to vector<8x128xbf16>
    %448 = arith.index_cast %c6_i32 : i32 to index
    %c0_224 = arith.constant 0 : index
    %c0_225 = arith.constant 0 : index
    %449 = vector.load %arg4[%448, %c0_224, %c0_225] : memref<8x8x128xbf16, #tpu.memory_space<vmem>>, vector<1x8x128xbf16>
    %450 = vector.shape_cast %449 : vector<1x8x128xbf16> to vector<8x128xbf16>
    %451 = vector.shape_cast %447 : vector<8x128xbf16> to vector<1x8x128xbf16>
    tpu.vector_store %arg4[%448, %c0_224, %c0_225], %451 {strides = array<i32>} : memref<8x8x128xbf16, #tpu.memory_space<vmem>>, vector<1x8x128xbf16>,
    %c1_226 = arith.constant 1 : index
    %c0_227 = arith.constant 0 : index
    %c0_228 = arith.constant 0 : index
    %452 = vector.load %arg10[%c1_226, %c0_227, %c0_228] : memref<2x128x512xbf16, #tpu.memory_space<vmem>>, vector<1x128x512xbf16>
    %453 = vector.shape_cast %452 : vector<1x128x512xbf16> to vector<128x512xbf16>
    %454 = arith.index_cast %417 : i32 to index
    %c0_229 = arith.constant 0 : index
    %c0_230 = arith.constant 0 : index
    %455 = vector.load %arg2[%454, %c0_229, %c0_230] : memref<8x8x512xbf16, #tpu.memory_space<vmem>>, vector<1x8x512xbf16>
    %456 = vector.shape_cast %455 : vector<1x8x512xbf16> to vector<8x512xbf16>
    %457 = arith.extf %456 : vector<8x512xbf16> to vector<8x512xf32>
    %c0_231 = arith.constant 0 : index
    %c0_232 = arith.constant 0 : index
    %458 = vector.load %arg8[%c0_231, %c0_232] : memref<8x128xf32, #tpu.memory_space<vmem>>, vector<8x128xf32>
    %459 = arith.truncf %458 : vector<8x128xf32> to vector<8x128xbf16>
    %cst_233 = arith.constant dense<0.000000e+00> : vector<8x512xf32>
    %460 = tpu.matmul %459, %453, %cst_233 {dimension_numbers = #tpu.dot_dimension_numbers<[1], [0], [0], [1], [0, 0, 1, 1], [], []>} : vector<8x128xbf16>, vector<128x512xbf16>, vector<8x512xf32> -> vector<8x512xf32>
    %461 = arith.addf %457, %460 : vector<8x512xf32>
    %c0_234 = arith.constant 0 : index
    %c0_235 = arith.constant 0 : index
    %462 = vector.load %arg9[%c0_234, %c0_235] : memref<8x128xf32, #tpu.memory_space<vmem>>, vector<8x128xf32>
    %463 = vector.extract_strided_slice %461 {offsets = [0, 0], sizes = [8, 384], strides = [1, 1]} : vector<8x512xf32> to vector<8x384xf32>
    %464 = arith.negf %463 : vector<8x384xf32>
    %465 = math.exp %464 : vector<8x384xf32>
    %cst_236 = arith.constant 1.000000e+00 : f32
    %466 = vector.broadcast %cst_236 : f32 to vector<8x384xf32>
    %467 = arith.addf %466, %465 : vector<8x384xf32>
    %468 = arith.divf %466, %467 : vector<8x384xf32>
    %469 = vector.extract_strided_slice %461 {offsets = [0, 384], sizes = [8, 128], strides = [1, 1]} : vector<8x512xf32> to vector<8x128xf32>
    %470 = math.tanh %469 : vector<8x128xf32>
    %471 = vector.extract_strided_slice %468 {offsets = [0, 0], sizes = [8, 128], strides = [1, 1]} : vector<8x384xf32> to vector<8x128xf32>
    %472 = vector.extract_strided_slice %468 {offsets = [0, 128], sizes = [8, 128], strides = [1, 1]} : vector<8x384xf32> to vector<8x128xf32>
    %473 = vector.extract_strided_slice %468 {offsets = [0, 256], sizes = [8, 128], strides = [1, 1]} : vector<8x384xf32> to vector<8x128xf32>
    %474 = arith.mulf %472, %462 : vector<8x128xf32>
    %475 = arith.mulf %471, %470 : vector<8x128xf32>
    %476 = arith.addf %474, %475 : vector<8x128xf32>
    %477 = math.tanh %476 : vector<8x128xf32>
    %478 = arith.mulf %473, %477 : vector<8x128xf32>
    %c0_237 = arith.constant 0 : index
    %c0_238 = arith.constant 0 : index
    %479 = vector.load %arg8[%c0_237, %c0_238] : memref<8x128xf32, #tpu.memory_space<vmem>>, vector<8x128xf32>
    tpu.vector_store %arg8[%c0_237, %c0_238], %478 {strides = array<i32>} : memref<8x128xf32, #tpu.memory_space<vmem>>, vector<8x128xf32>,
    %c0_239 = arith.constant 0 : index
    %c0_240 = arith.constant 0 : index
    %480 = vector.load %arg9[%c0_239, %c0_240] : memref<8x128xf32, #tpu.memory_space<vmem>>, vector<8x128xf32>
    tpu.vector_store %arg9[%c0_239, %c0_240], %476 {strides = array<i32>} : memref<8x128xf32, #tpu.memory_space<vmem>>, vector<8x128xf32>,
    %481 = arith.truncf %478 : vector<8x128xf32> to vector<8x128xbf16>
    %482 = arith.index_cast %417 : i32 to index
    %c0_241 = arith.constant 0 : index
    %c0_242 = arith.constant 0 : index
    %483 = vector.load %arg5[%482, %c0_241, %c0_242] : memref<8x8x128xbf16, #tpu.memory_space<vmem>>, vector<1x8x128xbf16>
    %484 = vector.shape_cast %483 : vector<1x8x128xbf16> to vector<8x128xbf16>
    %485 = vector.shape_cast %481 : vector<8x128xbf16> to vector<1x8x128xbf16>
    tpu.vector_store %arg5[%482, %c0_241, %c0_242], %485 {strides = array<i32>} : memref<8x8x128xbf16, #tpu.memory_space<vmem>>, vector<1x8x128xbf16>,
    %c7_i32_243 = arith.constant 7 : i32
    %c7_i32_244 = arith.constant 7 : i32
    %486 = arith.subi %c7_i32_244, %c7_i32_243 : i32
    %c0_245 = arith.constant 0 : index
    %c0_246 = arith.constant 0 : index
    %c0_247 = arith.constant 0 : index
    %487 = vector.load %arg10[%c0_245, %c0_246, %c0_247] : memref<2x128x512xbf16, #tpu.memory_space<vmem>>, vector<1x128x512xbf16>
    %488 = vector.shape_cast %487 : vector<1x128x512xbf16> to vector<128x512xbf16>
    %489 = arith.index_cast %c7_i32_243 : i32 to index
    %c0_248 = arith.constant 0 : index
    %c0_249 = arith.constant 0 : index
    %490 = vector.load %arg1[%489, %c0_248, %c0_249] : memref<8x8x512xbf16, #tpu.memory_space<vmem>>, vector<1x8x512xbf16>
    %491 = vector.shape_cast %490 : vector<1x8x512xbf16> to vector<8x512xbf16>
    %492 = arith.extf %491 : vector<8x512xbf16> to vector<8x512xf32>
    %c0_250 = arith.constant 0 : index
    %c0_251 = arith.constant 0 : index
    %493 = vector.load %arg6[%c0_250, %c0_251] : memref<8x128xf32, #tpu.memory_space<vmem>>, vector<8x128xf32>
    %494 = arith.truncf %493 : vector<8x128xf32> to vector<8x128xbf16>
    %cst_252 = arith.constant dense<0.000000e+00> : vector<8x512xf32>
    %495 = tpu.matmul %494, %488, %cst_252 {dimension_numbers = #tpu.dot_dimension_numbers<[1], [0], [0], [1], [0, 0, 1, 1], [], []>} : vector<8x128xbf16>, vector<128x512xbf16>, vector<8x512xf32> -> vector<8x512xf32>
    %496 = arith.addf %492, %495 : vector<8x512xf32>
    %c0_253 = arith.constant 0 : index
    %c0_254 = arith.constant 0 : index
    %497 = vector.load %arg7[%c0_253, %c0_254] : memref<8x128xf32, #tpu.memory_space<vmem>>, vector<8x128xf32>
    %498 = vector.extract_strided_slice %496 {offsets = [0, 0], sizes = [8, 384], strides = [1, 1]} : vector<8x512xf32> to vector<8x384xf32>
    %499 = arith.negf %498 : vector<8x384xf32>
    %500 = math.exp %499 : vector<8x384xf32>
    %cst_255 = arith.constant 1.000000e+00 : f32
    %501 = vector.broadcast %cst_255 : f32 to vector<8x384xf32>
    %502 = arith.addf %501, %500 : vector<8x384xf32>
    %503 = arith.divf %501, %502 : vector<8x384xf32>
    %504 = vector.extract_strided_slice %496 {offsets = [0, 384], sizes = [8, 128], strides = [1, 1]} : vector<8x512xf32> to vector<8x128xf32>
    %505 = math.tanh %504 : vector<8x128xf32>
    %506 = vector.extract_strided_slice %503 {offsets = [0, 0], sizes = [8, 128], strides = [1, 1]} : vector<8x384xf32> to vector<8x128xf32>
    %507 = vector.extract_strided_slice %503 {offsets = [0, 128], sizes = [8, 128], strides = [1, 1]} : vector<8x384xf32> to vector<8x128xf32>
    %508 = vector.extract_strided_slice %503 {offsets = [0, 256], sizes = [8, 128], strides = [1, 1]} : vector<8x384xf32> to vector<8x128xf32>
    %509 = arith.mulf %507, %497 : vector<8x128xf32>
    %510 = arith.mulf %506, %505 : vector<8x128xf32>
    %511 = arith.addf %509, %510 : vector<8x128xf32>
    %512 = math.tanh %511 : vector<8x128xf32>
    %513 = arith.mulf %508, %512 : vector<8x128xf32>
    %c0_256 = arith.constant 0 : index
    %c0_257 = arith.constant 0 : index
    %514 = vector.load %arg6[%c0_256, %c0_257] : memref<8x128xf32, #tpu.memory_space<vmem>>, vector<8x128xf32>
    tpu.vector_store %arg6[%c0_256, %c0_257], %513 {strides = array<i32>} : memref<8x128xf32, #tpu.memory_space<vmem>>, vector<8x128xf32>,
    %c0_258 = arith.constant 0 : index
    %c0_259 = arith.constant 0 : index
    %515 = vector.load %arg7[%c0_258, %c0_259] : memref<8x128xf32, #tpu.memory_space<vmem>>, vector<8x128xf32>
    tpu.vector_store %arg7[%c0_258, %c0_259], %511 {strides = array<i32>} : memref<8x128xf32, #tpu.memory_space<vmem>>, vector<8x128xf32>,
    %516 = arith.truncf %513 : vector<8x128xf32> to vector<8x128xbf16>
    %517 = arith.index_cast %c7_i32_243 : i32 to index
    %c0_260 = arith.constant 0 : index
    %c0_261 = arith.constant 0 : index
    %518 = vector.load %arg4[%517, %c0_260, %c0_261] : memref<8x8x128xbf16, #tpu.memory_space<vmem>>, vector<1x8x128xbf16>
    %519 = vector.shape_cast %518 : vector<1x8x128xbf16> to vector<8x128xbf16>
    %520 = vector.shape_cast %516 : vector<8x128xbf16> to vector<1x8x128xbf16>
    tpu.vector_store %arg4[%517, %c0_260, %c0_261], %520 {strides = array<i32>} : memref<8x8x128xbf16, #tpu.memory_space<vmem>>, vector<1x8x128xbf16>,
    %c1_262 = arith.constant 1 : index
    %c0_263 = arith.constant 0 : index
    %c0_264 = arith.constant 0 : index
    %521 = vector.load %arg10[%c1_262, %c0_263, %c0_264] : memref<2x128x512xbf16, #tpu.memory_space<vmem>>, vector<1x128x512xbf16>
    %522 = vector.shape_cast %521 : vector<1x128x512xbf16> to vector<128x512xbf16>
    %523 = arith.index_cast %486 : i32 to index
    %c0_265 = arith.constant 0 : index
    %c0_266 = arith.constant 0 : index
    %524 = vector.load %arg2[%523, %c0_265, %c0_266] : memref<8x8x512xbf16, #tpu.memory_space<vmem>>, vector<1x8x512xbf16>
    %525 = vector.shape_cast %524 : vector<1x8x512xbf16> to vector<8x512xbf16>
    %526 = arith.extf %525 : vector<8x512xbf16> to vector<8x512xf32>
    %c0_267 = arith.constant 0 : index
    %c0_268 = arith.constant 0 : index
    %527 = vector.load %arg8[%c0_267, %c0_268] : memref<8x128xf32, #tpu.memory_space<vmem>>, vector<8x128xf32>
    %528 = arith.truncf %527 : vector<8x128xf32> to vector<8x128xbf16>
    %cst_269 = arith.constant dense<0.000000e+00> : vector<8x512xf32>
    %529 = tpu.matmul %528, %522, %cst_269 {dimension_numbers = #tpu.dot_dimension_numbers<[1], [0], [0], [1], [0, 0, 1, 1], [], []>} : vector<8x128xbf16>, vector<128x512xbf16>, vector<8x512xf32> -> vector<8x512xf32>
    %530 = arith.addf %526, %529 : vector<8x512xf32>
    %c0_270 = arith.constant 0 : index
    %c0_271 = arith.constant 0 : index
    %531 = vector.load %arg9[%c0_270, %c0_271] : memref<8x128xf32, #tpu.memory_space<vmem>>, vector<8x128xf32>
    %532 = vector.extract_strided_slice %530 {offsets = [0, 0], sizes = [8, 384], strides = [1, 1]} : vector<8x512xf32> to vector<8x384xf32>
    %533 = arith.negf %532 : vector<8x384xf32>
    %534 = math.exp %533 : vector<8x384xf32>
    %cst_272 = arith.constant 1.000000e+00 : f32
    %535 = vector.broadcast %cst_272 : f32 to vector<8x384xf32>
    %536 = arith.addf %535, %534 : vector<8x384xf32>
    %537 = arith.divf %535, %536 : vector<8x384xf32>
    %538 = vector.extract_strided_slice %530 {offsets = [0, 384], sizes = [8, 128], strides = [1, 1]} : vector<8x512xf32> to vector<8x128xf32>
    %539 = math.tanh %538 : vector<8x128xf32>
    %540 = vector.extract_strided_slice %537 {offsets = [0, 0], sizes = [8, 128], strides = [1, 1]} : vector<8x384xf32> to vector<8x128xf32>
    %541 = vector.extract_strided_slice %537 {offsets = [0, 128], sizes = [8, 128], strides = [1, 1]} : vector<8x384xf32> to vector<8x128xf32>
    %542 = vector.extract_strided_slice %537 {offsets = [0, 256], sizes = [8, 128], strides = [1, 1]} : vector<8x384xf32> to vector<8x128xf32>
    %543 = arith.mulf %541, %531 : vector<8x128xf32>
    %544 = arith.mulf %540, %539 : vector<8x128xf32>
    %545 = arith.addf %543, %544 : vector<8x128xf32>
    %546 = math.tanh %545 : vector<8x128xf32>
    %547 = arith.mulf %542, %546 : vector<8x128xf32>
    %c0_273 = arith.constant 0 : index
    %c0_274 = arith.constant 0 : index
    %548 = vector.load %arg8[%c0_273, %c0_274] : memref<8x128xf32, #tpu.memory_space<vmem>>, vector<8x128xf32>
    tpu.vector_store %arg8[%c0_273, %c0_274], %547 {strides = array<i32>} : memref<8x128xf32, #tpu.memory_space<vmem>>, vector<8x128xf32>,
    %c0_275 = arith.constant 0 : index
    %c0_276 = arith.constant 0 : index
    %549 = vector.load %arg9[%c0_275, %c0_276] : memref<8x128xf32, #tpu.memory_space<vmem>>, vector<8x128xf32>
    tpu.vector_store %arg9[%c0_275, %c0_276], %545 {strides = array<i32>} : memref<8x128xf32, #tpu.memory_space<vmem>>, vector<8x128xf32>,
    %550 = arith.truncf %547 : vector<8x128xf32> to vector<8x128xbf16>
    %551 = arith.index_cast %486 : i32 to index
    %c0_277 = arith.constant 0 : index
    %c0_278 = arith.constant 0 : index
    %552 = vector.load %arg5[%551, %c0_277, %c0_278] : memref<8x8x128xbf16, #tpu.memory_space<vmem>>, vector<1x8x128xbf16>
    %553 = vector.shape_cast %552 : vector<1x8x128xbf16> to vector<8x128xbf16>
    %554 = vector.shape_cast %550 : vector<8x128xbf16> to vector<1x8x128xbf16>
    tpu.vector_store %arg5[%551, %c0_277, %c0_278], %554 {strides = array<i32>} : memref<8x8x128xbf16, #tpu.memory_space<vmem>>, vector<1x8x128xbf16>,
    %c8_i32 = arith.constant 8 : i32
    return
  }
  func.func @transform_0(%arg0: i32) -> (i32, i32, i32) {
    %c0_i32 = arith.constant 0 : i32
    %c0_i32_0 = arith.constant 0 : i32
    %c0_i32_1 = arith.constant 0 : i32
    return %arg0, %c0_i32, %c0_i32_0 : i32, i32, i32
  }
  func.func @transform_1(%arg0: i32) -> (i32, i32, i32) {
    %c0_i32 = arith.constant 0 : i32
    %0 = arith.subi %c0_i32, %arg0 : i32
    %c0_i32_0 = arith.constant 0 : i32
    %c1_i32 = arith.constant 1 : i32
    %c0_i32_1 = arith.constant 0 : i32
    return %0, %c0_i32_0, %c1_i32 : i32, i32, i32
  }
  func.func @transform_3(%arg0: i32) -> (i32, i32, i32) {
    %c0_i32 = arith.constant 0 : i32
    %c0_i32_0 = arith.constant 0 : i32
    %c0_i32_1 = arith.constant 0 : i32
    return %arg0, %c0_i32, %c0_i32_0 : i32, i32, i32
  }
  func.func @transform_4(%arg0: i32) -> (i32, i32, i32) {
    %c0_i32 = arith.constant 0 : i32
    %0 = arith.subi %c0_i32, %arg0 : i32
    %c0_i32_0 = arith.constant 0 : i32
    %c0_i32_1 = arith.constant 0 : i32
    %c0_i32_2 = arith.constant 0 : i32
    return %0, %c0_i32_0, %c0_i32_1 : i32, i32, i32
  }
}

module attributes {stable_mosaic.version = 11 : i64} {
  func.func @_head_kernel(%arg0: i32, %arg1: memref<64x128xbf16, #tpu.memory_space<vmem>>, %arg2: memref<64x128xbf16, #tpu.memory_space<vmem>>, %arg3: memref<128x128xbf16, #tpu.memory_space<vmem>>, %arg4: memref<128x128xbf16, #tpu.memory_space<vmem>>, %arg5: memref<1x128xf32, #tpu.memory_space<vmem>>, %arg6: memref<64x128xf32, #tpu.memory_space<vmem>>) attributes {dimension_semantics = [#tpu.dimension_semantics<parallel>], iteration_bounds = array<i64: 1>, scalar_prefetch = 0 : i64, scratch_operands = 0 : i64, tpu.core_type = #tpu.core_type<tc>, window_params = [{transform_indices = @transform_0, window_bounds = array<i64: 64, 128>}, {transform_indices = @transform_1, window_bounds = array<i64: 64, 128>}, {pipeline_mode = #tpu.pipeline_mode<synchronous>, transform_indices = @transform_2, window_bounds = array<i64: 128, 128>}, {pipeline_mode = #tpu.pipeline_mode<synchronous>, transform_indices = @transform_3, window_bounds = array<i64: 128, 128>}, {pipeline_mode = #tpu.pipeline_mode<synchronous>, transform_indices = @transform_4, window_bounds = array<i64: 1, 128>}, {transform_indices = @transform_5, window_bounds = array<i64: 64, 128>}]} {
    %c0 = arith.constant 0 : index
    %c0_0 = arith.constant 0 : index
    %0 = vector.load %arg1[%c0, %c0_0] : memref<64x128xbf16, #tpu.memory_space<vmem>>, vector<64x128xbf16>
    %c0_1 = arith.constant 0 : index
    %c0_2 = arith.constant 0 : index
    %1 = vector.load %arg3[%c0_1, %c0_2] : memref<128x128xbf16, #tpu.memory_space<vmem>>, vector<128x128xbf16>
    %cst = arith.constant dense<0.000000e+00> : vector<64x128xf32>
    %2 = tpu.matmul %0, %1, %cst {dimension_numbers = #tpu.dot_dimension_numbers<[1], [0], [0], [1], [0, 0, 1, 1], [], []>} : vector<64x128xbf16>, vector<128x128xbf16>, vector<64x128xf32> -> vector<64x128xf32>
    %c0_3 = arith.constant 0 : index
    %c0_4 = arith.constant 0 : index
    %3 = vector.load %arg2[%c0_3, %c0_4] : memref<64x128xbf16, #tpu.memory_space<vmem>>, vector<64x128xbf16>
    %c0_5 = arith.constant 0 : index
    %c0_6 = arith.constant 0 : index
    %4 = vector.load %arg4[%c0_5, %c0_6] : memref<128x128xbf16, #tpu.memory_space<vmem>>, vector<128x128xbf16>
    %cst_7 = arith.constant dense<0.000000e+00> : vector<64x128xf32>
    %5 = tpu.matmul %3, %4, %cst_7 {dimension_numbers = #tpu.dot_dimension_numbers<[1], [0], [0], [1], [0, 0, 1, 1], [], []>} : vector<64x128xbf16>, vector<128x128xbf16>, vector<64x128xf32> -> vector<64x128xf32>
    %6 = arith.addf %2, %5 : vector<64x128xf32>
    %c0_8 = arith.constant 0 : index
    %c0_9 = arith.constant 0 : index
    %7 = vector.load %arg5[%c0_8, %c0_9] : memref<1x128xf32, #tpu.memory_space<vmem>>, vector<1x128xf32>
    %8 = vector.broadcast %7 : vector<1x128xf32> to vector<64x128xf32>
    %9 = arith.addf %6, %8 : vector<64x128xf32>
    %c0_10 = arith.constant 0 : index
    %c0_11 = arith.constant 0 : index
    %10 = vector.load %arg6[%c0_10, %c0_11] : memref<64x128xf32, #tpu.memory_space<vmem>>, vector<64x128xf32>
    tpu.vector_store %arg6[%c0_10, %c0_11], %9 {strides = array<i32>} : memref<64x128xf32, #tpu.memory_space<vmem>>, vector<64x128xf32>,
    return
  }
  func.func @transform_0(%arg0: i32) -> (i32, i32) {
    %c0_i32 = arith.constant 0 : i32
    %c0_i32_0 = arith.constant 0 : i32
    return %arg0, %c0_i32 : i32, i32
  }
  func.func @transform_1(%arg0: i32) -> (i32, i32) {
    %c0_i32 = arith.constant 0 : i32
    %c0_i32_0 = arith.constant 0 : i32
    return %arg0, %c0_i32 : i32, i32
  }
  func.func @transform_2(%arg0: i32) -> (i32, i32) {
    %c0_i32 = arith.constant 0 : i32
    %c0_i32_0 = arith.constant 0 : i32
    %c0_i32_1 = arith.constant 0 : i32
    return %c0_i32, %c0_i32_0 : i32, i32
  }
  func.func @transform_3(%arg0: i32) -> (i32, i32) {
    %c0_i32 = arith.constant 0 : i32
    %c0_i32_0 = arith.constant 0 : i32
    %c0_i32_1 = arith.constant 0 : i32
    return %c0_i32, %c0_i32_0 : i32, i32
  }
  func.func @transform_4(%arg0: i32) -> (i32, i32) {
    %c0_i32 = arith.constant 0 : i32
    %c0_i32_0 = arith.constant 0 : i32
    %c0_i32_1 = arith.constant 0 : i32
    return %c0_i32, %c0_i32_0 : i32, i32
  }
  func.func @transform_5(%arg0: i32) -> (i32, i32) {
    %c0_i32 = arith.constant 0 : i32
    %c0_i32_0 = arith.constant 0 : i32
    return %arg0, %c0_i32 : i32, i32
  }
}

</mosaic_0001>

<llo_original>
// kernel: bilstm_forward.3
$region0: #{bilstm_forward.3}
  #allocation0 [shape = 'u32[]', space=smem, size = 0x4, offset = 0x4, fixed_abs, tag = 'smem constant byte address 0x4 - core index']
  #allocation1 [shape = 'u32[144,128]{1,0:T(1,128)}', space=vmem, size = 0x12000, scoped, tag = 'internal scratch']
  %s0 = inlined_call_operand.vmem [shape: bf16[64,16], index: 0, kind: input, shape index: {}]
  %s1 = inlined_call_operand.vmem [shape: bf16[16,1024], index: 1, kind: input, shape index: {}]
  %s2 = inlined_call_operand.vmem [shape: f32[1,1024], index: 2, kind: input, shape index: {}]
  %s3 = inlined_call_operand.vmem [shape: bf16[64,1024], index: 3, kind: output, shape index: {}]
  %s4 = sld [smem:[#allocation0]]
  $region22: #{bilstm_forward.3} parent=0
    _
  %s6 = ssub.s32 1, %s4
  %s7 = scalar_select 0, %s6, %s4
  // Predicated region
  $region2: #{bilstm_forward.3} parent=0 // pred_check
    _
  $region3: #{bilstm_forward.3} parent=0 // pred_check_branch
    %9 = sbr.rel (0) target = $region5
  $region4: #{bilstm_forward.3} parent=0 // pred_region
    _
  $region5: #{bilstm_forward.3} parent=0 // pred_fallthru
    _
  // Predicated region
  $region6: #{bilstm_forward.3} parent=0 // pred_check
    _
  $region7: #{bilstm_forward.3} parent=0 // pred_check_branch
    %11 = sbr.rel (0) target = $region9
  $region8: #{bilstm_forward.3} parent=0 // pred_region
    _
  $region9: #{bilstm_forward.3} parent=0 // pred_fallthru
    _
  // Predicated region
  $region10: #{bilstm_forward.3} parent=0 // pred_check
    _
  $region11: #{bilstm_forward.3} parent=0 // pred_check_branch
    %13 = sbr.rel (0) target = $region13
  $region12: #{bilstm_forward.3} parent=0 // pred_region
    _
  $region13: #{bilstm_forward.3} parent=0 // pred_fallthru
    _
  %v15 = vld [vmem:[%s0] sm:$0xf]
  %v16 = vld [vmem:[%s0 + $0x4] sm:$0xf]
  %v17 = vld [vmem:[%s0 + $0x8] sm:$0xf]
  %v18 = vld [vmem:[%s0 + $0xc] sm:$0xf]
  %v19 = vld [vmem:[%s0 + $0x10] sm:$0xf]
  %v20 = vld [vmem:[%s0 + $0x14] sm:$0xf]
  %v21 = vld [vmem:[%s0 + $0x18] sm:$0xf]
  %v22 = vld [vmem:[%s0 + $0x1c] sm:$0xf]
  %v23 = vld [vmem:[%s1] sm:$0xff]
  %v24 = vld [vmem:[%s1 + $0x8] sm:$0xff]
  %v25 = vld [vmem:[%s1 + $0x10] sm:$0xff]
  %v26 = vld [vmem:[%s1 + $0x18] sm:$0xff]
  %v27 = vld [vmem:[%s1 + $0x20] sm:$0xff]
  %v28 = vld [vmem:[%s1 + $0x28] sm:$0xff]
  %v29 = vld [vmem:[%s1 + $0x30] sm:$0xff]
  %v30 = vld [vmem:[%s1 + $0x38] sm:$0xff]
  %v31 = vld [vmem:[%s2] sm:$0xff]
  %v33 = vlaneseq
  %v34 = vshrl.u32 %v33, 7
  %v35 = vsub.s32 0, %v34
  %v36 = vrot.slane %v31, %v35
  %v37 = vlaneseq
  %v38 = vshrl.u32 %v37, 7
  %v39 = vsub.s32 1, %v38
  %v40 = vrot.slane %v31, %v39
  %v41 = vlaneseq
  %v42 = vshrl.u32 %v41, 7
  %v43 = vsub.s32 2, %v42
  %v44 = vrot.slane %v31, %v43
  %v45 = vlaneseq
  %v46 = vshrl.u32 %v45, 7
  %v47 = vsub.s32 3, %v46
  %v48 = vrot.slane %v31, %v47
  %v49 = vlaneseq
  %v50 = vshrl.u32 %v49, 7
  %v51 = vsub.s32 4, %v50
  %v52 = vrot.slane %v31, %v51
  %v53 = vlaneseq
  %v54 = vshrl.u32 %v53, 7
  %v55 = vsub.s32 5, %v54
  %v56 = vrot.slane %v31, %v55
  %v57 = vlaneseq
  %v58 = vshrl.u32 %v57, 7
  %v59 = vsub.s32 6, %v58
  %v60 = vrot.slane %v31, %v59
  %v61 = vlaneseq
  %v62 = vshrl.u32 %v61, 7
  %v63 = vsub.s32 7, %v62
  %v64 = vrot.slane %v31, %v63
  %v81 = vunpack.c.l.b16 %v15
  %v82 = vunpack.c.l.b16 %v16
  %v83 = vunpack.c.l.b16 %v17
  %v84 = vunpack.c.l.b16 %v18
  %v85 = vunpack.c.l.b16 %v19
  %v86 = vunpack.c.l.b16 %v20
  %v87 = vunpack.c.l.b16 %v21
  %v88 = vunpack.c.l.b16 %v22
  %v89 = vpack.c.b16 %v82, %v81
  %v90 = vpack.c.b16 %v84, %v83
  %v91 = vpack.c.b16 %v86, %v85
  %v92 = vpack.c.b16 %v88, %v87
  %v101 = vunpack.c.l.b16 %v23
  %v102 = vunpack.c.h.b16 %v23
  %v103 = vunpack.c.l.b16 %v24
  %v104 = vunpack.c.h.b16 %v24
  %v105 = vunpack.c.l.b16 %v25
  %v106 = vunpack.c.h.b16 %v25
  %v107 = vunpack.c.l.b16 %v26
  %v108 = vunpack.c.h.b16 %v26
  %v109 = vunpack.c.l.b16 %v27
  %v110 = vunpack.c.h.b16 %v27
  %v111 = vunpack.c.l.b16 %v28
  %v112 = vunpack.c.h.b16 %v28
  %v113 = vunpack.c.l.b16 %v29
  %v114 = vunpack.c.h.b16 %v29
  %v115 = vunpack.c.l.b16 %v30
  %v116 = vunpack.c.h.b16 %v30
  %v117 = vpack.c.b16 %v109, %v101
  %v118 = vpack.c.b16 %v110, %v102
  %v119 = vpack.c.b16 %v111, %v103
  %v120 = vpack.c.b16 %v112, %v104
  %v121 = vpack.c.b16 %v113, %v105
  %v122 = vpack.c.b16 %v114, %v106
  %v123 = vpack.c.b16 %v115, %v107
  %v124 = vpack.c.b16 %v116, %v108
  %vm133 = vcmask 130048
  %v135 = vsel %vm133, %v89, 0
  %v138 = vsel %vm133, %v90, 0
  %v141 = vsel %vm133, %v91, 0
  %v144 = vsel %vm133, %v92, 0
  %146 = vmatprep.subr.bf16.mxu0 %v118
  %147 = vmatpush1.bf16.msra.mxu0 %v117
  %148 = vmatprep.subr.bf16.mxu0 0
  %149 = vmatpush1.bf16.msra.mxu0 0
  %150 = vmatprep.subr.bf16.mxu0 0
  %151 = vmatpush1.bf16.msra.mxu0 0
  %152 = vmatprep.subr.bf16.mxu0 0
  %153 = vmatpush1.bf16.msra.mxu0 0
  %154 = vmatprep.subr.bf16.mxu0 0
  %155 = vmatpush1.bf16.msra.mxu0 0
  %156 = vmatprep.subr.bf16.mxu0 0
  %157 = vmatpush1.bf16.msra.mxu0 0
  %158 = vmatprep.subr.bf16.mxu0 0
  %159 = vmatpush1.bf16.msra.mxu0 0
  %160 = vmatprep.subr.bf16.mxu0 0
  %161 = vmatpush1.bf16.msra.mxu0 0
  %162 = vmatprep.subr.bf16.mxu0 0
  %163 = vmatpush1.bf16.msra.mxu0 0
  %164 = vmatprep.subr.bf16.mxu0 0
  %165 = vmatpush1.bf16.msra.mxu0 0
  %166 = vmatprep.subr.bf16.mxu0 0
  %167 = vmatpush1.bf16.msra.mxu0 0
  %168 = vmatprep.subr.bf16.mxu0 0
  %169 = vmatpush1.bf16.msra.mxu0 0
  %170 = vmatprep.subr.bf16.mxu0 0
  %171 = vmatpush1.bf16.msra.mxu0 0
  %172 = vmatprep.subr.bf16.mxu0 0
  %173 = vmatpush1.bf16.msra.mxu0 0
  %174 = vmatprep.subr.bf16.mxu0 0
  %175 = vmatpush1.bf16.msra.mxu0 0
  %176 = vmatprep.subr.bf16.mxu0 0
  %177 = vmatpush1.bf16.msra.mxu0 0
  %178 = vmatprep.mubr.bf16.mxu0 0
  %179 = vmatmul.mubr.bf16.gmra.mrb[0].mxu0 %v135
  %v180 = vpop.f32.mrb[0].mxu0
  %v181 = vadd.f32 %v36, %v180
  %v182 = vpop.f32.mrb[0].mxu0
  %v183 = vadd.f32 %v40, %v182
  %v184 = vpop.f32.mrb[0].mxu0
  %v185 = vadd.f32 %v36, %v184
  %v186 = vpop.f32.mrb[0].mxu0
  %v187 = vadd.f32 %v40, %v186
  %188 = vmatprep.mubr.bf16.mxu0 0
  %189 = vmatmul.mubr.bf16.gmra.mrb[0].mxu0 %v138
  %v190 = vpop.f32.mrb[0].mxu0
  %v191 = vadd.f32 %v36, %v190
  %v192 = vpop.f32.mrb[0].mxu0
  %v193 = vadd.f32 %v40, %v192
  %v194 = vpop.f32.mrb[0].mxu0
  %v195 = vadd.f32 %v36, %v194
  %v196 = vpop.f32.mrb[0].mxu0
  %v197 = vadd.f32 %v40, %v196
  %198 = vmatprep.mubr.bf16.mxu0 0
  %199 = vmatmul.mubr.bf16.gmra.mrb[0].mxu0 %v141
  %v200 = vpop.f32.mrb[0].mxu0
  %v201 = vadd.f32 %v36, %v200
  %v202 = vpop.f32.mrb[0].mxu0
  %v203 = vadd.f32 %v40, %v202
  %v204 = vpop.f32.mrb[0].mxu0
  %v205 = vadd.f32 %v36, %v204
  %v206 = vpop.f32.mrb[0].mxu0
  %v207 = vadd.f32 %v40, %v206
  %208 = vmatprep.mubr.bf16.mxu0 0
  %209 = vmatmul.mubr.bf16.gmra.mrb[0].mxu0 %v144
  %v210 = vpop.f32.mrb[0].mxu0
  %v211 = vadd.f32 %v36, %v210
  %v212 = vpop.f32.mrb[0].mxu0
  %v213 = vadd.f32 %v40, %v212
  %v214 = vpop.f32.mrb[0].mxu0
  %v215 = vadd.f32 %v36, %v214
  %v216 = vpop.f32.mrb[0].mxu0
  %v217 = vadd.f32 %v40, %v216
  %218 = vdwg.mxu0
  %219 = vmatprep.subr.bf16.mxu0 %v120
  %220 = vmatpush1.bf16.msra.mxu0 %v119
  %221 = vmatprep.subr.bf16.mxu0 0
  %222 = vmatpush1.bf16.msra.mxu0 0
  %223 = vmatprep.subr.bf16.mxu0 0
  %224 = vmatpush1.bf16.msra.mxu0 0
  %225 = vmatprep.subr.bf16.mxu0 0
  %226 = vmatpush1.bf16.msra.mxu0 0
  %227 = vmatprep.subr.bf16.mxu0 0
  %228 = vmatpush1.bf16.msra.mxu0 0
  %229 = vmatprep.subr.bf16.mxu0 0
  %230 = vmatpush1.bf16.msra.mxu0 0
  %231 = vmatprep.subr.bf16.mxu0 0
  %232 = vmatpush1.bf16.msra.mxu0 0
  %233 = vmatprep.subr.bf16.mxu0 0
  %234 = vmatpush1.bf16.msra.mxu0 0
  %235 = vmatprep.subr.bf16.mxu0 0
  %236 = vmatpush1.bf16.msra.mxu0 0
  %237 = vmatprep.subr.bf16.mxu0 0
  %238 = vmatpush1.bf16.msra.mxu0 0
  %239 = vmatprep.subr.bf16.mxu0 0
  %240 = vmatpush1.bf16.msra.mxu0 0
  %241 = vmatprep.subr.bf16.mxu0 0
  %242 = vmatpush1.bf16.msra.mxu0 0
  %243 = vmatprep.subr.bf16.mxu0 0
  %244 = vmatpush1.bf16.msra.mxu0 0
  %245 = vmatprep.subr.bf16.mxu0 0
  %246 = vmatpush1.bf16.msra.mxu0 0
  %247 = vmatprep.subr.bf16.mxu0 0
  %248 = vmatpush1.bf16.msra.mxu0 0
  %249 = vmatprep.subr.bf16.mxu0 0
  %250 = vmatpush1.bf16.msra.mxu0 0
  %251 = vmatprep.mubr.bf16.mxu0 0
  %252 = vmatmul.mubr.bf16.gmra.mrb[0].mxu0 %v135
  %v253 = vpop.f32.mrb[0].mxu0
  %v254 = vadd.f32 %v44, %v253
  %v255 = vpop.f32.mrb[0].mxu0
  %v256 = vadd.f32 %v48, %v255
  %v257 = vpop.f32.mrb[0].mxu0
  %v258 = vadd.f32 %v44, %v257
  %v259 = vpop.f32.mrb[0].mxu0
  %v260 = vadd.f32 %v48, %v259
  %261 = vmatprep.mubr.bf16.mxu0 0
  %262 = vmatmul.mubr.bf16.gmra.mrb[0].mxu0 %v138
  %v263 = vpop.f32.mrb[0].mxu0
  %v264 = vadd.f32 %v44, %v263
  %v265 = vpop.f32.mrb[0].mxu0
  %v266 = vadd.f32 %v48, %v265
  %v267 = vpop.f32.mrb[0].mxu0
  %v268 = vadd.f32 %v44, %v267
  %v269 = vpop.f32.mrb[0].mxu0
  %v270 = vadd.f32 %v48, %v269
  %271 = vmatprep.mubr.bf16.mxu0 0
  %272 = vmatmul.mubr.bf16.gmra.mrb[0].mxu0 %v141
  %v273 = vpop.f32.mrb[0].mxu0
  %v274 = vadd.f32 %v44, %v273
  %v275 = vpop.f32.mrb[0].mxu0
  %v276 = vadd.f32 %v48, %v275
  %v277 = vpop.f32.mrb[0].mxu0
  %v278 = vadd.f32 %v44, %v277
  %v279 = vpop.f32.mrb[0].mxu0
  %v280 = vadd.f32 %v48, %v279
  %281 = vmatprep.mubr.bf16.mxu0 0
  %282 = vmatmul.mubr.bf16.gmra.mrb[0].mxu0 %v144
  %v283 = vpop.f32.mrb[0].mxu0
  %v284 = vadd.f32 %v44, %v283
  %v285 = vpop.f32.mrb[0].mxu0
  %v286 = vadd.f32 %v48, %v285
  %v287 = vpop.f32.mrb[0].mxu0
  %v288 = vadd.f32 %v44, %v287
  %v289 = vpop.f32.mrb[0].mxu0
  %v290 = vadd.f32 %v48, %v289
  %291 = vdwg.mxu0
  %292 = vmatprep.subr.bf16.mxu0 %v122
  %293 = vmatpush1.bf16.msra.mxu0 %v121
  %294 = vmatprep.subr.bf16.mxu0 0
  %295 = vmatpush1.bf16.msra.mxu0 0
  %296 = vmatprep.subr.bf16.mxu0 0
  %297 = vmatpush1.bf16.msra.mxu0 0
  %298 = vmatprep.subr.bf16.mxu0 0
  %299 = vmatpush1.bf16.msra.mxu0 0
  %300 = vmatprep.subr.bf16.mxu0 0
  %301 = vmatpush1.bf16.msra.mxu0 0
  %302 = vmatprep.subr.bf16.mxu0 0
  %303 = vmatpush1.bf16.msra.mxu0 0
  %304 = vmatprep.subr.bf16.mxu0 0
  %305 = vmatpush1.bf16.msra.mxu0 0
  %306 = vmatprep.subr.bf16.mxu0 0
  %307 = vmatpush1.bf16.msra.mxu0 0
  %308 = vmatprep.subr.bf16.mxu0 0
  %309 = vmatpush1.bf16.msra.mxu0 0
  %310 = vmatprep.subr.bf16.mxu0 0
  %311 = vmatpush1.bf16.msra.mxu0 0
  %312 = vmatprep.subr.bf16.mxu0 0
  %313 = vmatpush1.bf16.msra.mxu0 0
  %314 = vmatprep.subr.bf16.mxu0 0
  %315 = vmatpush1.bf16.msra.mxu0 0
  %316 = vmatprep.subr.bf16.mxu0 0
  %317 = vmatpush1.bf16.msra.mxu0 0
  %318 = vmatprep.subr.bf16.mxu0 0
  %319 = vmatpush1.bf16.msra.mxu0 0
  %320 = vmatprep.subr.bf16.mxu0 0
  %321 = vmatpush1.bf16.msra.mxu0 0
  %322 = vmatprep.subr.bf16.mxu0 0
  %323 = vmatpush1.bf16.msra.mxu0 0
  %324 = vmatprep.mubr.bf16.mxu0 0
  %325 = vmatmul.mubr.bf16.gmra.mrb[0].mxu0 %v135
  %v326 = vpop.f32.mrb[0].mxu0
  %v327 = vadd.f32 %v52, %v326
  %v328 = vpop.f32.mrb[0].mxu0
  %v329 = vadd.f32 %v56, %v328
  %v330 = vpop.f32.mrb[0].mxu0
  %v331 = vadd.f32 %v52, %v330
  %v332 = vpop.f32.mrb[0].mxu0
  %v333 = vadd.f32 %v56, %v332
  %334 = vmatprep.mubr.bf16.mxu0 0
  %335 = vmatmul.mubr.bf16.gmra.mrb[0].mxu0 %v138
  %v336 = vpop.f32.mrb[0].mxu0
  %v337 = vadd.f32 %v52, %v336
  %v338 = vpop.f32.mrb[0].mxu0
  %v339 = vadd.f32 %v56, %v338
  %v340 = vpop.f32.mrb[0].mxu0
  %v341 = vadd.f32 %v52, %v340
  %v342 = vpop.f32.mrb[0].mxu0
  %v343 = vadd.f32 %v56, %v342
  %344 = vmatprep.mubr.bf16.mxu0 0
  %345 = vmatmul.mubr.bf16.gmra.mrb[0].mxu0 %v141
  %v346 = vpop.f32.mrb[0].mxu0
  %v347 = vadd.f32 %v52, %v346
  %v348 = vpop.f32.mrb[0].mxu0
  %v349 = vadd.f32 %v56, %v348
  %v350 = vpop.f32.mrb[0].mxu0
  %v351 = vadd.f32 %v52, %v350
  %v352 = vpop.f32.mrb[0].mxu0
  %v353 = vadd.f32 %v56, %v352
  %354 = vmatprep.mubr.bf16.mxu0 0
  %355 = vmatmul.mubr.bf16.gmra.mrb[0].mxu0 %v144
  %v356 = vpop.f32.mrb[0].mxu0
  %v357 = vadd.f32 %v52, %v356
  %v358 = vpop.f32.mrb[0].mxu0
  %v359 = vadd.f32 %v56, %v358
  %v360 = vpop.f32.mrb[0].mxu0
  %v361 = vadd.f32 %v52, %v360
  %v362 = vpop.f32.mrb[0].mxu0
  %v363 = vadd.f32 %v56, %v362
  %364 = vdwg.mxu0
  %365 = vmatprep.subr.bf16.mxu0 %v124
  %366 = vmatpush1.bf16.msra.mxu0 %v123
  %367 = vmatprep.subr.bf16.mxu0 0
  %368 = vmatpush1.bf16.msra.mxu0 0
  %369 = vmatprep.subr.bf16.mxu0 0
  %370 = vmatpush1.bf16.msra.mxu0 0
  %371 = vmatprep.subr.bf16.mxu0 0
  %372 = vmatpush1.bf16.msra.mxu0 0
  %373 = vmatprep.subr.bf16.mxu0 0
  %374 = vmatpush1.bf16.msra.mxu0 0
  %375 = vmatprep.subr.bf16.mxu0 0
  %376 = vmatpush1.bf16.msra.mxu0 0
  %377 = vmatprep.subr.bf16.mxu0 0
  %378 = vmatpush1.bf16.msra.mxu0 0
  %379 = vmatprep.subr.bf16.mxu0 0
  %380 = vmatpush1.bf16.msra.mxu0 0
  %381 = vmatprep.subr.bf16.mxu0 0
  %382 = vmatpush1.bf16.msra.mxu0 0
  %383 = vmatprep.subr.bf16.mxu0 0
  %384 = vmatpush1.bf16.msra.mxu0 0
  %385 = vmatprep.subr.bf16.mxu0 0
  %386 = vmatpush1.bf16.msra.mxu0 0
  %387 = vmatprep.subr.bf16.mxu0 0
  %388 = vmatpush1.bf16.msra.mxu0 0
  %389 = vmatprep.subr.bf16.mxu0 0
  %390 = vmatpush1.bf16.msra.mxu0 0
  %391 = vmatprep.subr.bf16.mxu0 0
  %392 = vmatpush1.bf16.msra.mxu0 0
  %393 = vmatprep.subr.bf16.mxu0 0
  %394 = vmatpush1.bf16.msra.mxu0 0
  %395 = vmatprep.subr.bf16.mxu0 0
  %396 = vmatpush1.bf16.msra.mxu0 0
  %397 = vmatprep.mubr.bf16.mxu0 0
  %398 = vmatmul.mubr.bf16.gmra.mrb[0].mxu0 %v135
  %v399 = vpop.f32.mrb[0].mxu0
  %v400 = vadd.f32 %v60, %v399
  %v401 = vpop.f32.mrb[0].mxu0
  %v402 = vadd.f32 %v64, %v401
  %v403 = vpop.f32.mrb[0].mxu0
  %v404 = vadd.f32 %v60, %v403
  %v405 = vpop.f32.mrb[0].mxu0
  %v406 = vadd.f32 %v64, %v405
  %407 = vmatprep.mubr.bf16.mxu0 0
  %408 = vmatmul.mubr.bf16.gmra.mrb[0].mxu0 %v138
  %v409 = vpop.f32.mrb[0].mxu0
  %v410 = vadd.f32 %v60, %v409
  %v411 = vpop.f32.mrb[0].mxu0
  %v412 = vadd.f32 %v64, %v411
  %v413 = vpop.f32.mrb[0].mxu0
  %v414 = vadd.f32 %v60, %v413
  %v415 = vpop.f32.mrb[0].mxu0
  %v416 = vadd.f32 %v64, %v415
  %417 = vmatprep.mubr.bf16.mxu0 0
  %418 = vmatmul.mubr.bf16.gmra.mrb[0].mxu0 %v141
  %v419 = vpop.f32.mrb[0].mxu0
  %v420 = vadd.f32 %v60, %v419
  %v421 = vpop.f32.mrb[0].mxu0
  %v422 = vadd.f32 %v64, %v421
  %v423 = vpop.f32.mrb[0].mxu0
  %v424 = vadd.f32 %v60, %v423
  %v425 = vpop.f32.mrb[0].mxu0
  %v426 = vadd.f32 %v64, %v425
  %427 = vmatprep.mubr.bf16.mxu0 0
  %428 = vmatmul.mubr.bf16.gmra.mrb[0].mxu0 %v144
  %v429 = vpop.f32.mrb[0].mxu0
  %v430 = vadd.f32 %v60, %v429
  %v431 = vpop.f32.mrb[0].mxu0
  %v432 = vadd.f32 %v64, %v431
  %v433 = vpop.f32.mrb[0].mxu0
  %v434 = vadd.f32 %v60, %v433
  %v435 = vpop.f32.mrb[0].mxu0
  %v436 = vadd.f32 %v64, %v435
  %437 = vdwg.mxu0
  %v438 = vpack.c.bf16 %v185, %v181
  %v439 = vpack.c.bf16 %v187, %v183
  %v440 = vpack.c.bf16 %v258, %v254
  %v441 = vpack.c.bf16 %v260, %v256
  %v442 = vpack.c.bf16 %v331, %v327
  %v443 = vpack.c.bf16 %v333, %v329
  %v444 = vpack.c.bf16 %v404, %v400
  %v445 = vpack.c.bf16 %v406, %v402
  %v446 = vpack.c.bf16 %v195, %v191
  %v447 = vpack.c.bf16 %v197, %v193
  %v448 = vpack.c.bf16 %v268, %v264
  %v449 = vpack.c.bf16 %v270, %v266
  %v450 = vpack.c.bf16 %v341, %v337
  %v451 = vpack.c.bf16 %v343, %v339
  %v452 = vpack.c.bf16 %v414, %v410
  %v453 = vpack.c.bf16 %v416, %v412
  %v454 = vpack.c.bf16 %v205, %v201
  %v455 = vpack.c.bf16 %v207, %v203
  %v456 = vpack.c.bf16 %v278, %v274
  %v457 = vpack.c.bf16 %v280, %v276
  %v458 = vpack.c.bf16 %v351, %v347
  %v459 = vpack.c.bf16 %v353, %v349
  %v460 = vpack.c.bf16 %v424, %v420
  %v461 = vpack.c.bf16 %v426, %v422
  %v462 = vpack.c.bf16 %v215, %v211
  %v463 = vpack.c.bf16 %v217, %v213
  %v464 = vpack.c.bf16 %v288, %v284
  %v465 = vpack.c.bf16 %v290, %v286
  %v466 = vpack.c.bf16 %v361, %v357
  %v467 = vpack.c.bf16 %v363, %v359
  %v468 = vpack.c.bf16 %v434, %v430
  %v469 = vpack.c.bf16 %v436, %v432
  %v502 = vunpack.c.l.b16 %v438
  %v503 = vunpack.c.l.b16 %v439
  %v504 = vunpack.c.l.b16 %v440
  %v505 = vunpack.c.l.b16 %v441
  %v506 = vunpack.c.l.b16 %v442
  %v507 = vunpack.c.l.b16 %v443
  %v508 = vunpack.c.l.b16 %v444
  %v509 = vunpack.c.l.b16 %v445
  %v510 = vunpack.c.h.b16 %v438
  %v511 = vunpack.c.h.b16 %v439
  %v512 = vunpack.c.h.b16 %v440
  %v513 = vunpack.c.h.b16 %v441
  %v514 = vunpack.c.h.b16 %v442
  %v515 = vunpack.c.h.b16 %v443
  %v516 = vunpack.c.h.b16 %v444
  %v517 = vunpack.c.h.b16 %v445
  %v518 = vunpack.c.l.b16 %v446
  %v519 = vunpack.c.l.b16 %v447
  %v520 = vunpack.c.l.b16 %v448
  %v521 = vunpack.c.l.b16 %v449
  %v522 = vunpack.c.l.b16 %v450
  %v523 = vunpack.c.l.b16 %v451
  %v524 = vunpack.c.l.b16 %v452
  %v525 = vunpack.c.l.b16 %v453
  %v526 = vunpack.c.h.b16 %v446
  %v527 = vunpack.c.h.b16 %v447
  %v528 = vunpack.c.h.b16 %v448
  %v529 = vunpack.c.h.b16 %v449
  %v530 = vunpack.c.h.b16 %v450
  %v531 = vunpack.c.h.b16 %v451
  %v532 = vunpack.c.h.b16 %v452
  %v533 = vunpack.c.h.b16 %v453
  %v534 = vunpack.c.l.b16 %v454
  %v535 = vunpack.c.l.b16 %v455
  %v536 = vunpack.c.l.b16 %v456
  %v537 = vunpack.c.l.b16 %v457
  %v538 = vunpack.c.l.b16 %v458
  %v539 = vunpack.c.l.b16 %v459
  %v540 = vunpack.c.l.b16 %v460
  %v541 = vunpack.c.l.b16 %v461
  %v542 = vunpack.c.h.b16 %v454
  %v543 = vunpack.c.h.b16 %v455
  %v544 = vunpack.c.h.b16 %v456
  %v545 = vunpack.c.h.b16 %v457
  %v546 = vunpack.c.h.b16 %v458
  %v547 = vunpack.c.h.b16 %v459
  %v548 = vunpack.c.h.b16 %v460
  %v549 = vunpack.c.h.b16 %v461
  %v550 = vunpack.c.l.b16 %v462
  %v551 = vunpack.c.l.b16 %v463
  %v552 = vunpack.c.l.b16 %v464
  %v553 = vunpack.c.l.b16 %v465
  %v554 = vunpack.c.l.b16 %v466
  %v555 = vunpack.c.l.b16 %v467
  %v556 = vunpack.c.l.b16 %v468
  %v557 = vunpack.c.l.b16 %v469
  %v558 = vunpack.c.h.b16 %v462
  %v559 = vunpack.c.h.b16 %v463
  %v560 = vunpack.c.h.b16 %v464
  %v561 = vunpack.c.h.b16 %v465
  %v562 = vunpack.c.h.b16 %v466
  %v563 = vunpack.c.h.b16 %v467
  %v564 = vunpack.c.h.b16 %v468
  %v565 = vunpack.c.h.b16 %v469
  %v566 = vpack.c.b16 %v503, %v502
  %v567 = vpack.c.b16 %v505, %v504
  %v568 = vpack.c.b16 %v507, %v506
  %v569 = vpack.c.b16 %v509, %v508
  %v570 = vpack.c.b16 %v511, %v510
  %v571 = vpack.c.b16 %v513, %v512
  %v572 = vpack.c.b16 %v515, %v514
  %v573 = vpack.c.b16 %v517, %v516
  %v574 = vpack.c.b16 %v519, %v518
  %v575 = vpack.c.b16 %v521, %v520
  %v576 = vpack.c.b16 %v523, %v522
  %v577 = vpack.c.b16 %v525, %v524
  %v578 = vpack.c.b16 %v527, %v526
  %v579 = vpack.c.b16 %v529, %v528
  %v580 = vpack.c.b16 %v531, %v530
  %v581 = vpack.c.b16 %v533, %v532
  %v582 = vpack.c.b16 %v535, %v534
  %v583 = vpack.c.b16 %v537, %v536
  %v584 = vpack.c.b16 %v539, %v538
  %v585 = vpack.c.b16 %v541, %v540
  %v586 = vpack.c.b16 %v543, %v542
  %v587 = vpack.c.b16 %v545, %v544
  %v588 = vpack.c.b16 %v547, %v546
  %v589 = vpack.c.b16 %v549, %v548
  %v590 = vpack.c.b16 %v551, %v550
  %v591 = vpack.c.b16 %v553, %v552
  %v592 = vpack.c.b16 %v555, %v554
  %v593 = vpack.c.b16 %v557, %v556
  %v594 = vpack.c.b16 %v559, %v558
  %v595 = vpack.c.b16 %v561, %v560
  %v596 = vpack.c.b16 %v563, %v562
  %v597 = vpack.c.b16 %v565, %v564
  %630 = vst [vmem:[%s3] sm:$0xff] %v566
  %631 = vst [vmem:[%s3 + $0x8] sm:$0xff] %v567
  %632 = vst [vmem:[%s3 + $0x10] sm:$0xff] %v568
  %633 = vst [vmem:[%s3 + $0x18] sm:$0xff] %v569
  %634 = vst [vmem:[%s3 + $0x20] sm:$0xff] %v570
  %635 = vst [vmem:[%s3 + $0x28] sm:$0xff] %v571
  %636 = vst [vmem:[%s3 + $0x30] sm:$0xff] %v572
  %637 = vst [vmem:[%s3 + $0x38] sm:$0xff] %v573
  %638 = vst [vmem:[%s3 + $0x40] sm:$0xff] %v574
  %639 = vst [vmem:[%s3 + $0x48] sm:$0xff] %v575
  %640 = vst [vmem:[%s3 + $0x50] sm:$0xff] %v576
  %641 = vst [vmem:[%s3 + $0x58] sm:$0xff] %v577
  %642 = vst [vmem:[%s3 + $0x60] sm:$0xff] %v578
  %643 = vst [vmem:[%s3 + $0x68] sm:$0xff] %v579
  %644 = vst [vmem:[%s3 + $0x70] sm:$0xff] %v580
  %645 = vst [vmem:[%s3 + $0x78] sm:$0xff] %v581
  %646 = vst [vmem:[%s3 + $0x80] sm:$0xff] %v582
  %647 = vst [vmem:[%s3 + $0x88] sm:$0xff] %v583
  %648 = vst [vmem:[%s3 + $0x90] sm:$0xff] %v584
  %649 = vst [vmem:[%s3 + $0x98] sm:$0xff] %v585
  %650 = vst [vmem:[%s3 + $0xa0] sm:$0xff] %v586
  %651 = vst [vmem:[%s3 + $0xa8] sm:$0xff] %v587
  %652 = vst [vmem:[%s3 + $0xb0] sm:$0xff] %v588
  %653 = vst [vmem:[%s3 + $0xb8] sm:$0xff] %v589
  %654 = vst [vmem:[%s3 + $0xc0] sm:$0xff] %v590
  %655 = vst [vmem:[%s3 + $0xc8] sm:$0xff] %v591
  %656 = vst [vmem:[%s3 + $0xd0] sm:$0xff] %v592
  %657 = vst [vmem:[%s3 + $0xd8] sm:$0xff] %v593
  %658 = vst [vmem:[%s3 + $0xe0] sm:$0xff] %v594
  %659 = vst [vmem:[%s3 + $0xe8] sm:$0xff] %v595
  %660 = vst [vmem:[%s3 + $0xf0] sm:$0xff] %v596
  %661 = vst [vmem:[%s3 + $0xf8] sm:$0xff] %v597
  // Predicated region
  $region14: #{bilstm_forward.3} parent=0 // pred_check
    _
  $region15: #{bilstm_forward.3} parent=0 // pred_check_branch
    %663 = sbr.rel (0) target = $region17
  $region16: #{bilstm_forward.3} parent=0 // pred_region
    _
  $region17: #{bilstm_forward.3} parent=0 // pred_fallthru
    _
  // Predicated region
  $region18: #{bilstm_forward.3} parent=0 // pred_check
    _
  $region19: #{bilstm_forward.3} parent=0 // pred_check_branch
    %665 = sbr.rel (0) target = $region21
  $region20: #{bilstm_forward.3} parent=0 // pred_region
    _
  $region21: #{bilstm_forward.3} parent=0 // pred_fallthru
    _

// kernel: bilstm_forward.5
$region0: #{bilstm_forward.5}
  #allocation0 [shape = 'u32[]', space=smem, size = 0x4, offset = 0x4, fixed_abs, tag = 'smem constant byte address 0x4 - core index']
  #allocation1 [shape = 'u32[144,128]{1,0:T(1,128)}', space=vmem, size = 0x12000, scoped, tag = 'internal scratch']
  %s0 = inlined_call_operand.vmem [shape: bf16[64,128], index: 0, kind: input, shape index: {}]
  %s1 = inlined_call_operand.vmem [shape: bf16[64,128], index: 1, kind: input, shape index: {}]
  %s2 = inlined_call_operand.vmem [shape: bf16[128,128], index: 2, kind: input, shape index: {}]
  %s3 = inlined_call_operand.vmem [shape: bf16[128,128], index: 3, kind: input, shape index: {}]
  %s4 = inlined_call_operand.vmem [shape: f32[1,128], index: 4, kind: input, shape index: {}]
  %s5 = inlined_call_operand.vmem [shape: f32[64,128], index: 5, kind: output, shape index: {}]
  %s6 = sld [smem:[#allocation0]]
  $region30: #{bilstm_forward.5} parent=0
    _
  %s8 = ssub.s32 1, %s6
  %s9 = scalar_select 0, %s8, %s6
  // Predicated region
  $region2: #{bilstm_forward.5} parent=0 // pred_check
    _
  $region3: #{bilstm_forward.5} parent=0 // pred_check_branch
    %11 = sbr.rel (0) target = $region5
  $region4: #{bilstm_forward.5} parent=0 // pred_region
    _
  $region5: #{bilstm_forward.5} parent=0 // pred_fallthru
    _
  // Predicated region
  $region6: #{bilstm_forward.5} parent=0 // pred_check
    _
  $region7: #{bilstm_forward.5} parent=0 // pred_check_branch
    %13 = sbr.rel (0) target = $region9
  $region8: #{bilstm_forward.5} parent=0 // pred_region
    _
  $region9: #{bilstm_forward.5} parent=0 // pred_fallthru
    _
  // Predicated region
  $region10: #{bilstm_forward.5} parent=0 // pred_check
    _
  $region11: #{bilstm_forward.5} parent=0 // pred_check_branch
    %15 = sbr.rel (0) target = $region13
  $region12: #{bilstm_forward.5} parent=0 // pred_region
    _
  $region13: #{bilstm_forward.5} parent=0 // pred_fallthru
    _
  // Predicated region
  $region14: #{bilstm_forward.5} parent=0 // pred_check
    _
  $region15: #{bilstm_forward.5} parent=0 // pred_check_branch
    %17 = sbr.rel (0) target = $region17
  $region16: #{bilstm_forward.5} parent=0 // pred_region
    _
  $region17: #{bilstm_forward.5} parent=0 // pred_fallthru
    _
  // Predicated region
  $region18: #{bilstm_forward.5} parent=0 // pred_check
    _
  $region19: #{bilstm_forward.5} parent=0 // pred_check_branch
    %19 = sbr.rel (0) target = $region21
  $region20: #{bilstm_forward.5} parent=0 // pred_region
    _
  $region21: #{bilstm_forward.5} parent=0 // pred_fallthru
    _
  %v21 = vld [vmem:[%s0] sm:$0xf]
  %v22 = vld [vmem:[%s0 + $0x4] sm:$0xf]
  %v23 = vld [vmem:[%s0 + $0x8] sm:$0xf]
  %v24 = vld [vmem:[%s0 + $0xc] sm:$0xf]
  %v25 = vld [vmem:[%s0 + $0x10] sm:$0xf]
  %v26 = vld [vmem:[%s0 + $0x14] sm:$0xf]
  %v27 = vld [vmem:[%s0 + $0x18] sm:$0xf]
  %v28 = vld [vmem:[%s0 + $0x1c] sm:$0xf]
  %v29 = vld [vmem:[%s2] sm:$0xf]
  %v30 = vld [vmem:[%s2 + $0x4] sm:$0xf]
  %v31 = vld [vmem:[%s2 + $0x8] sm:$0xf]
  %v32 = vld [vmem:[%s2 + $0xc] sm:$0xf]
  %v33 = vld [vmem:[%s2 + $0x10] sm:$0xf]
  %v34 = vld [vmem:[%s2 + $0x14] sm:$0xf]
  %v35 = vld [vmem:[%s2 + $0x18] sm:$0xf]
  %v36 = vld [vmem:[%s2 + $0x1c] sm:$0xf]
  %v37 = vld [vmem:[%s2 + $0x20] sm:$0xf]
  %v38 = vld [vmem:[%s2 + $0x24] sm:$0xf]
  %v39 = vld [vmem:[%s2 + $0x28] sm:$0xf]
  %v40 = vld [vmem:[%s2 + $0x2c] sm:$0xf]
  %v41 = vld [vmem:[%s2 + $0x30] sm:$0xf]
  %v42 = vld [vmem:[%s2 + $0x34] sm:$0xf]
  %v43 = vld [vmem:[%s2 + $0x38] sm:$0xf]
  %v44 = vld [vmem:[%s2 + $0x3c] sm:$0xf]
  %v45 = vld [vmem:[%s1] sm:$0xf]
  %v46 = vld [vmem:[%s1 + $0x4] sm:$0xf]
  %v47 = vld [vmem:[%s1 + $0x8] sm:$0xf]
  %v48 = vld [vmem:[%s1 + $0xc] sm:$0xf]
  %v49 = vld [vmem:[%s1 + $0x10] sm:$0xf]
  %v50 = vld [vmem:[%s1 + $0x14] sm:$0xf]
  %v51 = vld [vmem:[%s1 + $0x18] sm:$0xf]
  %v52 = vld [vmem:[%s1 + $0x1c] sm:$0xf]
  %v53 = vld [vmem:[%s3] sm:$0xf]
  %v54 = vld [vmem:[%s3 + $0x4] sm:$0xf]
  %v55 = vld [vmem:[%s3 + $0x8] sm:$0xf]
  %v56 = vld [vmem:[%s3 + $0xc] sm:$0xf]
  %v57 = vld [vmem:[%s3 + $0x10] sm:$0xf]
  %v58 = vld [vmem:[%s3 + $0x14] sm:$0xf]
  %v59 = vld [vmem:[%s3 + $0x18] sm:$0xf]
  %v60 = vld [vmem:[%s3 + $0x1c] sm:$0xf]
  %v61 = vld [vmem:[%s3 + $0x20] sm:$0xf]
  %v62 = vld [vmem:[%s3 + $0x24] sm:$0xf]
  %v63 = vld [vmem:[%s3 + $0x28] sm:$0xf]
  %v64 = vld [vmem:[%s3 + $0x2c] sm:$0xf]
  %v65 = vld [vmem:[%s3 + $0x30] sm:$0xf]
  %v66 = vld [vmem:[%s3 + $0x34] sm:$0xf]
  %v67 = vld [vmem:[%s3 + $0x38] sm:$0xf]
  %v68 = vld [vmem:[%s3 + $0x3c] sm:$0xf]
  %v77 = vunpack.c.l.b16 %v45
  %v78 = vunpack.c.l.b16 %v46
  %v79 = vunpack.c.l.b16 %v47
  %v80 = vunpack.c.l.b16 %v48
  %v81 = vunpack.c.l.b16 %v49
  %v82 = vunpack.c.l.b16 %v50
  %v83 = vunpack.c.l.b16 %v51
  %v84 = vunpack.c.l.b16 %v52
  %v85 = vpack.c.b16 %v78, %v77
  %v86 = vpack.c.b16 %v80, %v79
  %v87 = vpack.c.b16 %v82, %v81
  %v88 = vpack.c.b16 %v84, %v83
  %v109 = vunpack.c.l.b16 %v53
  %v110 = vunpack.c.l.b16 %v54
  %v111 = vunpack.c.l.b16 %v55
  %v112 = vunpack.c.l.b16 %v56
  %v113 = vunpack.c.l.b16 %v57
  %v114 = vunpack.c.l.b16 %v58
  %v115 = vunpack.c.l.b16 %v59
  %v116 = vunpack.c.l.b16 %v60
  %v117 = vunpack.c.l.b16 %v61
  %v118 = vunpack.c.l.b16 %v62
  %v119 = vunpack.c.l.b16 %v63
  %v120 = vunpack.c.l.b16 %v64
  %v121 = vunpack.c.l.b16 %v65
  %v122 = vunpack.c.l.b16 %v66
  %v123 = vunpack.c.l.b16 %v67
  %v124 = vunpack.c.l.b16 %v68
  %v125 = vpack.c.b16 %v110, %v109
  %v126 = vpack.c.b16 %v112, %v111
  %v127 = vpack.c.b16 %v114, %v113
  %v128 = vpack.c.b16 %v116, %v115
  %v129 = vpack.c.b16 %v118, %v117
  %v130 = vpack.c.b16 %v120, %v119
  %v131 = vpack.c.b16 %v122, %v121
  %v132 = vpack.c.b16 %v124, %v123
  %141 = vmatprep.subr.bf16.mxu0 0
  %142 = vmatpush1.bf16.msra.mxu0 %v125
  %143 = vmatprep.subr.bf16.mxu0 0
  %144 = vmatpush1.bf16.msra.mxu0 %v126
  %145 = vmatprep.subr.bf16.mxu0 0
  %146 = vmatpush1.bf16.msra.mxu0 %v127
  %147 = vmatprep.subr.bf16.mxu0 0
  %148 = vmatpush1.bf16.msra.mxu0 %v128
  %149 = vmatprep.subr.bf16.mxu0 0
  %150 = vmatpush1.bf16.msra.mxu0 %v129
  %151 = vmatprep.subr.bf16.mxu0 0
  %152 = vmatpush1.bf16.msra.mxu0 %v130
  %153 = vmatprep.subr.bf16.mxu0 0
  %154 = vmatpush1.bf16.msra.mxu0 %v131
  %155 = vmatprep.subr.bf16.mxu0 0
  %156 = vmatpush1.bf16.msra.mxu0 %v132
  %157 = vmatprep.subr.bf16.mxu0 0
  %158 = vmatpush1.bf16.msra.mxu0 0
  %159 = vmatprep.subr.bf16.mxu0 0
  %160 = vmatpush1.bf16.msra.mxu0 0
  %161 = vmatprep.subr.bf16.mxu0 0
  %162 = vmatpush1.bf16.msra.mxu0 0
  %163 = vmatprep.subr.bf16.mxu0 0
  %164 = vmatpush1.bf16.msra.mxu0 0
  %165 = vmatprep.subr.bf16.mxu0 0
  %166 = vmatpush1.bf16.msra.mxu0 0
  %167 = vmatprep.subr.bf16.mxu0 0
  %168 = vmatpush1.bf16.msra.mxu0 0
  %169 = vmatprep.subr.bf16.mxu0 0
  %170 = vmatpush1.bf16.msra.mxu0 0
  %171 = vmatprep.subr.bf16.mxu0 0
  %172 = vmatpush1.bf16.msra.mxu0 0
  %173 = vmatprep.mubr.bf16.mxu0 0
  %174 = vmatmul.mubr.bf16.gmra.mrb[0].mxu0 %v85
  %v175 = vpop.f32.mrb[0].mxu0
  %v176 = vadd.f32 0.0, %v175
  %v177 = vpop.f32.mrb[0].mxu0
  %v178 = vpop.f32.mrb[0].mxu0
  %v179 = vadd.f32 0.0, %v178
  %v180 = vpop.f32.mrb[0].mxu0
  %181 = vmatprep.mubr.bf16.mxu0 0
  %182 = vmatmul.mubr.bf16.gmra.mrb[0].mxu0 %v86
  %v183 = vpop.f32.mrb[0].mxu0
  %v184 = vadd.f32 0.0, %v183
  %v185 = vpop.f32.mrb[0].mxu0
  %v186 = vpop.f32.mrb[0].mxu0
  %v187 = vadd.f32 0.0, %v186
  %v188 = vpop.f32.mrb[0].mxu0
  %189 = vmatprep.mubr.bf16.mxu0 0
  %190 = vmatmul.mubr.bf16.gmra.mrb[0].mxu0 %v87
  %v191 = vpop.f32.mrb[0].mxu0
  %v192 = vadd.f32 0.0, %v191
  %v193 = vpop.f32.mrb[0].mxu0
  %v194 = vpop.f32.mrb[0].mxu0
  %v195 = vadd.f32 0.0, %v194
  %v196 = vpop.f32.mrb[0].mxu0
  %197 = vmatprep.mubr.bf16.mxu0 0
  %198 = vmatmul.mubr.bf16.gmra.mrb[0].mxu0 %v88
  %v199 = vpop.f32.mrb[0].mxu0
  %v200 = vadd.f32 0.0, %v199
  %v201 = vpop.f32.mrb[0].mxu0
  %v202 = vpop.f32.mrb[0].mxu0
  %v203 = vadd.f32 0.0, %v202
  %v204 = vpop.f32.mrb[0].mxu0
  %205 = vdwg.mxu0
  %v214 = vunpack.c.l.b16 %v21
  %v215 = vunpack.c.l.b16 %v22
  %v216 = vunpack.c.l.b16 %v23
  %v217 = vunpack.c.l.b16 %v24
  %v218 = vunpack.c.l.b16 %v25
  %v219 = vunpack.c.l.b16 %v26
  %v220 = vunpack.c.l.b16 %v27
  %v221 = vunpack.c.l.b16 %v28
  %v222 = vpack.c.b16 %v215, %v214
  %v223 = vpack.c.b16 %v217, %v216
  %v224 = vpack.c.b16 %v219, %v218
  %v225 = vpack.c.b16 %v221, %v220
  %v246 = vunpack.c.l.b16 %v29
  %v247 = vunpack.c.l.b16 %v30
  %v248 = vunpack.c.l.b16 %v31
  %v249 = vunpack.c.l.b16 %v32
  %v250 = vunpack.c.l.b16 %v33
  %v251 = vunpack.c.l.b16 %v34
  %v252 = vunpack.c.l.b16 %v35
  %v253 = vunpack.c.l.b16 %v36
  %v254 = vunpack.c.l.b16 %v37
  %v255 = vunpack.c.l.b16 %v38
  %v256 = vunpack.c.l.b16 %v39
  %v257 = vunpack.c.l.b16 %v40
  %v258 = vunpack.c.l.b16 %v41
  %v259 = vunpack.c.l.b16 %v42
  %v260 = vunpack.c.l.b16 %v43
  %v261 = vunpack.c.l.b16 %v44
  %v262 = vpack.c.b16 %v247, %v246
  %v263 = vpack.c.b16 %v249, %v248
  %v264 = vpack.c.b16 %v251, %v250
  %v265 = vpack.c.b16 %v253, %v252
  %v266 = vpack.c.b16 %v255, %v254
  %v267 = vpack.c.b16 %v257, %v256
  %v268 = vpack.c.b16 %v259, %v258
  %v269 = vpack.c.b16 %v261, %v260
  %278 = vmatprep.subr.bf16.mxu0 0
  %279 = vmatpush1.bf16.msra.mxu0 %v262
  %280 = vmatprep.subr.bf16.mxu0 0
  %281 = vmatpush1.bf16.msra.mxu0 %v263
  %282 = vmatprep.subr.bf16.mxu0 0
  %283 = vmatpush1.bf16.msra.mxu0 %v264
  %284 = vmatprep.subr.bf16.mxu0 0
  %285 = vmatpush1.bf16.msra.mxu0 %v265
  %286 = vmatprep.subr.bf16.mxu0 0
  %287 = vmatpush1.bf16.msra.mxu0 %v266
  %288 = vmatprep.subr.bf16.mxu0 0
  %289 = vmatpush1.bf16.msra.mxu0 %v267
  %290 = vmatprep.subr.bf16.mxu0 0
  %291 = vmatpush1.bf16.msra.mxu0 %v268
  %292 = vmatprep.subr.bf16.mxu0 0
  %293 = vmatpush1.bf16.msra.mxu0 %v269
  %294 = vmatprep.subr.bf16.mxu0 0
  %295 = vmatpush1.bf16.msra.mxu0 0
  %296 = vmatprep.subr.bf16.mxu0 0
  %297 = vmatpush1.bf16.msra.mxu0 0
  %298 = vmatprep.subr.bf16.mxu0 0
  %299 = vmatpush1.bf16.msra.mxu0 0
  %300 = vmatprep.subr.bf16.mxu0 0
  %301 = vmatpush1.bf16.msra.mxu0 0
  %302 = vmatprep.subr.bf16.mxu0 0
  %303 = vmatpush1.bf16.msra.mxu0 0
  %304 = vmatprep.subr.bf16.mxu0 0
  %305 = vmatpush1.bf16.msra.mxu0 0
  %306 = vmatprep.subr.bf16.mxu0 0
  %307 = vmatpush1.bf16.msra.mxu0 0
  %308 = vmatprep.subr.bf16.mxu0 0
  %309 = vmatpush1.bf16.msra.mxu0 0
  %310 = vmatprep.mubr.bf16.mxu0 0
  %311 = vmatmul.mubr.bf16.gmra.mrb[0].mxu0 %v222
  %v312 = vpop.f32.mrb[0].mxu0
  %v313 = vadd.f32 %v176, %v312
  %v314 = vpop.f32.mrb[0].mxu0
  %v315 = vpop.f32.mrb[0].mxu0
  %v316 = vadd.f32 %v179, %v315
  %v317 = vpop.f32.mrb[0].mxu0
  %318 = vmatprep.mubr.bf16.mxu0 0
  %319 = vmatmul.mubr.bf16.gmra.mrb[0].mxu0 %v223
  %v320 = vpop.f32.mrb[0].mxu0
  %v321 = vadd.f32 %v184, %v320
  %v322 = vpop.f32.mrb[0].mxu0
  %v323 = vpop.f32.mrb[0].mxu0
  %v324 = vadd.f32 %v187, %v323
  %v325 = vpop.f32.mrb[0].mxu0
  %326 = vmatprep.mubr.bf16.mxu0 0
  %327 = vmatmul.mubr.bf16.gmra.mrb[0].mxu0 %v224
  %v328 = vpop.f32.mrb[0].mxu0
  %v329 = vadd.f32 %v192, %v328
  %v330 = vpop.f32.mrb[0].mxu0
  %v331 = vpop.f32.mrb[0].mxu0
  %v332 = vadd.f32 %v195, %v331
  %v333 = vpop.f32.mrb[0].mxu0
  %334 = vmatprep.mubr.bf16.mxu0 0
  %335 = vmatmul.mubr.bf16.gmra.mrb[0].mxu0 %v225
  %v336 = vpop.f32.mrb[0].mxu0
  %v337 = vadd.f32 %v200, %v336
  %v338 = vpop.f32.mrb[0].mxu0
  %v339 = vpop.f32.mrb[0].mxu0
  %v340 = vadd.f32 %v203, %v339
  %v341 = vpop.f32.mrb[0].mxu0
  %342 = vdwg.mxu0
  %v343 = vld [vmem:[%s4] sm:$0x1]
  %v345 = vlaneseq
  %v346 = vshrl.u32 %v345, 7
  %v347 = vsub.s32 0, %v346
  %v348 = vrot.slane %v343, %v347
  %v350 = vadd.f32 %v313, %v348
  %v351 = vadd.f32 %v316, %v348
  %v352 = vadd.f32 %v321, %v348
  %v353 = vadd.f32 %v324, %v348
  %v354 = vadd.f32 %v329, %v348
  %v355 = vadd.f32 %v332, %v348
  %v356 = vadd.f32 %v337, %v348
  %v357 = vadd.f32 %v340, %v348
  %358 = vst [vmem:[%s5] sm:$0xff] %v350
  %359 = vst [vmem:[%s5 + $0x8] sm:$0xff] %v351
  %360 = vst [vmem:[%s5 + $0x10] sm:$0xff] %v352
  %361 = vst [vmem:[%s5 + $0x18] sm:$0xff] %v353
  %362 = vst [vmem:[%s5 + $0x20] sm:$0xff] %v354
  %363 = vst [vmem:[%s5 + $0x28] sm:$0xff] %v355
  %364 = vst [vmem:[%s5 + $0x30] sm:$0xff] %v356
  %365 = vst [vmem:[%s5 + $0x38] sm:$0xff] %v357
  // Predicated region
  $region22: #{bilstm_forward.5} parent=0 // pred_check
    _
  $region23: #{bilstm_forward.5} parent=0 // pred_check_branch
    %367 = sbr.rel (0) target = $region25
  $region24: #{bilstm_forward.5} parent=0 // pred_region
    _
  $region25: #{bilstm_forward.5} parent=0 // pred_fallthru
    _
  // Predicated region
  $region26: #{bilstm_forward.5} parent=0 // pred_check
    _
  $region27: #{bilstm_forward.5} parent=0 // pred_check_branch
    %369 = sbr.rel (0) target = $region29
  $region28: #{bilstm_forward.5} parent=0 // pred_region
    _
  $region29: #{bilstm_forward.5} parent=0 // pred_fallthru
    _

// kernel: bilstm_forward.4
$region0: #{bilstm_forward.4}
  #allocation0 [shape = 'u32[]', space=smem, size = 0x4, offset = 0x4, fixed_abs, tag = 'smem constant byte address 0x4 - core index']
  #allocation1 [shape = 'u32[144,128]{1,0:T(1,128)}', space=vmem, size = 0x12000, scoped, tag = 'internal scratch']
  #allocation2 [shape = 'f32[8,128]{1,0:T(8,128)}', space=vmem, size = 0x1000, scoped, tag = 'scratch operand']
  #allocation3 [shape = 'f32[8,128]{1,0:T(8,128)}', space=vmem, size = 0x1000, scoped, tag = 'scratch operand']
  #allocation4 [shape = 'f32[8,128]{1,0:T(8,128)}', space=vmem, size = 0x1000, scoped, tag = 'scratch operand']
  #allocation5 [shape = 'f32[8,128]{1,0:T(8,128)}', space=vmem, size = 0x1000, scoped, tag = 'scratch operand']
  #allocation6 [shape = 'bf16[2,128,512]{2,1,0:T(16,128)(2,1)}', space=vmem, size = 0x40000, scoped, tag = 'scratch operand']
  #allocation7 [shape = 's32[1]{0}', space=sflag, size = 0x4, scoped, tag = 'scratch operand']
  #allocation10 [shape = 's32[]', space=sflag, size = 0x4, offset = 0, fixed_abs, tag = 'sflag constant byte address 0x0 - dummy sync flag']
  %s0 = inlined_call_operand.vmem [shape: bf16[8,8,1024], index: 0, kind: input, shape index: {}, may-alias: {0,1}]
  %s1 = inlined_call_operand.vmem [shape: bf16[8,8,1024], index: 1, kind: input, shape index: {}, may-alias: {0,1}]
  %s2 = inlined_call_operand.vmem [shape: bf16[2,128,512], index: 2, kind: input, shape index: {}]
  %s3 = inlined_call_operand.vmem [shape: bf16[8,8,128], index: 3, kind: output, shape index: {0}]
  %s4 = inlined_call_operand.vmem [shape: bf16[8,8,128], index: 4, kind: output, shape index: {1}]
  %5 = xla_tuple %s3, %s4
  %s6 = sld [smem:[#allocation0]]
  $region113: #{bilstm_forward.4} parent=0
    _
  %s8 = ssub.s32 1, %s6
  %s9 = scalar_select 0, %s8, %s6
  $region1: #{bilstm_forward.4} parent=0
    #allocation8 [shape = 'u8[65536]{0}', space=vmem, size = 0x10000, scoped, tag = 'input window, operand 0, single buffered']
    #allocation9 [shape = 'u8[65536]{0}', space=vmem, size = 0x10000, scoped, tag = 'input window, operand 1, single buffered']
    // Predicated region
    $region2: #{bilstm_forward.4} parent=1 // pred_check
      _
    $region3: #{bilstm_forward.4} parent=1 // pred_check_branch
      %11 = sbr.rel (0) target = $region5
    $region4: #{bilstm_forward.4} parent=1 // pred_region
      // Predicated region
      $region6: #{bilstm_forward.4} parent=4 // pred_check
        _
      $region7: #{bilstm_forward.4} parent=4 // pred_check_branch
        %13 = sbr.rel (0) target = $region9
      $region8: #{bilstm_forward.4} parent=4 // pred_region
        // Predicated region
        $region10: #{bilstm_forward.4} parent=8 // pred_check
          _
        $region11: #{bilstm_forward.4} parent=8 // pred_check_branch
          %15 = sbr.rel (0) target = $region13
        $region12: #{bilstm_forward.4} parent=8 // pred_region
          loop: start=0, step=1, limit=1
          $region14: #{bilstm_forward.4} parent=12 // loop_pre_header
            _
          $region15: #{bilstm_forward.4} parent=12 // loop_header
            %s17 = sphi 0, %s21
            %p18 = scmp.ge.s32.totalorder %s17, 1
            %s22 = sphi %s0, %s0
            %s23 = sphi [#allocation8], [#allocation8]
          $region16: #{bilstm_forward.4} parent=12 // loop_header_branch
            %20 = sbr.rel (%p18) target = $region20
          $region17: #{bilstm_forward.4} parent=12 // loop_body
            %v24 = vld [vmem:[%s22] sm:$0xff]
            %25 = vst [vmem:[%s23] sm:$0xff] %v24
            %v26 = vld [vmem:[%s22 + $0x8] sm:$0xff]
            %27 = vst [vmem:[%s23 + $0x8] sm:$0xff] %v26
            %v28 = vld [vmem:[%s22 + $0x20] sm:$0xff]
            %29 = vst [vmem:[%s23 + $0x10] sm:$0xff] %v28
            %v30 = vld [vmem:[%s22 + $0x28] sm:$0xff]
            %31 = vst [vmem:[%s23 + $0x18] sm:$0xff] %v30
            %v32 = vld [vmem:[%s22 + $0x40] sm:$0xff]
            %33 = vst [vmem:[%s23 + $0x20] sm:$0xff] %v32
            %v34 = vld [vmem:[%s22 + $0x48] sm:$0xff]
            %35 = vst [vmem:[%s23 + $0x28] sm:$0xff] %v34
            %v36 = vld [vmem:[%s22 + $0x60] sm:$0xff]
            %37 = vst [vmem:[%s23 + $0x30] sm:$0xff] %v36
            %v38 = vld [vmem:[%s22 + $0x68] sm:$0xff]
            %39 = vst [vmem:[%s23 + $0x38] sm:$0xff] %v38
            %v40 = vld [vmem:[%s22 + $0x80] sm:$0xff]
            %41 = vst [vmem:[%s23 + $0x40] sm:$0xff] %v40
            %v42 = vld [vmem:[%s22 + $0x88] sm:$0xff]
            %43 = vst [vmem:[%s23 + $0x48] sm:$0xff] %v42
            %v44 = vld [vmem:[%s22 + $0xa0] sm:$0xff]
            %45 = vst [vmem:[%s23 + $0x50] sm:$0xff] %v44
            %v46 = vld [vmem:[%s22 + $0xa8] sm:$0xff]
            %47 = vst [vmem:[%s23 + $0x58] sm:$0xff] %v46
            %v48 = vld [vmem:[%s22 + $0xc0] sm:$0xff]
            %49 = vst [vmem:[%s23 + $0x60] sm:$0xff] %v48
            %v50 = vld [vmem:[%s22 + $0xc8] sm:$0xff]
            %51 = vst [vmem:[%s23 + $0x68] sm:$0xff] %v50
            %v52 = vld [vmem:[%s22 + $0xe0] sm:$0xff]
            %53 = vst [vmem:[%s23 + $0x70] sm:$0xff] %v52
            %v54 = vld [vmem:[%s22 + $0xe8] sm:$0xff]
            %55 = vst [vmem:[%s23 + $0x78] sm:$0xff] %v54
          $region18: #{bilstm_forward.4} parent=12 // loop_footer
            %s21 = sadd.s32 1, %s17
          $region19: #{bilstm_forward.4} parent=12 // loop_footer_branch
            %16 = sbr.rel target = $region15
          $region20: #{bilstm_forward.4} parent=12 // loop_exit
            _
        $region13: #{bilstm_forward.4} parent=8 // pred_fallthru
          _
        // Predicated region
        $region21: #{bilstm_forward.4} parent=8 // pred_check
          _
        $region22: #{bilstm_forward.4} parent=8 // pred_check_branch
          %57 = sbr.rel target = $region24
        $region23: #{bilstm_forward.4} parent=8 // pred_region
          _
        $region24: #{bilstm_forward.4} parent=8 // pred_fallthru
          _
      $region9: #{bilstm_forward.4} parent=4 // pred_fallthru
        _
      %58 = vnop
    $region5: #{bilstm_forward.4} parent=1 // pred_fallthru
      _
    // Predicated region
    $region25: #{bilstm_forward.4} parent=1 // pred_check
      _
    $region26: #{bilstm_forward.4} parent=1 // pred_check_branch
      %60 = sbr.rel (0) target = $region28
    $region27: #{bilstm_forward.4} parent=1 // pred_region
      %s61 = ssub.s32 0, 0
      %s62 = smul.u32 8, %s61
      %s63 = smul.addr %s62, 8
      %s64 = sadd.s32 4, %s63
      %s65 = smul.addr %s64, 4
      %s66 = scalar_lea.vmem %s1, %s65
      // Predicated region
      $region29: #{bilstm_forward.4} parent=27 // pred_check
        _
      $region30: #{bilstm_forward.4} parent=27 // pred_check_branch
        %68 = sbr.rel (0) target = $region32
      $region31: #{bilstm_forward.4} parent=27 // pred_region
        // Predicated region
        $region33: #{bilstm_forward.4} parent=31 // pred_check
          _
        $region34: #{bilstm_forward.4} parent=31 // pred_check_branch
          %70 = sbr.rel (0) target = $region36
        $region35: #{bilstm_forward.4} parent=31 // pred_region
          loop: start=0, step=1, limit=1
          $region37: #{bilstm_forward.4} parent=35 // loop_pre_header
            _
          $region38: #{bilstm_forward.4} parent=35 // loop_header
            %s72 = sphi 0, %s76
            %p73 = scmp.ge.s32.totalorder %s72, 1
            %s77 = sphi %s66, %s66
            %s78 = sphi [#allocation9], [#allocation9]
          $region39: #{bilstm_forward.4} parent=35 // loop_header_branch
            %75 = sbr.rel (%p73) target = $region43
          $region40: #{bilstm_forward.4} parent=35 // loop_body
            %v79 = vld [vmem:[%s77] sm:$0xff]
            %80 = vst [vmem:[%s78] sm:$0xff] %v79
            %v81 = vld [vmem:[%s77 + $0x8] sm:$0xff]
            %82 = vst [vmem:[%s78 + $0x8] sm:$0xff] %v81
            %v83 = vld [vmem:[%s77 + $0x20] sm:$0xff]
            %84 = vst [vmem:[%s78 + $0x10] sm:$0xff] %v83
            %v85 = vld [vmem:[%s77 + $0x28] sm:$0xff]
            %86 = vst [vmem:[%s78 + $0x18] sm:$0xff] %v85
            %v87 = vld [vmem:[%s77 + $0x40] sm:$0xff]
            %88 = vst [vmem:[%s78 + $0x20] sm:$0xff] %v87
            %v89 = vld [vmem:[%s77 + $0x48] sm:$0xff]
            %90 = vst [vmem:[%s78 + $0x28] sm:$0xff] %v89
            %v91 = vld [vmem:[%s77 + $0x60] sm:$0xff]
            %92 = vst [vmem:[%s78 + $0x30] sm:$0xff] %v91
            %v93 = vld [vmem:[%s77 + $0x68] sm:$0xff]
            %94 = vst [vmem:[%s78 + $0x38] sm:$0xff] %v93
            %v95 = vld [vmem:[%s77 + $0x80] sm:$0xff]
            %96 = vst [vmem:[%s78 + $0x40] sm:$0xff] %v95
            %v97 = vld [vmem:[%s77 + $0x88] sm:$0xff]
            %98 = vst [vmem:[%s78 + $0x48] sm:$0xff] %v97
            %v99 = vld [vmem:[%s77 + $0xa0] sm:$0xff]
            %100 = vst [vmem:[%s78 + $0x50] sm:$0xff] %v99
            %v101 = vld [vmem:[%s77 + $0xa8] sm:$0xff]
            %102 = vst [vmem:[%s78 + $0x58] sm:$0xff] %v101
            %v103 = vld [vmem:[%s77 + $0xc0] sm:$0xff]
            %104 = vst [vmem:[%s78 + $0x60] sm:$0xff] %v103
            %v105 = vld [vmem:[%s77 + $0xc8] sm:$0xff]
            %106 = vst [vmem:[%s78 + $0x68] sm:$0xff] %v105
            %v107 = vld [vmem:[%s77 + $0xe0] sm:$0xff]
            %108 = vst [vmem:[%s78 + $0x70] sm:$0xff] %v107
            %v109 = vld [vmem:[%s77 + $0xe8] sm:$0xff]
            %110 = vst [vmem:[%s78 + $0x78] sm:$0xff] %v109
          $region41: #{bilstm_forward.4} parent=35 // loop_footer
            %s76 = sadd.s32 1, %s72
          $region42: #{bilstm_forward.4} parent=35 // loop_footer_branch
            %71 = sbr.rel target = $region38
          $region43: #{bilstm_forward.4} parent=35 // loop_exit
            _
        $region36: #{bilstm_forward.4} parent=31 // pred_fallthru
          _
        // Predicated region
        $region44: #{bilstm_forward.4} parent=31 // pred_check
          _
        $region45: #{bilstm_forward.4} parent=31 // pred_check_branch
          %112 = sbr.rel target = $region47
        $region46: #{bilstm_forward.4} parent=31 // pred_region
          _
        $region47: #{bilstm_forward.4} parent=31 // pred_fallthru
          _
      $region32: #{bilstm_forward.4} parent=27 // pred_fallthru
        _
      %113 = vnop
    $region28: #{bilstm_forward.4} parent=1 // pred_fallthru
      _
    // Predicated region
    $region48: #{bilstm_forward.4} parent=1 // pred_check
      _
    $region49: #{bilstm_forward.4} parent=1 // pred_check_branch
      %115 = sbr.rel (0) target = $region51
    $region50: #{bilstm_forward.4} parent=1 // pred_region
      _
    $region51: #{bilstm_forward.4} parent=1 // pred_fallthru
      _
    // Predicated region
    $region52: #{bilstm_forward.4} parent=1 // pred_check
      _
    $region53: #{bilstm_forward.4} parent=1 // pred_check_branch
      %117 = sbr.rel (0) target = $region55
    $region54: #{bilstm_forward.4} parent=1 // pred_region
      _
    $region55: #{bilstm_forward.4} parent=1 // pred_fallthru
      _
    %s118 = ssub.s32 0, 0
    %s119 = smul.u32 8, %s118
    %p120 = scmp.lt.s32.totalorder %s119, 7
    %s121 = scalar_select %p120, %s119, 7
    %s122 = smul.addr %s121, 4
    %s123 = scalar_lea.vmem %s4, %s122
    %s124 = ssub.s32 0, 0
    %s125 = smul.u32 8, %s124
    %s126 = ssub.s32 0, 0
    %s127 = smul.u32 8, %s126
    %p128 = scmp.lt.s32.totalorder %s127, 7
    %s129 = scalar_select %p128, %s127, 7
    %s130 = smul.addr %s129, 4
    %s131 = scalar_lea.vmem %s4, %s130
    %s132 = ssub.s32 0, 0
    %s133 = smul.u32 8, %s132
    %p135 = scmp.eq.s32.totalorder 0, 0
    // Predicated region
    $region56: #{bilstm_forward.4} parent=1 // pred_check
      %p136 = pneg %p135
    $region57: #{bilstm_forward.4} parent=1 // pred_check_branch
      %138 = sbr.rel (%p136) target = $region59
    $region58: #{bilstm_forward.4} parent=1 // pred_region
      %139 = vst [vmem:[#allocation2] sm:$0xff] 0.0
      %140 = vst [vmem:[#allocation3] sm:$0xff] 0.0
      %141 = vst [vmem:[#allocation4] sm:$0xff] 0.0
      %142 = vst [vmem:[#allocation5] sm:$0xff] 0.0
      %p144 = scmp.lt.u32.totalorder 4, 8
      %p145 = pneg %p144
      // Predicated region
      $region60: #{bilstm_forward.4} parent=58 // pred_check
        _
      $region61: #{bilstm_forward.4} parent=58 // pred_check_branch
        %147 = sbr.rel (%p144) target = $region63
      $region62: #{bilstm_forward.4} parent=58 // pred_region
        %s416 = sand.u32 4, 7
        %p417 = scmp.eq.s32.totalorder %s416, 0
        %p418 = pneg %p417
        // Predicated region
        $region75: #{bilstm_forward.4} parent=62 // pred_check
          _
        $region76: #{bilstm_forward.4} parent=62 // pred_check_branch
          %420 = sbr.rel (%p417) target = $region78
        $region77: #{bilstm_forward.4} parent=62 // pred_region
          %s421 = sand.u32 4, 7
          %s422 = ssub.s32 4, %s421
          %s423 = scalar_lea.vmem %s2, %s422
          %s424 = ssub.s32 4, %s421
          %s425 = scalar_lea.vmem [#allocation6], %s424
          loop: start=0, step=1, limit=1
          $region79: #{bilstm_forward.4} parent=77 // loop_pre_header
            _
          $region80: #{bilstm_forward.4} parent=77 // loop_header
            %s427 = sphi 0, %s431
            %p428 = scmp.ge.s32.totalorder %s427, 1
            %s432 = sphi %s2, %s2
            %s433 = sphi [#allocation6], [#allocation6]
          $region81: #{bilstm_forward.4} parent=77 // loop_header_branch
            %430 = sbr.rel (%p428) target = $region85
          $region82: #{bilstm_forward.4} parent=77 // loop_body
            _
          $region83: #{bilstm_forward.4} parent=77 // loop_footer
            %s431 = sadd.s32 1, %s427
          $region84: #{bilstm_forward.4} parent=77 // loop_footer_branch
            %426 = sbr.rel target = $region80
          $region85: #{bilstm_forward.4} parent=77 // loop_exit
            _
          %s434 = sshllo.u32 0, %s421
          loop: start=0, step=1, limit=1
          $region86: #{bilstm_forward.4} parent=77 // loop_pre_header
            _
          $region87: #{bilstm_forward.4} parent=77 // loop_header
            %s436 = sphi 0, %s440
            %p437 = scmp.ge.s32.totalorder %s436, 1
            %s441 = sphi %s423, %s423
            %s442 = sphi %s425, %s425
          $region88: #{bilstm_forward.4} parent=77 // loop_header_branch
            %439 = sbr.rel (%p437) target = $region92
          $region89: #{bilstm_forward.4} parent=77 // loop_body
            %v443 = vld [vmem:[%s441] sm:%s434]
            %444 = vst [vmem:[%s442] sm:%s434] %v443
            %v445 = vld [vmem:[%s441 + $0x10] sm:%s434]
            %446 = vst [vmem:[%s442 + $0x4] sm:%s434] %v445
            %v447 = vld [vmem:[%s441 + $0x4] sm:%s434]
            %448 = vst [vmem:[%s442 + $0x8] sm:%s434] %v447
            %v449 = vld [vmem:[%s441 + $0x14] sm:%s434]
            %450 = vst [vmem:[%s442 + $0xc] sm:%s434] %v449
            %v451 = vld [vmem:[%s441 + $0x8] sm:%s434]
            %452 = vst [vmem:[%s442 + $0x10] sm:%s434] %v451
            %v453 = vld [vmem:[%s441 + $0x18] sm:%s434]
            %454 = vst [vmem:[%s442 + $0x14] sm:%s434] %v453
            %v455 = vld [vmem:[%s441 + $0xc] sm:%s434]
            %456 = vst [vmem:[%s442 + $0x18] sm:%s434] %v455
            %v457 = vld [vmem:[%s441 + $0x1c] sm:%s434]
            %458 = vst [vmem:[%s442 + $0x1c] sm:%s434] %v457
            %v459 = vld [vmem:[%s441 + $0x20] sm:%s434]
            %460 = vst [vmem:[%s442 + $0x20] sm:%s434] %v459
            %v461 = vld [vmem:[%s441 + $0x30] sm:%s434]
            %462 = vst [vmem:[%s442 + $0x24] sm:%s434] %v461
            %v463 = vld [vmem:[%s441 + $0x24] sm:%s434]
            %464 = vst [vmem:[%s442 + $0x28] sm:%s434] %v463
            %v465 = vld [vmem:[%s441 + $0x34] sm:%s434]
            %466 = vst [vmem:[%s442 + $0x2c] sm:%s434] %v465
            %v467 = vld [vmem:[%s441 + $0x28] sm:%s434]
            %468 = vst [vmem:[%s442 + $0x30] sm:%s434] %v467
            %v469 = vld [vmem:[%s441 + $0x38] sm:%s434]
            %470 = vst [vmem:[%s442 + $0x34] sm:%s434] %v469
            %v471 = vld [vmem:[%s441 + $0x2c] sm:%s434]
            %472 = vst [vmem:[%s442 + $0x38] sm:%s434] %v471
            %v473 = vld [vmem:[%s441 + $0x3c] sm:%s434]
            %474 = vst [vmem:[%s442 + $0x3c] sm:%s434] %v473
            %v475 = vld [vmem:[%s441 + $0x40] sm:%s434]
            %476 = vst [vmem:[%s442 + $0x40] sm:%s434] %v475
            %v477 = vld [vmem:[%s441 + $0x50] sm:%s434]
            %478 = vst [vmem:[%s442 + $0x44] sm:%s434] %v477
            %v479 = vld [vmem:[%s441 + $0x44] sm:%s434]
            %480 = vst [vmem:[%s442 + $0x48] sm:%s434] %v479
            %v481 = vld [vmem:[%s441 + $0x54] sm:%s434]
            %482 = vst [vmem:[%s442 + $0x4c] sm:%s434] %v481
            %v483 = vld [vmem:[%s441 + $0x48] sm:%s434]
            %484 = vst [vmem:[%s442 + $0x50] sm:%s434] %v483
            %v485 = vld [vmem:[%s441 + $0x58] sm:%s434]
            %486 = vst [vmem:[%s442 + $0x54] sm:%s434] %v485
            %v487 = vld [vmem:[%s441 + $0x4c] sm:%s434]
            %488 = vst [vmem:[%s442 + $0x58] sm:%s434] %v487
            %v489 = vld [vmem:[%s441 + $0x5c] sm:%s434]
            %490 = vst [vmem:[%s442 + $0x5c] sm:%s434] %v489
            %v491 = vld [vmem:[%s441 + $0x60] sm:%s434]
            %492 = vst [vmem:[%s442 + $0x60] sm:%s434] %v491
            %v493 = vld [vmem:[%s441 + $0x70] sm:%s434]
            %494 = vst [vmem:[%s442 + $0x64] sm:%s434] %v493
            %v495 = vld [vmem:[%s441 + $0x64] sm:%s434]
            %496 = vst [vmem:[%s442 + $0x68] sm:%s434] %v495
            %v497 = vld [vmem:[%s441 + $0x74] sm:%s434]
            %498 = vst [vmem:[%s442 + $0x6c] sm:%s434] %v497
            %v499 = vld [vmem:[%s441 + $0x68] sm:%s434]
            %500 = vst [vmem:[%s442 + $0x70] sm:%s434] %v499
            %v501 = vld [vmem:[%s441 + $0x78] sm:%s434]
            %502 = vst [vmem:[%s442 + $0x74] sm:%s434] %v501
            %v503 = vld [vmem:[%s441 + $0x6c] sm:%s434]
            %504 = vst [vmem:[%s442 + $0x78] sm:%s434] %v503
            %v505 = vld [vmem:[%s441 + $0x7c] sm:%s434]
            %506 = vst [vmem:[%s442 + $0x7c] sm:%s434] %v505
            %v507 = vld [vmem:[%s441 + $0x80] sm:%s434]
            %508 = vst [vmem:[%s442 + $0x80] sm:%s434] %v507
            %v509 = vld [vmem:[%s441 + $0x90] sm:%s434]
            %510 = vst [vmem:[%s442 + $0x84] sm:%s434] %v509
            %v511 = vld [vmem:[%s441 + $0x84] sm:%s434]
            %512 = vst [vmem:[%s442 + $0x88] sm:%s434] %v511
            %v513 = vld [vmem:[%s441 + $0x94] sm:%s434]
            %514 = vst [vmem:[%s442 + $0x8c] sm:%s434] %v513
            %v515 = vld [vmem:[%s441 + $0x88] sm:%s434]
            %516 = vst [vmem:[%s442 + $0x90] sm:%s434] %v515
            %v517 = vld [vmem:[%s441 + $0x98] sm:%s434]
            %518 = vst [vmem:[%s442 + $0x94] sm:%s434] %v517
            %v519 = vld [vmem:[%s441 + $0x8c] sm:%s434]
            %520 = vst [vmem:[%s442 + $0x98] sm:%s434] %v519
            %v521 = vld [vmem:[%s441 + $0x9c] sm:%s434]
            %522 = vst [vmem:[%s442 + $0x9c] sm:%s434] %v521
            %v523 = vld [vmem:[%s441 + $0xa0] sm:%s434]
            %524 = vst [vmem:[%s442 + $0xa0] sm:%s434] %v523
            %v525 = vld [vmem:[%s441 + $0xb0] sm:%s434]
            %526 = vst [vmem:[%s442 + $0xa4] sm:%s434] %v525
            %v527 = vld [vmem:[%s441 + $0xa4] sm:%s434]
            %528 = vst [vmem:[%s442 + $0xa8] sm:%s434] %v527
            %v529 = vld [vmem:[%s441 + $0xb4] sm:%s434]
            %530 = vst [vmem:[%s442 + $0xac] sm:%s434] %v529
            %v531 = vld [vmem:[%s441 + $0xa8] sm:%s434]
            %532 = vst [vmem:[%s442 + $0xb0] sm:%s434] %v531
            %v533 = vld [vmem:[%s441 + $0xb8] sm:%s434]
            %534 = vst [vmem:[%s442 + $0xb4] sm:%s434] %v533
            %v535 = vld [vmem:[%s441 + $0xac] sm:%s434]
            %536 = vst [vmem:[%s442 + $0xb8] sm:%s434] %v535
            %v537 = vld [vmem:[%s441 + $0xbc] sm:%s434]
            %538 = vst [vmem:[%s442 + $0xbc] sm:%s434] %v537
            %v539 = vld [vmem:[%s441 + $0xc0] sm:%s434]
            %540 = vst [vmem:[%s442 + $0xc0] sm:%s434] %v539
            %v541 = vld [vmem:[%s441 + $0xd0] sm:%s434]
            %542 = vst [vmem:[%s442 + $0xc4] sm:%s434] %v541
            %v543 = vld [vmem:[%s441 + $0xc4] sm:%s434]
            %544 = vst [vmem:[%s442 + $0xc8] sm:%s434] %v543
            %v545 = vld [vmem:[%s441 + $0xd4] sm:%s434]
            %546 = vst [vmem:[%s442 + $0xcc] sm:%s434] %v545
            %v547 = vld [vmem:[%s441 + $0xc8] sm:%s434]
            %548 = vst [vmem:[%s442 + $0xd0] sm:%s434] %v547
            %v549 = vld [vmem:[%s441 + $0xd8] sm:%s434]
            %550 = vst [vmem:[%s442 + $0xd4] sm:%s434] %v549
            %v551 = vld [vmem:[%s441 + $0xcc] sm:%s434]
            %552 = vst [vmem:[%s442 + $0xd8] sm:%s434] %v551
            %v553 = vld [vmem:[%s441 + $0xdc] sm:%s434]
            %554 = vst [vmem:[%s442 + $0xdc] sm:%s434] %v553
            %v555 = vld [vmem:[%s441 + $0xe0] sm:%s434]
            %556 = vst [vmem:[%s442 + $0xe0] sm:%s434] %v555
            %v557 = vld [vmem:[%s441 + $0xf0] sm:%s434]
            %558 = vst [vmem:[%s442 + $0xe4] sm:%s434] %v557
            %v559 = vld [vmem:[%s441 + $0xe4] sm:%s434]
            %560 = vst [vmem:[%s442 + $0xe8] sm:%s434] %v559
            %v561 = vld [vmem:[%s441 + $0xf4] sm:%s434]
            %562 = vst [vmem:[%s442 + $0xec] sm:%s434] %v561
            %v563 = vld [vmem:[%s441 + $0xe8] sm:%s434]
            %564 = vst [vmem:[%s442 + $0xf0] sm:%s434] %v563
            %v565 = vld [vmem:[%s441 + $0xf8] sm:%s434]
            %566 = vst [vmem:[%s442 + $0xf4] sm:%s434] %v565
            %v567 = vld [vmem:[%s441 + $0xec] sm:%s434]
            %568 = vst [vmem:[%s442 + $0xf8] sm:%s434] %v567
            %v569 = vld [vmem:[%s441 + $0xfc] sm:%s434]
            %570 = vst [vmem:[%s442 + $0xfc] sm:%s434] %v569
            %v571 = vld [vmem:[%s441 + $0x100] sm:%s434]
            %572 = vst [vmem:[%s442 + $0x100] sm:%s434] %v571
            %v573 = vld [vmem:[%s441 + $0x110] sm:%s434]
            %574 = vst [vmem:[%s442 + $0x104] sm:%s434] %v573
            %v575 = vld [vmem:[%s441 + $0x104] sm:%s434]
            %576 = vst [vmem:[%s442 + $0x108] sm:%s434] %v575
            %v577 = vld [vmem:[%s441 + $0x114] sm:%s434]
            %578 = vst [vmem:[%s442 + $0x10c] sm:%s434] %v577
            %v579 = vld [vmem:[%s441 + $0x108] sm:%s434]
            %580 = vst [vmem:[%s442 + $0x110] sm:%s434] %v579
            %v581 = vld [vmem:[%s441 + $0x118] sm:%s434]
            %582 = vst [vmem:[%s442 + $0x114] sm:%s434] %v581
            %v583 = vld [vmem:[%s441 + $0x10c] sm:%s434]
            %584 = vst [vmem:[%s442 + $0x118] sm:%s434] %v583
            %v585 = vld [vmem:[%s441 + $0x11c] sm:%s434]
            %586 = vst [vmem:[%s442 + $0x11c] sm:%s434] %v585
            %v587 = vld [vmem:[%s441 + $0x120] sm:%s434]
            %588 = vst [vmem:[%s442 + $0x120] sm:%s434] %v587
            %v589 = vld [vmem:[%s441 + $0x130] sm:%s434]
            %590 = vst [vmem:[%s442 + $0x124] sm:%s434] %v589
            %v591 = vld [vmem:[%s441 + $0x124] sm:%s434]
            %592 = vst [vmem:[%s442 + $0x128] sm:%s434] %v591
            %v593 = vld [vmem:[%s441 + $0x134] sm:%s434]
            %594 = vst [vmem:[%s442 + $0x12c] sm:%s434] %v593
            %v595 = vld [vmem:[%s441 + $0x128] sm:%s434]
            %596 = vst [vmem:[%s442 + $0x130] sm:%s434] %v595
            %v597 = vld [vmem:[%s441 + $0x138] sm:%s434]
            %598 = vst [vmem:[%s442 + $0x134] sm:%s434] %v597
            %v599 = vld [vmem:[%s441 + $0x12c] sm:%s434]
            %600 = vst [vmem:[%s442 + $0x138] sm:%s434] %v599
            %v601 = vld [vmem:[%s441 + $0x13c] sm:%s434]
            %602 = vst [vmem:[%s442 + $0x13c] sm:%s434] %v601
            %v603 = vld [vmem:[%s441 + $0x140] sm:%s434]
            %604 = vst [vmem:[%s442 + $0x140] sm:%s434] %v603
            %v605 = vld [vmem:[%s441 + $0x150] sm:%s434]
            %606 = vst [vmem:[%s442 + $0x144] sm:%s434] %v605
            %v607 = vld [vmem:[%s441 + $0x144] sm:%s434]
            %608 = vst [vmem:[%s442 + $0x148] sm:%s434] %v607
            %v609 = vld [vmem:[%s441 + $0x154] sm:%s434]
            %610 = vst [vmem:[%s442 + $0x14c] sm:%s434] %v609
            %v611 = vld [vmem:[%s441 + $0x148] sm:%s434]
            %612 = vst [vmem:[%s442 + $0x150] sm:%s434] %v611
            %v613 = vld [vmem:[%s441 + $0x158] sm:%s434]
            %614 = vst [vmem:[%s442 + $0x154] sm:%s434] %v613
            %v615 = vld [vmem:[%s441 + $0x14c] sm:%s434]
            %616 = vst [vmem:[%s442 + $0x158] sm:%s434] %v615
            %v617 = vld [vmem:[%s441 + $0x15c] sm:%s434]
            %618 = vst [vmem:[%s442 + $0x15c] sm:%s434] %v617
            %v619 = vld [vmem:[%s441 + $0x160] sm:%s434]
            %620 = vst [vmem:[%s442 + $0x160] sm:%s434] %v619
            %v621 = vld [vmem:[%s441 + $0x170] sm:%s434]
            %622 = vst [vmem:[%s442 + $0x164] sm:%s434] %v621
            %v623 = vld [vmem:[%s441 + $0x164] sm:%s434]
            %624 = vst [vmem:[%s442 + $0x168] sm:%s434] %v623
            %v625 = vld [vmem:[%s441 + $0x174] sm:%s434]
            %626 = vst [vmem:[%s442 + $0x16c] sm:%s434] %v625
            %v627 = vld [vmem:[%s441 + $0x168] sm:%s434]
            %628 = vst [vmem:[%s442 + $0x170] sm:%s434] %v627
            %v629 = vld [vmem:[%s441 + $0x178] sm:%s434]
            %630 = vst [vmem:[%s442 + $0x174] sm:%s434] %v629
            %v631 = vld [vmem:[%s441 + $0x16c] sm:%s434]
            %632 = vst [vmem:[%s442 + $0x178] sm:%s434] %v631
            %v633 = vld [vmem:[%s441 + $0x17c] sm:%s434]
            %634 = vst [vmem:[%s442 + $0x17c] sm:%s434] %v633
            %v635 = vld [vmem:[%s441 + $0x180] sm:%s434]
            %636 = vst [vmem:[%s442 + $0x180] sm:%s434] %v635
            %v637 = vld [vmem:[%s441 + $0x190] sm:%s434]
            %638 = vst [vmem:[%s442 + $0x184] sm:%s434] %v637
            %v639 = vld [vmem:[%s441 + $0x184] sm:%s434]
            %640 = vst [vmem:[%s442 + $0x188] sm:%s434] %v639
            %v641 = vld [vmem:[%s441 + $0x194] sm:%s434]
            %642 = vst [vmem:[%s442 + $0x18c] sm:%s434] %v641
            %v643 = vld [vmem:[%s441 + $0x188] sm:%s434]
            %644 = vst [vmem:[%s442 + $0x190] sm:%s434] %v643
            %v645 = vld [vmem:[%s441 + $0x198] sm:%s434]
            %646 = vst [vmem:[%s442 + $0x194] sm:%s434] %v645
            %v647 = vld [vmem:[%s441 + $0x18c] sm:%s434]
            %648 = vst [vmem:[%s442 + $0x198] sm:%s434] %v647
            %v649 = vld [vmem:[%s441 + $0x19c] sm:%s434]
            %650 = vst [vmem:[%s442 + $0x19c] sm:%s434] %v649
            %v651 = vld [vmem:[%s441 + $0x1a0] sm:%s434]
            %652 = vst [vmem:[%s442 + $0x1a0] sm:%s434] %v651
            %v653 = vld [vmem:[%s441 + $0x1b0] sm:%s434]
            %654 = vst [vmem:[%s442 + $0x1a4] sm:%s434] %v653
            %v655 = vld [vmem:[%s441 + $0x1a4] sm:%s434]
            %656 = vst [vmem:[%s442 + $0x1a8] sm:%s434] %v655
            %v657 = vld [vmem:[%s441 + $0x1b4] sm:%s434]
            %658 = vst [vmem:[%s442 + $0x1ac] sm:%s434] %v657
            %v659 = vld [vmem:[%s441 + $0x1a8] sm:%s434]
            %660 = vst [vmem:[%s442 + $0x1b0] sm:%s434] %v659
            %v661 = vld [vmem:[%s441 + $0x1b8] sm:%s434]
            %662 = vst [vmem:[%s442 + $0x1b4] sm:%s434] %v661
            %v663 = vld [vmem:[%s441 + $0x1ac] sm:%s434]
            %664 = vst [vmem:[%s442 + $0x1b8] sm:%s434] %v663
            %v665 = vld [vmem:[%s441 + $0x1bc] sm:%s434]
            %666 = vst [vmem:[%s442 + $0x1bc] sm:%s434] %v665
            %v667 = vld [vmem:[%s441 + $0x1c0] sm:%s434]
            %668 = vst [vmem:[%s442 + $0x1c0] sm:%s434] %v667
            %v669 = vld [vmem:[%s441 + $0x1d0] sm:%s434]
            %670 = vst [vmem:[%s442 + $0x1c4] sm:%s434] %v669
            %v671 = vld [vmem:[%s441 + $0x1c4] sm:%s434]
            %672 = vst [vmem:[%s442 + $0x1c8] sm:%s434] %v671
            %v673 = vld [vmem:[%s441 + $0x1d4] sm:%s434]
            %674 = vst [vmem:[%s442 + $0x1cc] sm:%s434] %v673
            %v675 = vld [vmem:[%s441 + $0x1c8] sm:%s434]
            %676 = vst [vmem:[%s442 + $0x1d0] sm:%s434] %v675
            %v677 = vld [vmem:[%s441 + $0x1d8] sm:%s434]
            %678 = vst [vmem:[%s442 + $0x1d4] sm:%s434] %v677
            %v679 = vld [vmem:[%s441 + $0x1cc] sm:%s434]
            %680 = vst [vmem:[%s442 + $0x1d8] sm:%s434] %v679
            %v681 = vld [vmem:[%s441 + $0x1dc] sm:%s434]
            %682 = vst [vmem:[%s442 + $0x1dc] sm:%s434] %v681
            %v683 = vld [vmem:[%s441 + $0x1e0] sm:%s434]
            %684 = vst [vmem:[%s442 + $0x1e0] sm:%s434] %v683
            %v685 = vld [vmem:[%s441 + $0x1f0] sm:%s434]
            %686 = vst [vmem:[%s442 + $0x1e4] sm:%s434] %v685
            %v687 = vld [vmem:[%s441 + $0x1e4] sm:%s434]
            %688 = vst [vmem:[%s442 + $0x1e8] sm:%s434] %v687
            %v689 = vld [vmem:[%s441 + $0x1f4] sm:%s434]
            %690 = vst [vmem:[%s442 + $0x1ec] sm:%s434] %v689
            %v691 = vld [vmem:[%s441 + $0x1e8] sm:%s434]
            %692 = vst [vmem:[%s442 + $0x1f0] sm:%s434] %v691
            %v693 = vld [vmem:[%s441 + $0x1f8] sm:%s434]
            %694 = vst [vmem:[%s442 + $0x1f4] sm:%s434] %v693
            %v695 = vld [vmem:[%s441 + $0x1ec] sm:%s434]
            %696 = vst [vmem:[%s442 + $0x1f8] sm:%s434] %v695
            %v697 = vld [vmem:[%s441 + $0x1fc] sm:%s434]
            %698 = vst [vmem:[%s442 + $0x1fc] sm:%s434] %v697
          $region90: #{bilstm_forward.4} parent=77 // loop_footer
            %s440 = sadd.s32 1, %s436
          $region91: #{bilstm_forward.4} parent=77 // loop_footer_branch
            %435 = sbr.rel target = $region87
          $region92: #{bilstm_forward.4} parent=77 // loop_exit
            _
        $region78: #{bilstm_forward.4} parent=62 // pred_fallthru
          _
      $region63: #{bilstm_forward.4} parent=58 // pred_fallthru
        _
      // Predicated region
      $region64: #{bilstm_forward.4} parent=58 // pred_check
        %p148 = pneg %p144
      $region65: #{bilstm_forward.4} parent=58 // pred_check_branch
        %150 = sbr.rel (%p148) target = $region67
      $region66: #{bilstm_forward.4} parent=58 // pred_region
        %s151 = sshllo.u32 0, 4
        loop: start=0, step=1, limit=1
        $region68: #{bilstm_forward.4} parent=66 // loop_pre_header
          _
        $region69: #{bilstm_forward.4} parent=66 // loop_header
          %s153 = sphi 0, %s157
          %p154 = scmp.ge.s32.totalorder %s153, 1
          %s158 = sphi %s2, %s2
          %s159 = sphi [#allocation6], [#allocation6]
        $region70: #{bilstm_forward.4} parent=66 // loop_header_branch
          %156 = sbr.rel (%p154) target = $region74
        $region71: #{bilstm_forward.4} parent=66 // loop_body
          %v160 = vld [vmem:[%s158] sm:%s151]
          %161 = vst [vmem:[%s159] sm:%s151] %v160
          %v162 = vld [vmem:[%s158 + $0x10] sm:%s151]
          %163 = vst [vmem:[%s159 + $0x4] sm:%s151] %v162
          %v164 = vld [vmem:[%s158 + $0x4] sm:%s151]
          %165 = vst [vmem:[%s159 + $0x8] sm:%s151] %v164
          %v166 = vld [vmem:[%s158 + $0x14] sm:%s151]
          %167 = vst [vmem:[%s159 + $0xc] sm:%s151] %v166
          %v168 = vld [vmem:[%s158 + $0x8] sm:%s151]
          %169 = vst [vmem:[%s159 + $0x10] sm:%s151] %v168
          %v170 = vld [vmem:[%s158 + $0x18] sm:%s151]
          %171 = vst [vmem:[%s159 + $0x14] sm:%s151] %v170
          %v172 = vld [vmem:[%s158 + $0xc] sm:%s151]
          %173 = vst [vmem:[%s159 + $0x18] sm:%s151] %v172
          %v174 = vld [vmem:[%s158 + $0x1c] sm:%s151]
          %175 = vst [vmem:[%s159 + $0x1c] sm:%s151] %v174
          %v176 = vld [vmem:[%s158 + $0x20] sm:%s151]
          %177 = vst [vmem:[%s159 + $0x20] sm:%s151] %v176
          %v178 = vld [vmem:[%s158 + $0x30] sm:%s151]
          %179 = vst [vmem:[%s159 + $0x24] sm:%s151] %v178
          %v180 = vld [vmem:[%s158 + $0x24] sm:%s151]
          %181 = vst [vmem:[%s159 + $0x28] sm:%s151] %v180
          %v182 = vld [vmem:[%s158 + $0x34] sm:%s151]
          %183 = vst [vmem:[%s159 + $0x2c] sm:%s151] %v182
          %v184 = vld [vmem:[%s158 + $0x28] sm:%s151]
          %185 = vst [vmem:[%s159 + $0x30] sm:%s151] %v184
          %v186 = vld [vmem:[%s158 + $0x38] sm:%s151]
          %187 = vst [vmem:[%s159 + $0x34] sm:%s151] %v186
          %v188 = vld [vmem:[%s158 + $0x2c] sm:%s151]
          %189 = vst [vmem:[%s159 + $0x38] sm:%s151] %v188
          %v190 = vld [vmem:[%s158 + $0x3c] sm:%s151]
          %191 = vst [vmem:[%s159 + $0x3c] sm:%s151] %v190
          %v192 = vld [vmem:[%s158 + $0x40] sm:%s151]
          %193 = vst [vmem:[%s159 + $0x40] sm:%s151] %v192
          %v194 = vld [vmem:[%s158 + $0x50] sm:%s151]
          %195 = vst [vmem:[%s159 + $0x44] sm:%s151] %v194
          %v196 = vld [vmem:[%s158 + $0x44] sm:%s151]
          %197 = vst [vmem:[%s159 + $0x48] sm:%s151] %v196
          %v198 = vld [vmem:[%s158 + $0x54] sm:%s151]
          %199 = vst [vmem:[%s159 + $0x4c] sm:%s151] %v198
          %v200 = vld [vmem:[%s158 + $0x48] sm:%s151]
          %201 = vst [vmem:[%s159 + $0x50] sm:%s151] %v200
          %v202 = vld [vmem:[%s158 + $0x58] sm:%s151]
          %203 = vst [vmem:[%s159 + $0x54] sm:%s151] %v202
          %v204 = vld [vmem:[%s158 + $0x4c] sm:%s151]
          %205 = vst [vmem:[%s159 + $0x58] sm:%s151] %v204
          %v206 = vld [vmem:[%s158 + $0x5c] sm:%s151]
          %207 = vst [vmem:[%s159 + $0x5c] sm:%s151] %v206
          %v208 = vld [vmem:[%s158 + $0x60] sm:%s151]
          %209 = vst [vmem:[%s159 + $0x60] sm:%s151] %v208
          %v210 = vld [vmem:[%s158 + $0x70] sm:%s151]
          %211 = vst [vmem:[%s159 + $0x64] sm:%s151] %v210
          %v212 = vld [vmem:[%s158 + $0x64] sm:%s151]
          %213 = vst [vmem:[%s159 + $0x68] sm:%s151] %v212
          %v214 = vld [vmem:[%s158 + $0x74] sm:%s151]
          %215 = vst [vmem:[%s159 + $0x6c] sm:%s151] %v214
          %v216 = vld [vmem:[%s158 + $0x68] sm:%s151]
          %217 = vst [vmem:[%s159 + $0x70] sm:%s151] %v216
          %v218 = vld [vmem:[%s158 + $0x78] sm:%s151]
          %219 = vst [vmem:[%s159 + $0x74] sm:%s151] %v218
          %v220 = vld [vmem:[%s158 + $0x6c] sm:%s151]
          %221 = vst [vmem:[%s159 + $0x78] sm:%s151] %v220
          %v222 = vld [vmem:[%s158 + $0x7c] sm:%s151]
          %223 = vst [vmem:[%s159 + $0x7c] sm:%s151] %v222
          %v224 = vld [vmem:[%s158 + $0x80] sm:%s151]
          %225 = vst [vmem:[%s159 + $0x80] sm:%s151] %v224
          %v226 = vld [vmem:[%s158 + $0x90] sm:%s151]
          %227 = vst [vmem:[%s159 + $0x84] sm:%s151] %v226
          %v228 = vld [vmem:[%s158 + $0x84] sm:%s151]
          %229 = vst [vmem:[%s159 + $0x88] sm:%s151] %v228
          %v230 = vld [vmem:[%s158 + $0x94] sm:%s151]
          %231 = vst [vmem:[%s159 + $0x8c] sm:%s151] %v230
          %v232 = vld [vmem:[%s158 + $0x88] sm:%s151]
          %233 = vst [vmem:[%s159 + $0x90] sm:%s151] %v232
          %v234 = vld [vmem:[%s158 + $0x98] sm:%s151]
          %235 = vst [vmem:[%s159 + $0x94] sm:%s151] %v234
          %v236 = vld [vmem:[%s158 + $0x8c] sm:%s151]
          %237 = vst [vmem:[%s159 + $0x98] sm:%s151] %v236
          %v238 = vld [vmem:[%s158 + $0x9c] sm:%s151]
          %239 = vst [vmem:[%s159 + $0x9c] sm:%s151] %v238
          %v240 = vld [vmem:[%s158 + $0xa0] sm:%s151]
          %241 = vst [vmem:[%s159 + $0xa0] sm:%s151] %v240
          %v242 = vld [vmem:[%s158 + $0xb0] sm:%s151]
          %243 = vst [vmem:[%s159 + $0xa4] sm:%s151] %v242
          %v244 = vld [vmem:[%s158 + $0xa4] sm:%s151]
          %245 = vst [vmem:[%s159 + $0xa8] sm:%s151] %v244
          %v246 = vld [vmem:[%s158 + $0xb4] sm:%s151]
          %247 = vst [vmem:[%s159 + $0xac] sm:%s151] %v246
          %v248 = vld [vmem:[%s158 + $0xa8] sm:%s151]
          %249 = vst [vmem:[%s159 + $0xb0] sm:%s151] %v248
          %v250 = vld [vmem:[%s158 + $0xb8] sm:%s151]
          %251 = vst [vmem:[%s159 + $0xb4] sm:%s151] %v250
          %v252 = vld [vmem:[%s158 + $0xac] sm:%s151]
          %253 = vst [vmem:[%s159 + $0xb8] sm:%s151] %v252
          %v254 = vld [vmem:[%s158 + $0xbc] sm:%s151]
          %255 = vst [vmem:[%s159 + $0xbc] sm:%s151] %v254
          %v256 = vld [vmem:[%s158 + $0xc0] sm:%s151]
          %257 = vst [vmem:[%s159 + $0xc0] sm:%s151] %v256
          %v258 = vld [vmem:[%s158 + $0xd0] sm:%s151]
          %259 = vst [vmem:[%s159 + $0xc4] sm:%s151] %v258
          %v260 = vld [vmem:[%s158 + $0xc4] sm:%s151]
          %261 = vst [vmem:[%s159 + $0xc8] sm:%s151] %v260
          %v262 = vld [vmem:[%s158 + $0xd4] sm:%s151]
          %263 = vst [vmem:[%s159 + $0xcc] sm:%s151] %v262
          %v264 = vld [vmem:[%s158 + $0xc8] sm:%s151]
          %265 = vst [vmem:[%s159 + $0xd0] sm:%s151] %v264
          %v266 = vld [vmem:[%s158 + $0xd8] sm:%s151]
          %267 = vst [vmem:[%s159 + $0xd4] sm:%s151] %v266
          %v268 = vld [vmem:[%s158 + $0xcc] sm:%s151]
          %269 = vst [vmem:[%s159 + $0xd8] sm:%s151] %v268
          %v270 = vld [vmem:[%s158 + $0xdc] sm:%s151]
          %271 = vst [vmem:[%s159 + $0xdc] sm:%s151] %v270
          %v272 = vld [vmem:[%s158 + $0xe0] sm:%s151]
          %273 = vst [vmem:[%s159 + $0xe0] sm:%s151] %v272
          %v274 = vld [vmem:[%s158 + $0xf0] sm:%s151]
          %275 = vst [vmem:[%s159 + $0xe4] sm:%s151] %v274
          %v276 = vld [vmem:[%s158 + $0xe4] sm:%s151]
          %277 = vst [vmem:[%s159 + $0xe8] sm:%s151] %v276
          %v278 = vld [vmem:[%s158 + $0xf4] sm:%s151]
          %279 = vst [vmem:[%s159 + $0xec] sm:%s151] %v278
          %v280 = vld [vmem:[%s158 + $0xe8] sm:%s151]
          %281 = vst [vmem:[%s159 + $0xf0] sm:%s151] %v280
          %v282 = vld [vmem:[%s158 + $0xf8] sm:%s151]
          %283 = vst [vmem:[%s159 + $0xf4] sm:%s151] %v282
          %v284 = vld [vmem:[%s158 + $0xec] sm:%s151]
          %285 = vst [vmem:[%s159 + $0xf8] sm:%s151] %v284
          %v286 = vld [vmem:[%s158 + $0xfc] sm:%s151]
          %287 = vst [vmem:[%s159 + $0xfc] sm:%s151] %v286
          %v288 = vld [vmem:[%s158 + $0x100] sm:%s151]
          %289 = vst [vmem:[%s159 + $0x100] sm:%s151] %v288
          %v290 = vld [vmem:[%s158 + $0x110] sm:%s151]
          %291 = vst [vmem:[%s159 + $0x104] sm:%s151] %v290
          %v292 = vld [vmem:[%s158 + $0x104] sm:%s151]
          %293 = vst [vmem:[%s159 + $0x108] sm:%s151] %v292
          %v294 = vld [vmem:[%s158 + $0x114] sm:%s151]
          %295 = vst [vmem:[%s159 + $0x10c] sm:%s151] %v294
          %v296 = vld [vmem:[%s158 + $0x108] sm:%s151]
          %297 = vst [vmem:[%s159 + $0x110] sm:%s151] %v296
          %v298 = vld [vmem:[%s158 + $0x118] sm:%s151]
          %299 = vst [vmem:[%s159 + $0x114] sm:%s151] %v298
          %v300 = vld [vmem:[%s158 + $0x10c] sm:%s151]
          %301 = vst [vmem:[%s159 + $0x118] sm:%s151] %v300
          %v302 = vld [vmem:[%s158 + $0x11c] sm:%s151]
          %303 = vst [vmem:[%s159 + $0x11c] sm:%s151] %v302
          %v304 = vld [vmem:[%s158 + $0x120] sm:%s151]
          %305 = vst [vmem:[%s159 + $0x120] sm:%s151] %v304
          %v306 = vld [vmem:[%s158 + $0x130] sm:%s151]
          %307 = vst [vmem:[%s159 + $0x124] sm:%s151] %v306
          %v308 = vld [vmem:[%s158 + $0x124] sm:%s151]
          %309 = vst [vmem:[%s159 + $0x128] sm:%s151] %v308
          %v310 = vld [vmem:[%s158 + $0x134] sm:%s151]
          %311 = vst [vmem:[%s159 + $0x12c] sm:%s151] %v310
          %v312 = vld [vmem:[%s158 + $0x128] sm:%s151]
          %313 = vst [vmem:[%s159 + $0x130] sm:%s151] %v312
          %v314 = vld [vmem:[%s158 + $0x138] sm:%s151]
          %315 = vst [vmem:[%s159 + $0x134] sm:%s151] %v314
          %v316 = vld [vmem:[%s158 + $0x12c] sm:%s151]
          %317 = vst [vmem:[%s159 + $0x138] sm:%s151] %v316
          %v318 = vld [vmem:[%s158 + $0x13c] sm:%s151]
          %319 = vst [vmem:[%s159 + $0x13c] sm:%s151] %v318
          %v320 = vld [vmem:[%s158 + $0x140] sm:%s151]
          %321 = vst [vmem:[%s159 + $0x140] sm:%s151] %v320
          %v322 = vld [vmem:[%s158 + $0x150] sm:%s151]
          %323 = vst [vmem:[%s159 + $0x144] sm:%s151] %v322
          %v324 = vld [vmem:[%s158 + $0x144] sm:%s151]
          %325 = vst [vmem:[%s159 + $0x148] sm:%s151] %v324
          %v326 = vld [vmem:[%s158 + $0x154] sm:%s151]
          %327 = vst [vmem:[%s159 + $0x14c] sm:%s151] %v326
          %v328 = vld [vmem:[%s158 + $0x148] sm:%s151]
          %329 = vst [vmem:[%s159 + $0x150] sm:%s151] %v328
          %v330 = vld [vmem:[%s158 + $0x158] sm:%s151]
          %331 = vst [vmem:[%s159 + $0x154] sm:%s151] %v330
          %v332 = vld [vmem:[%s158 + $0x14c] sm:%s151]
          %333 = vst [vmem:[%s159 + $0x158] sm:%s151] %v332
          %v334 = vld [vmem:[%s158 + $0x15c] sm:%s151]
          %335 = vst [vmem:[%s159 + $0x15c] sm:%s151] %v334
          %v336 = vld [vmem:[%s158 + $0x160] sm:%s151]
          %337 = vst [vmem:[%s159 + $0x160] sm:%s151] %v336
          %v338 = vld [vmem:[%s158 + $0x170] sm:%s151]
          %339 = vst [vmem:[%s159 + $0x164] sm:%s151] %v338
          %v340 = vld [vmem:[%s158 + $0x164] sm:%s151]
          %341 = vst [vmem:[%s159 + $0x168] sm:%s151] %v340
          %v342 = vld [vmem:[%s158 + $0x174] sm:%s151]
          %343 = vst [vmem:[%s159 + $0x16c] sm:%s151] %v342
          %v344 = vld [vmem:[%s158 + $0x168] sm:%s151]
          %345 = vst [vmem:[%s159 + $0x170] sm:%s151] %v344
          %v346 = vld [vmem:[%s158 + $0x178] sm:%s151]
          %347 = vst [vmem:[%s159 + $0x174] sm:%s151] %v346
          %v348 = vld [vmem:[%s158 + $0x16c] sm:%s151]
          %349 = vst [vmem:[%s159 + $0x178] sm:%s151] %v348
          %v350 = vld [vmem:[%s158 + $0x17c] sm:%s151]
          %351 = vst [vmem:[%s159 + $0x17c] sm:%s151] %v350
          %v352 = vld [vmem:[%s158 + $0x180] sm:%s151]
          %353 = vst [vmem:[%s159 + $0x180] sm:%s151] %v352
          %v354 = vld [vmem:[%s158 + $0x190] sm:%s151]
          %355 = vst [vmem:[%s159 + $0x184] sm:%s151] %v354
          %v356 = vld [vmem:[%s158 + $0x184] sm:%s151]
          %357 = vst [vmem:[%s159 + $0x188] sm:%s151] %v356
          %v358 = vld [vmem:[%s158 + $0x194] sm:%s151]
          %359 = vst [vmem:[%s159 + $0x18c] sm:%s151] %v358
          %v360 = vld [vmem:[%s158 + $0x188] sm:%s151]
          %361 = vst [vmem:[%s159 + $0x190] sm:%s151] %v360
          %v362 = vld [vmem:[%s158 + $0x198] sm:%s151]
          %363 = vst [vmem:[%s159 + $0x194] sm:%s151] %v362
          %v364 = vld [vmem:[%s158 + $0x18c] sm:%s151]
          %365 = vst [vmem:[%s159 + $0x198] sm:%s151] %v364
          %v366 = vld [vmem:[%s158 + $0x19c] sm:%s151]
          %367 = vst [vmem:[%s159 + $0x19c] sm:%s151] %v366
          %v368 = vld [vmem:[%s158 + $0x1a0] sm:%s151]
          %369 = vst [vmem:[%s159 + $0x1a0] sm:%s151] %v368
          %v370 = vld [vmem:[%s158 + $0x1b0] sm:%s151]
          %371 = vst [vmem:[%s159 + $0x1a4] sm:%s151] %v370
          %v372 = vld [vmem:[%s158 + $0x1a4] sm:%s151]
          %373 = vst [vmem:[%s159 + $0x1a8] sm:%s151] %v372
          %v374 = vld [vmem:[%s158 + $0x1b4] sm:%s151]
          %375 = vst [vmem:[%s159 + $0x1ac] sm:%s151] %v374
          %v376 = vld [vmem:[%s158 + $0x1a8] sm:%s151]
          %377 = vst [vmem:[%s159 + $0x1b0] sm:%s151] %v376
          %v378 = vld [vmem:[%s158 + $0x1b8] sm:%s151]
          %379 = vst [vmem:[%s159 + $0x1b4] sm:%s151] %v378
          %v380 = vld [vmem:[%s158 + $0x1ac] sm:%s151]
          %381 = vst [vmem:[%s159 + $0x1b8] sm:%s151] %v380
          %v382 = vld [vmem:[%s158 + $0x1bc] sm:%s151]
          %383 = vst [vmem:[%s159 + $0x1bc] sm:%s151] %v382
          %v384 = vld [vmem:[%s158 + $0x1c0] sm:%s151]
          %385 = vst [vmem:[%s159 + $0x1c0] sm:%s151] %v384
          %v386 = vld [vmem:[%s158 + $0x1d0] sm:%s151]
          %387 = vst [vmem:[%s159 + $0x1c4] sm:%s151] %v386
          %v388 = vld [vmem:[%s158 + $0x1c4] sm:%s151]
          %389 = vst [vmem:[%s159 + $0x1c8] sm:%s151] %v388
          %v390 = vld [vmem:[%s158 + $0x1d4] sm:%s151]
          %391 = vst [vmem:[%s159 + $0x1cc] sm:%s151] %v390
          %v392 = vld [vmem:[%s158 + $0x1c8] sm:%s151]
          %393 = vst [vmem:[%s159 + $0x1d0] sm:%s151] %v392
          %v394 = vld [vmem:[%s158 + $0x1d8] sm:%s151]
          %395 = vst [vmem:[%s159 + $0x1d4] sm:%s151] %v394
          %v396 = vld [vmem:[%s158 + $0x1cc] sm:%s151]
          %397 = vst [vmem:[%s159 + $0x1d8] sm:%s151] %v396
          %v398 = vld [vmem:[%s158 + $0x1dc] sm:%s151]
          %399 = vst [vmem:[%s159 + $0x1dc] sm:%s151] %v398
          %v400 = vld [vmem:[%s158 + $0x1e0] sm:%s151]
          %401 = vst [vmem:[%s159 + $0x1e0] sm:%s151] %v400
          %v402 = vld [vmem:[%s158 + $0x1f0] sm:%s151]
          %403 = vst [vmem:[%s159 + $0x1e4] sm:%s151] %v402
          %v404 = vld [vmem:[%s158 + $0x1e4] sm:%s151]
          %405 = vst [vmem:[%s159 + $0x1e8] sm:%s151] %v404
          %v406 = vld [vmem:[%s158 + $0x1f4] sm:%s151]
          %407 = vst [vmem:[%s159 + $0x1ec] sm:%s151] %v406
          %v408 = vld [vmem:[%s158 + $0x1e8] sm:%s151]
          %409 = vst [vmem:[%s159 + $0x1f0] sm:%s151] %v408
          %v410 = vld [vmem:[%s158 + $0x1f8] sm:%s151]
          %411 = vst [vmem:[%s159 + $0x1f4] sm:%s151] %v410
          %v412 = vld [vmem:[%s158 + $0x1ec] sm:%s151]
          %413 = vst [vmem:[%s159 + $0x1f8] sm:%s151] %v412
          %v414 = vld [vmem:[%s158 + $0x1fc] sm:%s151]
          %415 = vst [vmem:[%s159 + $0x1fc] sm:%s151] %v414
        $region72: #{bilstm_forward.4} parent=66 // loop_footer
          %s157 = sadd.s32 1, %s153
        $region73: #{bilstm_forward.4} parent=66 // loop_footer_branch
          %152 = sbr.rel target = $region69
        $region74: #{bilstm_forward.4} parent=66 // loop_exit
          _
      $region67: #{bilstm_forward.4} parent=58 // pred_fallthru
        _
      // Predicated region
      $region93: #{bilstm_forward.4} parent=58 // pred_check
        _
      $region94: #{bilstm_forward.4} parent=58 // pred_check_branch
        %701 = sbr.rel (0) target = $region96
      $region95: #{bilstm_forward.4} parent=58 // pred_region
        %702 = vsyncadd [#allocation7], 8192
      $region96: #{bilstm_forward.4} parent=58 // pred_fallthru
        _
      %s703 = smul.u32 4, 2
      %s704 = smul.u32 %s703, 16
      %s705 = smul.u32 %s704, 4
      %s706 = sshll.u32 %s705, 4
      %707 = dma.done [#allocation7], %s706
    $region59: #{bilstm_forward.4} parent=1 // pred_fallthru
      _
    %v708 = vld [vmem:[#allocation6] sm:$0xff]
    %v709 = vld [vmem:[#allocation6 + $0x8] sm:$0xff]
    %v710 = vld [vmem:[#allocation6 + $0x10] sm:$0xff]
    %v711 = vld [vmem:[#allocation6 + $0x18] sm:$0xff]
    %v712 = vld [vmem:[#allocation6 + $0x20] sm:$0xff]
    %v713 = vld [vmem:[#allocation6 + $0x28] sm:$0xff]
    %v714 = vld [vmem:[#allocation6 + $0x30] sm:$0xff]
    %v715 = vld [vmem:[#allocation6 + $0x38] sm:$0xff]
    %v716 = vld [vmem:[#allocation6 + $0x40] sm:$0xff]
    %v717 = vld [vmem:[#allocation6 + $0x48] sm:$0xff]
    %v718 = vld [vmem:[#allocation6 + $0x50] sm:$0xff]
    %v719 = vld [vmem:[#allocation6 + $0x58] sm:$0xff]
    %v720 = vld [vmem:[#allocation6 + $0x60] sm:$0xff]
    %v721 = vld [vmem:[#allocation6 + $0x68] sm:$0xff]
    %v722 = vld [vmem:[#allocation6 + $0x70] sm:$0xff]
    %v723 = vld [vmem:[#allocation6 + $0x78] sm:$0xff]
    %v724 = vld [vmem:[#allocation6 + $0x80] sm:$0xff]
    %v725 = vld [vmem:[#allocation6 + $0x88] sm:$0xff]
    %v726 = vld [vmem:[#allocation6 + $0x90] sm:$0xff]
    %v727 = vld [vmem:[#allocation6 + $0x98] sm:$0xff]
    %v728 = vld [vmem:[#allocation6 + $0xa0] sm:$0xff]
    %v729 = vld [vmem:[#allocation6 + $0xa8] sm:$0xff]
    %v730 = vld [vmem:[#allocation6 + $0xb0] sm:$0xff]
    %v731 = vld [vmem:[#allocation6 + $0xb8] sm:$0xff]
    %v732 = vld [vmem:[#allocation6 + $0xc0] sm:$0xff]
    %v733 = vld [vmem:[#allocation6 + $0xc8] sm:$0xff]
    %v734 = vld [vmem:[#allocation6 + $0xd0] sm:$0xff]
    %v735 = vld [vmem:[#allocation6 + $0xd8] sm:$0xff]
    %v736 = vld [vmem:[#allocation6 + $0xe0] sm:$0xff]
    %v737 = vld [vmem:[#allocation6 + $0xe8] sm:$0xff]
    %v738 = vld [vmem:[#allocation6 + $0xf0] sm:$0xff]
    %v739 = vld [vmem:[#allocation6 + $0xf8] sm:$0xff]
    %v740 = vld [vmem:[#allocation8] sm:$0xff]
    %v741 = vld [vmem:[#allocation8 + $0x8] sm:$0xff]
    %v742 = vunpack.c.l.bf16 %v740
    %v743 = vunpack.c.h.bf16 %v740
    %v744 = vunpack.c.l.bf16 %v741
    %v745 = vunpack.c.h.bf16 %v741
    %v746 = vld [vmem:[#allocation2] sm:$0xff]
    %v747 = vpack.c.bf16 %v746, %v746
    %748 = vmatprep.subr.bf16.mxu0 %v709
    %749 = vmatpush1.bf16.msra.mxu0 %v708
    %750 = vmatprep.subr.bf16.mxu0 %v713
    %751 = vmatpush1.bf16.msra.mxu0 %v712
    %752 = vmatprep.subr.bf16.mxu0 %v717
    %753 = vmatpush1.bf16.msra.mxu0 %v716
    %754 = vmatprep.subr.bf16.mxu0 %v721
    %755 = vmatpush1.bf16.msra.mxu0 %v720
    %756 = vmatprep.subr.bf16.mxu0 %v725
    %757 = vmatpush1.bf16.msra.mxu0 %v724
    %758 = vmatprep.subr.bf16.mxu0 %v729
    %759 = vmatpush1.bf16.msra.mxu0 %v728
    %760 = vmatprep.subr.bf16.mxu0 %v733
    %761 = vmatpush1.bf16.msra.mxu0 %v732
    %762 = vmatprep.subr.bf16.mxu0 %v737
    %763 = vmatpush1.bf16.msra.mxu0 %v736
    %764 = vmatprep.subr.bf16.mxu0 0
    %765 = vmatpush1.bf16.msra.mxu0 0
    %766 = vmatprep.subr.bf16.mxu0 0
    %767 = vmatpush1.bf16.msra.mxu0 0
    %768 = vmatprep.subr.bf16.mxu0 0
    %769 = vmatpush1.bf16.msra.mxu0 0
    %770 = vmatprep.subr.bf16.mxu0 0
    %771 = vmatpush1.bf16.msra.mxu0 0
    %772 = vmatprep.subr.bf16.mxu0 0
    %773 = vmatpush1.bf16.msra.mxu0 0
    %774 = vmatprep.subr.bf16.mxu0 0
    %775 = vmatpush1.bf16.msra.mxu0 0
    %776 = vmatprep.subr.bf16.mxu0 0
    %777 = vmatpush1.bf16.msra.mxu0 0
    %778 = vmatprep.subr.bf16.mxu0 0
    %779 = vmatpush1.bf16.msra.mxu0 0
    %780 = vmatprep.mubr.bf16.mxu0 0
    %781 = vmatmul.mubr.bf16.gmra.mrb[0].mxu0 %v747
    %v782 = vpop.f32.mrb[0].mxu0
    %v783 = vadd.f32 0.0, %v782
    %v784 = vpop.f32.mrb[0].mxu0
    %v785 = vadd.f32 0.0, %v784
    %v786 = vpop.f32.mrb[0].mxu0
    %v787 = vpop.f32.mrb[0].mxu0
    %788 = vdwg.mxu0
    %789 = vmatprep.subr.bf16.mxu0 %v711
    %790 = vmatpush1.bf16.msra.mxu0 %v710
    %791 = vmatprep.subr.bf16.mxu0 %v715
    %792 = vmatpush1.bf16.msra.mxu0 %v714
    %793 = vmatprep.subr.bf16.mxu0 %v719
    %794 = vmatpush1.bf16.msra.mxu0 %v718
    %795 = vmatprep.subr.bf16.mxu0 %v723
    %796 = vmatpush1.bf16.msra.mxu0 %v722
    %797 = vmatprep.subr.bf16.mxu0 %v727
    %798 = vmatpush1.bf16.msra.mxu0 %v726
    %799 = vmatprep.subr.bf16.mxu0 %v731
    %800 = vmatpush1.bf16.msra.mxu0 %v730
    %801 = vmatprep.subr.bf16.mxu0 %v735
    %802 = vmatpush1.bf16.msra.mxu0 %v734
    %803 = vmatprep.subr.bf16.mxu0 %v739
    %804 = vmatpush1.bf16.msra.mxu0 %v738
    %805 = vmatprep.subr.bf16.mxu0 0
    %806 = vmatpush1.bf16.msra.mxu0 0
    %807 = vmatprep.subr.bf16.mxu0 0
    %808 = vmatpush1.bf16.msra.mxu0 0
    %809 = vmatprep.subr.bf16.mxu0 0
    %810 = vmatpush1.bf16.msra.mxu0 0
    %811 = vmatprep.subr.bf16.mxu0 0
    %812 = vmatpush1.bf16.msra.mxu0 0
    %813 = vmatprep.subr.bf16.mxu0 0
    %814 = vmatpush1.bf16.msra.mxu0 0
    %815 = vmatprep.subr.bf16.mxu0 0
    %816 = vmatpush1.bf16.msra.mxu0 0
    %817 = vmatprep.subr.bf16.mxu0 0
    %818 = vmatpush1.bf16.msra.mxu0 0
    %819 = vmatprep.subr.bf16.mxu0 0
    %820 = vmatpush1.bf16.msra.mxu0 0
    %821 = vmatprep.mubr.bf16.mxu0 0
    %822 = vmatmul.mubr.bf16.gmra.mrb[0].mxu0 %v747
    %v823 = vpop.f32.mrb[0].mxu0
    %v824 = vadd.f32 0.0, %v823
    %v825 = vpop.f32.mrb[0].mxu0
    %v826 = vadd.f32 0.0, %v825
    %v827 = vpop.f32.mrb[0].mxu0
    %v828 = vpop.f32.mrb[0].mxu0
    %829 = vdwg.mxu0
    %v830 = vadd.f32 %v742, %v783
    %v831 = vadd.f32 %v743, %v785
    %v832 = vadd.f32 %v744, %v824
    %v833 = vadd.f32 %v745, %v826
    %v834 = vld [vmem:[#allocation3] sm:$0xff]
    %v835 = vxor.u32 %v830, 2147483648
    %v836 = vxor.u32 %v831, 2147483648
    %v837 = vxor.u32 %v832, 2147483648
    %v838 = vmul.f32 %v835, 1.442695
    %v839 = vpow.pop %v838
    %v840 = vmul.f32 %v836, 1.442695
    %v841 = vpow.pop %v840
    %v842 = vmul.f32 %v837, 1.442695
    %v843 = vpow.pop %v842
    %v844 = vadd.f32 %v839, 1.0
    %v845 = vadd.f32 %v841, 1.0
    %v846 = vadd.f32 %v843, 1.0
    %v847 = vrcp.pop %v844
    %v848 = vmul.f32 1.0, %v847
    %v849 = vrcp.pop %v845
    %v850 = vmul.f32 1.0, %v849
    %v851 = vrcp.pop %v846
    %v852 = vmul.f32 1.0, %v851
    %v853 = vtanh.pop %v833
    %v854 = vmul.f32 %v850, %v834
    %v855 = vmul.f32 %v848, %v853
    %v856 = vadd.f32 %v854, %v855
    %v857 = vtanh.pop %v856
    %v858 = vmul.f32 %v852, %v857
    %859 = vst [vmem:[#allocation2] sm:$0xff] %v858
    %860 = vst [vmem:[#allocation3] sm:$0xff] %v856
    %v861 = vpack.c.bf16 %v858, %v858
    %862 = vst [vmem:[%s3] sm:$0xf] %v861
    %s863 = scalar_lea.vmem [#allocation6], 256
    %v864 = vld [vmem:[%s863] sm:$0xff]
    %v865 = vld [vmem:[%s863 + $0x8] sm:$0xff]
    %v866 = vld [vmem:[%s863 + $0x10] sm:$0xff]
    %v867 = vld [vmem:[%s863 + $0x18] sm:$0xff]
    %v868 = vld [vmem:[%s863 + $0x20] sm:$0xff]
    %v869 = vld [vmem:[%s863 + $0x28] sm:$0xff]
    %v870 = vld [vmem:[%s863 + $0x30] sm:$0xff]
    %v871 = vld [vmem:[%s863 + $0x38] sm:$0xff]
    %v872 = vld [vmem:[%s863 + $0x40] sm:$0xff]
    %v873 = vld [vmem:[%s863 + $0x48] sm:$0xff]
    %v874 = vld [vmem:[%s863 + $0x50] sm:$0xff]
    %v875 = vld [vmem:[%s863 + $0x58] sm:$0xff]
    %v876 = vld [vmem:[%s863 + $0x60] sm:$0xff]
    %v877 = vld [vmem:[%s863 + $0x68] sm:$0xff]
    %v878 = vld [vmem:[%s863 + $0x70] sm:$0xff]
    %v879 = vld [vmem:[%s863 + $0x78] sm:$0xff]
    %v880 = vld [vmem:[%s863 + $0x80] sm:$0xff]
    %v881 = vld [vmem:[%s863 + $0x88] sm:$0xff]
    %v882 = vld [vmem:[%s863 + $0x90] sm:$0xff]
    %v883 = vld [vmem:[%s863 + $0x98] sm:$0xff]
    %v884 = vld [vmem:[%s863 + $0xa0] sm:$0xff]
    %v885 = vld [vmem:[%s863 + $0xa8] sm:$0xff]
    %v886 = vld [vmem:[%s863 + $0xb0] sm:$0xff]
    %v887 = vld [vmem:[%s863 + $0xb8] sm:$0xff]
    %v888 = vld [vmem:[%s863 + $0xc0] sm:$0xff]
    %v889 = vld [vmem:[%s863 + $0xc8] sm:$0xff]
    %v890 = vld [vmem:[%s863 + $0xd0] sm:$0xff]
    %v891 = vld [vmem:[%s863 + $0xd8] sm:$0xff]
    %v892 = vld [vmem:[%s863 + $0xe0] sm:$0xff]
    %v893 = vld [vmem:[%s863 + $0xe8] sm:$0xff]
    %v894 = vld [vmem:[%s863 + $0xf0] sm:$0xff]
    %v895 = vld [vmem:[%s863 + $0xf8] sm:$0xff]
    %s896 = scalar_lea.vmem [#allocation9], 112
    %v897 = vld [vmem:[%s896] sm:$0xff]
    %v898 = vld [vmem:[%s896 + $0x8] sm:$0xff]
    %v899 = vunpack.c.l.bf16 %v897
    %v900 = vunpack.c.h.bf16 %v897
    %v901 = vunpack.c.l.bf16 %v898
    %v902 = vunpack.c.h.bf16 %v898
    %v903 = vld [vmem:[#allocation4] sm:$0xff]
    %v904 = vpack.c.bf16 %v903, %v903
    %905 = vmatprep.subr.bf16.mxu0 %v865
    %906 = vmatpush1.bf16.msra.mxu0 %v864
    %907 = vmatprep.subr.bf16.mxu0 %v869
    %908 = vmatpush1.bf16.msra.mxu0 %v868
    %909 = vmatprep.subr.bf16.mxu0 %v873
    %910 = vmatpush1.bf16.msra.mxu0 %v872
    %911 = vmatprep.subr.bf16.mxu0 %v877
    %912 = vmatpush1.bf16.msra.mxu0 %v876
    %913 = vmatprep.subr.bf16.mxu0 %v881
    %914 = vmatpush1.bf16.msra.mxu0 %v880
    %915 = vmatprep.subr.bf16.mxu0 %v885
    %916 = vmatpush1.bf16.msra.mxu0 %v884
    %917 = vmatprep.subr.bf16.mxu0 %v889
    %918 = vmatpush1.bf16.msra.mxu0 %v888
    %919 = vmatprep.subr.bf16.mxu0 %v893
    %920 = vmatpush1.bf16.msra.mxu0 %v892
    %921 = vmatprep.subr.bf16.mxu0 0
    %922 = vmatpush1.bf16.msra.mxu0 0
    %923 = vmatprep.subr.bf16.mxu0 0
    %924 = vmatpush1.bf16.msra.mxu0 0
    %925 = vmatprep.subr.bf16.mxu0 0
    %926 = vmatpush1.bf16.msra.mxu0 0
    %927 = vmatprep.subr.bf16.mxu0 0
    %928 = vmatpush1.bf16.msra.mxu0 0
    %929 = vmatprep.subr.bf16.mxu0 0
    %930 = vmatpush1.bf16.msra.mxu0 0
    %931 = vmatprep.subr.bf16.mxu0 0
    %932 = vmatpush1.bf16.msra.mxu0 0
    %933 = vmatprep.subr.bf16.mxu0 0
    %934 = vmatpush1.bf16.msra.mxu0 0
    %935 = vmatprep.subr.bf16.mxu0 0
    %936 = vmatpush1.bf16.msra.mxu0 0
    %937 = vmatprep.mubr.bf16.mxu0 0
    %938 = vmatmul.mubr.bf16.gmra.mrb[0].mxu0 %v904
    %v939 = vpop.f32.mrb[0].mxu0
    %v940 = vadd.f32 0.0, %v939
    %v941 = vpop.f32.mrb[0].mxu0
    %v942 = vadd.f32 0.0, %v941
    %v943 = vpop.f32.mrb[0].mxu0
    %v944 = vpop.f32.mrb[0].mxu0
    %945 = vdwg.mxu0
    %946 = vmatprep.subr.bf16.mxu0 %v867
    %947 = vmatpush1.bf16.msra.mxu0 %v866
    %948 = vmatprep.subr.bf16.mxu0 %v871
    %949 = vmatpush1.bf16.msra.mxu0 %v870
    %950 = vmatprep.subr.bf16.mxu0 %v875
    %951 = vmatpush1.bf16.msra.mxu0 %v874
    %952 = vmatprep.subr.bf16.mxu0 %v879
    %953 = vmatpush1.bf16.msra.mxu0 %v878
    %954 = vmatprep.subr.bf16.mxu0 %v883
    %955 = vmatpush1.bf16.msra.mxu0 %v882
    %956 = vmatprep.subr.bf16.mxu0 %v887
    %957 = vmatpush1.bf16.msra.mxu0 %v886
    %958 = vmatprep.subr.bf16.mxu0 %v891
    %959 = vmatpush1.bf16.msra.mxu0 %v890
    %960 = vmatprep.subr.bf16.mxu0 %v895
    %961 = vmatpush1.bf16.msra.mxu0 %v894
    %962 = vmatprep.subr.bf16.mxu0 0
    %963 = vmatpush1.bf16.msra.mxu0 0
    %964 = vmatprep.subr.bf16.mxu0 0
    %965 = vmatpush1.bf16.msra.mxu0 0
    %966 = vmatprep.subr.bf16.mxu0 0
    %967 = vmatpush1.bf16.msra.mxu0 0
    %968 = vmatprep.subr.bf16.mxu0 0
    %969 = vmatpush1.bf16.msra.mxu0 0
    %970 = vmatprep.subr.bf16.mxu0 0
    %971 = vmatpush1.bf16.msra.mxu0 0
    %972 = vmatprep.subr.bf16.mxu0 0
    %973 = vmatpush1.bf16.msra.mxu0 0
    %974 = vmatprep.subr.bf16.mxu0 0
    %975 = vmatpush1.bf16.msra.mxu0 0
    %976 = vmatprep.subr.bf16.mxu0 0
    %977 = vmatpush1.bf16.msra.mxu0 0
    %978 = vmatprep.mubr.bf16.mxu0 0
    %979 = vmatmul.mubr.bf16.gmra.mrb[0].mxu0 %v904
    %v980 = vpop.f32.mrb[0].mxu0
    %v981 = vadd.f32 0.0, %v980
    %v982 = vpop.f32.mrb[0].mxu0
    %v983 = vadd.f32 0.0, %v982
    %v984 = vpop.f32.mrb[0].mxu0
    %v985 = vpop.f32.mrb[0].mxu0
    %986 = vdwg.mxu0
    %v987 = vadd.f32 %v899, %v940
    %v988 = vadd.f32 %v900, %v942
    %v989 = vadd.f32 %v901, %v981
    %v990 = vadd.f32 %v902, %v983
    %v991 = vld [vmem:[#allocation5] sm:$0xff]
    %v992 = vxor.u32 %v987, 2147483648
    %v993 = vxor.u32 %v988, 2147483648
    %v994 = vxor.u32 %v989, 2147483648
    %v995 = vmul.f32 %v992, 1.442695
    %v996 = vpow.pop %v995
    %v997 = vmul.f32 %v993, 1.442695
    %v998 = vpow.pop %v997
    %v999 = vmul.f32 %v994, 1.442695
    %v1000 = vpow.pop %v999
    %v1001 = vadd.f32 %v996, 1.0
    %v1002 = vadd.f32 %v998, 1.0
    %v1003 = vadd.f32 %v1000, 1.0
    %v1004 = vrcp.pop %v1001
    %v1005 = vmul.f32 1.0, %v1004
    %v1006 = vrcp.pop %v1002
    %v1007 = vmul.f32 1.0, %v1006
    %v1008 = vrcp.pop %v1003
    %v1009 = vmul.f32 1.0, %v1008
    %v1010 = vtanh.pop %v990
    %v1011 = vmul.f32 %v1007, %v991
    %v1012 = vmul.f32 %v1005, %v1010
    %v1013 = vadd.f32 %v1011, %v1012
    %v1014 = vtanh.pop %v1013
    %v1015 = vmul.f32 %v1009, %v1014
    %1016 = vst [vmem:[#allocation4] sm:$0xff] %v1015
    %1017 = vst [vmem:[#allocation5] sm:$0xff] %v1013
    %v1018 = vpack.c.bf16 %v1015, %v1015
    %s1019 = scalar_lea.vmem %s131, 28
    %1020 = vst [vmem:[%s1019] sm:$0xf] %v1018
    %v1021 = vld [vmem:[#allocation6] sm:$0xff]
    %v1022 = vld [vmem:[#allocation6 + $0x8] sm:$0xff]
    %v1023 = vld [vmem:[#allocation6 + $0x10] sm:$0xff]
    %v1024 = vld [vmem:[#allocation6 + $0x18] sm:$0xff]
    %v1025 = vld [vmem:[#allocation6 + $0x20] sm:$0xff]
    %v1026 = vld [vmem:[#allocation6 + $0x28] sm:$0xff]
    %v1027 = vld [vmem:[#allocation6 + $0x30] sm:$0xff]
    %v1028 = vld [vmem:[#allocation6 + $0x38] sm:$0xff]
    %v1029 = vld [vmem:[#allocation6 + $0x40] sm:$0xff]
    %v1030 = vld [vmem:[#allocation6 + $0x48] sm:$0xff]
    %v1031 = vld [vmem:[#allocation6 + $0x50] sm:$0xff]
    %v1032 = vld [vmem:[#allocation6 + $0x58] sm:$0xff]
    %v1033 = vld [vmem:[#allocation6 + $0x60] sm:$0xff]
    %v1034 = vld [vmem:[#allocation6 + $0x68] sm:$0xff]
    %v1035 = vld [vmem:[#allocation6 + $0x70] sm:$0xff]
    %v1036 = vld [vmem:[#allocation6 + $0x78] sm:$0xff]
    %v1037 = vld [vmem:[#allocation6 + $0x80] sm:$0xff]
    %v1038 = vld [vmem:[#allocation6 + $0x88] sm:$0xff]
    %v1039 = vld [vmem:[#allocation6 + $0x90] sm:$0xff]
    %v1040 = vld [vmem:[#allocation6 + $0x98] sm:$0xff]
    %v1041 = vld [vmem:[#allocation6 + $0xa0] sm:$0xff]
    %v1042 = vld [vmem:[#allocation6 + $0xa8] sm:$0xff]
    %v1043 = vld [vmem:[#allocation6 + $0xb0] sm:$0xff]
    %v1044 = vld [vmem:[#allocation6 + $0xb8] sm:$0xff]
    %v1045 = vld [vmem:[#allocation6 + $0xc0] sm:$0xff]
    %v1046 = vld [vmem:[#allocation6 + $0xc8] sm:$0xff]
    %v1047 = vld [vmem:[#allocation6 + $0xd0] sm:$0xff]
    %v1048 = vld [vmem:[#allocation6 + $0xd8] sm:$0xff]
    %v1049 = vld [vmem:[#allocation6 + $0xe0] sm:$0xff]
    %v1050 = vld [vmem:[#allocation6 + $0xe8] sm:$0xff]
    %v1051 = vld [vmem:[#allocation6 + $0xf0] sm:$0xff]
    %v1052 = vld [vmem:[#allocation6 + $0xf8] sm:$0xff]
    %s1053 = scalar_lea.vmem [#allocation8], 16
    %v1054 = vld [vmem:[%s1053] sm:$0xff]
    %v1055 = vld [vmem:[%s1053 + $0x8] sm:$0xff]
    %v1056 = vunpack.c.l.bf16 %v1054
    %v1057 = vunpack.c.h.bf16 %v1054
    %v1058 = vunpack.c.l.bf16 %v1055
    %v1059 = vunpack.c.h.bf16 %v1055
    %v1060 = vld [vmem:[#allocation2] sm:$0xff]
    %v1061 = vpack.c.bf16 %v1060, %v1060
    %1062 = vmatprep.subr.bf16.mxu0 %v1022
    %1063 = vmatpush1.bf16.msra.mxu0 %v1021
    %1064 = vmatprep.subr.bf16.mxu0 %v1026
    %1065 = vmatpush1.bf16.msra.mxu0 %v1025
    %1066 = vmatprep.subr.bf16.mxu0 %v1030
    %1067 = vmatpush1.bf16.msra.mxu0 %v1029
    %1068 = vmatprep.subr.bf16.mxu0 %v1034
    %1069 = vmatpush1.bf16.msra.mxu0 %v1033
    %1070 = vmatprep.subr.bf16.mxu0 %v1038
    %1071 = vmatpush1.bf16.msra.mxu0 %v1037
    %1072 = vmatprep.subr.bf16.mxu0 %v1042
    %1073 = vmatpush1.bf16.msra.mxu0 %v1041
    %1074 = vmatprep.subr.bf16.mxu0 %v1046
    %1075 = vmatpush1.bf16.msra.mxu0 %v1045
    %1076 = vmatprep.subr.bf16.mxu0 %v1050
    %1077 = vmatpush1.bf16.msra.mxu0 %v1049
    %1078 = vmatprep.subr.bf16.mxu0 0
    %1079 = vmatpush1.bf16.msra.mxu0 0
    %1080 = vmatprep.subr.bf16.mxu0 0
    %1081 = vmatpush1.bf16.msra.mxu0 0
    %1082 = vmatprep.subr.bf16.mxu0 0
    %1083 = vmatpush1.bf16.msra.mxu0 0
    %1084 = vmatprep.subr.bf16.mxu0 0
    %1085 = vmatpush1.bf16.msra.mxu0 0
    %1086 = vmatprep.subr.bf16.mxu0 0
    %1087 = vmatpush1.bf16.msra.mxu0 0
    %1088 = vmatprep.subr.bf16.mxu0 0
    %1089 = vmatpush1.bf16.msra.mxu0 0
    %1090 = vmatprep.subr.bf16.mxu0 0
    %1091 = vmatpush1.bf16.msra.mxu0 0
    %1092 = vmatprep.subr.bf16.mxu0 0
    %1093 = vmatpush1.bf16.msra.mxu0 0
    %1094 = vmatprep.mubr.bf16.mxu0 0
    %1095 = vmatmul.mubr.bf16.gmra.mrb[0].mxu0 %v1061
    %v1096 = vpop.f32.mrb[0].mxu0
    %v1097 = vadd.f32 0.0, %v1096
    %v1098 = vpop.f32.mrb[0].mxu0
    %v1099 = vadd.f32 0.0, %v1098
    %v1100 = vpop.f32.mrb[0].mxu0
    %v1101 = vpop.f32.mrb[0].mxu0
    %1102 = vdwg.mxu0
    %1103 = vmatprep.subr.bf16.mxu0 %v1024
    %1104 = vmatpush1.bf16.msra.mxu0 %v1023
    %1105 = vmatprep.subr.bf16.mxu0 %v1028
    %1106 = vmatpush1.bf16.msra.mxu0 %v1027
    %1107 = vmatprep.subr.bf16.mxu0 %v1032
    %1108 = vmatpush1.bf16.msra.mxu0 %v1031
    %1109 = vmatprep.subr.bf16.mxu0 %v1036
    %1110 = vmatpush1.bf16.msra.mxu0 %v1035
    %1111 = vmatprep.subr.bf16.mxu0 %v1040
    %1112 = vmatpush1.bf16.msra.mxu0 %v1039
    %1113 = vmatprep.subr.bf16.mxu0 %v1044
    %1114 = vmatpush1.bf16.msra.mxu0 %v1043
    %1115 = vmatprep.subr.bf16.mxu0 %v1048
    %1116 = vmatpush1.bf16.msra.mxu0 %v1047
    %1117 = vmatprep.subr.bf16.mxu0 %v1052
    %1118 = vmatpush1.bf16.msra.mxu0 %v1051
    %1119 = vmatprep.subr.bf16.mxu0 0
    %1120 = vmatpush1.bf16.msra.mxu0 0
    %1121 = vmatprep.subr.bf16.mxu0 0
    %1122 = vmatpush1.bf16.msra.mxu0 0
    %1123 = vmatprep.subr.bf16.mxu0 0
    %1124 = vmatpush1.bf16.msra.mxu0 0
    %1125 = vmatprep.subr.bf16.mxu0 0
    %1126 = vmatpush1.bf16.msra.mxu0 0
    %1127 = vmatprep.subr.bf16.mxu0 0
    %1128 = vmatpush1.bf16.msra.mxu0 0
    %1129 = vmatprep.subr.bf16.mxu0 0
    %1130 = vmatpush1.bf16.msra.mxu0 0
    %1131 = vmatprep.subr.bf16.mxu0 0
    %1132 = vmatpush1.bf16.msra.mxu0 0
    %1133 = vmatprep.subr.bf16.mxu0 0
    %1134 = vmatpush1.bf16.msra.mxu0 0
    %1135 = vmatprep.mubr.bf16.mxu0 0
    %1136 = vmatmul.mubr.bf16.gmra.mrb[0].mxu0 %v1061
    %v1137 = vpop.f32.mrb[0].mxu0
    %v1138 = vadd.f32 0.0, %v1137
    %v1139 = vpop.f32.mrb[0].mxu0
    %v1140 = vadd.f32 0.0, %v1139
    %v1141 = vpop.f32.mrb[0].mxu0
    %v1142 = vpop.f32.mrb[0].mxu0
    %1143 = vdwg.mxu0
    %v1144 = vadd.f32 %v1056, %v1097
    %v1145 = vadd.f32 %v1057, %v1099
    %v1146 = vadd.f32 %v1058, %v1138
    %v1147 = vadd.f32 %v1059, %v1140
    %v1148 = vld [vmem:[#allocation3] sm:$0xff]
    %v1149 = vxor.u32 %v1144, 2147483648
    %v1150 = vxor.u32 %v1145, 2147483648
    %v1151 = vxor.u32 %v1146, 2147483648
    %v1152 = vmul.f32 %v1149, 1.442695
    %v1153 = vpow.pop %v1152
    %v1154 = vmul.f32 %v1150, 1.442695
    %v1155 = vpow.pop %v1154
    %v1156 = vmul.f32 %v1151, 1.442695
    %v1157 = vpow.pop %v1156
    %v1158 = vadd.f32 %v1153, 1.0
    %v1159 = vadd.f32 %v1155, 1.0
    %v1160 = vadd.f32 %v1157, 1.0
    %v1161 = vrcp.pop %v1158
    %v1162 = vmul.f32 1.0, %v1161
    %v1163 = vrcp.pop %v1159
    %v1164 = vmul.f32 1.0, %v1163
    %v1165 = vrcp.pop %v1160
    %v1166 = vmul.f32 1.0, %v1165
    %v1167 = vtanh.pop %v1147
    %v1168 = vmul.f32 %v1164, %v1148
    %v1169 = vmul.f32 %v1162, %v1167
    %v1170 = vadd.f32 %v1168, %v1169
    %v1171 = vtanh.pop %v1170
    %v1172 = vmul.f32 %v1166, %v1171
    %1173 = vst [vmem:[#allocation2] sm:$0xff] %v1172
    %1174 = vst [vmem:[#allocation3] sm:$0xff] %v1170
    %v1175 = vpack.c.bf16 %v1172, %v1172
    %s1176 = scalar_lea.vmem %s3, 4
    %1177 = vst [vmem:[%s1176] sm:$0xf] %v1175
    %v1178 = vld [vmem:[%s863] sm:$0xff]
    %v1179 = vld [vmem:[%s863 + $0x8] sm:$0xff]
    %v1180 = vld [vmem:[%s863 + $0x10] sm:$0xff]
    %v1181 = vld [vmem:[%s863 + $0x18] sm:$0xff]
    %v1182 = vld [vmem:[%s863 + $0x20] sm:$0xff]
    %v1183 = vld [vmem:[%s863 + $0x28] sm:$0xff]
    %v1184 = vld [vmem:[%s863 + $0x30] sm:$0xff]
    %v1185 = vld [vmem:[%s863 + $0x38] sm:$0xff]
    %v1186 = vld [vmem:[%s863 + $0x40] sm:$0xff]
    %v1187 = vld [vmem:[%s863 + $0x48] sm:$0xff]
    %v1188 = vld [vmem:[%s863 + $0x50] sm:$0xff]
    %v1189 = vld [vmem:[%s863 + $0x58] sm:$0xff]
    %v1190 = vld [vmem:[%s863 + $0x60] sm:$0xff]
    %v1191 = vld [vmem:[%s863 + $0x68] sm:$0xff]
    %v1192 = vld [vmem:[%s863 + $0x70] sm:$0xff]
    %v1193 = vld [vmem:[%s863 + $0x78] sm:$0xff]
    %v1194 = vld [vmem:[%s863 + $0x80] sm:$0xff]
    %v1195 = vld [vmem:[%s863 + $0x88] sm:$0xff]
    %v1196 = vld [vmem:[%s863 + $0x90] sm:$0xff]
    %v1197 = vld [vmem:[%s863 + $0x98] sm:$0xff]
    %v1198 = vld [vmem:[%s863 + $0xa0] sm:$0xff]
    %v1199 = vld [vmem:[%s863 + $0xa8] sm:$0xff]
    %v1200 = vld [vmem:[%s863 + $0xb0] sm:$0xff]
    %v1201 = vld [vmem:[%s863 + $0xb8] sm:$0xff]
    %v1202 = vld [vmem:[%s863 + $0xc0] sm:$0xff]
    %v1203 = vld [vmem:[%s863 + $0xc8] sm:$0xff]
    %v1204 = vld [vmem:[%s863 + $0xd0] sm:$0xff]
    %v1205 = vld [vmem:[%s863 + $0xd8] sm:$0xff]
    %v1206 = vld [vmem:[%s863 + $0xe0] sm:$0xff]
    %v1207 = vld [vmem:[%s863 + $0xe8] sm:$0xff]
    %v1208 = vld [vmem:[%s863 + $0xf0] sm:$0xff]
    %v1209 = vld [vmem:[%s863 + $0xf8] sm:$0xff]
    %s1210 = scalar_lea.vmem [#allocation9], 96
    %v1211 = vld [vmem:[%s1210] sm:$0xff]
    %v1212 = vld [vmem:[%s1210 + $0x8] sm:$0xff]
    %v1213 = vunpack.c.l.bf16 %v1211
    %v1214 = vunpack.c.h.bf16 %v1211
    %v1215 = vunpack.c.l.bf16 %v1212
    %v1216 = vunpack.c.h.bf16 %v1212
    %v1217 = vld [vmem:[#allocation4] sm:$0xff]
    %v1218 = vpack.c.bf16 %v1217, %v1217
    %1219 = vmatprep.subr.bf16.mxu0 %v1179
    %1220 = vmatpush1.bf16.msra.mxu0 %v1178
    %1221 = vmatprep.subr.bf16.mxu0 %v1183
    %1222 = vmatpush1.bf16.msra.mxu0 %v1182
    %1223 = vmatprep.subr.bf16.mxu0 %v1187
    %1224 = vmatpush1.bf16.msra.mxu0 %v1186
    %1225 = vmatprep.subr.bf16.mxu0 %v1191
    %1226 = vmatpush1.bf16.msra.mxu0 %v1190
    %1227 = vmatprep.subr.bf16.mxu0 %v1195
    %1228 = vmatpush1.bf16.msra.mxu0 %v1194
    %1229 = vmatprep.subr.bf16.mxu0 %v1199
    %1230 = vmatpush1.bf16.msra.mxu0 %v1198
    %1231 = vmatprep.subr.bf16.mxu0 %v1203
    %1232 = vmatpush1.bf16.msra.mxu0 %v1202
    %1233 = vmatprep.subr.bf16.mxu0 %v1207
    %1234 = vmatpush1.bf16.msra.mxu0 %v1206
    %1235 = vmatprep.subr.bf16.mxu0 0
    %1236 = vmatpush1.bf16.msra.mxu0 0
    %1237 = vmatprep.subr.bf16.mxu0 0
    %1238 = vmatpush1.bf16.msra.mxu0 0
    %1239 = vmatprep.subr.bf16.mxu0 0
    %1240 = vmatpush1.bf16.msra.mxu0 0
    %1241 = vmatprep.subr.bf16.mxu0 0
    %1242 = vmatpush1.bf16.msra.mxu0 0
    %1243 = vmatprep.subr.bf16.mxu0 0
    %1244 = vmatpush1.bf16.msra.mxu0 0
    %1245 = vmatprep.subr.bf16.mxu0 0
    %1246 = vmatpush1.bf16.msra.mxu0 0
    %1247 = vmatprep.subr.bf16.mxu0 0
    %1248 = vmatpush1.bf16.msra.mxu0 0
    %1249 = vmatprep.subr.bf16.mxu0 0
    %1250 = vmatpush1.bf16.msra.mxu0 0
    %1251 = vmatprep.mubr.bf16.mxu0 0
    %1252 = vmatmul.mubr.bf16.gmra.mrb[0].mxu0 %v1218
    %v1253 = vpop.f32.mrb[0].mxu0
    %v1254 = vadd.f32 0.0, %v1253
    %v1255 = vpop.f32.mrb[0].mxu0
    %v1256 = vadd.f32 0.0, %v1255
    %v1257 = vpop.f32.mrb[0].mxu0
    %v1258 = vpop.f32.mrb[0].mxu0
    %1259 = vdwg.mxu0
    %1260 = vmatprep.subr.bf16.mxu0 %v1181
    %1261 = vmatpush1.bf16.msra.mxu0 %v1180
    %1262 = vmatprep.subr.bf16.mxu0 %v1185
    %1263 = vmatpush1.bf16.msra.mxu0 %v1184
    %1264 = vmatprep.subr.bf16.mxu0 %v1189
    %1265 = vmatpush1.bf16.msra.mxu0 %v1188
    %1266 = vmatprep.subr.bf16.mxu0 %v1193
    %1267 = vmatpush1.bf16.msra.mxu0 %v1192
    %1268 = vmatprep.subr.bf16.mxu0 %v1197
    %1269 = vmatpush1.bf16.msra.mxu0 %v1196
    %1270 = vmatprep.subr.bf16.mxu0 %v1201
    %1271 = vmatpush1.bf16.msra.mxu0 %v1200
    %1272 = vmatprep.subr.bf16.mxu0 %v1205
    %1273 = vmatpush1.bf16.msra.mxu0 %v1204
    %1274 = vmatprep.subr.bf16.mxu0 %v1209
    %1275 = vmatpush1.bf16.msra.mxu0 %v1208
    %1276 = vmatprep.subr.bf16.mxu0 0
    %1277 = vmatpush1.bf16.msra.mxu0 0
    %1278 = vmatprep.subr.bf16.mxu0 0
    %1279 = vmatpush1.bf16.msra.mxu0 0
    %1280 = vmatprep.subr.bf16.mxu0 0
    %1281 = vmatpush1.bf16.msra.mxu0 0
    %1282 = vmatprep.subr.bf16.mxu0 0
    %1283 = vmatpush1.bf16.msra.mxu0 0
    %1284 = vmatprep.subr.bf16.mxu0 0
    %1285 = vmatpush1.bf16.msra.mxu0 0
    %1286 = vmatprep.subr.bf16.mxu0 0
    %1287 = vmatpush1.bf16.msra.mxu0 0
    %1288 = vmatprep.subr.bf16.mxu0 0
    %1289 = vmatpush1.bf16.msra.mxu0 0
    %1290 = vmatprep.subr.bf16.mxu0 0
    %1291 = vmatpush1.bf16.msra.mxu0 0
    %1292 = vmatprep.mubr.bf16.mxu0 0
    %1293 = vmatmul.mubr.bf16.gmra.mrb[0].mxu0 %v1218
    %v1294 = vpop.f32.mrb[0].mxu0
    %v1295 = vadd.f32 0.0, %v1294
    %v1296 = vpop.f32.mrb[0].mxu0
    %v1297 = vadd.f32 0.0, %v1296
    %v1298 = vpop.f32.mrb[0].mxu0
    %v1299 = vpop.f32.mrb[0].mxu0
    %1300 = vdwg.mxu0
    %v1301 = vadd.f32 %v1213, %v1254
    %v1302 = vadd.f32 %v1214, %v1256
    %v1303 = vadd.f32 %v1215, %v1295
    %v1304 = vadd.f32 %v1216, %v1297
    %v1305 = vld [vmem:[#allocation5] sm:$0xff]
    %v1306 = vxor.u32 %v1301, 2147483648
    %v1307 = vxor.u32 %v1302, 2147483648
    %v1308 = vxor.u32 %v1303, 2147483648
    %v1309 = vmul.f32 %v1306, 1.442695
    %v1310 = vpow.pop %v1309
    %v1311 = vmul.f32 %v1307, 1.442695
    %v1312 = vpow.pop %v1311
    %v1313 = vmul.f32 %v1308, 1.442695
    %v1314 = vpow.pop %v1313
    %v1315 = vadd.f32 %v1310, 1.0
    %v1316 = vadd.f32 %v1312, 1.0
    %v1317 = vadd.f32 %v1314, 1.0
    %v1318 = vrcp.pop %v1315
    %v1319 = vmul.f32 1.0, %v1318
    %v1320 = vrcp.pop %v1316
    %v1321 = vmul.f32 1.0, %v1320
    %v1322 = vrcp.pop %v1317
    %v1323 = vmul.f32 1.0, %v1322
    %v1324 = vtanh.pop %v1304
    %v1325 = vmul.f32 %v1321, %v1305
    %v1326 = vmul.f32 %v1319, %v1324
    %v1327 = vadd.f32 %v1325, %v1326
    %v1328 = vtanh.pop %v1327
    %v1329 = vmul.f32 %v1323, %v1328
    %1330 = vst [vmem:[#allocation4] sm:$0xff] %v1329
    %1331 = vst [vmem:[#allocation5] sm:$0xff] %v1327
    %v1332 = vpack.c.bf16 %v1329, %v1329
    %s1333 = scalar_lea.vmem %s131, 24
    %1334 = vst [vmem:[%s1333] sm:$0xf] %v1332
    %v1335 = vld [vmem:[#allocation6] sm:$0xff]
    %v1336 = vld [vmem:[#allocation6 + $0x8] sm:$0xff]
    %v1337 = vld [vmem:[#allocation6 + $0x10] sm:$0xff]
    %v1338 = vld [vmem:[#allocation6 + $0x18] sm:$0xff]
    %v1339 = vld [vmem:[#allocation6 + $0x20] sm:$0xff]
    %v1340 = vld [vmem:[#allocation6 + $0x28] sm:$0xff]
    %v1341 = vld [vmem:[#allocation6 + $0x30] sm:$0xff]
    %v1342 = vld [vmem:[#allocation6 + $0x38] sm:$0xff]
    %v1343 = vld [vmem:[#allocation6 + $0x40] sm:$0xff]
    %v1344 = vld [vmem:[#allocation6 + $0x48] sm:$0xff]
    %v1345 = vld [vmem:[#allocation6 + $0x50] sm:$0xff]
    %v1346 = vld [vmem:[#allocation6 + $0x58] sm:$0xff]
    %v1347 = vld [vmem:[#allocation6 + $0x60] sm:$0xff]
    %v1348 = vld [vmem:[#allocation6 + $0x68] sm:$0xff]
    %v1349 = vld [vmem:[#allocation6 + $0x70] sm:$0xff]
    %v1350 = vld [vmem:[#allocation6 + $0x78] sm:$0xff]
    %v1351 = vld [vmem:[#allocation6 + $0x80] sm:$0xff]
    %v1352 = vld [vmem:[#allocation6 + $0x88] sm:$0xff]
    %v1353 = vld [vmem:[#allocation6 + $0x90] sm:$0xff]
    %v1354 = vld [vmem:[#allocation6 + $0x98] sm:$0xff]
    %v1355 = vld [vmem:[#allocation6 + $0xa0] sm:$0xff]
    %v1356 = vld [vmem:[#allocation6 + $0xa8] sm:$0xff]
    %v1357 = vld [vmem:[#allocation6 + $0xb0] sm:$0xff]
    %v1358 = vld [vmem:[#allocation6 + $0xb8] sm:$0xff]
    %v1359 = vld [vmem:[#allocation6 + $0xc0] sm:$0xff]
    %v1360 = vld [vmem:[#allocation6 + $0xc8] sm:$0xff]
    %v1361 = vld [vmem:[#allocation6 + $0xd0] sm:$0xff]
    %v1362 = vld [vmem:[#allocation6 + $0xd8] sm:$0xff]
    %v1363 = vld [vmem:[#allocation6 + $0xe0] sm:$0xff]
    %v1364 = vld [vmem:[#allocation6 + $0xe8] sm:$0xff]
    %v1365 = vld [vmem:[#allocation6 + $0xf0] sm:$0xff]
    %v1366 = vld [vmem:[#allocation6 + $0xf8] sm:$0xff]
    %s1367 = scalar_lea.vmem [#allocation8], 32
    %v1368 = vld [vmem:[%s1367] sm:$0xff]
    %v1369 = vld [vmem:[%s1367 + $0x8] sm:$0xff]
    %v1370 = vunpack.c.l.bf16 %v1368
    %v1371 = vunpack.c.h.bf16 %v1368
    %v1372 = vunpack.c.l.bf16 %v1369
    %v1373 = vunpack.c.h.bf16 %v1369
    %v1374 = vld [vmem:[#allocation2] sm:$0xff]
    %v1375 = vpack.c.bf16 %v1374, %v1374
    %1376 = vmatprep.subr.bf16.mxu0 %v1336
    %1377 = vmatpush1.bf16.msra.mxu0 %v1335
    %1378 = vmatprep.subr.bf16.mxu0 %v1340
    %1379 = vmatpush1.bf16.msra.mxu0 %v1339
    %1380 = vmatprep.subr.bf16.mxu0 %v1344
    %1381 = vmatpush1.bf16.msra.mxu0 %v1343
    %1382 = vmatprep.subr.bf16.mxu0 %v1348
    %1383 = vmatpush1.bf16.msra.mxu0 %v1347
    %1384 = vmatprep.subr.bf16.mxu0 %v1352
    %1385 = vmatpush1.bf16.msra.mxu0 %v1351
    %1386 = vmatprep.subr.bf16.mxu0 %v1356
    %1387 = vmatpush1.bf16.msra.mxu0 %v1355
    %1388 = vmatprep.subr.bf16.mxu0 %v1360
    %1389 = vmatpush1.bf16.msra.mxu0 %v1359
    %1390 = vmatprep.subr.bf16.mxu0 %v1364
    %1391 = vmatpush1.bf16.msra.mxu0 %v1363
    %1392 = vmatprep.subr.bf16.mxu0 0
    %1393 = vmatpush1.bf16.msra.mxu0 0
    %1394 = vmatprep.subr.bf16.mxu0 0
    %1395 = vmatpush1.bf16.msra.mxu0 0
    %1396 = vmatprep.subr.bf16.mxu0 0
    %1397 = vmatpush1.bf16.msra.mxu0 0
    %1398 = vmatprep.subr.bf16.mxu0 0
    %1399 = vmatpush1.bf16.msra.mxu0 0
    %1400 = vmatprep.subr.bf16.mxu0 0
    %1401 = vmatpush1.bf16.msra.mxu0 0
    %1402 = vmatprep.subr.bf16.mxu0 0
    %1403 = vmatpush1.bf16.msra.mxu0 0
    %1404 = vmatprep.subr.bf16.mxu0 0
    %1405 = vmatpush1.bf16.msra.mxu0 0
    %1406 = vmatprep.subr.bf16.mxu0 0
    %1407 = vmatpush1.bf16.msra.mxu0 0
    %1408 = vmatprep.mubr.bf16.mxu0 0
    %1409 = vmatmul.mubr.bf16.gmra.mrb[0].mxu0 %v1375
    %v1410 = vpop.f32.mrb[0].mxu0
    %v1411 = vadd.f32 0.0, %v1410
    %v1412 = vpop.f32.mrb[0].mxu0
    %v1413 = vadd.f32 0.0, %v1412
    %v1414 = vpop.f32.mrb[0].mxu0
    %v1415 = vpop.f32.mrb[0].mxu0
    %1416 = vdwg.mxu0
    %1417 = vmatprep.subr.bf16.mxu0 %v1338
    %1418 = vmatpush1.bf16.msra.mxu0 %v1337
    %1419 = vmatprep.subr.bf16.mxu0 %v1342
    %1420 = vmatpush1.bf16.msra.mxu0 %v1341
    %1421 = vmatprep.subr.bf16.mxu0 %v1346
    %1422 = vmatpush1.bf16.msra.mxu0 %v1345
    %1423 = vmatprep.subr.bf16.mxu0 %v1350
    %1424 = vmatpush1.bf16.msra.mxu0 %v1349
    %1425 = vmatprep.subr.bf16.mxu0 %v1354
    %1426 = vmatpush1.bf16.msra.mxu0 %v1353
    %1427 = vmatprep.subr.bf16.mxu0 %v1358
    %1428 = vmatpush1.bf16.msra.mxu0 %v1357
    %1429 = vmatprep.subr.bf16.mxu0 %v1362
    %1430 = vmatpush1.bf16.msra.mxu0 %v1361
    %1431 = vmatprep.subr.bf16.mxu0 %v1366
    %1432 = vmatpush1.bf16.msra.mxu0 %v1365
    %1433 = vmatprep.subr.bf16.mxu0 0
    %1434 = vmatpush1.bf16.msra.mxu0 0
    %1435 = vmatprep.subr.bf16.mxu0 0
    %1436 = vmatpush1.bf16.msra.mxu0 0
    %1437 = vmatprep.subr.bf16.mxu0 0
    %1438 = vmatpush1.bf16.msra.mxu0 0
    %1439 = vmatprep.subr.bf16.mxu0 0
    %1440 = vmatpush1.bf16.msra.mxu0 0
    %1441 = vmatprep.subr.bf16.mxu0 0
    %1442 = vmatpush1.bf16.msra.mxu0 0
    %1443 = vmatprep.subr.bf16.mxu0 0
    %1444 = vmatpush1.bf16.msra.mxu0 0
    %1445 = vmatprep.subr.bf16.mxu0 0
    %1446 = vmatpush1.bf16.msra.mxu0 0
    %1447 = vmatprep.subr.bf16.mxu0 0
    %1448 = vmatpush1.bf16.msra.mxu0 0
    %1449 = vmatprep.mubr.bf16.mxu0 0
    %1450 = vmatmul.mubr.bf16.gmra.mrb[0].mxu0 %v1375
    %v1451 = vpop.f32.mrb[0].mxu0
    %v1452 = vadd.f32 0.0, %v1451
    %v1453 = vpop.f32.mrb[0].mxu0
    %v1454 = vadd.f32 0.0, %v1453
    %v1455 = vpop.f32.mrb[0].mxu0
    %v1456 = vpop.f32.mrb[0].mxu0
    %1457 = vdwg.mxu0
    %v1458 = vadd.f32 %v1370, %v1411
    %v1459 = vadd.f32 %v1371, %v1413
    %v1460 = vadd.f32 %v1372, %v1452
    %v1461 = vadd.f32 %v1373, %v1454
    %v1462 = vld [vmem:[#allocation3] sm:$0xff]
    %v1463 = vxor.u32 %v1458, 2147483648
    %v1464 = vxor.u32 %v1459, 2147483648
    %v1465 = vxor.u32 %v1460, 2147483648
    %v1466 = vmul.f32 %v1463, 1.442695
    %v1467 = vpow.pop %v1466
    %v1468 = vmul.f32 %v1464, 1.442695
    %v1469 = vpow.pop %v1468
    %v1470 = vmul.f32 %v1465, 1.442695
    %v1471 = vpow.pop %v1470
    %v1472 = vadd.f32 %v1467, 1.0
    %v1473 = vadd.f32 %v1469, 1.0
    %v1474 = vadd.f32 %v1471, 1.0
    %v1475 = vrcp.pop %v1472
    %v1476 = vmul.f32 1.0, %v1475
    %v1477 = vrcp.pop %v1473
    %v1478 = vmul.f32 1.0, %v1477
    %v1479 = vrcp.pop %v1474
    %v1480 = vmul.f32 1.0, %v1479
    %v1481 = vtanh.pop %v1461
    %v1482 = vmul.f32 %v1478, %v1462
    %v1483 = vmul.f32 %v1476, %v1481
    %v1484 = vadd.f32 %v1482, %v1483
    %v1485 = vtanh.pop %v1484
    %v1486 = vmul.f32 %v1480, %v1485
    %1487 = vst [vmem:[#allocation2] sm:$0xff] %v1486
    %1488 = vst [vmem:[#allocation3] sm:$0xff] %v1484
    %v1489 = vpack.c.bf16 %v1486, %v1486
    %s1490 = scalar_lea.vmem %s3, 8
    %1491 = vst [vmem:[%s1490] sm:$0xf] %v1489
    %v1492 = vld [vmem:[%s863] sm:$0xff]
    %v1493 = vld [vmem:[%s863 + $0x8] sm:$0xff]
    %v1494 = vld [vmem:[%s863 + $0x10] sm:$0xff]
    %v1495 = vld [vmem:[%s863 + $0x18] sm:$0xff]
    %v1496 = vld [vmem:[%s863 + $0x20] sm:$0xff]
    %v1497 = vld [vmem:[%s863 + $0x28] sm:$0xff]
    %v1498 = vld [vmem:[%s863 + $0x30] sm:$0xff]
    %v1499 = vld [vmem:[%s863 + $0x38] sm:$0xff]
    %v1500 = vld [vmem:[%s863 + $0x40] sm:$0xff]
    %v1501 = vld [vmem:[%s863 + $0x48] sm:$0xff]
    %v1502 = vld [vmem:[%s863 + $0x50] sm:$0xff]
    %v1503 = vld [vmem:[%s863 + $0x58] sm:$0xff]
    %v1504 = vld [vmem:[%s863 + $0x60] sm:$0xff]
    %v1505 = vld [vmem:[%s863 + $0x68] sm:$0xff]
    %v1506 = vld [vmem:[%s863 + $0x70] sm:$0xff]
    %v1507 = vld [vmem:[%s863 + $0x78] sm:$0xff]
    %v1508 = vld [vmem:[%s863 + $0x80] sm:$0xff]
    %v1509 = vld [vmem:[%s863 + $0x88] sm:$0xff]
    %v1510 = vld [vmem:[%s863 + $0x90] sm:$0xff]
    %v1511 = vld [vmem:[%s863 + $0x98] sm:$0xff]
    %v1512 = vld [vmem:[%s863 + $0xa0] sm:$0xff]
    %v1513 = vld [vmem:[%s863 + $0xa8] sm:$0xff]
    %v1514 = vld [vmem:[%s863 + $0xb0] sm:$0xff]
    %v1515 = vld [vmem:[%s863 + $0xb8] sm:$0xff]
    %v1516 = vld [vmem:[%s863 + $0xc0] sm:$0xff]
    %v1517 = vld [vmem:[%s863 + $0xc8] sm:$0xff]
    %v1518 = vld [vmem:[%s863 + $0xd0] sm:$0xff]
    %v1519 = vld [vmem:[%s863 + $0xd8] sm:$0xff]
    %v1520 = vld [vmem:[%s863 + $0xe0] sm:$0xff]
    %v1521 = vld [vmem:[%s863 + $0xe8] sm:$0xff]
    %v1522 = vld [vmem:[%s863 + $0xf0] sm:$0xff]
    %v1523 = vld [vmem:[%s863 + $0xf8] sm:$0xff]
    %s1524 = scalar_lea.vmem [#allocation9], 80
    %v1525 = vld [vmem:[%s1524] sm:$0xff]
    %v1526 = vld [vmem:[%s1524 + $0x8] sm:$0xff]
    %v1527 = vunpack.c.l.bf16 %v1525
    %v1528 = vunpack.c.h.bf16 %v1525
    %v1529 = vunpack.c.l.bf16 %v1526
    %v1530 = vunpack.c.h.bf16 %v1526
    %v1531 = vld [vmem:[#allocation4] sm:$0xff]
    %v1532 = vpack.c.bf16 %v1531, %v1531
    %1533 = vmatprep.subr.bf16.mxu0 %v1493
    %1534 = vmatpush1.bf16.msra.mxu0 %v1492
    %1535 = vmatprep.subr.bf16.mxu0 %v1497
    %1536 = vmatpush1.bf16.msra.mxu0 %v1496
    %1537 = vmatprep.subr.bf16.mxu0 %v1501
    %1538 = vmatpush1.bf16.msra.mxu0 %v1500
    %1539 = vmatprep.subr.bf16.mxu0 %v1505
    %1540 = vmatpush1.bf16.msra.mxu0 %v1504
    %1541 = vmatprep.subr.bf16.mxu0 %v1509
    %1542 = vmatpush1.bf16.msra.mxu0 %v1508
    %1543 = vmatprep.subr.bf16.mxu0 %v1513
    %1544 = vmatpush1.bf16.msra.mxu0 %v1512
    %1545 = vmatprep.subr.bf16.mxu0 %v1517
    %1546 = vmatpush1.bf16.msra.mxu0 %v1516
    %1547 = vmatprep.subr.bf16.mxu0 %v1521
    %1548 = vmatpush1.bf16.msra.mxu0 %v1520
    %1549 = vmatprep.subr.bf16.mxu0 0
    %1550 = vmatpush1.bf16.msra.mxu0 0
    %1551 = vmatprep.subr.bf16.mxu0 0
    %1552 = vmatpush1.bf16.msra.mxu0 0
    %1553 = vmatprep.subr.bf16.mxu0 0
    %1554 = vmatpush1.bf16.msra.mxu0 0
    %1555 = vmatprep.subr.bf16.mxu0 0
    %1556 = vmatpush1.bf16.msra.mxu0 0
    %1557 = vmatprep.subr.bf16.mxu0 0
    %1558 = vmatpush1.bf16.msra.mxu0 0
    %1559 = vmatprep.subr.bf16.mxu0 0
    %1560 = vmatpush1.bf16.msra.mxu0 0
    %1561 = vmatprep.subr.bf16.mxu0 0
    %1562 = vmatpush1.bf16.msra.mxu0 0
    %1563 = vmatprep.subr.bf16.mxu0 0
    %1564 = vmatpush1.bf16.msra.mxu0 0
    %1565 = vmatprep.mubr.bf16.mxu0 0
    %1566 = vmatmul.mubr.bf16.gmra.mrb[0].mxu0 %v1532
    %v1567 = vpop.f32.mrb[0].mxu0
    %v1568 = vadd.f32 0.0, %v1567
    %v1569 = vpop.f32.mrb[0].mxu0
    %v1570 = vadd.f32 0.0, %v1569
    %v1571 = vpop.f32.mrb[0].mxu0
    %v1572 = vpop.f32.mrb[0].mxu0
    %1573 = vdwg.mxu0
    %1574 = vmatprep.subr.bf16.mxu0 %v1495
    %1575 = vmatpush1.bf16.msra.mxu0 %v1494
    %1576 = vmatprep.subr.bf16.mxu0 %v1499
    %1577 = vmatpush1.bf16.msra.mxu0 %v1498
    %1578 = vmatprep.subr.bf16.mxu0 %v1503
    %1579 = vmatpush1.bf16.msra.mxu0 %v1502
    %1580 = vmatprep.subr.bf16.mxu0 %v1507
    %1581 = vmatpush1.bf16.msra.mxu0 %v1506
    %1582 = vmatprep.subr.bf16.mxu0 %v1511
    %1583 = vmatpush1.bf16.msra.mxu0 %v1510
    %1584 = vmatprep.subr.bf16.mxu0 %v1515
    %1585 = vmatpush1.bf16.msra.mxu0 %v1514
    %1586 = vmatprep.subr.bf16.mxu0 %v1519
    %1587 = vmatpush1.bf16.msra.mxu0 %v1518
    %1588 = vmatprep.subr.bf16.mxu0 %v1523
    %1589 = vmatpush1.bf16.msra.mxu0 %v1522
    %1590 = vmatprep.subr.bf16.mxu0 0
    %1591 = vmatpush1.bf16.msra.mxu0 0
    %1592 = vmatprep.subr.bf16.mxu0 0
    %1593 = vmatpush1.bf16.msra.mxu0 0
    %1594 = vmatprep.subr.bf16.mxu0 0
    %1595 = vmatpush1.bf16.msra.mxu0 0
    %1596 = vmatprep.subr.bf16.mxu0 0
    %1597 = vmatpush1.bf16.msra.mxu0 0
    %1598 = vmatprep.subr.bf16.mxu0 0
    %1599 = vmatpush1.bf16.msra.mxu0 0
    %1600 = vmatprep.subr.bf16.mxu0 0
    %1601 = vmatpush1.bf16.msra.mxu0 0
    %1602 = vmatprep.subr.bf16.mxu0 0
    %1603 = vmatpush1.bf16.msra.mxu0 0
    %1604 = vmatprep.subr.bf16.mxu0 0
    %1605 = vmatpush1.bf16.msra.mxu0 0
    %1606 = vmatprep.mubr.bf16.mxu0 0
    %1607 = vmatmul.mubr.bf16.gmra.mrb[0].mxu0 %v1532
    %v1608 = vpop.f32.mrb[0].mxu0
    %v1609 = vadd.f32 0.0, %v1608
    %v1610 = vpop.f32.mrb[0].mxu0
    %v1611 = vadd.f32 0.0, %v1610
    %v1612 = vpop.f32.mrb[0].mxu0
    %v1613 = vpop.f32.mrb[0].mxu0
    %1614 = vdwg.mxu0
    %v1615 = vadd.f32 %v1527, %v1568
    %v1616 = vadd.f32 %v1528, %v1570
    %v1617 = vadd.f32 %v1529, %v1609
    %v1618 = vadd.f32 %v1530, %v1611
    %v1619 = vld [vmem:[#allocation5] sm:$0xff]
    %v1620 = vxor.u32 %v1615, 2147483648
    %v1621 = vxor.u32 %v1616, 2147483648
    %v1622 = vxor.u32 %v1617, 2147483648
    %v1623 = vmul.f32 %v1620, 1.442695
    %v1624 = vpow.pop %v1623
    %v1625 = vmul.f32 %v1621, 1.442695
    %v1626 = vpow.pop %v1625
    %v1627 = vmul.f32 %v1622, 1.442695
    %v1628 = vpow.pop %v1627
    %v1629 = vadd.f32 %v1624, 1.0
    %v1630 = vadd.f32 %v1626, 1.0
    %v1631 = vadd.f32 %v1628, 1.0
    %v1632 = vrcp.pop %v1629
    %v1633 = vmul.f32 1.0, %v1632
    %v1634 = vrcp.pop %v1630
    %v1635 = vmul.f32 1.0, %v1634
    %v1636 = vrcp.pop %v1631
    %v1637 = vmul.f32 1.0, %v1636
    %v1638 = vtanh.pop %v1618
    %v1639 = vmul.f32 %v1635, %v1619
    %v1640 = vmul.f32 %v1633, %v1638
    %v1641 = vadd.f32 %v1639, %v1640
    %v1642 = vtanh.pop %v1641
    %v1643 = vmul.f32 %v1637, %v1642
    %1644 = vst [vmem:[#allocation4] sm:$0xff] %v1643
    %1645 = vst [vmem:[#allocation5] sm:$0xff] %v1641
    %v1646 = vpack.c.bf16 %v1643, %v1643
    %s1647 = scalar_lea.vmem %s131, 20
    %1648 = vst [vmem:[%s1647] sm:$0xf] %v1646
    %v1649 = vld [vmem:[#allocation6] sm:$0xff]
    %v1650 = vld [vmem:[#allocation6 + $0x8] sm:$0xff]
    %v1651 = vld [vmem:[#allocation6 + $0x10] sm:$0xff]
    %v1652 = vld [vmem:[#allocation6 + $0x18] sm:$0xff]
    %v1653 = vld [vmem:[#allocation6 + $0x20] sm:$0xff]
    %v1654 = vld [vmem:[#allocation6 + $0x28] sm:$0xff]
    %v1655 = vld [vmem:[#allocation6 + $0x30] sm:$0xff]
    %v1656 = vld [vmem:[#allocation6 + $0x38] sm:$0xff]
    %v1657 = vld [vmem:[#allocation6 + $0x40] sm:$0xff]
    %v1658 = vld [vmem:[#allocation6 + $0x48] sm:$0xff]
    %v1659 = vld [vmem:[#allocation6 + $0x50] sm:$0xff]
    %v1660 = vld [vmem:[#allocation6 + $0x58] sm:$0xff]
    %v1661 = vld [vmem:[#allocation6 + $0x60] sm:$0xff]
    %v1662 = vld [vmem:[#allocation6 + $0x68] sm:$0xff]
    %v1663 = vld [vmem:[#allocation6 + $0x70] sm:$0xff]
    %v1664 = vld [vmem:[#allocation6 + $0x78] sm:$0xff]
    %v1665 = vld [vmem:[#allocation6 + $0x80] sm:$0xff]
    %v1666 = vld [vmem:[#allocation6 + $0x88] sm:$0xff]
    %v1667 = vld [vmem:[#allocation6 + $0x90] sm:$0xff]
    %v1668 = vld [vmem:[#allocation6 + $0x98] sm:$0xff]
    %v1669 = vld [vmem:[#allocation6 + $0xa0] sm:$0xff]
    %v1670 = vld [vmem:[#allocation6 + $0xa8] sm:$0xff]
    %v1671 = vld [vmem:[#allocation6 + $0xb0] sm:$0xff]
    %v1672 = vld [vmem:[#allocation6 + $0xb8] sm:$0xff]
    %v1673 = vld [vmem:[#allocation6 + $0xc0] sm:$0xff]
    %v1674 = vld [vmem:[#allocation6 + $0xc8] sm:$0xff]
    %v1675 = vld [vmem:[#allocation6 + $0xd0] sm:$0xff]
    %v1676 = vld [vmem:[#allocation6 + $0xd8] sm:$0xff]
    %v1677 = vld [vmem:[#allocation6 + $0xe0] sm:$0xff]
    %v1678 = vld [vmem:[#allocation6 + $0xe8] sm:$0xff]
    %v1679 = vld [vmem:[#allocation6 + $0xf0] sm:$0xff]
    %v1680 = vld [vmem:[#allocation6 + $0xf8] sm:$0xff]
    %s1681 = scalar_lea.vmem [#allocation8], 48
    %v1682 = vld [vmem:[%s1681] sm:$0xff]
    %v1683 = vld [vmem:[%s1681 + $0x8] sm:$0xff]
    %v1684 = vunpack.c.l.bf16 %v1682
    %v1685 = vunpack.c.h.bf16 %v1682
    %v1686 = vunpack.c.l.bf16 %v1683
    %v1687 = vunpack.c.h.bf16 %v1683
    %v1688 = vld [vmem:[#allocation2] sm:$0xff]
    %v1689 = vpack.c.bf16 %v1688, %v1688
    %1690 = vmatprep.subr.bf16.mxu0 %v1650
    %1691 = vmatpush1.bf16.msra.mxu0 %v1649
    %1692 = vmatprep.subr.bf16.mxu0 %v1654
    %1693 = vmatpush1.bf16.msra.mxu0 %v1653
    %1694 = vmatprep.subr.bf16.mxu0 %v1658
    %1695 = vmatpush1.bf16.msra.mxu0 %v1657
    %1696 = vmatprep.subr.bf16.mxu0 %v1662
    %1697 = vmatpush1.bf16.msra.mxu0 %v1661
    %1698 = vmatprep.subr.bf16.mxu0 %v1666
    %1699 = vmatpush1.bf16.msra.mxu0 %v1665
    %1700 = vmatprep.subr.bf16.mxu0 %v1670
    %1701 = vmatpush1.bf16.msra.mxu0 %v1669
    %1702 = vmatprep.subr.bf16.mxu0 %v1674
    %1703 = vmatpush1.bf16.msra.mxu0 %v1673
    %1704 = vmatprep.subr.bf16.mxu0 %v1678
    %1705 = vmatpush1.bf16.msra.mxu0 %v1677
    %1706 = vmatprep.subr.bf16.mxu0 0
    %1707 = vmatpush1.bf16.msra.mxu0 0
    %1708 = vmatprep.subr.bf16.mxu0 0
    %1709 = vmatpush1.bf16.msra.mxu0 0
    %1710 = vmatprep.subr.bf16.mxu0 0
    %1711 = vmatpush1.bf16.msra.mxu0 0
    %1712 = vmatprep.subr.bf16.mxu0 0
    %1713 = vmatpush1.bf16.msra.mxu0 0
    %1714 = vmatprep.subr.bf16.mxu0 0
    %1715 = vmatpush1.bf16.msra.mxu0 0
    %1716 = vmatprep.subr.bf16.mxu0 0
    %1717 = vmatpush1.bf16.msra.mxu0 0
    %1718 = vmatprep.subr.bf16.mxu0 0
    %1719 = vmatpush1.bf16.msra.mxu0 0
    %1720 = vmatprep.subr.bf16.mxu0 0
    %1721 = vmatpush1.bf16.msra.mxu0 0
    %1722 = vmatprep.mubr.bf16.mxu0 0
    %1723 = vmatmul.mubr.bf16.gmra.mrb[0].mxu0 %v1689
    %v1724 = vpop.f32.mrb[0].mxu0
    %v1725 = vadd.f32 0.0, %v1724
    %v1726 = vpop.f32.mrb[0].mxu0
    %v1727 = vadd.f32 0.0, %v1726
    %v1728 = vpop.f32.mrb[0].mxu0
    %v1729 = vpop.f32.mrb[0].mxu0
    %1730 = vdwg.mxu0
    %1731 = vmatprep.subr.bf16.mxu0 %v1652
    %1732 = vmatpush1.bf16.msra.mxu0 %v1651
    %1733 = vmatprep.subr.bf16.mxu0 %v1656
    %1734 = vmatpush1.bf16.msra.mxu0 %v1655
    %1735 = vmatprep.subr.bf16.mxu0 %v1660
    %1736 = vmatpush1.bf16.msra.mxu0 %v1659
    %1737 = vmatprep.subr.bf16.mxu0 %v1664
    %1738 = vmatpush1.bf16.msra.mxu0 %v1663
    %1739 = vmatprep.subr.bf16.mxu0 %v1668
    %1740 = vmatpush1.bf16.msra.mxu0 %v1667
    %1741 = vmatprep.subr.bf16.mxu0 %v1672
    %1742 = vmatpush1.bf16.msra.mxu0 %v1671
    %1743 = vmatprep.subr.bf16.mxu0 %v1676
    %1744 = vmatpush1.bf16.msra.mxu0 %v1675
    %1745 = vmatprep.subr.bf16.mxu0 %v1680
    %1746 = vmatpush1.bf16.msra.mxu0 %v1679
    %1747 = vmatprep.subr.bf16.mxu0 0
    %1748 = vmatpush1.bf16.msra.mxu0 0
    %1749 = vmatprep.subr.bf16.mxu0 0
    %1750 = vmatpush1.bf16.msra.mxu0 0
    %1751 = vmatprep.subr.bf16.mxu0 0
    %1752 = vmatpush1.bf16.msra.mxu0 0
    %1753 = vmatprep.subr.bf16.mxu0 0
    %1754 = vmatpush1.bf16.msra.mxu0 0
    %1755 = vmatprep.subr.bf16.mxu0 0
    %1756 = vmatpush1.bf16.msra.mxu0 0
    %1757 = vmatprep.subr.bf16.mxu0 0
    %1758 = vmatpush1.bf16.msra.mxu0 0
    %1759 = vmatprep.subr.bf16.mxu0 0
    %1760 = vmatpush1.bf16.msra.mxu0 0
    %1761 = vmatprep.subr.bf16.mxu0 0
    %1762 = vmatpush1.bf16.msra.mxu0 0
    %1763 = vmatprep.mubr.bf16.mxu0 0
    %1764 = vmatmul.mubr.bf16.gmra.mrb[0].mxu0 %v1689
    %v1765 = vpop.f32.mrb[0].mxu0
    %v1766 = vadd.f32 0.0, %v1765
    %v1767 = vpop.f32.mrb[0].mxu0
    %v1768 = vadd.f32 0.0, %v1767
    %v1769 = vpop.f32.mrb[0].mxu0
    %v1770 = vpop.f32.mrb[0].mxu0
    %1771 = vdwg.mxu0
    %v1772 = vadd.f32 %v1684, %v1725
    %v1773 = vadd.f32 %v1685, %v1727
    %v1774 = vadd.f32 %v1686, %v1766
    %v1775 = vadd.f32 %v1687, %v1768
    %v1776 = vld [vmem:[#allocation3] sm:$0xff]
    %v1777 = vxor.u32 %v1772, 2147483648
    %v1778 = vxor.u32 %v1773, 2147483648
    %v1779 = vxor.u32 %v1774, 2147483648
    %v1780 = vmul.f32 %v1777, 1.442695
    %v1781 = vpow.pop %v1780
    %v1782 = vmul.f32 %v1778, 1.442695
    %v1783 = vpow.pop %v1782
    %v1784 = vmul.f32 %v1779, 1.442695
    %v1785 = vpow.pop %v1784
    %v1786 = vadd.f32 %v1781, 1.0
    %v1787 = vadd.f32 %v1783, 1.0
    %v1788 = vadd.f32 %v1785, 1.0
    %v1789 = vrcp.pop %v1786
    %v1790 = vmul.f32 1.0, %v1789
    %v1791 = vrcp.pop %v1787
    %v1792 = vmul.f32 1.0, %v1791
    %v1793 = vrcp.pop %v1788
    %v1794 = vmul.f32 1.0, %v1793
    %v1795 = vtanh.pop %v1775
    %v1796 = vmul.f32 %v1792, %v1776
    %v1797 = vmul.f32 %v1790, %v1795
    %v1798 = vadd.f32 %v1796, %v1797
    %v1799 = vtanh.pop %v1798
    %v1800 = vmul.f32 %v1794, %v1799
    %1801 = vst [vmem:[#allocation2] sm:$0xff] %v1800
    %1802 = vst [vmem:[#allocation3] sm:$0xff] %v1798
    %v1803 = vpack.c.bf16 %v1800, %v1800
    %s1804 = scalar_lea.vmem %s3, 12
    %1805 = vst [vmem:[%s1804] sm:$0xf] %v1803
    %v1806 = vld [vmem:[%s863] sm:$0xff]
    %v1807 = vld [vmem:[%s863 + $0x8] sm:$0xff]
    %v1808 = vld [vmem:[%s863 + $0x10] sm:$0xff]
    %v1809 = vld [vmem:[%s863 + $0x18] sm:$0xff]
    %v1810 = vld [vmem:[%s863 + $0x20] sm:$0xff]
    %v1811 = vld [vmem:[%s863 + $0x28] sm:$0xff]
    %v1812 = vld [vmem:[%s863 + $0x30] sm:$0xff]
    %v1813 = vld [vmem:[%s863 + $0x38] sm:$0xff]
    %v1814 = vld [vmem:[%s863 + $0x40] sm:$0xff]
    %v1815 = vld [vmem:[%s863 + $0x48] sm:$0xff]
    %v1816 = vld [vmem:[%s863 + $0x50] sm:$0xff]
    %v1817 = vld [vmem:[%s863 + $0x58] sm:$0xff]
    %v1818 = vld [vmem:[%s863 + $0x60] sm:$0xff]
    %v1819 = vld [vmem:[%s863 + $0x68] sm:$0xff]
    %v1820 = vld [vmem:[%s863 + $0x70] sm:$0xff]
    %v1821 = vld [vmem:[%s863 + $0x78] sm:$0xff]
    %v1822 = vld [vmem:[%s863 + $0x80] sm:$0xff]
    %v1823 = vld [vmem:[%s863 + $0x88] sm:$0xff]
    %v1824 = vld [vmem:[%s863 + $0x90] sm:$0xff]
    %v1825 = vld [vmem:[%s863 + $0x98] sm:$0xff]
    %v1826 = vld [vmem:[%s863 + $0xa0] sm:$0xff]
    %v1827 = vld [vmem:[%s863 + $0xa8] sm:$0xff]
    %v1828 = vld [vmem:[%s863 + $0xb0] sm:$0xff]
    %v1829 = vld [vmem:[%s863 + $0xb8] sm:$0xff]
    %v1830 = vld [vmem:[%s863 + $0xc0] sm:$0xff]
    %v1831 = vld [vmem:[%s863 + $0xc8] sm:$0xff]
    %v1832 = vld [vmem:[%s863 + $0xd0] sm:$0xff]
    %v1833 = vld [vmem:[%s863 + $0xd8] sm:$0xff]
    %v1834 = vld [vmem:[%s863 + $0xe0] sm:$0xff]
    %v1835 = vld [vmem:[%s863 + $0xe8] sm:$0xff]
    %v1836 = vld [vmem:[%s863 + $0xf0] sm:$0xff]
    %v1837 = vld [vmem:[%s863 + $0xf8] sm:$0xff]
    %s1838 = scalar_lea.vmem [#allocation9], 64
    %v1839 = vld [vmem:[%s1838] sm:$0xff]
    %v1840 = vld [vmem:[%s1838 + $0x8] sm:$0xff]
    %v1841 = vunpack.c.l.bf16 %v1839
    %v1842 = vunpack.c.h.bf16 %v1839
    %v1843 = vunpack.c.l.bf16 %v1840
    %v1844 = vunpack.c.h.bf16 %v1840
    %v1845 = vld [vmem:[#allocation4] sm:$0xff]
    %v1846 = vpack.c.bf16 %v1845, %v1845
    %1847 = vmatprep.subr.bf16.mxu0 %v1807
    %1848 = vmatpush1.bf16.msra.mxu0 %v1806
    %1849 = vmatprep.subr.bf16.mxu0 %v1811
    %1850 = vmatpush1.bf16.msra.mxu0 %v1810
    %1851 = vmatprep.subr.bf16.mxu0 %v1815
    %1852 = vmatpush1.bf16.msra.mxu0 %v1814
    %1853 = vmatprep.subr.bf16.mxu0 %v1819
    %1854 = vmatpush1.bf16.msra.mxu0 %v1818
    %1855 = vmatprep.subr.bf16.mxu0 %v1823
    %1856 = vmatpush1.bf16.msra.mxu0 %v1822
    %1857 = vmatprep.subr.bf16.mxu0 %v1827
    %1858 = vmatpush1.bf16.msra.mxu0 %v1826
    %1859 = vmatprep.subr.bf16.mxu0 %v1831
    %1860 = vmatpush1.bf16.msra.mxu0 %v1830
    %1861 = vmatprep.subr.bf16.mxu0 %v1835
    %1862 = vmatpush1.bf16.msra.mxu0 %v1834
    %1863 = vmatprep.subr.bf16.mxu0 0
    %1864 = vmatpush1.bf16.msra.mxu0 0
    %1865 = vmatprep.subr.bf16.mxu0 0
    %1866 = vmatpush1.bf16.msra.mxu0 0
    %1867 = vmatprep.subr.bf16.mxu0 0
    %1868 = vmatpush1.bf16.msra.mxu0 0
    %1869 = vmatprep.subr.bf16.mxu0 0
    %1870 = vmatpush1.bf16.msra.mxu0 0
    %1871 = vmatprep.subr.bf16.mxu0 0
    %1872 = vmatpush1.bf16.msra.mxu0 0
    %1873 = vmatprep.subr.bf16.mxu0 0
    %1874 = vmatpush1.bf16.msra.mxu0 0
    %1875 = vmatprep.subr.bf16.mxu0 0
    %1876 = vmatpush1.bf16.msra.mxu0 0
    %1877 = vmatprep.subr.bf16.mxu0 0
    %1878 = vmatpush1.bf16.msra.mxu0 0
    %1879 = vmatprep.mubr.bf16.mxu0 0
    %1880 = vmatmul.mubr.bf16.gmra.mrb[0].mxu0 %v1846
    %v1881 = vpop.f32.mrb[0].mxu0
    %v1882 = vadd.f32 0.0, %v1881
    %v1883 = vpop.f32.mrb[0].mxu0
    %v1884 = vadd.f32 0.0, %v1883
    %v1885 = vpop.f32.mrb[0].mxu0
    %v1886 = vpop.f32.mrb[0].mxu0
    %1887 = vdwg.mxu0
    %1888 = vmatprep.subr.bf16.mxu0 %v1809
    %1889 = vmatpush1.bf16.msra.mxu0 %v1808
    %1890 = vmatprep.subr.bf16.mxu0 %v1813
    %1891 = vmatpush1.bf16.msra.mxu0 %v1812
    %1892 = vmatprep.subr.bf16.mxu0 %v1817
    %1893 = vmatpush1.bf16.msra.mxu0 %v1816
    %1894 = vmatprep.subr.bf16.mxu0 %v1821
    %1895 = vmatpush1.bf16.msra.mxu0 %v1820
    %1896 = vmatprep.subr.bf16.mxu0 %v1825
    %1897 = vmatpush1.bf16.msra.mxu0 %v1824
    %1898 = vmatprep.subr.bf16.mxu0 %v1829
    %1899 = vmatpush1.bf16.msra.mxu0 %v1828
    %1900 = vmatprep.subr.bf16.mxu0 %v1833
    %1901 = vmatpush1.bf16.msra.mxu0 %v1832
    %1902 = vmatprep.subr.bf16.mxu0 %v1837
    %1903 = vmatpush1.bf16.msra.mxu0 %v1836
    %1904 = vmatprep.subr.bf16.mxu0 0
    %1905 = vmatpush1.bf16.msra.mxu0 0
    %1906 = vmatprep.subr.bf16.mxu0 0
    %1907 = vmatpush1.bf16.msra.mxu0 0
    %1908 = vmatprep.subr.bf16.mxu0 0
    %1909 = vmatpush1.bf16.msra.mxu0 0
    %1910 = vmatprep.subr.bf16.mxu0 0
    %1911 = vmatpush1.bf16.msra.mxu0 0
    %1912 = vmatprep.subr.bf16.mxu0 0
    %1913 = vmatpush1.bf16.msra.mxu0 0
    %1914 = vmatprep.subr.bf16.mxu0 0
    %1915 = vmatpush1.bf16.msra.mxu0 0
    %1916 = vmatprep.subr.bf16.mxu0 0
    %1917 = vmatpush1.bf16.msra.mxu0 0
    %1918 = vmatprep.subr.bf16.mxu0 0
    %1919 = vmatpush1.bf16.msra.mxu0 0
    %1920 = vmatprep.mubr.bf16.mxu0 0
    %1921 = vmatmul.mubr.bf16.gmra.mrb[0].mxu0 %v1846
    %v1922 = vpop.f32.mrb[0].mxu0
    %v1923 = vadd.f32 0.0, %v1922
    %v1924 = vpop.f32.mrb[0].mxu0
    %v1925 = vadd.f32 0.0, %v1924
    %v1926 = vpop.f32.mrb[0].mxu0
    %v1927 = vpop.f32.mrb[0].mxu0
    %1928 = vdwg.mxu0
    %v1929 = vadd.f32 %v1841, %v1882
    %v1930 = vadd.f32 %v1842, %v1884
    %v1931 = vadd.f32 %v1843, %v1923
    %v1932 = vadd.f32 %v1844, %v1925
    %v1933 = vld [vmem:[#allocation5] sm:$0xff]
    %v1934 = vxor.u32 %v1929, 2147483648
    %v1935 = vxor.u32 %v1930, 2147483648
    %v1936 = vxor.u32 %v1931, 2147483648
    %v1937 = vmul.f32 %v1934, 1.442695
    %v1938 = vpow.pop %v1937
    %v1939 = vmul.f32 %v1935, 1.442695
    %v1940 = vpow.pop %v1939
    %v1941 = vmul.f32 %v1936, 1.442695
    %v1942 = vpow.pop %v1941
    %v1943 = vadd.f32 %v1938, 1.0
    %v1944 = vadd.f32 %v1940, 1.0
    %v1945 = vadd.f32 %v1942, 1.0
    %v1946 = vrcp.pop %v1943
    %v1947 = vmul.f32 1.0, %v1946
    %v1948 = vrcp.pop %v1944
    %v1949 = vmul.f32 1.0, %v1948
    %v1950 = vrcp.pop %v1945
    %v1951 = vmul.f32 1.0, %v1950
    %v1952 = vtanh.pop %v1932
    %v1953 = vmul.f32 %v1949, %v1933
    %v1954 = vmul.f32 %v1947, %v1952
    %v1955 = vadd.f32 %v1953, %v1954
    %v1956 = vtanh.pop %v1955
    %v1957 = vmul.f32 %v1951, %v1956
    %1958 = vst [vmem:[#allocation4] sm:$0xff] %v1957
    %1959 = vst [vmem:[#allocation5] sm:$0xff] %v1955
    %v1960 = vpack.c.bf16 %v1957, %v1957
    %s1961 = scalar_lea.vmem %s131, 16
    %1962 = vst [vmem:[%s1961] sm:$0xf] %v1960
    %v1963 = vld [vmem:[#allocation6] sm:$0xff]
    %v1964 = vld [vmem:[#allocation6 + $0x8] sm:$0xff]
    %v1965 = vld [vmem:[#allocation6 + $0x10] sm:$0xff]
    %v1966 = vld [vmem:[#allocation6 + $0x18] sm:$0xff]
    %v1967 = vld [vmem:[#allocation6 + $0x20] sm:$0xff]
    %v1968 = vld [vmem:[#allocation6 + $0x28] sm:$0xff]
    %v1969 = vld [vmem:[#allocation6 + $0x30] sm:$0xff]
    %v1970 = vld [vmem:[#allocation6 + $0x38] sm:$0xff]
    %v1971 = vld [vmem:[#allocation6 + $0x40] sm:$0xff]
    %v1972 = vld [vmem:[#allocation6 + $0x48] sm:$0xff]
    %v1973 = vld [vmem:[#allocation6 + $0x50] sm:$0xff]
    %v1974 = vld [vmem:[#allocation6 + $0x58] sm:$0xff]
    %v1975 = vld [vmem:[#allocation6 + $0x60] sm:$0xff]
    %v1976 = vld [vmem:[#allocation6 + $0x68] sm:$0xff]
    %v1977 = vld [vmem:[#allocation6 + $0x70] sm:$0xff]
    %v1978 = vld [vmem:[#allocation6 + $0x78] sm:$0xff]
    %v1979 = vld [vmem:[#allocation6 + $0x80] sm:$0xff]
    %v1980 = vld [vmem:[#allocation6 + $0x88] sm:$0xff]
    %v1981 = vld [vmem:[#allocation6 + $0x90] sm:$0xff]
    %v1982 = vld [vmem:[#allocation6 + $0x98] sm:$0xff]
    %v1983 = vld [vmem:[#allocation6 + $0xa0] sm:$0xff]
    %v1984 = vld [vmem:[#allocation6 + $0xa8] sm:$0xff]
    %v1985 = vld [vmem:[#allocation6 + $0xb0] sm:$0xff]
    %v1986 = vld [vmem:[#allocation6 + $0xb8] sm:$0xff]
    %v1987 = vld [vmem:[#allocation6 + $0xc0] sm:$0xff]
    %v1988 = vld [vmem:[#allocation6 + $0xc8] sm:$0xff]
    %v1989 = vld [vmem:[#allocation6 + $0xd0] sm:$0xff]
    %v1990 = vld [vmem:[#allocation6 + $0xd8] sm:$0xff]
    %v1991 = vld [vmem:[#allocation6 + $0xe0] sm:$0xff]
    %v1992 = vld [vmem:[#allocation6 + $0xe8] sm:$0xff]
    %v1993 = vld [vmem:[#allocation6 + $0xf0] sm:$0xff]
    %v1994 = vld [vmem:[#allocation6 + $0xf8] sm:$0xff]
    %s1995 = scalar_lea.vmem [#allocation8], 64
    %v1996 = vld [vmem:[%s1995] sm:$0xff]
    %v1997 = vld [vmem:[%s1995 + $0x8] sm:$0xff]
    %v1998 = vunpack.c.l.bf16 %v1996
    %v1999 = vunpack.c.h.bf16 %v1996
    %v2000 = vunpack.c.l.bf16 %v1997
    %v2001 = vunpack.c.h.bf16 %v1997
    %v2002 = vld [vmem:[#allocation2] sm:$0xff]
    %v2003 = vpack.c.bf16 %v2002, %v2002
    %2004 = vmatprep.subr.bf16.mxu0 %v1964
    %2005 = vmatpush1.bf16.msra.mxu0 %v1963
    %2006 = vmatprep.subr.bf16.mxu0 %v1968
    %2007 = vmatpush1.bf16.msra.mxu0 %v1967
    %2008 = vmatprep.subr.bf16.mxu0 %v1972
    %2009 = vmatpush1.bf16.msra.mxu0 %v1971
    %2010 = vmatprep.subr.bf16.mxu0 %v1976
    %2011 = vmatpush1.bf16.msra.mxu0 %v1975
    %2012 = vmatprep.subr.bf16.mxu0 %v1980
    %2013 = vmatpush1.bf16.msra.mxu0 %v1979
    %2014 = vmatprep.subr.bf16.mxu0 %v1984
    %2015 = vmatpush1.bf16.msra.mxu0 %v1983
    %2016 = vmatprep.subr.bf16.mxu0 %v1988
    %2017 = vmatpush1.bf16.msra.mxu0 %v1987
    %2018 = vmatprep.subr.bf16.mxu0 %v1992
    %2019 = vmatpush1.bf16.msra.mxu0 %v1991
    %2020 = vmatprep.subr.bf16.mxu0 0
    %2021 = vmatpush1.bf16.msra.mxu0 0
    %2022 = vmatprep.subr.bf16.mxu0 0
    %2023 = vmatpush1.bf16.msra.mxu0 0
    %2024 = vmatprep.subr.bf16.mxu0 0
    %2025 = vmatpush1.bf16.msra.mxu0 0
    %2026 = vmatprep.subr.bf16.mxu0 0
    %2027 = vmatpush1.bf16.msra.mxu0 0
    %2028 = vmatprep.subr.bf16.mxu0 0
    %2029 = vmatpush1.bf16.msra.mxu0 0
    %2030 = vmatprep.subr.bf16.mxu0 0
    %2031 = vmatpush1.bf16.msra.mxu0 0
    %2032 = vmatprep.subr.bf16.mxu0 0
    %2033 = vmatpush1.bf16.msra.mxu0 0
    %2034 = vmatprep.subr.bf16.mxu0 0
    %2035 = vmatpush1.bf16.msra.mxu0 0
    %2036 = vmatprep.mubr.bf16.mxu0 0
    %2037 = vmatmul.mubr.bf16.gmra.mrb[0].mxu0 %v2003
    %v2038 = vpop.f32.mrb[0].mxu0
    %v2039 = vadd.f32 0.0, %v2038
    %v2040 = vpop.f32.mrb[0].mxu0
    %v2041 = vadd.f32 0.0, %v2040
    %v2042 = vpop.f32.mrb[0].mxu0
    %v2043 = vpop.f32.mrb[0].mxu0
    %2044 = vdwg.mxu0
    %2045 = vmatprep.subr.bf16.mxu0 %v1966
    %2046 = vmatpush1.bf16.msra.mxu0 %v1965
    %2047 = vmatprep.subr.bf16.mxu0 %v1970
    %2048 = vmatpush1.bf16.msra.mxu0 %v1969
    %2049 = vmatprep.subr.bf16.mxu0 %v1974
    %2050 = vmatpush1.bf16.msra.mxu0 %v1973
    %2051 = vmatprep.subr.bf16.mxu0 %v1978
    %2052 = vmatpush1.bf16.msra.mxu0 %v1977
    %2053 = vmatprep.subr.bf16.mxu0 %v1982
    %2054 = vmatpush1.bf16.msra.mxu0 %v1981
    %2055 = vmatprep.subr.bf16.mxu0 %v1986
    %2056 = vmatpush1.bf16.msra.mxu0 %v1985
    %2057 = vmatprep.subr.bf16.mxu0 %v1990
    %2058 = vmatpush1.bf16.msra.mxu0 %v1989
    %2059 = vmatprep.subr.bf16.mxu0 %v1994
    %2060 = vmatpush1.bf16.msra.mxu0 %v1993
    %2061 = vmatprep.subr.bf16.mxu0 0
    %2062 = vmatpush1.bf16.msra.mxu0 0
    %2063 = vmatprep.subr.bf16.mxu0 0
    %2064 = vmatpush1.bf16.msra.mxu0 0
    %2065 = vmatprep.subr.bf16.mxu0 0
    %2066 = vmatpush1.bf16.msra.mxu0 0
    %2067 = vmatprep.subr.bf16.mxu0 0
    %2068 = vmatpush1.bf16.msra.mxu0 0
    %2069 = vmatprep.subr.bf16.mxu0 0
    %2070 = vmatpush1.bf16.msra.mxu0 0
    %2071 = vmatprep.subr.bf16.mxu0 0
    %2072 = vmatpush1.bf16.msra.mxu0 0
    %2073 = vmatprep.subr.bf16.mxu0 0
    %2074 = vmatpush1.bf16.msra.mxu0 0
    %2075 = vmatprep.subr.bf16.mxu0 0
    %2076 = vmatpush1.bf16.msra.mxu0 0
    %2077 = vmatprep.mubr.bf16.mxu0 0
    %2078 = vmatmul.mubr.bf16.gmra.mrb[0].mxu0 %v2003
    %v2079 = vpop.f32.mrb[0].mxu0
    %v2080 = vadd.f32 0.0, %v2079
    %v2081 = vpop.f32.mrb[0].mxu0
    %v2082 = vadd.f32 0.0, %v2081
    %v2083 = vpop.f32.mrb[0].mxu0
    %v2084 = vpop.f32.mrb[0].mxu0
    %2085 = vdwg.mxu0
    %v2086 = vadd.f32 %v1998, %v2039
    %v2087 = vadd.f32 %v1999, %v2041
    %v2088 = vadd.f32 %v2000, %v2080
    %v2089 = vadd.f32 %v2001, %v2082
    %v2090 = vld [vmem:[#allocation3] sm:$0xff]
    %v2091 = vxor.u32 %v2086, 2147483648
    %v2092 = vxor.u32 %v2087, 2147483648
    %v2093 = vxor.u32 %v2088, 2147483648
    %v2094 = vmul.f32 %v2091, 1.442695
    %v2095 = vpow.pop %v2094
    %v2096 = vmul.f32 %v2092, 1.442695
    %v2097 = vpow.pop %v2096
    %v2098 = vmul.f32 %v2093, 1.442695
    %v2099 = vpow.pop %v2098
    %v2100 = vadd.f32 %v2095, 1.0
    %v2101 = vadd.f32 %v2097, 1.0
    %v2102 = vadd.f32 %v2099, 1.0
    %v2103 = vrcp.pop %v2100
    %v2104 = vmul.f32 1.0, %v2103
    %v2105 = vrcp.pop %v2101
    %v2106 = vmul.f32 1.0, %v2105
    %v2107 = vrcp.pop %v2102
    %v2108 = vmul.f32 1.0, %v2107
    %v2109 = vtanh.pop %v2089
    %v2110 = vmul.f32 %v2106, %v2090
    %v2111 = vmul.f32 %v2104, %v2109
    %v2112 = vadd.f32 %v2110, %v2111
    %v2113 = vtanh.pop %v2112
    %v2114 = vmul.f32 %v2108, %v2113
    %2115 = vst [vmem:[#allocation2] sm:$0xff] %v2114
    %2116 = vst [vmem:[#allocation3] sm:$0xff] %v2112
    %v2117 = vpack.c.bf16 %v2114, %v2114
    %s2118 = scalar_lea.vmem %s3, 16
    %2119 = vst [vmem:[%s2118] sm:$0xf] %v2117
    %v2120 = vld [vmem:[%s863] sm:$0xff]
    %v2121 = vld [vmem:[%s863 + $0x8] sm:$0xff]
    %v2122 = vld [vmem:[%s863 + $0x10] sm:$0xff]
    %v2123 = vld [vmem:[%s863 + $0x18] sm:$0xff]
    %v2124 = vld [vmem:[%s863 + $0x20] sm:$0xff]
    %v2125 = vld [vmem:[%s863 + $0x28] sm:$0xff]
    %v2126 = vld [vmem:[%s863 + $0x30] sm:$0xff]
    %v2127 = vld [vmem:[%s863 + $0x38] sm:$0xff]
    %v2128 = vld [vmem:[%s863 + $0x40] sm:$0xff]
    %v2129 = vld [vmem:[%s863 + $0x48] sm:$0xff]
    %v2130 = vld [vmem:[%s863 + $0x50] sm:$0xff]
    %v2131 = vld [vmem:[%s863 + $0x58] sm:$0xff]
    %v2132 = vld [vmem:[%s863 + $0x60] sm:$0xff]
    %v2133 = vld [vmem:[%s863 + $0x68] sm:$0xff]
    %v2134 = vld [vmem:[%s863 + $0x70] sm:$0xff]
    %v2135 = vld [vmem:[%s863 + $0x78] sm:$0xff]
    %v2136 = vld [vmem:[%s863 + $0x80] sm:$0xff]
    %v2137 = vld [vmem:[%s863 + $0x88] sm:$0xff]
    %v2138 = vld [vmem:[%s863 + $0x90] sm:$0xff]
    %v2139 = vld [vmem:[%s863 + $0x98] sm:$0xff]
    %v2140 = vld [vmem:[%s863 + $0xa0] sm:$0xff]
    %v2141 = vld [vmem:[%s863 + $0xa8] sm:$0xff]
    %v2142 = vld [vmem:[%s863 + $0xb0] sm:$0xff]
    %v2143 = vld [vmem:[%s863 + $0xb8] sm:$0xff]
    %v2144 = vld [vmem:[%s863 + $0xc0] sm:$0xff]
    %v2145 = vld [vmem:[%s863 + $0xc8] sm:$0xff]
    %v2146 = vld [vmem:[%s863 + $0xd0] sm:$0xff]
    %v2147 = vld [vmem:[%s863 + $0xd8] sm:$0xff]
    %v2148 = vld [vmem:[%s863 + $0xe0] sm:$0xff]
    %v2149 = vld [vmem:[%s863 + $0xe8] sm:$0xff]
    %v2150 = vld [vmem:[%s863 + $0xf0] sm:$0xff]
    %v2151 = vld [vmem:[%s863 + $0xf8] sm:$0xff]
    %s2152 = scalar_lea.vmem [#allocation9], 48
    %v2153 = vld [vmem:[%s2152] sm:$0xff]
    %v2154 = vld [vmem:[%s2152 + $0x8] sm:$0xff]
    %v2155 = vunpack.c.l.bf16 %v2153
    %v2156 = vunpack.c.h.bf16 %v2153
    %v2157 = vunpack.c.l.bf16 %v2154
    %v2158 = vunpack.c.h.bf16 %v2154
    %v2159 = vld [vmem:[#allocation4] sm:$0xff]
    %v2160 = vpack.c.bf16 %v2159, %v2159
    %2161 = vmatprep.subr.bf16.mxu0 %v2121
    %2162 = vmatpush1.bf16.msra.mxu0 %v2120
    %2163 = vmatprep.subr.bf16.mxu0 %v2125
    %2164 = vmatpush1.bf16.msra.mxu0 %v2124
    %2165 = vmatprep.subr.bf16.mxu0 %v2129
    %2166 = vmatpush1.bf16.msra.mxu0 %v2128
    %2167 = vmatprep.subr.bf16.mxu0 %v2133
    %2168 = vmatpush1.bf16.msra.mxu0 %v2132
    %2169 = vmatprep.subr.bf16.mxu0 %v2137
    %2170 = vmatpush1.bf16.msra.mxu0 %v2136
    %2171 = vmatprep.subr.bf16.mxu0 %v2141
    %2172 = vmatpush1.bf16.msra.mxu0 %v2140
    %2173 = vmatprep.subr.bf16.mxu0 %v2145
    %2174 = vmatpush1.bf16.msra.mxu0 %v2144
    %2175 = vmatprep.subr.bf16.mxu0 %v2149
    %2176 = vmatpush1.bf16.msra.mxu0 %v2148
    %2177 = vmatprep.subr.bf16.mxu0 0
    %2178 = vmatpush1.bf16.msra.mxu0 0
    %2179 = vmatprep.subr.bf16.mxu0 0
    %2180 = vmatpush1.bf16.msra.mxu0 0
    %2181 = vmatprep.subr.bf16.mxu0 0
    %2182 = vmatpush1.bf16.msra.mxu0 0
    %2183 = vmatprep.subr.bf16.mxu0 0
    %2184 = vmatpush1.bf16.msra.mxu0 0
    %2185 = vmatprep.subr.bf16.mxu0 0
    %2186 = vmatpush1.bf16.msra.mxu0 0
    %2187 = vmatprep.subr.bf16.mxu0 0
    %2188 = vmatpush1.bf16.msra.mxu0 0
    %2189 = vmatprep.subr.bf16.mxu0 0
    %2190 = vmatpush1.bf16.msra.mxu0 0
    %2191 = vmatprep.subr.bf16.mxu0 0
    %2192 = vmatpush1.bf16.msra.mxu0 0
    %2193 = vmatprep.mubr.bf16.mxu0 0
    %2194 = vmatmul.mubr.bf16.gmra.mrb[0].mxu0 %v2160
    %v2195 = vpop.f32.mrb[0].mxu0
    %v2196 = vadd.f32 0.0, %v2195
    %v2197 = vpop.f32.mrb[0].mxu0
    %v2198 = vadd.f32 0.0, %v2197
    %v2199 = vpop.f32.mrb[0].mxu0
    %v2200 = vpop.f32.mrb[0].mxu0
    %2201 = vdwg.mxu0
    %2202 = vmatprep.subr.bf16.mxu0 %v2123
    %2203 = vmatpush1.bf16.msra.mxu0 %v2122
    %2204 = vmatprep.subr.bf16.mxu0 %v2127
    %2205 = vmatpush1.bf16.msra.mxu0 %v2126
    %2206 = vmatprep.subr.bf16.mxu0 %v2131
    %2207 = vmatpush1.bf16.msra.mxu0 %v2130
    %2208 = vmatprep.subr.bf16.mxu0 %v2135
    %2209 = vmatpush1.bf16.msra.mxu0 %v2134
    %2210 = vmatprep.subr.bf16.mxu0 %v2139
    %2211 = vmatpush1.bf16.msra.mxu0 %v2138
    %2212 = vmatprep.subr.bf16.mxu0 %v2143
    %2213 = vmatpush1.bf16.msra.mxu0 %v2142
    %2214 = vmatprep.subr.bf16.mxu0 %v2147
    %2215 = vmatpush1.bf16.msra.mxu0 %v2146
    %2216 = vmatprep.subr.bf16.mxu0 %v2151
    %2217 = vmatpush1.bf16.msra.mxu0 %v2150
    %2218 = vmatprep.subr.bf16.mxu0 0
    %2219 = vmatpush1.bf16.msra.mxu0 0
    %2220 = vmatprep.subr.bf16.mxu0 0
    %2221 = vmatpush1.bf16.msra.mxu0 0
    %2222 = vmatprep.subr.bf16.mxu0 0
    %2223 = vmatpush1.bf16.msra.mxu0 0
    %2224 = vmatprep.subr.bf16.mxu0 0
    %2225 = vmatpush1.bf16.msra.mxu0 0
    %2226 = vmatprep.subr.bf16.mxu0 0
    %2227 = vmatpush1.bf16.msra.mxu0 0
    %2228 = vmatprep.subr.bf16.mxu0 0
    %2229 = vmatpush1.bf16.msra.mxu0 0
    %2230 = vmatprep.subr.bf16.mxu0 0
    %2231 = vmatpush1.bf16.msra.mxu0 0
    %2232 = vmatprep.subr.bf16.mxu0 0
    %2233 = vmatpush1.bf16.msra.mxu0 0
    %2234 = vmatprep.mubr.bf16.mxu0 0
    %2235 = vmatmul.mubr.bf16.gmra.mrb[0].mxu0 %v2160
    %v2236 = vpop.f32.mrb[0].mxu0
    %v2237 = vadd.f32 0.0, %v2236
    %v2238 = vpop.f32.mrb[0].mxu0
    %v2239 = vadd.f32 0.0, %v2238
    %v2240 = vpop.f32.mrb[0].mxu0
    %v2241 = vpop.f32.mrb[0].mxu0
    %2242 = vdwg.mxu0
    %v2243 = vadd.f32 %v2155, %v2196
    %v2244 = vadd.f32 %v2156, %v2198
    %v2245 = vadd.f32 %v2157, %v2237
    %v2246 = vadd.f32 %v2158, %v2239
    %v2247 = vld [vmem:[#allocation5] sm:$0xff]
    %v2248 = vxor.u32 %v2243, 2147483648
    %v2249 = vxor.u32 %v2244, 2147483648
    %v2250 = vxor.u32 %v2245, 2147483648
    %v2251 = vmul.f32 %v2248, 1.442695
    %v2252 = vpow.pop %v2251
    %v2253 = vmul.f32 %v2249, 1.442695
    %v2254 = vpow.pop %v2253
    %v2255 = vmul.f32 %v2250, 1.442695
    %v2256 = vpow.pop %v2255
    %v2257 = vadd.f32 %v2252, 1.0
    %v2258 = vadd.f32 %v2254, 1.0
    %v2259 = vadd.f32 %v2256, 1.0
    %v2260 = vrcp.pop %v2257
    %v2261 = vmul.f32 1.0, %v2260
    %v2262 = vrcp.pop %v2258
    %v2263 = vmul.f32 1.0, %v2262
    %v2264 = vrcp.pop %v2259
    %v2265 = vmul.f32 1.0, %v2264
    %v2266 = vtanh.pop %v2246
    %v2267 = vmul.f32 %v2263, %v2247
    %v2268 = vmul.f32 %v2261, %v2266
    %v2269 = vadd.f32 %v2267, %v2268
    %v2270 = vtanh.pop %v2269
    %v2271 = vmul.f32 %v2265, %v2270
    %2272 = vst [vmem:[#allocation4] sm:$0xff] %v2271
    %2273 = vst [vmem:[#allocation5] sm:$0xff] %v2269
    %v2274 = vpack.c.bf16 %v2271, %v2271
    %s2275 = scalar_lea.vmem %s131, 12
    %2276 = vst [vmem:[%s2275] sm:$0xf] %v2274
    %v2277 = vld [vmem:[#allocation6] sm:$0xff]
    %v2278 = vld [vmem:[#allocation6 + $0x8] sm:$0xff]
    %v2279 = vld [vmem:[#allocation6 + $0x10] sm:$0xff]
    %v2280 = vld [vmem:[#allocation6 + $0x18] sm:$0xff]
    %v2281 = vld [vmem:[#allocation6 + $0x20] sm:$0xff]
    %v2282 = vld [vmem:[#allocation6 + $0x28] sm:$0xff]
    %v2283 = vld [vmem:[#allocation6 + $0x30] sm:$0xff]
    %v2284 = vld [vmem:[#allocation6 + $0x38] sm:$0xff]
    %v2285 = vld [vmem:[#allocation6 + $0x40] sm:$0xff]
    %v2286 = vld [vmem:[#allocation6 + $0x48] sm:$0xff]
    %v2287 = vld [vmem:[#allocation6 + $0x50] sm:$0xff]
    %v2288 = vld [vmem:[#allocation6 + $0x58] sm:$0xff]
    %v2289 = vld [vmem:[#allocation6 + $0x60] sm:$0xff]
    %v2290 = vld [vmem:[#allocation6 + $0x68] sm:$0xff]
    %v2291 = vld [vmem:[#allocation6 + $0x70] sm:$0xff]
    %v2292 = vld [vmem:[#allocation6 + $0x78] sm:$0xff]
    %v2293 = vld [vmem:[#allocation6 + $0x80] sm:$0xff]
    %v2294 = vld [vmem:[#allocation6 + $0x88] sm:$0xff]
    %v2295 = vld [vmem:[#allocation6 + $0x90] sm:$0xff]
    %v2296 = vld [vmem:[#allocation6 + $0x98] sm:$0xff]
    %v2297 = vld [vmem:[#allocation6 + $0xa0] sm:$0xff]
    %v2298 = vld [vmem:[#allocation6 + $0xa8] sm:$0xff]
    %v2299 = vld [vmem:[#allocation6 + $0xb0] sm:$0xff]
    %v2300 = vld [vmem:[#allocation6 + $0xb8] sm:$0xff]
    %v2301 = vld [vmem:[#allocation6 + $0xc0] sm:$0xff]
    %v2302 = vld [vmem:[#allocation6 + $0xc8] sm:$0xff]
    %v2303 = vld [vmem:[#allocation6 + $0xd0] sm:$0xff]
    %v2304 = vld [vmem:[#allocation6 + $0xd8] sm:$0xff]
    %v2305 = vld [vmem:[#allocation6 + $0xe0] sm:$0xff]
    %v2306 = vld [vmem:[#allocation6 + $0xe8] sm:$0xff]
    %v2307 = vld [vmem:[#allocation6 + $0xf0] sm:$0xff]
    %v2308 = vld [vmem:[#allocation6 + $0xf8] sm:$0xff]
    %s2309 = scalar_lea.vmem [#allocation8], 80
    %v2310 = vld [vmem:[%s2309] sm:$0xff]
    %v2311 = vld [vmem:[%s2309 + $0x8] sm:$0xff]
    %v2312 = vunpack.c.l.bf16 %v2310
    %v2313 = vunpack.c.h.bf16 %v2310
    %v2314 = vunpack.c.l.bf16 %v2311
    %v2315 = vunpack.c.h.bf16 %v2311
    %v2316 = vld [vmem:[#allocation2] sm:$0xff]
    %v2317 = vpack.c.bf16 %v2316, %v2316
    %2318 = vmatprep.subr.bf16.mxu0 %v2278
    %2319 = vmatpush1.bf16.msra.mxu0 %v2277
    %2320 = vmatprep.subr.bf16.mxu0 %v2282
    %2321 = vmatpush1.bf16.msra.mxu0 %v2281
    %2322 = vmatprep.subr.bf16.mxu0 %v2286
    %2323 = vmatpush1.bf16.msra.mxu0 %v2285
    %2324 = vmatprep.subr.bf16.mxu0 %v2290
    %2325 = vmatpush1.bf16.msra.mxu0 %v2289
    %2326 = vmatprep.subr.bf16.mxu0 %v2294
    %2327 = vmatpush1.bf16.msra.mxu0 %v2293
    %2328 = vmatprep.subr.bf16.mxu0 %v2298
    %2329 = vmatpush1.bf16.msra.mxu0 %v2297
    %2330 = vmatprep.subr.bf16.mxu0 %v2302
    %2331 = vmatpush1.bf16.msra.mxu0 %v2301
    %2332 = vmatprep.subr.bf16.mxu0 %v2306
    %2333 = vmatpush1.bf16.msra.mxu0 %v2305
    %2334 = vmatprep.subr.bf16.mxu0 0
    %2335 = vmatpush1.bf16.msra.mxu0 0
    %2336 = vmatprep.subr.bf16.mxu0 0
    %2337 = vmatpush1.bf16.msra.mxu0 0
    %2338 = vmatprep.subr.bf16.mxu0 0
    %2339 = vmatpush1.bf16.msra.mxu0 0
    %2340 = vmatprep.subr.bf16.mxu0 0
    %2341 = vmatpush1.bf16.msra.mxu0 0
    %2342 = vmatprep.subr.bf16.mxu0 0
    %2343 = vmatpush1.bf16.msra.mxu0 0
    %2344 = vmatprep.subr.bf16.mxu0 0
    %2345 = vmatpush1.bf16.msra.mxu0 0
    %2346 = vmatprep.subr.bf16.mxu0 0
    %2347 = vmatpush1.bf16.msra.mxu0 0
    %2348 = vmatprep.subr.bf16.mxu0 0
    %2349 = vmatpush1.bf16.msra.mxu0 0
    %2350 = vmatprep.mubr.bf16.mxu0 0
    %2351 = vmatmul.mubr.bf16.gmra.mrb[0].mxu0 %v2317
    %v2352 = vpop.f32.mrb[0].mxu0
    %v2353 = vadd.f32 0.0, %v2352
    %v2354 = vpop.f32.mrb[0].mxu0
    %v2355 = vadd.f32 0.0, %v2354
    %v2356 = vpop.f32.mrb[0].mxu0
    %v2357 = vpop.f32.mrb[0].mxu0
    %2358 = vdwg.mxu0
    %2359 = vmatprep.subr.bf16.mxu0 %v2280
    %2360 = vmatpush1.bf16.msra.mxu0 %v2279
    %2361 = vmatprep.subr.bf16.mxu0 %v2284
    %2362 = vmatpush1.bf16.msra.mxu0 %v2283
    %2363 = vmatprep.subr.bf16.mxu0 %v2288
    %2364 = vmatpush1.bf16.msra.mxu0 %v2287
    %2365 = vmatprep.subr.bf16.mxu0 %v2292
    %2366 = vmatpush1.bf16.msra.mxu0 %v2291
    %2367 = vmatprep.subr.bf16.mxu0 %v2296
    %2368 = vmatpush1.bf16.msra.mxu0 %v2295
    %2369 = vmatprep.subr.bf16.mxu0 %v2300
    %2370 = vmatpush1.bf16.msra.mxu0 %v2299
    %2371 = vmatprep.subr.bf16.mxu0 %v2304
    %2372 = vmatpush1.bf16.msra.mxu0 %v2303
    %2373 = vmatprep.subr.bf16.mxu0 %v2308
    %2374 = vmatpush1.bf16.msra.mxu0 %v2307
    %2375 = vmatprep.subr.bf16.mxu0 0
    %2376 = vmatpush1.bf16.msra.mxu0 0
    %2377 = vmatprep.subr.bf16.mxu0 0
    %2378 = vmatpush1.bf16.msra.mxu0 0
    %2379 = vmatprep.subr.bf16.mxu0 0
    %2380 = vmatpush1.bf16.msra.mxu0 0
    %2381 = vmatprep.subr.bf16.mxu0 0
    %2382 = vmatpush1.bf16.msra.mxu0 0
    %2383 = vmatprep.subr.bf16.mxu0 0
    %2384 = vmatpush1.bf16.msra.mxu0 0
    %2385 = vmatprep.subr.bf16.mxu0 0
    %2386 = vmatpush1.bf16.msra.mxu0 0
    %2387 = vmatprep.subr.bf16.mxu0 0
    %2388 = vmatpush1.bf16.msra.mxu0 0
    %2389 = vmatprep.subr.bf16.mxu0 0
    %2390 = vmatpush1.bf16.msra.mxu0 0
    %2391 = vmatprep.mubr.bf16.mxu0 0
    %2392 = vmatmul.mubr.bf16.gmra.mrb[0].mxu0 %v2317
    %v2393 = vpop.f32.mrb[0].mxu0
    %v2394 = vadd.f32 0.0, %v2393
    %v2395 = vpop.f32.mrb[0].mxu0
    %v2396 = vadd.f32 0.0, %v2395
    %v2397 = vpop.f32.mrb[0].mxu0
    %v2398 = vpop.f32.mrb[0].mxu0
    %2399 = vdwg.mxu0
    %v2400 = vadd.f32 %v2312, %v2353
    %v2401 = vadd.f32 %v2313, %v2355
    %v2402 = vadd.f32 %v2314, %v2394
    %v2403 = vadd.f32 %v2315, %v2396
    %v2404 = vld [vmem:[#allocation3] sm:$0xff]
    %v2405 = vxor.u32 %v2400, 2147483648
    %v2406 = vxor.u32 %v2401, 2147483648
    %v2407 = vxor.u32 %v2402, 2147483648
    %v2408 = vmul.f32 %v2405, 1.442695
    %v2409 = vpow.pop %v2408
    %v2410 = vmul.f32 %v2406, 1.442695
    %v2411 = vpow.pop %v2410
    %v2412 = vmul.f32 %v2407, 1.442695
    %v2413 = vpow.pop %v2412
    %v2414 = vadd.f32 %v2409, 1.0
    %v2415 = vadd.f32 %v2411, 1.0
    %v2416 = vadd.f32 %v2413, 1.0
    %v2417 = vrcp.pop %v2414
    %v2418 = vmul.f32 1.0, %v2417
    %v2419 = vrcp.pop %v2415
    %v2420 = vmul.f32 1.0, %v2419
    %v2421 = vrcp.pop %v2416
    %v2422 = vmul.f32 1.0, %v2421
    %v2423 = vtanh.pop %v2403
    %v2424 = vmul.f32 %v2420, %v2404
    %v2425 = vmul.f32 %v2418, %v2423
    %v2426 = vadd.f32 %v2424, %v2425
    %v2427 = vtanh.pop %v2426
    %v2428 = vmul.f32 %v2422, %v2427
    %2429 = vst [vmem:[#allocation2] sm:$0xff] %v2428
    %2430 = vst [vmem:[#allocation3] sm:$0xff] %v2426
    %v2431 = vpack.c.bf16 %v2428, %v2428
    %s2432 = scalar_lea.vmem %s3, 20
    %2433 = vst [vmem:[%s2432] sm:$0xf] %v2431
    %v2434 = vld [vmem:[%s863] sm:$0xff]
    %v2435 = vld [vmem:[%s863 + $0x8] sm:$0xff]
    %v2436 = vld [vmem:[%s863 + $0x10] sm:$0xff]
    %v2437 = vld [vmem:[%s863 + $0x18] sm:$0xff]
    %v2438 = vld [vmem:[%s863 + $0x20] sm:$0xff]
    %v2439 = vld [vmem:[%s863 + $0x28] sm:$0xff]
    %v2440 = vld [vmem:[%s863 + $0x30] sm:$0xff]
    %v2441 = vld [vmem:[%s863 + $0x38] sm:$0xff]
    %v2442 = vld [vmem:[%s863 + $0x40] sm:$0xff]
    %v2443 = vld [vmem:[%s863 + $0x48] sm:$0xff]
    %v2444 = vld [vmem:[%s863 + $0x50] sm:$0xff]
    %v2445 = vld [vmem:[%s863 + $0x58] sm:$0xff]
    %v2446 = vld [vmem:[%s863 + $0x60] sm:$0xff]
    %v2447 = vld [vmem:[%s863 + $0x68] sm:$0xff]
    %v2448 = vld [vmem:[%s863 + $0x70] sm:$0xff]
    %v2449 = vld [vmem:[%s863 + $0x78] sm:$0xff]
    %v2450 = vld [vmem:[%s863 + $0x80] sm:$0xff]
    %v2451 = vld [vmem:[%s863 + $0x88] sm:$0xff]
    %v2452 = vld [vmem:[%s863 + $0x90] sm:$0xff]
    %v2453 = vld [vmem:[%s863 + $0x98] sm:$0xff]
    %v2454 = vld [vmem:[%s863 + $0xa0] sm:$0xff]
    %v2455 = vld [vmem:[%s863 + $0xa8] sm:$0xff]
    %v2456 = vld [vmem:[%s863 + $0xb0] sm:$0xff]
    %v2457 = vld [vmem:[%s863 + $0xb8] sm:$0xff]
    %v2458 = vld [vmem:[%s863 + $0xc0] sm:$0xff]
    %v2459 = vld [vmem:[%s863 + $0xc8] sm:$0xff]
    %v2460 = vld [vmem:[%s863 + $0xd0] sm:$0xff]
    %v2461 = vld [vmem:[%s863 + $0xd8] sm:$0xff]
    %v2462 = vld [vmem:[%s863 + $0xe0] sm:$0xff]
    %v2463 = vld [vmem:[%s863 + $0xe8] sm:$0xff]
    %v2464 = vld [vmem:[%s863 + $0xf0] sm:$0xff]
    %v2465 = vld [vmem:[%s863 + $0xf8] sm:$0xff]
    %s2466 = scalar_lea.vmem [#allocation9], 32
    %v2467 = vld [vmem:[%s2466] sm:$0xff]
    %v2468 = vld [vmem:[%s2466 + $0x8] sm:$0xff]
    %v2469 = vunpack.c.l.bf16 %v2467
    %v2470 = vunpack.c.h.bf16 %v2467
    %v2471 = vunpack.c.l.bf16 %v2468
    %v2472 = vunpack.c.h.bf16 %v2468
    %v2473 = vld [vmem:[#allocation4] sm:$0xff]
    %v2474 = vpack.c.bf16 %v2473, %v2473
    %2475 = vmatprep.subr.bf16.mxu0 %v2435
    %2476 = vmatpush1.bf16.msra.mxu0 %v2434
    %2477 = vmatprep.subr.bf16.mxu0 %v2439
    %2478 = vmatpush1.bf16.msra.mxu0 %v2438
    %2479 = vmatprep.subr.bf16.mxu0 %v2443
    %2480 = vmatpush1.bf16.msra.mxu0 %v2442
    %2481 = vmatprep.subr.bf16.mxu0 %v2447
    %2482 = vmatpush1.bf16.msra.mxu0 %v2446
    %2483 = vmatprep.subr.bf16.mxu0 %v2451
    %2484 = vmatpush1.bf16.msra.mxu0 %v2450
    %2485 = vmatprep.subr.bf16.mxu0 %v2455
    %2486 = vmatpush1.bf16.msra.mxu0 %v2454
    %2487 = vmatprep.subr.bf16.mxu0 %v2459
    %2488 = vmatpush1.bf16.msra.mxu0 %v2458
    %2489 = vmatprep.subr.bf16.mxu0 %v2463
    %2490 = vmatpush1.bf16.msra.mxu0 %v2462
    %2491 = vmatprep.subr.bf16.mxu0 0
    %2492 = vmatpush1.bf16.msra.mxu0 0
    %2493 = vmatprep.subr.bf16.mxu0 0
    %2494 = vmatpush1.bf16.msra.mxu0 0
    %2495 = vmatprep.subr.bf16.mxu0 0
    %2496 = vmatpush1.bf16.msra.mxu0 0
    %2497 = vmatprep.subr.bf16.mxu0 0
    %2498 = vmatpush1.bf16.msra.mxu0 0
    %2499 = vmatprep.subr.bf16.mxu0 0
    %2500 = vmatpush1.bf16.msra.mxu0 0
    %2501 = vmatprep.subr.bf16.mxu0 0
    %2502 = vmatpush1.bf16.msra.mxu0 0
    %2503 = vmatprep.subr.bf16.mxu0 0
    %2504 = vmatpush1.bf16.msra.mxu0 0
    %2505 = vmatprep.subr.bf16.mxu0 0
    %2506 = vmatpush1.bf16.msra.mxu0 0
    %2507 = vmatprep.mubr.bf16.mxu0 0
    %2508 = vmatmul.mubr.bf16.gmra.mrb[0].mxu0 %v2474
    %v2509 = vpop.f32.mrb[0].mxu0
    %v2510 = vadd.f32 0.0, %v2509
    %v2511 = vpop.f32.mrb[0].mxu0
    %v2512 = vadd.f32 0.0, %v2511
    %v2513 = vpop.f32.mrb[0].mxu0
    %v2514 = vpop.f32.mrb[0].mxu0
    %2515 = vdwg.mxu0
    %2516 = vmatprep.subr.bf16.mxu0 %v2437
    %2517 = vmatpush1.bf16.msra.mxu0 %v2436
    %2518 = vmatprep.subr.bf16.mxu0 %v2441
    %2519 = vmatpush1.bf16.msra.mxu0 %v2440
    %2520 = vmatprep.subr.bf16.mxu0 %v2445
    %2521 = vmatpush1.bf16.msra.mxu0 %v2444
    %2522 = vmatprep.subr.bf16.mxu0 %v2449
    %2523 = vmatpush1.bf16.msra.mxu0 %v2448
    %2524 = vmatprep.subr.bf16.mxu0 %v2453
    %2525 = vmatpush1.bf16.msra.mxu0 %v2452
    %2526 = vmatprep.subr.bf16.mxu0 %v2457
    %2527 = vmatpush1.bf16.msra.mxu0 %v2456
    %2528 = vmatprep.subr.bf16.mxu0 %v2461
    %2529 = vmatpush1.bf16.msra.mxu0 %v2460
    %2530 = vmatprep.subr.bf16.mxu0 %v2465
    %2531 = vmatpush1.bf16.msra.mxu0 %v2464
    %2532 = vmatprep.subr.bf16.mxu0 0
    %2533 = vmatpush1.bf16.msra.mxu0 0
    %2534 = vmatprep.subr.bf16.mxu0 0
    %2535 = vmatpush1.bf16.msra.mxu0 0
    %2536 = vmatprep.subr.bf16.mxu0 0
    %2537 = vmatpush1.bf16.msra.mxu0 0
    %2538 = vmatprep.subr.bf16.mxu0 0
    %2539 = vmatpush1.bf16.msra.mxu0 0
    %2540 = vmatprep.subr.bf16.mxu0 0
    %2541 = vmatpush1.bf16.msra.mxu0 0
    %2542 = vmatprep.subr.bf16.mxu0 0
    %2543 = vmatpush1.bf16.msra.mxu0 0
    %2544 = vmatprep.subr.bf16.mxu0 0
    %2545 = vmatpush1.bf16.msra.mxu0 0
    %2546 = vmatprep.subr.bf16.mxu0 0
    %2547 = vmatpush1.bf16.msra.mxu0 0
    %2548 = vmatprep.mubr.bf16.mxu0 0
    %2549 = vmatmul.mubr.bf16.gmra.mrb[0].mxu0 %v2474
    %v2550 = vpop.f32.mrb[0].mxu0
    %v2551 = vadd.f32 0.0, %v2550
    %v2552 = vpop.f32.mrb[0].mxu0
    %v2553 = vadd.f32 0.0, %v2552
    %v2554 = vpop.f32.mrb[0].mxu0
    %v2555 = vpop.f32.mrb[0].mxu0
    %2556 = vdwg.mxu0
    %v2557 = vadd.f32 %v2469, %v2510
    %v2558 = vadd.f32 %v2470, %v2512
    %v2559 = vadd.f32 %v2471, %v2551
    %v2560 = vadd.f32 %v2472, %v2553
    %v2561 = vld [vmem:[#allocation5] sm:$0xff]
    %v2562 = vxor.u32 %v2557, 2147483648
    %v2563 = vxor.u32 %v2558, 2147483648
    %v2564 = vxor.u32 %v2559, 2147483648
    %v2565 = vmul.f32 %v2562, 1.442695
    %v2566 = vpow.pop %v2565
    %v2567 = vmul.f32 %v2563, 1.442695
    %v2568 = vpow.pop %v2567
    %v2569 = vmul.f32 %v2564, 1.442695
    %v2570 = vpow.pop %v2569
    %v2571 = vadd.f32 %v2566, 1.0
    %v2572 = vadd.f32 %v2568, 1.0
    %v2573 = vadd.f32 %v2570, 1.0
    %v2574 = vrcp.pop %v2571
    %v2575 = vmul.f32 1.0, %v2574
    %v2576 = vrcp.pop %v2572
    %v2577 = vmul.f32 1.0, %v2576
    %v2578 = vrcp.pop %v2573
    %v2579 = vmul.f32 1.0, %v2578
    %v2580 = vtanh.pop %v2560
    %v2581 = vmul.f32 %v2577, %v2561
    %v2582 = vmul.f32 %v2575, %v2580
    %v2583 = vadd.f32 %v2581, %v2582
    %v2584 = vtanh.pop %v2583
    %v2585 = vmul.f32 %v2579, %v2584
    %2586 = vst [vmem:[#allocation4] sm:$0xff] %v2585
    %2587 = vst [vmem:[#allocation5] sm:$0xff] %v2583
    %v2588 = vpack.c.bf16 %v2585, %v2585
    %s2589 = scalar_lea.vmem %s131, 8
    %2590 = vst [vmem:[%s2589] sm:$0xf] %v2588
    %v2591 = vld [vmem:[#allocation6] sm:$0xff]
    %v2592 = vld [vmem:[#allocation6 + $0x8] sm:$0xff]
    %v2593 = vld [vmem:[#allocation6 + $0x10] sm:$0xff]
    %v2594 = vld [vmem:[#allocation6 + $0x18] sm:$0xff]
    %v2595 = vld [vmem:[#allocation6 + $0x20] sm:$0xff]
    %v2596 = vld [vmem:[#allocation6 + $0x28] sm:$0xff]
    %v2597 = vld [vmem:[#allocation6 + $0x30] sm:$0xff]
    %v2598 = vld [vmem:[#allocation6 + $0x38] sm:$0xff]
    %v2599 = vld [vmem:[#allocation6 + $0x40] sm:$0xff]
    %v2600 = vld [vmem:[#allocation6 + $0x48] sm:$0xff]
    %v2601 = vld [vmem:[#allocation6 + $0x50] sm:$0xff]
    %v2602 = vld [vmem:[#allocation6 + $0x58] sm:$0xff]
    %v2603 = vld [vmem:[#allocation6 + $0x60] sm:$0xff]
    %v2604 = vld [vmem:[#allocation6 + $0x68] sm:$0xff]
    %v2605 = vld [vmem:[#allocation6 + $0x70] sm:$0xff]
    %v2606 = vld [vmem:[#allocation6 + $0x78] sm:$0xff]
    %v2607 = vld [vmem:[#allocation6 + $0x80] sm:$0xff]
    %v2608 = vld [vmem:[#allocation6 + $0x88] sm:$0xff]
    %v2609 = vld [vmem:[#allocation6 + $0x90] sm:$0xff]
    %v2610 = vld [vmem:[#allocation6 + $0x98] sm:$0xff]
    %v2611 = vld [vmem:[#allocation6 + $0xa0] sm:$0xff]
    %v2612 = vld [vmem:[#allocation6 + $0xa8] sm:$0xff]
    %v2613 = vld [vmem:[#allocation6 + $0xb0] sm:$0xff]
    %v2614 = vld [vmem:[#allocation6 + $0xb8] sm:$0xff]
    %v2615 = vld [vmem:[#allocation6 + $0xc0] sm:$0xff]
    %v2616 = vld [vmem:[#allocation6 + $0xc8] sm:$0xff]
    %v2617 = vld [vmem:[#allocation6 + $0xd0] sm:$0xff]
    %v2618 = vld [vmem:[#allocation6 + $0xd8] sm:$0xff]
    %v2619 = vld [vmem:[#allocation6 + $0xe0] sm:$0xff]
    %v2620 = vld [vmem:[#allocation6 + $0xe8] sm:$0xff]
    %v2621 = vld [vmem:[#allocation6 + $0xf0] sm:$0xff]
    %v2622 = vld [vmem:[#allocation6 + $0xf8] sm:$0xff]
    %s2623 = scalar_lea.vmem [#allocation8], 96
    %v2624 = vld [vmem:[%s2623] sm:$0xff]
    %v2625 = vld [vmem:[%s2623 + $0x8] sm:$0xff]
    %v2626 = vunpack.c.l.bf16 %v2624
    %v2627 = vunpack.c.h.bf16 %v2624
    %v2628 = vunpack.c.l.bf16 %v2625
    %v2629 = vunpack.c.h.bf16 %v2625
    %v2630 = vld [vmem:[#allocation2] sm:$0xff]
    %v2631 = vpack.c.bf16 %v2630, %v2630
    %2632 = vmatprep.subr.bf16.mxu0 %v2592
    %2633 = vmatpush1.bf16.msra.mxu0 %v2591
    %2634 = vmatprep.subr.bf16.mxu0 %v2596
    %2635 = vmatpush1.bf16.msra.mxu0 %v2595
    %2636 = vmatprep.subr.bf16.mxu0 %v2600
    %2637 = vmatpush1.bf16.msra.mxu0 %v2599
    %2638 = vmatprep.subr.bf16.mxu0 %v2604
    %2639 = vmatpush1.bf16.msra.mxu0 %v2603
    %2640 = vmatprep.subr.bf16.mxu0 %v2608
    %2641 = vmatpush1.bf16.msra.mxu0 %v2607
    %2642 = vmatprep.subr.bf16.mxu0 %v2612
    %2643 = vmatpush1.bf16.msra.mxu0 %v2611
    %2644 = vmatprep.subr.bf16.mxu0 %v2616
    %2645 = vmatpush1.bf16.msra.mxu0 %v2615
    %2646 = vmatprep.subr.bf16.mxu0 %v2620
    %2647 = vmatpush1.bf16.msra.mxu0 %v2619
    %2648 = vmatprep.subr.bf16.mxu0 0
    %2649 = vmatpush1.bf16.msra.mxu0 0
    %2650 = vmatprep.subr.bf16.mxu0 0
    %2651 = vmatpush1.bf16.msra.mxu0 0
    %2652 = vmatprep.subr.bf16.mxu0 0
    %2653 = vmatpush1.bf16.msra.mxu0 0
    %2654 = vmatprep.subr.bf16.mxu0 0
    %2655 = vmatpush1.bf16.msra.mxu0 0
    %2656 = vmatprep.subr.bf16.mxu0 0
    %2657 = vmatpush1.bf16.msra.mxu0 0
    %2658 = vmatprep.subr.bf16.mxu0 0
    %2659 = vmatpush1.bf16.msra.mxu0 0
    %2660 = vmatprep.subr.bf16.mxu0 0
    %2661 = vmatpush1.bf16.msra.mxu0 0
    %2662 = vmatprep.subr.bf16.mxu0 0
    %2663 = vmatpush1.bf16.msra.mxu0 0
    %2664 = vmatprep.mubr.bf16.mxu0 0
    %2665 = vmatmul.mubr.bf16.gmra.mrb[0].mxu0 %v2631
    %v2666 = vpop.f32.mrb[0].mxu0
    %v2667 = vadd.f32 0.0, %v2666
    %v2668 = vpop.f32.mrb[0].mxu0
    %v2669 = vadd.f32 0.0, %v2668
    %v2670 = vpop.f32.mrb[0].mxu0
    %v2671 = vpop.f32.mrb[0].mxu0
    %2672 = vdwg.mxu0
    %2673 = vmatprep.subr.bf16.mxu0 %v2594
    %2674 = vmatpush1.bf16.msra.mxu0 %v2593
    %2675 = vmatprep.subr.bf16.mxu0 %v2598
    %2676 = vmatpush1.bf16.msra.mxu0 %v2597
    %2677 = vmatprep.subr.bf16.mxu0 %v2602
    %2678 = vmatpush1.bf16.msra.mxu0 %v2601
    %2679 = vmatprep.subr.bf16.mxu0 %v2606
    %2680 = vmatpush1.bf16.msra.mxu0 %v2605
    %2681 = vmatprep.subr.bf16.mxu0 %v2610
    %2682 = vmatpush1.bf16.msra.mxu0 %v2609
    %2683 = vmatprep.subr.bf16.mxu0 %v2614
    %2684 = vmatpush1.bf16.msra.mxu0 %v2613
    %2685 = vmatprep.subr.bf16.mxu0 %v2618
    %2686 = vmatpush1.bf16.msra.mxu0 %v2617
    %2687 = vmatprep.subr.bf16.mxu0 %v2622
    %2688 = vmatpush1.bf16.msra.mxu0 %v2621
    %2689 = vmatprep.subr.bf16.mxu0 0
    %2690 = vmatpush1.bf16.msra.mxu0 0
    %2691 = vmatprep.subr.bf16.mxu0 0
    %2692 = vmatpush1.bf16.msra.mxu0 0
    %2693 = vmatprep.subr.bf16.mxu0 0
    %2694 = vmatpush1.bf16.msra.mxu0 0
    %2695 = vmatprep.subr.bf16.mxu0 0
    %2696 = vmatpush1.bf16.msra.mxu0 0
    %2697 = vmatprep.subr.bf16.mxu0 0
    %2698 = vmatpush1.bf16.msra.mxu0 0
    %2699 = vmatprep.subr.bf16.mxu0 0
    %2700 = vmatpush1.bf16.msra.mxu0 0
    %2701 = vmatprep.subr.bf16.mxu0 0
    %2702 = vmatpush1.bf16.msra.mxu0 0
    %2703 = vmatprep.subr.bf16.mxu0 0
    %2704 = vmatpush1.bf16.msra.mxu0 0
    %2705 = vmatprep.mubr.bf16.mxu0 0
    %2706 = vmatmul.mubr.bf16.gmra.mrb[0].mxu0 %v2631
    %v2707 = vpop.f32.mrb[0].mxu0
    %v2708 = vadd.f32 0.0, %v2707
    %v2709 = vpop.f32.mrb[0].mxu0
    %v2710 = vadd.f32 0.0, %v2709
    %v2711 = vpop.f32.mrb[0].mxu0
    %v2712 = vpop.f32.mrb[0].mxu0
    %2713 = vdwg.mxu0
    %v2714 = vadd.f32 %v2626, %v2667
    %v2715 = vadd.f32 %v2627, %v2669
    %v2716 = vadd.f32 %v2628, %v2708
    %v2717 = vadd.f32 %v2629, %v2710
    %v2718 = vld [vmem:[#allocation3] sm:$0xff]
    %v2719 = vxor.u32 %v2714, 2147483648
    %v2720 = vxor.u32 %v2715, 2147483648
    %v2721 = vxor.u32 %v2716, 2147483648
    %v2722 = vmul.f32 %v2719, 1.442695
    %v2723 = vpow.pop %v2722
    %v2724 = vmul.f32 %v2720, 1.442695
    %v2725 = vpow.pop %v2724
    %v2726 = vmul.f32 %v2721, 1.442695
    %v2727 = vpow.pop %v2726
    %v2728 = vadd.f32 %v2723, 1.0
    %v2729 = vadd.f32 %v2725, 1.0
    %v2730 = vadd.f32 %v2727, 1.0
    %v2731 = vrcp.pop %v2728
    %v2732 = vmul.f32 1.0, %v2731
    %v2733 = vrcp.pop %v2729
    %v2734 = vmul.f32 1.0, %v2733
    %v2735 = vrcp.pop %v2730
    %v2736 = vmul.f32 1.0, %v2735
    %v2737 = vtanh.pop %v2717
    %v2738 = vmul.f32 %v2734, %v2718
    %v2739 = vmul.f32 %v2732, %v2737
    %v2740 = vadd.f32 %v2738, %v2739
    %v2741 = vtanh.pop %v2740
    %v2742 = vmul.f32 %v2736, %v2741
    %2743 = vst [vmem:[#allocation2] sm:$0xff] %v2742
    %2744 = vst [vmem:[#allocation3] sm:$0xff] %v2740
    %v2745 = vpack.c.bf16 %v2742, %v2742
    %s2746 = scalar_lea.vmem %s3, 24
    %2747 = vst [vmem:[%s2746] sm:$0xf] %v2745
    %v2748 = vld [vmem:[%s863] sm:$0xff]
    %v2749 = vld [vmem:[%s863 + $0x8] sm:$0xff]
    %v2750 = vld [vmem:[%s863 + $0x10] sm:$0xff]
    %v2751 = vld [vmem:[%s863 + $0x18] sm:$0xff]
    %v2752 = vld [vmem:[%s863 + $0x20] sm:$0xff]
    %v2753 = vld [vmem:[%s863 + $0x28] sm:$0xff]
    %v2754 = vld [vmem:[%s863 + $0x30] sm:$0xff]
    %v2755 = vld [vmem:[%s863 + $0x38] sm:$0xff]
    %v2756 = vld [vmem:[%s863 + $0x40] sm:$0xff]
    %v2757 = vld [vmem:[%s863 + $0x48] sm:$0xff]
    %v2758 = vld [vmem:[%s863 + $0x50] sm:$0xff]
    %v2759 = vld [vmem:[%s863 + $0x58] sm:$0xff]
    %v2760 = vld [vmem:[%s863 + $0x60] sm:$0xff]
    %v2761 = vld [vmem:[%s863 + $0x68] sm:$0xff]
    %v2762 = vld [vmem:[%s863 + $0x70] sm:$0xff]
    %v2763 = vld [vmem:[%s863 + $0x78] sm:$0xff]
    %v2764 = vld [vmem:[%s863 + $0x80] sm:$0xff]
    %v2765 = vld [vmem:[%s863 + $0x88] sm:$0xff]
    %v2766 = vld [vmem:[%s863 + $0x90] sm:$0xff]
    %v2767 = vld [vmem:[%s863 + $0x98] sm:$0xff]
    %v2768 = vld [vmem:[%s863 + $0xa0] sm:$0xff]
    %v2769 = vld [vmem:[%s863 + $0xa8] sm:$0xff]
    %v2770 = vld [vmem:[%s863 + $0xb0] sm:$0xff]
    %v2771 = vld [vmem:[%s863 + $0xb8] sm:$0xff]
    %v2772 = vld [vmem:[%s863 + $0xc0] sm:$0xff]
    %v2773 = vld [vmem:[%s863 + $0xc8] sm:$0xff]
    %v2774 = vld [vmem:[%s863 + $0xd0] sm:$0xff]
    %v2775 = vld [vmem:[%s863 + $0xd8] sm:$0xff]
    %v2776 = vld [vmem:[%s863 + $0xe0] sm:$0xff]
    %v2777 = vld [vmem:[%s863 + $0xe8] sm:$0xff]
    %v2778 = vld [vmem:[%s863 + $0xf0] sm:$0xff]
    %v2779 = vld [vmem:[%s863 + $0xf8] sm:$0xff]
    %s2780 = scalar_lea.vmem [#allocation9], 16
    %v2781 = vld [vmem:[%s2780] sm:$0xff]
    %v2782 = vld [vmem:[%s2780 + $0x8] sm:$0xff]
    %v2783 = vunpack.c.l.bf16 %v2781
    %v2784 = vunpack.c.h.bf16 %v2781
    %v2785 = vunpack.c.l.bf16 %v2782
    %v2786 = vunpack.c.h.bf16 %v2782
    %v2787 = vld [vmem:[#allocation4] sm:$0xff]
    %v2788 = vpack.c.bf16 %v2787, %v2787
    %2789 = vmatprep.subr.bf16.mxu0 %v2749
    %2790 = vmatpush1.bf16.msra.mxu0 %v2748
    %2791 = vmatprep.subr.bf16.mxu0 %v2753
    %2792 = vmatpush1.bf16.msra.mxu0 %v2752
    %2793 = vmatprep.subr.bf16.mxu0 %v2757
    %2794 = vmatpush1.bf16.msra.mxu0 %v2756
    %2795 = vmatprep.subr.bf16.mxu0 %v2761
    %2796 = vmatpush1.bf16.msra.mxu0 %v2760
    %2797 = vmatprep.subr.bf16.mxu0 %v2765
    %2798 = vmatpush1.bf16.msra.mxu0 %v2764
    %2799 = vmatprep.subr.bf16.mxu0 %v2769
    %2800 = vmatpush1.bf16.msra.mxu0 %v2768
    %2801 = vmatprep.subr.bf16.mxu0 %v2773
    %2802 = vmatpush1.bf16.msra.mxu0 %v2772
    %2803 = vmatprep.subr.bf16.mxu0 %v2777
    %2804 = vmatpush1.bf16.msra.mxu0 %v2776
    %2805 = vmatprep.subr.bf16.mxu0 0
    %2806 = vmatpush1.bf16.msra.mxu0 0
    %2807 = vmatprep.subr.bf16.mxu0 0
    %2808 = vmatpush1.bf16.msra.mxu0 0
    %2809 = vmatprep.subr.bf16.mxu0 0
    %2810 = vmatpush1.bf16.msra.mxu0 0
    %2811 = vmatprep.subr.bf16.mxu0 0
    %2812 = vmatpush1.bf16.msra.mxu0 0
    %2813 = vmatprep.subr.bf16.mxu0 0
    %2814 = vmatpush1.bf16.msra.mxu0 0
    %2815 = vmatprep.subr.bf16.mxu0 0
    %2816 = vmatpush1.bf16.msra.mxu0 0
    %2817 = vmatprep.subr.bf16.mxu0 0
    %2818 = vmatpush1.bf16.msra.mxu0 0
    %2819 = vmatprep.subr.bf16.mxu0 0
    %2820 = vmatpush1.bf16.msra.mxu0 0
    %2821 = vmatprep.mubr.bf16.mxu0 0
    %2822 = vmatmul.mubr.bf16.gmra.mrb[0].mxu0 %v2788
    %v2823 = vpop.f32.mrb[0].mxu0
    %v2824 = vadd.f32 0.0, %v2823
    %v2825 = vpop.f32.mrb[0].mxu0
    %v2826 = vadd.f32 0.0, %v2825
    %v2827 = vpop.f32.mrb[0].mxu0
    %v2828 = vpop.f32.mrb[0].mxu0
    %2829 = vdwg.mxu0
    %2830 = vmatprep.subr.bf16.mxu0 %v2751
    %2831 = vmatpush1.bf16.msra.mxu0 %v2750
    %2832 = vmatprep.subr.bf16.mxu0 %v2755
    %2833 = vmatpush1.bf16.msra.mxu0 %v2754
    %2834 = vmatprep.subr.bf16.mxu0 %v2759
    %2835 = vmatpush1.bf16.msra.mxu0 %v2758
    %2836 = vmatprep.subr.bf16.mxu0 %v2763
    %2837 = vmatpush1.bf16.msra.mxu0 %v2762
    %2838 = vmatprep.subr.bf16.mxu0 %v2767
    %2839 = vmatpush1.bf16.msra.mxu0 %v2766
    %2840 = vmatprep.subr.bf16.mxu0 %v2771
    %2841 = vmatpush1.bf16.msra.mxu0 %v2770
    %2842 = vmatprep.subr.bf16.mxu0 %v2775
    %2843 = vmatpush1.bf16.msra.mxu0 %v2774
    %2844 = vmatprep.subr.bf16.mxu0 %v2779
    %2845 = vmatpush1.bf16.msra.mxu0 %v2778
    %2846 = vmatprep.subr.bf16.mxu0 0
    %2847 = vmatpush1.bf16.msra.mxu0 0
    %2848 = vmatprep.subr.bf16.mxu0 0
    %2849 = vmatpush1.bf16.msra.mxu0 0
    %2850 = vmatprep.subr.bf16.mxu0 0
    %2851 = vmatpush1.bf16.msra.mxu0 0
    %2852 = vmatprep.subr.bf16.mxu0 0
    %2853 = vmatpush1.bf16.msra.mxu0 0
    %2854 = vmatprep.subr.bf16.mxu0 0
    %2855 = vmatpush1.bf16.msra.mxu0 0
    %2856 = vmatprep.subr.bf16.mxu0 0
    %2857 = vmatpush1.bf16.msra.mxu0 0
    %2858 = vmatprep.subr.bf16.mxu0 0
    %2859 = vmatpush1.bf16.msra.mxu0 0
    %2860 = vmatprep.subr.bf16.mxu0 0
    %2861 = vmatpush1.bf16.msra.mxu0 0
    %2862 = vmatprep.mubr.bf16.mxu0 0
    %2863 = vmatmul.mubr.bf16.gmra.mrb[0].mxu0 %v2788
    %v2864 = vpop.f32.mrb[0].mxu0
    %v2865 = vadd.f32 0.0, %v2864
    %v2866 = vpop.f32.mrb[0].mxu0
    %v2867 = vadd.f32 0.0, %v2866
    %v2868 = vpop.f32.mrb[0].mxu0
    %v2869 = vpop.f32.mrb[0].mxu0
    %2870 = vdwg.mxu0
    %v2871 = vadd.f32 %v2783, %v2824
    %v2872 = vadd.f32 %v2784, %v2826
    %v2873 = vadd.f32 %v2785, %v2865
    %v2874 = vadd.f32 %v2786, %v2867
    %v2875 = vld [vmem:[#allocation5] sm:$0xff]
    %v2876 = vxor.u32 %v2871, 2147483648
    %v2877 = vxor.u32 %v2872, 2147483648
    %v2878 = vxor.u32 %v2873, 2147483648
    %v2879 = vmul.f32 %v2876, 1.442695
    %v2880 = vpow.pop %v2879
    %v2881 = vmul.f32 %v2877, 1.442695
    %v2882 = vpow.pop %v2881
    %v2883 = vmul.f32 %v2878, 1.442695
    %v2884 = vpow.pop %v2883
    %v2885 = vadd.f32 %v2880, 1.0
    %v2886 = vadd.f32 %v2882, 1.0
    %v2887 = vadd.f32 %v2884, 1.0
    %v2888 = vrcp.pop %v2885
    %v2889 = vmul.f32 1.0, %v2888
    %v2890 = vrcp.pop %v2886
    %v2891 = vmul.f32 1.0, %v2890
    %v2892 = vrcp.pop %v2887
    %v2893 = vmul.f32 1.0, %v2892
    %v2894 = vtanh.pop %v2874
    %v2895 = vmul.f32 %v2891, %v2875
    %v2896 = vmul.f32 %v2889, %v2894
    %v2897 = vadd.f32 %v2895, %v2896
    %v2898 = vtanh.pop %v2897
    %v2899 = vmul.f32 %v2893, %v2898
    %2900 = vst [vmem:[#allocation4] sm:$0xff] %v2899
    %2901 = vst [vmem:[#allocation5] sm:$0xff] %v2897
    %v2902 = vpack.c.bf16 %v2899, %v2899
    %s2903 = scalar_lea.vmem %s131, 4
    %2904 = vst [vmem:[%s2903] sm:$0xf] %v2902
    %v2905 = vld [vmem:[#allocation6] sm:$0xff]
    %v2906 = vld [vmem:[#allocation6 + $0x8] sm:$0xff]
    %v2907 = vld [vmem:[#allocation6 + $0x10] sm:$0xff]
    %v2908 = vld [vmem:[#allocation6 + $0x18] sm:$0xff]
    %v2909 = vld [vmem:[#allocation6 + $0x20] sm:$0xff]
    %v2910 = vld [vmem:[#allocation6 + $0x28] sm:$0xff]
    %v2911 = vld [vmem:[#allocation6 + $0x30] sm:$0xff]
    %v2912 = vld [vmem:[#allocation6 + $0x38] sm:$0xff]
    %v2913 = vld [vmem:[#allocation6 + $0x40] sm:$0xff]
    %v2914 = vld [vmem:[#allocation6 + $0x48] sm:$0xff]
    %v2915 = vld [vmem:[#allocation6 + $0x50] sm:$0xff]
    %v2916 = vld [vmem:[#allocation6 + $0x58] sm:$0xff]
    %v2917 = vld [vmem:[#allocation6 + $0x60] sm:$0xff]
    %v2918 = vld [vmem:[#allocation6 + $0x68] sm:$0xff]
    %v2919 = vld [vmem:[#allocation6 + $0x70] sm:$0xff]
    %v2920 = vld [vmem:[#allocation6 + $0x78] sm:$0xff]
    %v2921 = vld [vmem:[#allocation6 + $0x80] sm:$0xff]
    %v2922 = vld [vmem:[#allocation6 + $0x88] sm:$0xff]
    %v2923 = vld [vmem:[#allocation6 + $0x90] sm:$0xff]
    %v2924 = vld [vmem:[#allocation6 + $0x98] sm:$0xff]
    %v2925 = vld [vmem:[#allocation6 + $0xa0] sm:$0xff]
    %v2926 = vld [vmem:[#allocation6 + $0xa8] sm:$0xff]
    %v2927 = vld [vmem:[#allocation6 + $0xb0] sm:$0xff]
    %v2928 = vld [vmem:[#allocation6 + $0xb8] sm:$0xff]
    %v2929 = vld [vmem:[#allocation6 + $0xc0] sm:$0xff]
    %v2930 = vld [vmem:[#allocation6 + $0xc8] sm:$0xff]
    %v2931 = vld [vmem:[#allocation6 + $0xd0] sm:$0xff]
    %v2932 = vld [vmem:[#allocation6 + $0xd8] sm:$0xff]
    %v2933 = vld [vmem:[#allocation6 + $0xe0] sm:$0xff]
    %v2934 = vld [vmem:[#allocation6 + $0xe8] sm:$0xff]
    %v2935 = vld [vmem:[#allocation6 + $0xf0] sm:$0xff]
    %v2936 = vld [vmem:[#allocation6 + $0xf8] sm:$0xff]
    %s2937 = scalar_lea.vmem [#allocation8], 112
    %v2938 = vld [vmem:[%s2937] sm:$0xff]
    %v2939 = vld [vmem:[%s2937 + $0x8] sm:$0xff]
    %v2940 = vunpack.c.l.bf16 %v2938
    %v2941 = vunpack.c.h.bf16 %v2938
    %v2942 = vunpack.c.l.bf16 %v2939
    %v2943 = vunpack.c.h.bf16 %v2939
    %v2944 = vld [vmem:[#allocation2] sm:$0xff]
    %v2945 = vpack.c.bf16 %v2944, %v2944
    %2946 = vmatprep.subr.bf16.mxu0 %v2906
    %2947 = vmatpush1.bf16.msra.mxu0 %v2905
    %2948 = vmatprep.subr.bf16.mxu0 %v2910
    %2949 = vmatpush1.bf16.msra.mxu0 %v2909
    %2950 = vmatprep.subr.bf16.mxu0 %v2914
    %2951 = vmatpush1.bf16.msra.mxu0 %v2913
    %2952 = vmatprep.subr.bf16.mxu0 %v2918
    %2953 = vmatpush1.bf16.msra.mxu0 %v2917
    %2954 = vmatprep.subr.bf16.mxu0 %v2922
    %2955 = vmatpush1.bf16.msra.mxu0 %v2921
    %2956 = vmatprep.subr.bf16.mxu0 %v2926
    %2957 = vmatpush1.bf16.msra.mxu0 %v2925
    %2958 = vmatprep.subr.bf16.mxu0 %v2930
    %2959 = vmatpush1.bf16.msra.mxu0 %v2929
    %2960 = vmatprep.subr.bf16.mxu0 %v2934
    %2961 = vmatpush1.bf16.msra.mxu0 %v2933
    %2962 = vmatprep.subr.bf16.mxu0 0
    %2963 = vmatpush1.bf16.msra.mxu0 0
    %2964 = vmatprep.subr.bf16.mxu0 0
    %2965 = vmatpush1.bf16.msra.mxu0 0
    %2966 = vmatprep.subr.bf16.mxu0 0
    %2967 = vmatpush1.bf16.msra.mxu0 0
    %2968 = vmatprep.subr.bf16.mxu0 0
    %2969 = vmatpush1.bf16.msra.mxu0 0
    %2970 = vmatprep.subr.bf16.mxu0 0
    %2971 = vmatpush1.bf16.msra.mxu0 0
    %2972 = vmatprep.subr.bf16.mxu0 0
    %2973 = vmatpush1.bf16.msra.mxu0 0
    %2974 = vmatprep.subr.bf16.mxu0 0
    %2975 = vmatpush1.bf16.msra.mxu0 0
    %2976 = vmatprep.subr.bf16.mxu0 0
    %2977 = vmatpush1.bf16.msra.mxu0 0
    %2978 = vmatprep.mubr.bf16.mxu0 0
    %2979 = vmatmul.mubr.bf16.gmra.mrb[0].mxu0 %v2945
    %v2980 = vpop.f32.mrb[0].mxu0
    %v2981 = vadd.f32 0.0, %v2980
    %v2982 = vpop.f32.mrb[0].mxu0
    %v2983 = vadd.f32 0.0, %v2982
    %v2984 = vpop.f32.mrb[0].mxu0
    %v2985 = vpop.f32.mrb[0].mxu0
    %2986 = vdwg.mxu0
    %2987 = vmatprep.subr.bf16.mxu0 %v2908
    %2988 = vmatpush1.bf16.msra.mxu0 %v2907
    %2989 = vmatprep.subr.bf16.mxu0 %v2912
    %2990 = vmatpush1.bf16.msra.mxu0 %v2911
    %2991 = vmatprep.subr.bf16.mxu0 %v2916
    %2992 = vmatpush1.bf16.msra.mxu0 %v2915
    %2993 = vmatprep.subr.bf16.mxu0 %v2920
    %2994 = vmatpush1.bf16.msra.mxu0 %v2919
    %2995 = vmatprep.subr.bf16.mxu0 %v2924
    %2996 = vmatpush1.bf16.msra.mxu0 %v2923
    %2997 = vmatprep.subr.bf16.mxu0 %v2928
    %2998 = vmatpush1.bf16.msra.mxu0 %v2927
    %2999 = vmatprep.subr.bf16.mxu0 %v2932
    %3000 = vmatpush1.bf16.msra.mxu0 %v2931
    %3001 = vmatprep.subr.bf16.mxu0 %v2936
    %3002 = vmatpush1.bf16.msra.mxu0 %v2935
    %3003 = vmatprep.subr.bf16.mxu0 0
    %3004 = vmatpush1.bf16.msra.mxu0 0
    %3005 = vmatprep.subr.bf16.mxu0 0
    %3006 = vmatpush1.bf16.msra.mxu0 0
    %3007 = vmatprep.subr.bf16.mxu0 0
    %3008 = vmatpush1.bf16.msra.mxu0 0
    %3009 = vmatprep.subr.bf16.mxu0 0
    %3010 = vmatpush1.bf16.msra.mxu0 0
    %3011 = vmatprep.subr.bf16.mxu0 0
    %3012 = vmatpush1.bf16.msra.mxu0 0
    %3013 = vmatprep.subr.bf16.mxu0 0
    %3014 = vmatpush1.bf16.msra.mxu0 0
    %3015 = vmatprep.subr.bf16.mxu0 0
    %3016 = vmatpush1.bf16.msra.mxu0 0
    %3017 = vmatprep.subr.bf16.mxu0 0
    %3018 = vmatpush1.bf16.msra.mxu0 0
    %3019 = vmatprep.mubr.bf16.mxu0 0
    %3020 = vmatmul.mubr.bf16.gmra.mrb[0].mxu0 %v2945
    %v3021 = vpop.f32.mrb[0].mxu0
    %v3022 = vadd.f32 0.0, %v3021
    %v3023 = vpop.f32.mrb[0].mxu0
    %v3024 = vadd.f32 0.0, %v3023
    %v3025 = vpop.f32.mrb[0].mxu0
    %v3026 = vpop.f32.mrb[0].mxu0
    %3027 = vdwg.mxu0
    %v3028 = vadd.f32 %v2940, %v2981
    %v3029 = vadd.f32 %v2941, %v2983
    %v3030 = vadd.f32 %v2942, %v3022
    %v3031 = vadd.f32 %v2943, %v3024
    %v3032 = vld [vmem:[#allocation3] sm:$0xff]
    %v3033 = vxor.u32 %v3028, 2147483648
    %v3034 = vxor.u32 %v3029, 2147483648
    %v3035 = vxor.u32 %v3030, 2147483648
    %v3036 = vmul.f32 %v3033, 1.442695
    %v3037 = vpow.pop %v3036
    %v3038 = vmul.f32 %v3034, 1.442695
    %v3039 = vpow.pop %v3038
    %v3040 = vmul.f32 %v3035, 1.442695
    %v3041 = vpow.pop %v3040
    %v3042 = vadd.f32 %v3037, 1.0
    %v3043 = vadd.f32 %v3039, 1.0
    %v3044 = vadd.f32 %v3041, 1.0
    %v3045 = vrcp.pop %v3042
    %v3046 = vmul.f32 1.0, %v3045
    %v3047 = vrcp.pop %v3043
    %v3048 = vmul.f32 1.0, %v3047
    %v3049 = vrcp.pop %v3044
    %v3050 = vmul.f32 1.0, %v3049
    %v3051 = vtanh.pop %v3031
    %v3052 = vmul.f32 %v3048, %v3032
    %v3053 = vmul.f32 %v3046, %v3051
    %v3054 = vadd.f32 %v3052, %v3053
    %v3055 = vtanh.pop %v3054
    %v3056 = vmul.f32 %v3050, %v3055
    %3057 = vst [vmem:[#allocation2] sm:$0xff] %v3056
    %3058 = vst [vmem:[#allocation3] sm:$0xff] %v3054
    %v3059 = vpack.c.bf16 %v3056, %v3056
    %s3060 = scalar_lea.vmem %s3, 28
    %3061 = vst [vmem:[%s3060] sm:$0xf] %v3059
    %v3062 = vld [vmem:[%s863] sm:$0xff]
    %v3063 = vld [vmem:[%s863 + $0x8] sm:$0xff]
    %v3064 = vld [vmem:[%s863 + $0x10] sm:$0xff]
    %v3065 = vld [vmem:[%s863 + $0x18] sm:$0xff]
    %v3066 = vld [vmem:[%s863 + $0x20] sm:$0xff]
    %v3067 = vld [vmem:[%s863 + $0x28] sm:$0xff]
    %v3068 = vld [vmem:[%s863 + $0x30] sm:$0xff]
    %v3069 = vld [vmem:[%s863 + $0x38] sm:$0xff]
    %v3070 = vld [vmem:[%s863 + $0x40] sm:$0xff]
    %v3071 = vld [vmem:[%s863 + $0x48] sm:$0xff]
    %v3072 = vld [vmem:[%s863 + $0x50] sm:$0xff]
    %v3073 = vld [vmem:[%s863 + $0x58] sm:$0xff]
    %v3074 = vld [vmem:[%s863 + $0x60] sm:$0xff]
    %v3075 = vld [vmem:[%s863 + $0x68] sm:$0xff]
    %v3076 = vld [vmem:[%s863 + $0x70] sm:$0xff]
    %v3077 = vld [vmem:[%s863 + $0x78] sm:$0xff]
    %v3078 = vld [vmem:[%s863 + $0x80] sm:$0xff]
    %v3079 = vld [vmem:[%s863 + $0x88] sm:$0xff]
    %v3080 = vld [vmem:[%s863 + $0x90] sm:$0xff]
    %v3081 = vld [vmem:[%s863 + $0x98] sm:$0xff]
    %v3082 = vld [vmem:[%s863 + $0xa0] sm:$0xff]
    %v3083 = vld [vmem:[%s863 + $0xa8] sm:$0xff]
    %v3084 = vld [vmem:[%s863 + $0xb0] sm:$0xff]
    %v3085 = vld [vmem:[%s863 + $0xb8] sm:$0xff]
    %v3086 = vld [vmem:[%s863 + $0xc0] sm:$0xff]
    %v3087 = vld [vmem:[%s863 + $0xc8] sm:$0xff]
    %v3088 = vld [vmem:[%s863 + $0xd0] sm:$0xff]
    %v3089 = vld [vmem:[%s863 + $0xd8] sm:$0xff]
    %v3090 = vld [vmem:[%s863 + $0xe0] sm:$0xff]
    %v3091 = vld [vmem:[%s863 + $0xe8] sm:$0xff]
    %v3092 = vld [vmem:[%s863 + $0xf0] sm:$0xff]
    %v3093 = vld [vmem:[%s863 + $0xf8] sm:$0xff]
    %v3094 = vld [vmem:[#allocation9] sm:$0xff]
    %v3095 = vld [vmem:[#allocation9 + $0x8] sm:$0xff]
    %v3096 = vunpack.c.l.bf16 %v3094
    %v3097 = vunpack.c.h.bf16 %v3094
    %v3098 = vunpack.c.l.bf16 %v3095
    %v3099 = vunpack.c.h.bf16 %v3095
    %v3100 = vld [vmem:[#allocation4] sm:$0xff]
    %v3101 = vpack.c.bf16 %v3100, %v3100
    %3102 = vmatprep.subr.bf16.mxu0 %v3063
    %3103 = vmatpush1.bf16.msra.mxu0 %v3062
    %3104 = vmatprep.subr.bf16.mxu0 %v3067
    %3105 = vmatpush1.bf16.msra.mxu0 %v3066
    %3106 = vmatprep.subr.bf16.mxu0 %v3071
    %3107 = vmatpush1.bf16.msra.mxu0 %v3070
    %3108 = vmatprep.subr.bf16.mxu0 %v3075
    %3109 = vmatpush1.bf16.msra.mxu0 %v3074
    %3110 = vmatprep.subr.bf16.mxu0 %v3079
    %3111 = vmatpush1.bf16.msra.mxu0 %v3078
    %3112 = vmatprep.subr.bf16.mxu0 %v3083
    %3113 = vmatpush1.bf16.msra.mxu0 %v3082
    %3114 = vmatprep.subr.bf16.mxu0 %v3087
    %3115 = vmatpush1.bf16.msra.mxu0 %v3086
    %3116 = vmatprep.subr.bf16.mxu0 %v3091
    %3117 = vmatpush1.bf16.msra.mxu0 %v3090
    %3118 = vmatprep.subr.bf16.mxu0 0
    %3119 = vmatpush1.bf16.msra.mxu0 0
    %3120 = vmatprep.subr.bf16.mxu0 0
    %3121 = vmatpush1.bf16.msra.mxu0 0
    %3122 = vmatprep.subr.bf16.mxu0 0
    %3123 = vmatpush1.bf16.msra.mxu0 0
    %3124 = vmatprep.subr.bf16.mxu0 0
    %3125 = vmatpush1.bf16.msra.mxu0 0
    %3126 = vmatprep.subr.bf16.mxu0 0
    %3127 = vmatpush1.bf16.msra.mxu0 0
    %3128 = vmatprep.subr.bf16.mxu0 0
    %3129 = vmatpush1.bf16.msra.mxu0 0
    %3130 = vmatprep.subr.bf16.mxu0 0
    %3131 = vmatpush1.bf16.msra.mxu0 0
    %3132 = vmatprep.subr.bf16.mxu0 0
    %3133 = vmatpush1.bf16.msra.mxu0 0
    %3134 = vmatprep.mubr.bf16.mxu0 0
    %3135 = vmatmul.mubr.bf16.gmra.mrb[0].mxu0 %v3101
    %v3136 = vpop.f32.mrb[0].mxu0
    %v3137 = vadd.f32 0.0, %v3136
    %v3138 = vpop.f32.mrb[0].mxu0
    %v3139 = vadd.f32 0.0, %v3138
    %v3140 = vpop.f32.mrb[0].mxu0
    %v3141 = vpop.f32.mrb[0].mxu0
    %3142 = vdwg.mxu0
    %3143 = vmatprep.subr.bf16.mxu0 %v3065
    %3144 = vmatpush1.bf16.msra.mxu0 %v3064
    %3145 = vmatprep.subr.bf16.mxu0 %v3069
    %3146 = vmatpush1.bf16.msra.mxu0 %v3068
    %3147 = vmatprep.subr.bf16.mxu0 %v3073
    %3148 = vmatpush1.bf16.msra.mxu0 %v3072
    %3149 = vmatprep.subr.bf16.mxu0 %v3077
    %3150 = vmatpush1.bf16.msra.mxu0 %v3076
    %3151 = vmatprep.subr.bf16.mxu0 %v3081
    %3152 = vmatpush1.bf16.msra.mxu0 %v3080
    %3153 = vmatprep.subr.bf16.mxu0 %v3085
    %3154 = vmatpush1.bf16.msra.mxu0 %v3084
    %3155 = vmatprep.subr.bf16.mxu0 %v3089
    %3156 = vmatpush1.bf16.msra.mxu0 %v3088
    %3157 = vmatprep.subr.bf16.mxu0 %v3093
    %3158 = vmatpush1.bf16.msra.mxu0 %v3092
    %3159 = vmatprep.subr.bf16.mxu0 0
    %3160 = vmatpush1.bf16.msra.mxu0 0
    %3161 = vmatprep.subr.bf16.mxu0 0
    %3162 = vmatpush1.bf16.msra.mxu0 0
    %3163 = vmatprep.subr.bf16.mxu0 0
    %3164 = vmatpush1.bf16.msra.mxu0 0
    %3165 = vmatprep.subr.bf16.mxu0 0
    %3166 = vmatpush1.bf16.msra.mxu0 0
    %3167 = vmatprep.subr.bf16.mxu0 0
    %3168 = vmatpush1.bf16.msra.mxu0 0
    %3169 = vmatprep.subr.bf16.mxu0 0
    %3170 = vmatpush1.bf16.msra.mxu0 0
    %3171 = vmatprep.subr.bf16.mxu0 0
    %3172 = vmatpush1.bf16.msra.mxu0 0
    %3173 = vmatprep.subr.bf16.mxu0 0
    %3174 = vmatpush1.bf16.msra.mxu0 0
    %3175 = vmatprep.mubr.bf16.mxu0 0
    %3176 = vmatmul.mubr.bf16.gmra.mrb[0].mxu0 %v3101
    %v3177 = vpop.f32.mrb[0].mxu0
    %v3178 = vadd.f32 0.0, %v3177
    %v3179 = vpop.f32.mrb[0].mxu0
    %v3180 = vadd.f32 0.0, %v3179
    %v3181 = vpop.f32.mrb[0].mxu0
    %v3182 = vpop.f32.mrb[0].mxu0
    %3183 = vdwg.mxu0
    %v3184 = vadd.f32 %v3096, %v3137
    %v3185 = vadd.f32 %v3097, %v3139
    %v3186 = vadd.f32 %v3098, %v3178
    %v3187 = vadd.f32 %v3099, %v3180
    %v3188 = vld [vmem:[#allocation5] sm:$0xff]
    %v3189 = vxor.u32 %v3184, 2147483648
    %v3190 = vxor.u32 %v3185, 2147483648
    %v3191 = vxor.u32 %v3186, 2147483648
    %v3192 = vmul.f32 %v3189, 1.442695
    %v3193 = vpow.pop %v3192
    %v3194 = vmul.f32 %v3190, 1.442695
    %v3195 = vpow.pop %v3194
    %v3196 = vmul.f32 %v3191, 1.442695
    %v3197 = vpow.pop %v3196
    %v3198 = vadd.f32 %v3193, 1.0
    %v3199 = vadd.f32 %v3195, 1.0
    %v3200 = vadd.f32 %v3197, 1.0
    %v3201 = vrcp.pop %v3198
    %v3202 = vmul.f32 1.0, %v3201
    %v3203 = vrcp.pop %v3199
    %v3204 = vmul.f32 1.0, %v3203
    %v3205 = vrcp.pop %v3200
    %v3206 = vmul.f32 1.0, %v3205
    %v3207 = vtanh.pop %v3187
    %v3208 = vmul.f32 %v3204, %v3188
    %v3209 = vmul.f32 %v3202, %v3207
    %v3210 = vadd.f32 %v3208, %v3209
    %v3211 = vtanh.pop %v3210
    %v3212 = vmul.f32 %v3206, %v3211
    %3213 = vst [vmem:[#allocation4] sm:$0xff] %v3212
    %3214 = vst [vmem:[#allocation5] sm:$0xff] %v3210
    %v3215 = vpack.c.bf16 %v3212, %v3212
    %3216 = vst [vmem:[%s131] sm:$0xf] %v3215
    %s3217 = ssub.s32 0, 0
    %s3218 = smul.u32 8, %s3217
    %p3219 = scmp.lt.s32.totalorder %s3218, 7
    %s3220 = scalar_select %p3219, %s3218, 7
    %s3221 = smul.addr %s3220, 4
    %s3222 = scalar_lea.vmem %s4, %s3221
    // Predicated region
    $region97: #{bilstm_forward.4} parent=1 // pred_check
      _
    $region98: #{bilstm_forward.4} parent=1 // pred_check_branch
      %3224 = sbr.rel (0) target = $region100
    $region99: #{bilstm_forward.4} parent=1 // pred_region
      _
    $region100: #{bilstm_forward.4} parent=1 // pred_fallthru
      _
    // Predicated region
    $region101: #{bilstm_forward.4} parent=1 // pred_check
      _
    $region102: #{bilstm_forward.4} parent=1 // pred_check_branch
      %3226 = sbr.rel (0) target = $region104
    $region103: #{bilstm_forward.4} parent=1 // pred_region
      %s3227 = ssub.s32 0, 0
      %s3228 = smul.u32 8, %s3227
    $region104: #{bilstm_forward.4} parent=1 // pred_fallthru
      _
    // Predicated region
    $region105: #{bilstm_forward.4} parent=1 // pred_check
      _
    $region106: #{bilstm_forward.4} parent=1 // pred_check_branch
      %3230 = sbr.rel (0) target = $region108
    $region107: #{bilstm_forward.4} parent=1 // pred_region
      _
    $region108: #{bilstm_forward.4} parent=1 // pred_fallthru
      _
    // Predicated region
    $region109: #{bilstm_forward.4} parent=1 // pred_check
      _
    $region110: #{bilstm_forward.4} parent=1 // pred_check_branch
      %3232 = sbr.rel (0) target = $region112
    $region111: #{bilstm_forward.4} parent=1 // pred_region
      %s3233 = ssub.s32 0, 0
      %s3234 = smul.u32 8, %s3233
      %p3235 = scmp.lt.s32.totalorder %s3234, 7
      %s3236 = scalar_select %p3235, %s3234, 7
      %s3237 = smul.addr %s3236, 4
      %s3238 = scalar_lea.vmem %s4, %s3237
    $region112: #{bilstm_forward.4} parent=1 // pred_fallthru
      _
  %3239 = vsyncmov [#allocation7]
  %s3240 = vpop.sfrf %3239
  %p3241 = scmp.eq.s32.totalorder %s3240, 0
  %p3242 = pneg %p3241
  %3244 = shalt.err (%p3242)

</llo_original>
